<compile_context>
chip_gen: v6e
topology: v6e:2x2x1
jax: 0.10.0
libtpu: 0.0.40
codegen_flags: <defaults>
</compile_context>

<pallas_src>
import numpy as np
import jax
import jax.numpy as jnp
from jax.experimental import pallas as pl
from jax.experimental.pallas import tpu as pltpu

# ---- module constants (from transfer_bias.py) -------------------------------
EMBEDDING_SIZE = 512       # embedding_size
NB_POSTAGS = 1             # nb_postags
HN = 100                   # postag_hn_size
NB_LAYERS = 2              # postag_nb_layers  (bidirectional => 4 (layer,dir) cells)
MAX_SENTENCE_SIZE = 16     # max_sentence_size (second dim of the h / w init-state params)

# ---- kernel layout constants -------------------------------------------------
HP = 128                   # hidden padded to a full 128-lane tile
BP = 8                     # batch padded to a full 8-sublane tile
G4 = 4 * HP                # four gate slots stacked along lanes


def _sigmoid(z):
    # exp and the approximate reciprocal both go to the EUP slot (VALU stays free).
    return pl.reciprocal(1.0 + jnp.exp(-z), approx=True)


def _transfer_bias_kernel(
    x2d_ref, h0_ref, c0_ref,
    wih0f_ref, whh0f_ref, b0f_ref,                  # layer 0, forward dir
    wih0b_ref, whh0b_ref, b0b_ref,                  # layer 0, backward dir
    wih1ff_ref, wih1fb_ref, whh1f_ref, b1f_ref,     # layer 1, forward dir (ih split in halves)
    wih1bf_ref, wih1bb_ref, whh1b_ref, b1b_ref,     # layer 1, backward dir
    fcwf_ref, fcwb_ref, fcb_ref,                    # fc weight halves (1, HP) + bias (1, 1)
    tags_ref,                                       # output (BP, NB_POSTAGS)
    pre0f_ref, pre0b_ref,                           # VMEM scratch: layer-0 input projections
    seq0f_ref, seq0b_ref,                           # VMEM scratch: layer-0 outputs per timestep
    pre1b_ref,                                      # VMEM scratch: layer-1-bwd input projections
):
    T = pre0f_ref.shape[0] // BP

    # ---- layer-0 input projections, hoisted out of the recurrence -----------
    x2d = x2d_ref[...]                                                    # (T*BP, E)
    pre0f_ref[...] = (jnp.dot(x2d, wih0f_ref[...],
                              preferred_element_type=jnp.float32) + b0f_ref[...])
    pre0b_ref[...] = (jnp.dot(x2d, wih0b_ref[...],
                              preferred_element_type=jnp.float32) + b0b_ref[...])

    def cell_step(h, c, pre, whh_ref):
        # One LSTM step: single gate-stacked matmul, lane-aligned gate slices.
        gates = jnp.dot(h, whh_ref[...], preferred_element_type=jnp.float32) + pre
        i = _sigmoid(gates[:, 0 * HP:1 * HP])
        f = _sigmoid(gates[:, 1 * HP:2 * HP])
        g = jnp.tanh(gates[:, 2 * HP:3 * HP])
        o = _sigmoid(gates[:, 3 * HP:4 * HP])
        c_new = f * c + i * g
        h_new = o * jnp.tanh(c_new)
        return h_new, c_new

    # ---- layer 0: forward + backward chains fused, fully unrolled (T static) -
    hf, cf = h0_ref[0], c0_ref[0]
    hb, cb = h0_ref[1], c0_ref[1]
    for t in range(T):
        tb = T - 1 - t
        hf, cf = cell_step(hf, cf, pre0f_ref[pl.ds(t * BP, BP), :], whh0f_ref)
        hb, cb = cell_step(hb, cb, pre0b_ref[pl.ds(tb * BP, BP), :], whh0b_ref)
        seq0f_ref[pl.ds(t * BP, BP), :] = hf
        seq0b_ref[pl.ds(tb * BP, BP), :] = hb

    # ---- layer-1 input projections, batched over all timesteps ---------------
    s0f = seq0f_ref[...]                                                  # (T*BP, HP)
    s0b = seq0b_ref[...]
    pre1b_ref[...] = (jnp.dot(s0f, wih1bf_ref[...], preferred_element_type=jnp.float32)
                      + jnp.dot(s0b, wih1bb_ref[...], preferred_element_type=jnp.float32)
                      + b1b_ref[...])

    # ---- layer 1, forward direction: out[0] only needs the t = 0 step --------
    pre1f0 = (jnp.dot(seq0f_ref[pl.ds(0, BP), :], wih1ff_ref[...],
                      preferred_element_type=jnp.float32)
              + jnp.dot(seq0b_ref[pl.ds(0, BP), :], wih1fb_ref[...],
                        preferred_element_type=jnp.float32)
              + b1f_ref[...])
    h1f, _ = cell_step(h0_ref[2], c0_ref[2], pre1f0, whh1f_ref)

    # ---- layer 1, backward direction: t = T-1 .. 0; its state at t=0 feeds out[0]
    h1b, c1b = h0_ref[3], c0_ref[3]
    for t in range(T - 1, -1, -1):
        h1b, c1b = cell_step(h1b, c1b, pre1b_ref[pl.ds(t * BP, BP), :], whh1b_ref)

    # ---- fc on out[0] = concat(h1f, h1b): VPU multiply + lane reduce ----------
    tags = (jnp.sum(h1f * fcwf_ref[...] + h1b * fcwb_ref[...], axis=-1, keepdims=True)
            + fcb_ref[...])
    tags_ref[...] = tags


def transfer_bias_forward(x, kparams):
    """x: (T, B, E) seq-first (PyTorch nn.LSTM convention)."""
    T, B, E = x.shape
    assert B <= BP
    # Layout plumbing: pad batch to a full sublane tile and flatten (T, BP) -> rows.
    xp = jnp.zeros((T, BP, E), jnp.float32).at[:, :B, :].set(x.astype(jnp.float32))
    x2d = xp.reshape(T * BP, E)

    inputs = (
        x2d, kparams["h0"], kparams["c0"],
        kparams["wih0f"], kparams["whh0f"], kparams["b0f"],
        kparams["wih0b"], kparams["whh0b"], kparams["b0b"],
        kparams["wih1f_f"], kparams["wih1f_b"], kparams["whh1f"], kparams["b1f"],
        kparams["wih1b_f"], kparams["wih1b_b"], kparams["whh1b"], kparams["b1b"],
        kparams["fcw_f"], kparams["fcw_b"], kparams["fcb"],
    )
    vmem = pl.BlockSpec(memory_space=pltpu.MemorySpace.VMEM)
    tags_padded = pl.pallas_call(
        _transfer_bias_kernel,
        out_shape=jax.ShapeDtypeStruct((BP, NB_POSTAGS), jnp.float32),
        in_specs=[vmem] * len(inputs),
        out_specs=vmem,
        scratch_shapes=[
            pltpu.VMEM((T * BP, G4), jnp.float32),   # pre0f: layer-0 fwd input projections
            pltpu.VMEM((T * BP, G4), jnp.float32),   # pre0b: layer-0 bwd input projections
            pltpu.VMEM((T * BP, HP), jnp.float32),   # seq0f: layer-0 fwd outputs
            pltpu.VMEM((T * BP, HP), jnp.float32),   # seq0b: layer-0 bwd outputs
            pltpu.VMEM((T * BP, G4), jnp.float32),   # pre1b: layer-1 bwd input projections
        ],
    )(*inputs)
    return tags_padded[:B]


# ---------------------------------------------------------------------------
# Parameter construction (PyTorch layout) and packing into the kernel layout.
# ---------------------------------------------------------------------------
def init_torch_params(key):
    """Deterministic synthetic parameters in PyTorch nn.LSTM / nn.Linear shapes."""
    keys = iter(jax.random.split(key, 32))

    def randn(shape, scale=0.1):
        return scale * jax.random.normal(next(keys), shape, dtype=jnp.float32)

    p = {}
    # nn.Parameter(torch.randn(2*nb_layers, max_sentence_size, hn))
    p["h"] = randn((2 * NB_LAYERS, MAX_SENTENCE_SIZE, HN), 1.0)   # LSTM h_0 source
    p["w"] = randn((2 * NB_LAYERS, MAX_SENTENCE_SIZE, HN), 1.0)   # LSTM c_0 source
    for name, in_size in (("l0f", EMBEDDING_SIZE), ("l0b", EMBEDDING_SIZE),
                          ("l1f", 2 * HN), ("l1b", 2 * HN)):
        p["w_ih_" + name] = randn((4 * HN, in_size))
        p["w_hh_" + name] = randn((4 * HN, HN))
        p["b_ih_" + name] = randn((4 * HN,))
        p["b_hh_" + name] = randn((4 * HN,))
    p["fc_w"] = randn((NB_POSTAGS, 2 * HN))
    p["fc_b"] = randn((NB_POSTAGS,))
    return p


def _pack_gate_w(w_pt):
    """PyTorch (4H, in) weight -> (in_pad, 4*HP) gate-stacked, 128-lane slots, zero-padded."""
    w_pt = np.asarray(w_pt, np.float32)
    in_size = w_pt.shape[1]
    in_pad = in_size if in_size % 8 == 0 else ((in_size + 7) // 8) * 8
    in_pad = max(in_pad, HP) if in_size <= HP else in_pad
    out = np.zeros((in_pad if in_size > HN else HP, G4), np.float32)
    if in_size == HN:                       # hidden-sized input -> pad rows to HP
        out = np.zeros((HP, G4), np.float32)
    else:
        out = np.zeros((in_size, G4), np.float32)
    wg = w_pt.reshape(4, HN, in_size)
    for g in range(4):
        out[:in_size, g * HP:g * HP + HN] = wg[g].T
    return jnp.asarray(out)


def _pack_bias(b_ih, b_hh):
    b = np.asarray(b_ih, np.float32) + np.asarray(b_hh, np.float32)
    out = np.zeros((1, G4), np.float32)
    bg = b.reshape(4, HN)
    for g in range(4):
        out[0, g * HP:g * HP + HN] = bg[g]
    return jnp.asarray(out)


def pack_params(tp, batch):
    """Convert PyTorch-shaped params into the padded / gate-stacked kernel layout."""
    kp = {}
    # init states: forward passes (self.h, self.w) as (h_0, c_0), sliced to batch
    h0 = np.zeros((4, BP, HP), np.float32)
    c0 = np.zeros((4, BP, HP), np.float32)
    h0[:, :batch, :HN] = np.asarray(tp["h"])[:, :batch, :]
    c0[:, :batch, :HN] = np.asarray(tp["w"])[:, :batch, :]
    kp["h0"], kp["c0"] = jnp.asarray(h0), jnp.asarray(c0)

    kp["wih0f"] = _pack_gate_w(tp["w_ih_l0f"])                 # (E, 4*HP)
    kp["whh0f"] = _pack_gate_w(tp["w_hh_l0f"])                 # (HP, 4*HP)
    kp["b0f"] = _pack_bias(tp["b_ih_l0f"], tp["b_hh_l0f"])
    kp["wih0b"] = _pack_gate_w(tp["w_ih_l0b"])
    kp["whh0b"] = _pack_gate_w(tp["w_hh_l0b"])
    kp["b0b"] = _pack_bias(tp["b_ih_l0b"], tp["b_hh_l0b"])

    w1f = np.asarray(tp["w_ih_l1f"], np.float32)               # (4H, 2H)
    w1b = np.asarray(tp["w_ih_l1b"], np.float32)
    kp["wih1f_f"] = _pack_gate_w(w1f[:, :HN])                  # half acting on fwd layer-0 out
    kp["wih1f_b"] = _pack_gate_w(w1f[:, HN:])                  # half acting on bwd layer-0 out
    kp["whh1f"] = _pack_gate_w(tp["w_hh_l1f"])
    kp["b1f"] = _pack_bias(tp["b_ih_l1f"], tp["b_hh_l1f"])
    kp["wih1b_f"] = _pack_gate_w(w1b[:, :HN])
    kp["wih1b_b"] = _pack_gate_w(w1b[:, HN:])
    kp["whh1b"] = _pack_gate_w(tp["w_hh_l1b"])
    kp["b1b"] = _pack_bias(tp["b_ih_l1b"], tp["b_hh_l1b"])

    # fc = nn.Linear(2H, nb_postags): y = x @ W.T + b; W is (1, 2H).
    fcw = np.asarray(tp["fc_w"], np.float32)
    fwf = np.zeros((1, HP), np.float32); fwf[0, :HN] = fcw[0, :HN]
    fwb = np.zeros((1, HP), np.float32); fwb[0, :HN] = fcw[0, HN:]
    kp["fcw_f"], kp["fcw_b"] = jnp.asarray(fwf), jnp.asarray(fwb)
    kp["fcb"] = jnp.asarray(np.asarray(tp["fc_b"], np.float32).reshape(1, NB_POSTAGS))
    return kp


# ---------------------------------------------------------------------------
# Pure numpy reference (PyTorch LSTM semantics) for the correctness check.
# ---------------------------------------------------------------------------
def reference_forward(x, tp):
    x = np.asarray(x, np.float32)
    T, B, _ = x.shape
    g = lambda k: np.asarray(tp[k], np.float32)

    def sigmoid(z):
        return 1.0 / (1.0 + np.exp(-z))

    def step(xv, h, c, w_ih, w_hh, b_ih, b_hh):
        gates = xv @ w_ih.T + b_ih + h @ w_hh.T + b_hh
        i, f, gg, o = np.split(gates, 4, axis=1)
        i, f, o = sigmoid(i), sigmoid(f), sigmoid(o)
        gg = np.tanh(gg)
        c = f * c + i * gg
        h = o * np.tanh(c)
        return h, c

    h0 = np.asarray(tp["h"], np.float32)[:, :B, :]
    c0 = np.asarray(tp["w"], np.float32)[:, :B, :]

    out0f = np.zeros((T, B, HN), np.float32)
    out0b = np.zeros((T, B, HN), np.float32)
    h, c = h0[0], c0[0]
    for t in range(T):
        h, c = step(x[t], h, c, g("w_ih_l0f"), g("w_hh_l0f"), g("b_ih_l0f"), g("b_hh_l0f"))
        out0f[t] = h
    h, c = h0[1], c0[1]
    for t in range(T - 1, -1, -1):
        h, c = step(x[t], h, c, g("w_ih_l0b"), g("w_hh_l0b"), g("b_ih_l0b"), g("b_hh_l0b"))
        out0b[t] = h
    l0out = np.concatenate([out0f, out0b], axis=-1)            # (T, B, 2H)

    h1f, _ = step(l0out[0], h0[2], c0[2],
                  g("w_ih_l1f"), g("w_hh_l1f"), g("b_ih_l1f"), g("b_hh_l1f"))
    h, c = h0[3], c0[3]
    for t in range(T - 1, -1, -1):
        h, c = step(l0out[t], h, c, g("w_ih_l1b"), g("w_hh_l1b"), g("b_ih_l1b"), g("b_hh_l1b"))
    out0 = np.concatenate([h1f, h], axis=-1)                   # out[0] = (B, 2H)
    return out0 @ g("fc_w").T + g("fc_b")


if __name__ == "__main__":
    seq_len, batch = 8, 2
    key = jax.random.PRNGKey(0)
    kx, kp = jax.random.split(key)
    x = jax.random.normal(kx, (seq_len, batch, EMBEDDING_SIZE), dtype=jnp.float32)

    tparams = init_torch_params(kp)
    kparams = pack_params(tparams, batch)

    tags = transfer_bias_forward(x, kparams)
    tags = jax.block_until_ready(tags)

    ref = reference_forward(np.asarray(x), tparams)
    np.testing.assert_allclose(np.asarray(tags), ref, rtol=1e-2, atol=1e-2)
    assert tags.shape == (batch, NB_POSTAGS)
    print("KERNEL_OK")
</pallas_src>

<mosaic_0001>
module attributes {stable_mosaic.version = 11 : i64} {
  func.func @_transfer_bias_kernel(%arg0: memref<64x512xf32, #tpu.memory_space<vmem>>, %arg1: memref<4x8x128xf32, #tpu.memory_space<vmem>>, %arg2: memref<4x8x128xf32, #tpu.memory_space<vmem>>, %arg3: memref<512x512xf32, #tpu.memory_space<vmem>>, %arg4: memref<128x512xf32, #tpu.memory_space<vmem>>, %arg5: memref<1x512xf32, #tpu.memory_space<vmem>>, %arg6: memref<512x512xf32, #tpu.memory_space<vmem>>, %arg7: memref<128x512xf32, #tpu.memory_space<vmem>>, %arg8: memref<1x512xf32, #tpu.memory_space<vmem>>, %arg9: memref<128x512xf32, #tpu.memory_space<vmem>>, %arg10: memref<128x512xf32, #tpu.memory_space<vmem>>, %arg11: memref<128x512xf32, #tpu.memory_space<vmem>>, %arg12: memref<1x512xf32, #tpu.memory_space<vmem>>, %arg13: memref<128x512xf32, #tpu.memory_space<vmem>>, %arg14: memref<128x512xf32, #tpu.memory_space<vmem>>, %arg15: memref<128x512xf32, #tpu.memory_space<vmem>>, %arg16: memref<1x512xf32, #tpu.memory_space<vmem>>, %arg17: memref<1x128xf32, #tpu.memory_space<vmem>>, %arg18: memref<1x128xf32, #tpu.memory_space<vmem>>, %arg19: memref<1x1xf32, #tpu.memory_space<vmem>>, %arg20: memref<8x1xf32, #tpu.memory_space<vmem>>, %arg21: memref<64x512xf32, #tpu.memory_space<vmem>>, %arg22: memref<64x512xf32, #tpu.memory_space<vmem>>, %arg23: memref<64x128xf32, #tpu.memory_space<vmem>>, %arg24: memref<64x128xf32, #tpu.memory_space<vmem>>, %arg25: memref<64x512xf32, #tpu.memory_space<vmem>>) attributes {dimension_semantics = [], scalar_prefetch = 0 : i64, scratch_operands = 5 : i64, tpu.core_type = #tpu.core_type<tc>} {
    %c0 = arith.constant 0 : index
    %c0_0 = arith.constant 0 : index
    %0 = vector.load %arg0[%c0, %c0_0] : memref<64x512xf32, #tpu.memory_space<vmem>>, vector<64x512xf32>
    %c0_1 = arith.constant 0 : index
    %c0_2 = arith.constant 0 : index
    %1 = vector.load %arg3[%c0_1, %c0_2] : memref<512x512xf32, #tpu.memory_space<vmem>>, vector<512x512xf32>
    %cst = arith.constant dense<0.000000e+00> : vector<64x512xf32>
    %2 = tpu.matmul %0, %1, %cst {dimension_numbers = #tpu.dot_dimension_numbers<[1], [0], [0], [1], [0, 0, 1, 1], [], []>} : vector<64x512xf32>, vector<512x512xf32>, vector<64x512xf32> -> vector<64x512xf32>
    %c0_3 = arith.constant 0 : index
    %c0_4 = arith.constant 0 : index
    %3 = vector.load %arg5[%c0_3, %c0_4] : memref<1x512xf32, #tpu.memory_space<vmem>>, vector<1x512xf32>
    %4 = vector.broadcast %3 : vector<1x512xf32> to vector<64x512xf32>
    %5 = arith.addf %2, %4 : vector<64x512xf32>
    %c0_5 = arith.constant 0 : index
    %c0_6 = arith.constant 0 : index
    %6 = vector.load %arg21[%c0_5, %c0_6] : memref<64x512xf32, #tpu.memory_space<vmem>>, vector<64x512xf32>
    tpu.vector_store %arg21[%c0_5, %c0_6], %5 {strides = array<i32>} : memref<64x512xf32, #tpu.memory_space<vmem>>, vector<64x512xf32>,
    %c0_7 = arith.constant 0 : index
    %c0_8 = arith.constant 0 : index
    %7 = vector.load %arg6[%c0_7, %c0_8] : memref<512x512xf32, #tpu.memory_space<vmem>>, vector<512x512xf32>
    %cst_9 = arith.constant dense<0.000000e+00> : vector<64x512xf32>
    %8 = tpu.matmul %0, %7, %cst_9 {dimension_numbers = #tpu.dot_dimension_numbers<[1], [0], [0], [1], [0, 0, 1, 1], [], []>} : vector<64x512xf32>, vector<512x512xf32>, vector<64x512xf32> -> vector<64x512xf32>
    %c0_10 = arith.constant 0 : index
    %c0_11 = arith.constant 0 : index
    %9 = vector.load %arg8[%c0_10, %c0_11] : memref<1x512xf32, #tpu.memory_space<vmem>>, vector<1x512xf32>
    %10 = vector.broadcast %9 : vector<1x512xf32> to vector<64x512xf32>
    %11 = arith.addf %8, %10 : vector<64x512xf32>
    %c0_12 = arith.constant 0 : index
    %c0_13 = arith.constant 0 : index
    %12 = vector.load %arg22[%c0_12, %c0_13] : memref<64x512xf32, #tpu.memory_space<vmem>>, vector<64x512xf32>
    tpu.vector_store %arg22[%c0_12, %c0_13], %11 {strides = array<i32>} : memref<64x512xf32, #tpu.memory_space<vmem>>, vector<64x512xf32>,
    %c0_14 = arith.constant 0 : index
    %c0_15 = arith.constant 0 : index
    %c0_16 = arith.constant 0 : index
    %13 = vector.load %arg1[%c0_14, %c0_15, %c0_16] : memref<4x8x128xf32, #tpu.memory_space<vmem>>, vector<1x8x128xf32>
    %14 = vector.shape_cast %13 : vector<1x8x128xf32> to vector<8x128xf32>
    %c0_17 = arith.constant 0 : index
    %c0_18 = arith.constant 0 : index
    %c0_19 = arith.constant 0 : index
    %15 = vector.load %arg2[%c0_17, %c0_18, %c0_19] : memref<4x8x128xf32, #tpu.memory_space<vmem>>, vector<1x8x128xf32>
    %16 = vector.shape_cast %15 : vector<1x8x128xf32> to vector<8x128xf32>
    %c1 = arith.constant 1 : index
    %c0_20 = arith.constant 0 : index
    %c0_21 = arith.constant 0 : index
    %17 = vector.load %arg1[%c1, %c0_20, %c0_21] : memref<4x8x128xf32, #tpu.memory_space<vmem>>, vector<1x8x128xf32>
    %18 = vector.shape_cast %17 : vector<1x8x128xf32> to vector<8x128xf32>
    %c1_22 = arith.constant 1 : index
    %c0_23 = arith.constant 0 : index
    %c0_24 = arith.constant 0 : index
    %19 = vector.load %arg2[%c1_22, %c0_23, %c0_24] : memref<4x8x128xf32, #tpu.memory_space<vmem>>, vector<1x8x128xf32>
    %20 = vector.shape_cast %19 : vector<1x8x128xf32> to vector<8x128xf32>
    %c0_25 = arith.constant 0 : index
    %c0_26 = arith.constant 0 : index
    %21 = vector.load %arg21[%c0_25, %c0_26] : memref<64x512xf32, #tpu.memory_space<vmem>>, vector<8x512xf32>
    %c0_27 = arith.constant 0 : index
    %c0_28 = arith.constant 0 : index
    %22 = vector.load %arg4[%c0_27, %c0_28] : memref<128x512xf32, #tpu.memory_space<vmem>>, vector<128x512xf32>
    %cst_29 = arith.constant dense<0.000000e+00> : vector<8x512xf32>
    %23 = tpu.matmul %14, %22, %cst_29 {dimension_numbers = #tpu.dot_dimension_numbers<[1], [0], [0], [1], [0, 0, 1, 1], [], []>} : vector<8x128xf32>, vector<128x512xf32>, vector<8x512xf32> -> vector<8x512xf32>
    %24 = arith.addf %23, %21 : vector<8x512xf32>
    %25 = vector.extract_strided_slice %24 {offsets = [0, 0], sizes = [8, 128], strides = [1, 1]} : vector<8x512xf32> to vector<8x128xf32>
    %cst_30 = arith.constant 0.000000e+00 : f32
    %26 = vector.broadcast %cst_30 : f32 to vector<8x128xf32>
    %27 = arith.subf %26, %25 : vector<8x128xf32>
    %28 = math.exp %27 : vector<8x128xf32>
    %cst_31 = arith.constant 1.000000e+00 : f32
    %29 = vector.broadcast %cst_31 : f32 to vector<8x128xf32>
    %30 = arith.addf %29, %28 : vector<8x128xf32>
    %31 = tpu.reciprocal %30 {approx = true} : vector<8x128xf32> -> vector<8x128xf32>
    %32 = vector.extract_strided_slice %24 {offsets = [0, 128], sizes = [8, 128], strides = [1, 1]} : vector<8x512xf32> to vector<8x128xf32>
    %cst_32 = arith.constant 0.000000e+00 : f32
    %33 = vector.broadcast %cst_32 : f32 to vector<8x128xf32>
    %34 = arith.subf %33, %32 : vector<8x128xf32>
    %35 = math.exp %34 : vector<8x128xf32>
    %cst_33 = arith.constant 1.000000e+00 : f32
    %36 = vector.broadcast %cst_33 : f32 to vector<8x128xf32>
    %37 = arith.addf %36, %35 : vector<8x128xf32>
    %38 = tpu.reciprocal %37 {approx = true} : vector<8x128xf32> -> vector<8x128xf32>
    %39 = vector.extract_strided_slice %24 {offsets = [0, 256], sizes = [8, 128], strides = [1, 1]} : vector<8x512xf32> to vector<8x128xf32>
    %40 = math.tanh %39 : vector<8x128xf32>
    %41 = vector.extract_strided_slice %24 {offsets = [0, 384], sizes = [8, 128], strides = [1, 1]} : vector<8x512xf32> to vector<8x128xf32>
    %cst_34 = arith.constant 0.000000e+00 : f32
    %42 = vector.broadcast %cst_34 : f32 to vector<8x128xf32>
    %43 = arith.subf %42, %41 : vector<8x128xf32>
    %44 = math.exp %43 : vector<8x128xf32>
    %cst_35 = arith.constant 1.000000e+00 : f32
    %45 = vector.broadcast %cst_35 : f32 to vector<8x128xf32>
    %46 = arith.addf %45, %44 : vector<8x128xf32>
    %47 = tpu.reciprocal %46 {approx = true} : vector<8x128xf32> -> vector<8x128xf32>
    %48 = arith.mulf %38, %16 : vector<8x128xf32>
    %49 = arith.mulf %31, %40 : vector<8x128xf32>
    %50 = arith.addf %48, %49 : vector<8x128xf32>
    %51 = math.tanh %50 : vector<8x128xf32>
    %52 = arith.mulf %47, %51 : vector<8x128xf32>
    %c56 = arith.constant 56 : index
    %c0_36 = arith.constant 0 : index
    %53 = vector.load %arg22[%c56, %c0_36] : memref<64x512xf32, #tpu.memory_space<vmem>>, vector<8x512xf32>
    %c0_37 = arith.constant 0 : index
    %c0_38 = arith.constant 0 : index
    %54 = vector.load %arg7[%c0_37, %c0_38] : memref<128x512xf32, #tpu.memory_space<vmem>>, vector<128x512xf32>
    %cst_39 = arith.constant dense<0.000000e+00> : vector<8x512xf32>
    %55 = tpu.matmul %18, %54, %cst_39 {dimension_numbers = #tpu.dot_dimension_numbers<[1], [0], [0], [1], [0, 0, 1, 1], [], []>} : vector<8x128xf32>, vector<128x512xf32>, vector<8x512xf32> -> vector<8x512xf32>
    %56 = arith.addf %55, %53 : vector<8x512xf32>
    %57 = vector.extract_strided_slice %56 {offsets = [0, 0], sizes = [8, 128], strides = [1, 1]} : vector<8x512xf32> to vector<8x128xf32>
    %cst_40 = arith.constant 0.000000e+00 : f32
    %58 = vector.broadcast %cst_40 : f32 to vector<8x128xf32>
    %59 = arith.subf %58, %57 : vector<8x128xf32>
    %60 = math.exp %59 : vector<8x128xf32>
    %cst_41 = arith.constant 1.000000e+00 : f32
    %61 = vector.broadcast %cst_41 : f32 to vector<8x128xf32>
    %62 = arith.addf %61, %60 : vector<8x128xf32>
    %63 = tpu.reciprocal %62 {approx = true} : vector<8x128xf32> -> vector<8x128xf32>
    %64 = vector.extract_strided_slice %56 {offsets = [0, 128], sizes = [8, 128], strides = [1, 1]} : vector<8x512xf32> to vector<8x128xf32>
    %cst_42 = arith.constant 0.000000e+00 : f32
    %65 = vector.broadcast %cst_42 : f32 to vector<8x128xf32>
    %66 = arith.subf %65, %64 : vector<8x128xf32>
    %67 = math.exp %66 : vector<8x128xf32>
    %cst_43 = arith.constant 1.000000e+00 : f32
    %68 = vector.broadcast %cst_43 : f32 to vector<8x128xf32>
    %69 = arith.addf %68, %67 : vector<8x128xf32>
    %70 = tpu.reciprocal %69 {approx = true} : vector<8x128xf32> -> vector<8x128xf32>
    %71 = vector.extract_strided_slice %56 {offsets = [0, 256], sizes = [8, 128], strides = [1, 1]} : vector<8x512xf32> to vector<8x128xf32>
    %72 = math.tanh %71 : vector<8x128xf32>
    %73 = vector.extract_strided_slice %56 {offsets = [0, 384], sizes = [8, 128], strides = [1, 1]} : vector<8x512xf32> to vector<8x128xf32>
    %cst_44 = arith.constant 0.000000e+00 : f32
    %74 = vector.broadcast %cst_44 : f32 to vector<8x128xf32>
    %75 = arith.subf %74, %73 : vector<8x128xf32>
    %76 = math.exp %75 : vector<8x128xf32>
    %cst_45 = arith.constant 1.000000e+00 : f32
    %77 = vector.broadcast %cst_45 : f32 to vector<8x128xf32>
    %78 = arith.addf %77, %76 : vector<8x128xf32>
    %79 = tpu.reciprocal %78 {approx = true} : vector<8x128xf32> -> vector<8x128xf32>
    %80 = arith.mulf %70, %20 : vector<8x128xf32>
    %81 = arith.mulf %63, %72 : vector<8x128xf32>
    %82 = arith.addf %80, %81 : vector<8x128xf32>
    %83 = math.tanh %82 : vector<8x128xf32>
    %84 = arith.mulf %79, %83 : vector<8x128xf32>
    %c0_46 = arith.constant 0 : index
    %c0_47 = arith.constant 0 : index
    %85 = vector.load %arg23[%c0_46, %c0_47] : memref<64x128xf32, #tpu.memory_space<vmem>>, vector<8x128xf32>
    tpu.vector_store %arg23[%c0_46, %c0_47], %52 {strides = array<i32>} : memref<64x128xf32, #tpu.memory_space<vmem>>, vector<8x128xf32>,
    %c56_48 = arith.constant 56 : index
    %c0_49 = arith.constant 0 : index
    %86 = vector.load %arg24[%c56_48, %c0_49] : memref<64x128xf32, #tpu.memory_space<vmem>>, vector<8x128xf32>
    tpu.vector_store %arg24[%c56_48, %c0_49], %84 {strides = array<i32>} : memref<64x128xf32, #tpu.memory_space<vmem>>, vector<8x128xf32>,
    %c8 = arith.constant 8 : index
    %c0_50 = arith.constant 0 : index
    %87 = vector.load %arg21[%c8, %c0_50] : memref<64x512xf32, #tpu.memory_space<vmem>>, vector<8x512xf32>
    %c0_51 = arith.constant 0 : index
    %c0_52 = arith.constant 0 : index
    %88 = vector.load %arg4[%c0_51, %c0_52] : memref<128x512xf32, #tpu.memory_space<vmem>>, vector<128x512xf32>
    %cst_53 = arith.constant dense<0.000000e+00> : vector<8x512xf32>
    %89 = tpu.matmul %52, %88, %cst_53 {dimension_numbers = #tpu.dot_dimension_numbers<[1], [0], [0], [1], [0, 0, 1, 1], [], []>} : vector<8x128xf32>, vector<128x512xf32>, vector<8x512xf32> -> vector<8x512xf32>
    %90 = arith.addf %89, %87 : vector<8x512xf32>
    %91 = vector.extract_strided_slice %90 {offsets = [0, 0], sizes = [8, 128], strides = [1, 1]} : vector<8x512xf32> to vector<8x128xf32>
    %cst_54 = arith.constant 0.000000e+00 : f32
    %92 = vector.broadcast %cst_54 : f32 to vector<8x128xf32>
    %93 = arith.subf %92, %91 : vector<8x128xf32>
    %94 = math.exp %93 : vector<8x128xf32>
    %cst_55 = arith.constant 1.000000e+00 : f32
    %95 = vector.broadcast %cst_55 : f32 to vector<8x128xf32>
    %96 = arith.addf %95, %94 : vector<8x128xf32>
    %97 = tpu.reciprocal %96 {approx = true} : vector<8x128xf32> -> vector<8x128xf32>
    %98 = vector.extract_strided_slice %90 {offsets = [0, 128], sizes = [8, 128], strides = [1, 1]} : vector<8x512xf32> to vector<8x128xf32>
    %cst_56 = arith.constant 0.000000e+00 : f32
    %99 = vector.broadcast %cst_56 : f32 to vector<8x128xf32>
    %100 = arith.subf %99, %98 : vector<8x128xf32>
    %101 = math.exp %100 : vector<8x128xf32>
    %cst_57 = arith.constant 1.000000e+00 : f32
    %102 = vector.broadcast %cst_57 : f32 to vector<8x128xf32>
    %103 = arith.addf %102, %101 : vector<8x128xf32>
    %104 = tpu.reciprocal %103 {approx = true} : vector<8x128xf32> -> vector<8x128xf32>
    %105 = vector.extract_strided_slice %90 {offsets = [0, 256], sizes = [8, 128], strides = [1, 1]} : vector<8x512xf32> to vector<8x128xf32>
    %106 = math.tanh %105 : vector<8x128xf32>
    %107 = vector.extract_strided_slice %90 {offsets = [0, 384], sizes = [8, 128], strides = [1, 1]} : vector<8x512xf32> to vector<8x128xf32>
    %cst_58 = arith.constant 0.000000e+00 : f32
    %108 = vector.broadcast %cst_58 : f32 to vector<8x128xf32>
    %109 = arith.subf %108, %107 : vector<8x128xf32>
    %110 = math.exp %109 : vector<8x128xf32>
    %cst_59 = arith.constant 1.000000e+00 : f32
    %111 = vector.broadcast %cst_59 : f32 to vector<8x128xf32>
    %112 = arith.addf %111, %110 : vector<8x128xf32>
    %113 = tpu.reciprocal %112 {approx = true} : vector<8x128xf32> -> vector<8x128xf32>
    %114 = arith.mulf %104, %50 : vector<8x128xf32>
    %115 = arith.mulf %97, %106 : vector<8x128xf32>
    %116 = arith.addf %114, %115 : vector<8x128xf32>
    %117 = math.tanh %116 : vector<8x128xf32>
    %118 = arith.mulf %113, %117 : vector<8x128xf32>
    %c48 = arith.constant 48 : index
    %c0_60 = arith.constant 0 : index
    %119 = vector.load %arg22[%c48, %c0_60] : memref<64x512xf32, #tpu.memory_space<vmem>>, vector<8x512xf32>
    %c0_61 = arith.constant 0 : index
    %c0_62 = arith.constant 0 : index
    %120 = vector.load %arg7[%c0_61, %c0_62] : memref<128x512xf32, #tpu.memory_space<vmem>>, vector<128x512xf32>
    %cst_63 = arith.constant dense<0.000000e+00> : vector<8x512xf32>
    %121 = tpu.matmul %84, %120, %cst_63 {dimension_numbers = #tpu.dot_dimension_numbers<[1], [0], [0], [1], [0, 0, 1, 1], [], []>} : vector<8x128xf32>, vector<128x512xf32>, vector<8x512xf32> -> vector<8x512xf32>
    %122 = arith.addf %121, %119 : vector<8x512xf32>
    %123 = vector.extract_strided_slice %122 {offsets = [0, 0], sizes = [8, 128], strides = [1, 1]} : vector<8x512xf32> to vector<8x128xf32>
    %cst_64 = arith.constant 0.000000e+00 : f32
    %124 = vector.broadcast %cst_64 : f32 to vector<8x128xf32>
    %125 = arith.subf %124, %123 : vector<8x128xf32>
    %126 = math.exp %125 : vector<8x128xf32>
    %cst_65 = arith.constant 1.000000e+00 : f32
    %127 = vector.broadcast %cst_65 : f32 to vector<8x128xf32>
    %128 = arith.addf %127, %126 : vector<8x128xf32>
    %129 = tpu.reciprocal %128 {approx = true} : vector<8x128xf32> -> vector<8x128xf32>
    %130 = vector.extract_strided_slice %122 {offsets = [0, 128], sizes = [8, 128], strides = [1, 1]} : vector<8x512xf32> to vector<8x128xf32>
    %cst_66 = arith.constant 0.000000e+00 : f32
    %131 = vector.broadcast %cst_66 : f32 to vector<8x128xf32>
    %132 = arith.subf %131, %130 : vector<8x128xf32>
    %133 = math.exp %132 : vector<8x128xf32>
    %cst_67 = arith.constant 1.000000e+00 : f32
    %134 = vector.broadcast %cst_67 : f32 to vector<8x128xf32>
    %135 = arith.addf %134, %133 : vector<8x128xf32>
    %136 = tpu.reciprocal %135 {approx = true} : vector<8x128xf32> -> vector<8x128xf32>
    %137 = vector.extract_strided_slice %122 {offsets = [0, 256], sizes = [8, 128], strides = [1, 1]} : vector<8x512xf32> to vector<8x128xf32>
    %138 = math.tanh %137 : vector<8x128xf32>
    %139 = vector.extract_strided_slice %122 {offsets = [0, 384], sizes = [8, 128], strides = [1, 1]} : vector<8x512xf32> to vector<8x128xf32>
    %cst_68 = arith.constant 0.000000e+00 : f32
    %140 = vector.broadcast %cst_68 : f32 to vector<8x128xf32>
    %141 = arith.subf %140, %139 : vector<8x128xf32>
    %142 = math.exp %141 : vector<8x128xf32>
    %cst_69 = arith.constant 1.000000e+00 : f32
    %143 = vector.broadcast %cst_69 : f32 to vector<8x128xf32>
    %144 = arith.addf %143, %142 : vector<8x128xf32>
    %145 = tpu.reciprocal %144 {approx = true} : vector<8x128xf32> -> vector<8x128xf32>
    %146 = arith.mulf %136, %82 : vector<8x128xf32>
    %147 = arith.mulf %129, %138 : vector<8x128xf32>
    %148 = arith.addf %146, %147 : vector<8x128xf32>
    %149 = math.tanh %148 : vector<8x128xf32>
    %150 = arith.mulf %145, %149 : vector<8x128xf32>
    %c8_70 = arith.constant 8 : index
    %c0_71 = arith.constant 0 : index
    %151 = vector.load %arg23[%c8_70, %c0_71] : memref<64x128xf32, #tpu.memory_space<vmem>>, vector<8x128xf32>
    tpu.vector_store %arg23[%c8_70, %c0_71], %118 {strides = array<i32>} : memref<64x128xf32, #tpu.memory_space<vmem>>, vector<8x128xf32>,
    %c48_72 = arith.constant 48 : index
    %c0_73 = arith.constant 0 : index
    %152 = vector.load %arg24[%c48_72, %c0_73] : memref<64x128xf32, #tpu.memory_space<vmem>>, vector<8x128xf32>
    tpu.vector_store %arg24[%c48_72, %c0_73], %150 {strides = array<i32>} : memref<64x128xf32, #tpu.memory_space<vmem>>, vector<8x128xf32>,
    %c16 = arith.constant 16 : index
    %c0_74 = arith.constant 0 : index
    %153 = vector.load %arg21[%c16, %c0_74] : memref<64x512xf32, #tpu.memory_space<vmem>>, vector<8x512xf32>
    %c0_75 = arith.constant 0 : index
    %c0_76 = arith.constant 0 : index
    %154 = vector.load %arg4[%c0_75, %c0_76] : memref<128x512xf32, #tpu.memory_space<vmem>>, vector<128x512xf32>
    %cst_77 = arith.constant dense<0.000000e+00> : vector<8x512xf32>
    %155 = tpu.matmul %118, %154, %cst_77 {dimension_numbers = #tpu.dot_dimension_numbers<[1], [0], [0], [1], [0, 0, 1, 1], [], []>} : vector<8x128xf32>, vector<128x512xf32>, vector<8x512xf32> -> vector<8x512xf32>
    %156 = arith.addf %155, %153 : vector<8x512xf32>
    %157 = vector.extract_strided_slice %156 {offsets = [0, 0], sizes = [8, 128], strides = [1, 1]} : vector<8x512xf32> to vector<8x128xf32>
    %cst_78 = arith.constant 0.000000e+00 : f32
    %158 = vector.broadcast %cst_78 : f32 to vector<8x128xf32>
    %159 = arith.subf %158, %157 : vector<8x128xf32>
    %160 = math.exp %159 : vector<8x128xf32>
    %cst_79 = arith.constant 1.000000e+00 : f32
    %161 = vector.broadcast %cst_79 : f32 to vector<8x128xf32>
    %162 = arith.addf %161, %160 : vector<8x128xf32>
    %163 = tpu.reciprocal %162 {approx = true} : vector<8x128xf32> -> vector<8x128xf32>
    %164 = vector.extract_strided_slice %156 {offsets = [0, 128], sizes = [8, 128], strides = [1, 1]} : vector<8x512xf32> to vector<8x128xf32>
    %cst_80 = arith.constant 0.000000e+00 : f32
    %165 = vector.broadcast %cst_80 : f32 to vector<8x128xf32>
    %166 = arith.subf %165, %164 : vector<8x128xf32>
    %167 = math.exp %166 : vector<8x128xf32>
    %cst_81 = arith.constant 1.000000e+00 : f32
    %168 = vector.broadcast %cst_81 : f32 to vector<8x128xf32>
    %169 = arith.addf %168, %167 : vector<8x128xf32>
    %170 = tpu.reciprocal %169 {approx = true} : vector<8x128xf32> -> vector<8x128xf32>
    %171 = vector.extract_strided_slice %156 {offsets = [0, 256], sizes = [8, 128], strides = [1, 1]} : vector<8x512xf32> to vector<8x128xf32>
    %172 = math.tanh %171 : vector<8x128xf32>
    %173 = vector.extract_strided_slice %156 {offsets = [0, 384], sizes = [8, 128], strides = [1, 1]} : vector<8x512xf32> to vector<8x128xf32>
    %cst_82 = arith.constant 0.000000e+00 : f32
    %174 = vector.broadcast %cst_82 : f32 to vector<8x128xf32>
    %175 = arith.subf %174, %173 : vector<8x128xf32>
    %176 = math.exp %175 : vector<8x128xf32>
    %cst_83 = arith.constant 1.000000e+00 : f32
    %177 = vector.broadcast %cst_83 : f32 to vector<8x128xf32>
    %178 = arith.addf %177, %176 : vector<8x128xf32>
    %179 = tpu.reciprocal %178 {approx = true} : vector<8x128xf32> -> vector<8x128xf32>
    %180 = arith.mulf %170, %116 : vector<8x128xf32>
    %181 = arith.mulf %163, %172 : vector<8x128xf32>
    %182 = arith.addf %180, %181 : vector<8x128xf32>
    %183 = math.tanh %182 : vector<8x128xf32>
    %184 = arith.mulf %179, %183 : vector<8x128xf32>
    %c40 = arith.constant 40 : index
    %c0_84 = arith.constant 0 : index
    %185 = vector.load %arg22[%c40, %c0_84] : memref<64x512xf32, #tpu.memory_space<vmem>>, vector<8x512xf32>
    %c0_85 = arith.constant 0 : index
    %c0_86 = arith.constant 0 : index
    %186 = vector.load %arg7[%c0_85, %c0_86] : memref<128x512xf32, #tpu.memory_space<vmem>>, vector<128x512xf32>
    %cst_87 = arith.constant dense<0.000000e+00> : vector<8x512xf32>
    %187 = tpu.matmul %150, %186, %cst_87 {dimension_numbers = #tpu.dot_dimension_numbers<[1], [0], [0], [1], [0, 0, 1, 1], [], []>} : vector<8x128xf32>, vector<128x512xf32>, vector<8x512xf32> -> vector<8x512xf32>
    %188 = arith.addf %187, %185 : vector<8x512xf32>
    %189 = vector.extract_strided_slice %188 {offsets = [0, 0], sizes = [8, 128], strides = [1, 1]} : vector<8x512xf32> to vector<8x128xf32>
    %cst_88 = arith.constant 0.000000e+00 : f32
    %190 = vector.broadcast %cst_88 : f32 to vector<8x128xf32>
    %191 = arith.subf %190, %189 : vector<8x128xf32>
    %192 = math.exp %191 : vector<8x128xf32>
    %cst_89 = arith.constant 1.000000e+00 : f32
    %193 = vector.broadcast %cst_89 : f32 to vector<8x128xf32>
    %194 = arith.addf %193, %192 : vector<8x128xf32>
    %195 = tpu.reciprocal %194 {approx = true} : vector<8x128xf32> -> vector<8x128xf32>
    %196 = vector.extract_strided_slice %188 {offsets = [0, 128], sizes = [8, 128], strides = [1, 1]} : vector<8x512xf32> to vector<8x128xf32>
    %cst_90 = arith.constant 0.000000e+00 : f32
    %197 = vector.broadcast %cst_90 : f32 to vector<8x128xf32>
    %198 = arith.subf %197, %196 : vector<8x128xf32>
    %199 = math.exp %198 : vector<8x128xf32>
    %cst_91 = arith.constant 1.000000e+00 : f32
    %200 = vector.broadcast %cst_91 : f32 to vector<8x128xf32>
    %201 = arith.addf %200, %199 : vector<8x128xf32>
    %202 = tpu.reciprocal %201 {approx = true} : vector<8x128xf32> -> vector<8x128xf32>
    %203 = vector.extract_strided_slice %188 {offsets = [0, 256], sizes = [8, 128], strides = [1, 1]} : vector<8x512xf32> to vector<8x128xf32>
    %204 = math.tanh %203 : vector<8x128xf32>
    %205 = vector.extract_strided_slice %188 {offsets = [0, 384], sizes = [8, 128], strides = [1, 1]} : vector<8x512xf32> to vector<8x128xf32>
    %cst_92 = arith.constant 0.000000e+00 : f32
    %206 = vector.broadcast %cst_92 : f32 to vector<8x128xf32>
    %207 = arith.subf %206, %205 : vector<8x128xf32>
    %208 = math.exp %207 : vector<8x128xf32>
    %cst_93 = arith.constant 1.000000e+00 : f32
    %209 = vector.broadcast %cst_93 : f32 to vector<8x128xf32>
    %210 = arith.addf %209, %208 : vector<8x128xf32>
    %211 = tpu.reciprocal %210 {approx = true} : vector<8x128xf32> -> vector<8x128xf32>
    %212 = arith.mulf %202, %148 : vector<8x128xf32>
    %213 = arith.mulf %195, %204 : vector<8x128xf32>
    %214 = arith.addf %212, %213 : vector<8x128xf32>
    %215 = math.tanh %214 : vector<8x128xf32>
    %216 = arith.mulf %211, %215 : vector<8x128xf32>
    %c16_94 = arith.constant 16 : index
    %c0_95 = arith.constant 0 : index
    %217 = vector.load %arg23[%c16_94, %c0_95] : memref<64x128xf32, #tpu.memory_space<vmem>>, vector<8x128xf32>
    tpu.vector_store %arg23[%c16_94, %c0_95], %184 {strides = array<i32>} : memref<64x128xf32, #tpu.memory_space<vmem>>, vector<8x128xf32>,
    %c40_96 = arith.constant 40 : index
    %c0_97 = arith.constant 0 : index
    %218 = vector.load %arg24[%c40_96, %c0_97] : memref<64x128xf32, #tpu.memory_space<vmem>>, vector<8x128xf32>
    tpu.vector_store %arg24[%c40_96, %c0_97], %216 {strides = array<i32>} : memref<64x128xf32, #tpu.memory_space<vmem>>, vector<8x128xf32>,
    %c24 = arith.constant 24 : index
    %c0_98 = arith.constant 0 : index
    %219 = vector.load %arg21[%c24, %c0_98] : memref<64x512xf32, #tpu.memory_space<vmem>>, vector<8x512xf32>
    %c0_99 = arith.constant 0 : index
    %c0_100 = arith.constant 0 : index
    %220 = vector.load %arg4[%c0_99, %c0_100] : memref<128x512xf32, #tpu.memory_space<vmem>>, vector<128x512xf32>
    %cst_101 = arith.constant dense<0.000000e+00> : vector<8x512xf32>
    %221 = tpu.matmul %184, %220, %cst_101 {dimension_numbers = #tpu.dot_dimension_numbers<[1], [0], [0], [1], [0, 0, 1, 1], [], []>} : vector<8x128xf32>, vector<128x512xf32>, vector<8x512xf32> -> vector<8x512xf32>
    %222 = arith.addf %221, %219 : vector<8x512xf32>
    %223 = vector.extract_strided_slice %222 {offsets = [0, 0], sizes = [8, 128], strides = [1, 1]} : vector<8x512xf32> to vector<8x128xf32>
    %cst_102 = arith.constant 0.000000e+00 : f32
    %224 = vector.broadcast %cst_102 : f32 to vector<8x128xf32>
    %225 = arith.subf %224, %223 : vector<8x128xf32>
    %226 = math.exp %225 : vector<8x128xf32>
    %cst_103 = arith.constant 1.000000e+00 : f32
    %227 = vector.broadcast %cst_103 : f32 to vector<8x128xf32>
    %228 = arith.addf %227, %226 : vector<8x128xf32>
    %229 = tpu.reciprocal %228 {approx = true} : vector<8x128xf32> -> vector<8x128xf32>
    %230 = vector.extract_strided_slice %222 {offsets = [0, 128], sizes = [8, 128], strides = [1, 1]} : vector<8x512xf32> to vector<8x128xf32>
    %cst_104 = arith.constant 0.000000e+00 : f32
    %231 = vector.broadcast %cst_104 : f32 to vector<8x128xf32>
    %232 = arith.subf %231, %230 : vector<8x128xf32>
    %233 = math.exp %232 : vector<8x128xf32>
    %cst_105 = arith.constant 1.000000e+00 : f32
    %234 = vector.broadcast %cst_105 : f32 to vector<8x128xf32>
    %235 = arith.addf %234, %233 : vector<8x128xf32>
    %236 = tpu.reciprocal %235 {approx = true} : vector<8x128xf32> -> vector<8x128xf32>
    %237 = vector.extract_strided_slice %222 {offsets = [0, 256], sizes = [8, 128], strides = [1, 1]} : vector<8x512xf32> to vector<8x128xf32>
    %238 = math.tanh %237 : vector<8x128xf32>
    %239 = vector.extract_strided_slice %222 {offsets = [0, 384], sizes = [8, 128], strides = [1, 1]} : vector<8x512xf32> to vector<8x128xf32>
    %cst_106 = arith.constant 0.000000e+00 : f32
    %240 = vector.broadcast %cst_106 : f32 to vector<8x128xf32>
    %241 = arith.subf %240, %239 : vector<8x128xf32>
    %242 = math.exp %241 : vector<8x128xf32>
    %cst_107 = arith.constant 1.000000e+00 : f32
    %243 = vector.broadcast %cst_107 : f32 to vector<8x128xf32>
    %244 = arith.addf %243, %242 : vector<8x128xf32>
    %245 = tpu.reciprocal %244 {approx = true} : vector<8x128xf32> -> vector<8x128xf32>
    %246 = arith.mulf %236, %182 : vector<8x128xf32>
    %247 = arith.mulf %229, %238 : vector<8x128xf32>
    %248 = arith.addf %246, %247 : vector<8x128xf32>
    %249 = math.tanh %248 : vector<8x128xf32>
    %250 = arith.mulf %245, %249 : vector<8x128xf32>
    %c32 = arith.constant 32 : index
    %c0_108 = arith.constant 0 : index
    %251 = vector.load %arg22[%c32, %c0_108] : memref<64x512xf32, #tpu.memory_space<vmem>>, vector<8x512xf32>
    %c0_109 = arith.constant 0 : index
    %c0_110 = arith.constant 0 : index
    %252 = vector.load %arg7[%c0_109, %c0_110] : memref<128x512xf32, #tpu.memory_space<vmem>>, vector<128x512xf32>
    %cst_111 = arith.constant dense<0.000000e+00> : vector<8x512xf32>
    %253 = tpu.matmul %216, %252, %cst_111 {dimension_numbers = #tpu.dot_dimension_numbers<[1], [0], [0], [1], [0, 0, 1, 1], [], []>} : vector<8x128xf32>, vector<128x512xf32>, vector<8x512xf32> -> vector<8x512xf32>
    %254 = arith.addf %253, %251 : vector<8x512xf32>
    %255 = vector.extract_strided_slice %254 {offsets = [0, 0], sizes = [8, 128], strides = [1, 1]} : vector<8x512xf32> to vector<8x128xf32>
    %cst_112 = arith.constant 0.000000e+00 : f32
    %256 = vector.broadcast %cst_112 : f32 to vector<8x128xf32>
    %257 = arith.subf %256, %255 : vector<8x128xf32>
    %258 = math.exp %257 : vector<8x128xf32>
    %cst_113 = arith.constant 1.000000e+00 : f32
    %259 = vector.broadcast %cst_113 : f32 to vector<8x128xf32>
    %260 = arith.addf %259, %258 : vector<8x128xf32>
    %261 = tpu.reciprocal %260 {approx = true} : vector<8x128xf32> -> vector<8x128xf32>
    %262 = vector.extract_strided_slice %254 {offsets = [0, 128], sizes = [8, 128], strides = [1, 1]} : vector<8x512xf32> to vector<8x128xf32>
    %cst_114 = arith.constant 0.000000e+00 : f32
    %263 = vector.broadcast %cst_114 : f32 to vector<8x128xf32>
    %264 = arith.subf %263, %262 : vector<8x128xf32>
    %265 = math.exp %264 : vector<8x128xf32>
    %cst_115 = arith.constant 1.000000e+00 : f32
    %266 = vector.broadcast %cst_115 : f32 to vector<8x128xf32>
    %267 = arith.addf %266, %265 : vector<8x128xf32>
    %268 = tpu.reciprocal %267 {approx = true} : vector<8x128xf32> -> vector<8x128xf32>
    %269 = vector.extract_strided_slice %254 {offsets = [0, 256], sizes = [8, 128], strides = [1, 1]} : vector<8x512xf32> to vector<8x128xf32>
    %270 = math.tanh %269 : vector<8x128xf32>
    %271 = vector.extract_strided_slice %254 {offsets = [0, 384], sizes = [8, 128], strides = [1, 1]} : vector<8x512xf32> to vector<8x128xf32>
    %cst_116 = arith.constant 0.000000e+00 : f32
    %272 = vector.broadcast %cst_116 : f32 to vector<8x128xf32>
    %273 = arith.subf %272, %271 : vector<8x128xf32>
    %274 = math.exp %273 : vector<8x128xf32>
    %cst_117 = arith.constant 1.000000e+00 : f32
    %275 = vector.broadcast %cst_117 : f32 to vector<8x128xf32>
    %276 = arith.addf %275, %274 : vector<8x128xf32>
    %277 = tpu.reciprocal %276 {approx = true} : vector<8x128xf32> -> vector<8x128xf32>
    %278 = arith.mulf %268, %214 : vector<8x128xf32>
    %279 = arith.mulf %261, %270 : vector<8x128xf32>
    %280 = arith.addf %278, %279 : vector<8x128xf32>
    %281 = math.tanh %280 : vector<8x128xf32>
    %282 = arith.mulf %277, %281 : vector<8x128xf32>
    %c24_118 = arith.constant 24 : index
    %c0_119 = arith.constant 0 : index
    %283 = vector.load %arg23[%c24_118, %c0_119] : memref<64x128xf32, #tpu.memory_space<vmem>>, vector<8x128xf32>
    tpu.vector_store %arg23[%c24_118, %c0_119], %250 {strides = array<i32>} : memref<64x128xf32, #tpu.memory_space<vmem>>, vector<8x128xf32>,
    %c32_120 = arith.constant 32 : index
    %c0_121 = arith.constant 0 : index
    %284 = vector.load %arg24[%c32_120, %c0_121] : memref<64x128xf32, #tpu.memory_space<vmem>>, vector<8x128xf32>
    tpu.vector_store %arg24[%c32_120, %c0_121], %282 {strides = array<i32>} : memref<64x128xf32, #tpu.memory_space<vmem>>, vector<8x128xf32>,
    %c32_122 = arith.constant 32 : index
    %c0_123 = arith.constant 0 : index
    %285 = vector.load %arg21[%c32_122, %c0_123] : memref<64x512xf32, #tpu.memory_space<vmem>>, vector<8x512xf32>
    %c0_124 = arith.constant 0 : index
    %c0_125 = arith.constant 0 : index
    %286 = vector.load %arg4[%c0_124, %c0_125] : memref<128x512xf32, #tpu.memory_space<vmem>>, vector<128x512xf32>
    %cst_126 = arith.constant dense<0.000000e+00> : vector<8x512xf32>
    %287 = tpu.matmul %250, %286, %cst_126 {dimension_numbers = #tpu.dot_dimension_numbers<[1], [0], [0], [1], [0, 0, 1, 1], [], []>} : vector<8x128xf32>, vector<128x512xf32>, vector<8x512xf32> -> vector<8x512xf32>
    %288 = arith.addf %287, %285 : vector<8x512xf32>
    %289 = vector.extract_strided_slice %288 {offsets = [0, 0], sizes = [8, 128], strides = [1, 1]} : vector<8x512xf32> to vector<8x128xf32>
    %cst_127 = arith.constant 0.000000e+00 : f32
    %290 = vector.broadcast %cst_127 : f32 to vector<8x128xf32>
    %291 = arith.subf %290, %289 : vector<8x128xf32>
    %292 = math.exp %291 : vector<8x128xf32>
    %cst_128 = arith.constant 1.000000e+00 : f32
    %293 = vector.broadcast %cst_128 : f32 to vector<8x128xf32>
    %294 = arith.addf %293, %292 : vector<8x128xf32>
    %295 = tpu.reciprocal %294 {approx = true} : vector<8x128xf32> -> vector<8x128xf32>
    %296 = vector.extract_strided_slice %288 {offsets = [0, 128], sizes = [8, 128], strides = [1, 1]} : vector<8x512xf32> to vector<8x128xf32>
    %cst_129 = arith.constant 0.000000e+00 : f32
    %297 = vector.broadcast %cst_129 : f32 to vector<8x128xf32>
    %298 = arith.subf %297, %296 : vector<8x128xf32>
    %299 = math.exp %298 : vector<8x128xf32>
    %cst_130 = arith.constant 1.000000e+00 : f32
    %300 = vector.broadcast %cst_130 : f32 to vector<8x128xf32>
    %301 = arith.addf %300, %299 : vector<8x128xf32>
    %302 = tpu.reciprocal %301 {approx = true} : vector<8x128xf32> -> vector<8x128xf32>
    %303 = vector.extract_strided_slice %288 {offsets = [0, 256], sizes = [8, 128], strides = [1, 1]} : vector<8x512xf32> to vector<8x128xf32>
    %304 = math.tanh %303 : vector<8x128xf32>
    %305 = vector.extract_strided_slice %288 {offsets = [0, 384], sizes = [8, 128], strides = [1, 1]} : vector<8x512xf32> to vector<8x128xf32>
    %cst_131 = arith.constant 0.000000e+00 : f32
    %306 = vector.broadcast %cst_131 : f32 to vector<8x128xf32>
    %307 = arith.subf %306, %305 : vector<8x128xf32>
    %308 = math.exp %307 : vector<8x128xf32>
    %cst_132 = arith.constant 1.000000e+00 : f32
    %309 = vector.broadcast %cst_132 : f32 to vector<8x128xf32>
    %310 = arith.addf %309, %308 : vector<8x128xf32>
    %311 = tpu.reciprocal %310 {approx = true} : vector<8x128xf32> -> vector<8x128xf32>
    %312 = arith.mulf %302, %248 : vector<8x128xf32>
    %313 = arith.mulf %295, %304 : vector<8x128xf32>
    %314 = arith.addf %312, %313 : vector<8x128xf32>
    %315 = math.tanh %314 : vector<8x128xf32>
    %316 = arith.mulf %311, %315 : vector<8x128xf32>
    %c24_133 = arith.constant 24 : index
    %c0_134 = arith.constant 0 : index
    %317 = vector.load %arg22[%c24_133, %c0_134] : memref<64x512xf32, #tpu.memory_space<vmem>>, vector<8x512xf32>
    %c0_135 = arith.constant 0 : index
    %c0_136 = arith.constant 0 : index
    %318 = vector.load %arg7[%c0_135, %c0_136] : memref<128x512xf32, #tpu.memory_space<vmem>>, vector<128x512xf32>
    %cst_137 = arith.constant dense<0.000000e+00> : vector<8x512xf32>
    %319 = tpu.matmul %282, %318, %cst_137 {dimension_numbers = #tpu.dot_dimension_numbers<[1], [0], [0], [1], [0, 0, 1, 1], [], []>} : vector<8x128xf32>, vector<128x512xf32>, vector<8x512xf32> -> vector<8x512xf32>
    %320 = arith.addf %319, %317 : vector<8x512xf32>
    %321 = vector.extract_strided_slice %320 {offsets = [0, 0], sizes = [8, 128], strides = [1, 1]} : vector<8x512xf32> to vector<8x128xf32>
    %cst_138 = arith.constant 0.000000e+00 : f32
    %322 = vector.broadcast %cst_138 : f32 to vector<8x128xf32>
    %323 = arith.subf %322, %321 : vector<8x128xf32>
    %324 = math.exp %323 : vector<8x128xf32>
    %cst_139 = arith.constant 1.000000e+00 : f32
    %325 = vector.broadcast %cst_139 : f32 to vector<8x128xf32>
    %326 = arith.addf %325, %324 : vector<8x128xf32>
    %327 = tpu.reciprocal %326 {approx = true} : vector<8x128xf32> -> vector<8x128xf32>
    %328 = vector.extract_strided_slice %320 {offsets = [0, 128], sizes = [8, 128], strides = [1, 1]} : vector<8x512xf32> to vector<8x128xf32>
    %cst_140 = arith.constant 0.000000e+00 : f32
    %329 = vector.broadcast %cst_140 : f32 to vector<8x128xf32>
    %330 = arith.subf %329, %328 : vector<8x128xf32>
    %331 = math.exp %330 : vector<8x128xf32>
    %cst_141 = arith.constant 1.000000e+00 : f32
    %332 = vector.broadcast %cst_141 : f32 to vector<8x128xf32>
    %333 = arith.addf %332, %331 : vector<8x128xf32>
    %334 = tpu.reciprocal %333 {approx = true} : vector<8x128xf32> -> vector<8x128xf32>
    %335 = vector.extract_strided_slice %320 {offsets = [0, 256], sizes = [8, 128], strides = [1, 1]} : vector<8x512xf32> to vector<8x128xf32>
    %336 = math.tanh %335 : vector<8x128xf32>
    %337 = vector.extract_strided_slice %320 {offsets = [0, 384], sizes = [8, 128], strides = [1, 1]} : vector<8x512xf32> to vector<8x128xf32>
    %cst_142 = arith.constant 0.000000e+00 : f32
    %338 = vector.broadcast %cst_142 : f32 to vector<8x128xf32>
    %339 = arith.subf %338, %337 : vector<8x128xf32>
    %340 = math.exp %339 : vector<8x128xf32>
    %cst_143 = arith.constant 1.000000e+00 : f32
    %341 = vector.broadcast %cst_143 : f32 to vector<8x128xf32>
    %342 = arith.addf %341, %340 : vector<8x128xf32>
    %343 = tpu.reciprocal %342 {approx = true} : vector<8x128xf32> -> vector<8x128xf32>
    %344 = arith.mulf %334, %280 : vector<8x128xf32>
    %345 = arith.mulf %327, %336 : vector<8x128xf32>
    %346 = arith.addf %344, %345 : vector<8x128xf32>
    %347 = math.tanh %346 : vector<8x128xf32>
    %348 = arith.mulf %343, %347 : vector<8x128xf32>
    %c32_144 = arith.constant 32 : index
    %c0_145 = arith.constant 0 : index
    %349 = vector.load %arg23[%c32_144, %c0_145] : memref<64x128xf32, #tpu.memory_space<vmem>>, vector<8x128xf32>
    tpu.vector_store %arg23[%c32_144, %c0_145], %316 {strides = array<i32>} : memref<64x128xf32, #tpu.memory_space<vmem>>, vector<8x128xf32>,
    %c24_146 = arith.constant 24 : index
    %c0_147 = arith.constant 0 : index
    %350 = vector.load %arg24[%c24_146, %c0_147] : memref<64x128xf32, #tpu.memory_space<vmem>>, vector<8x128xf32>
    tpu.vector_store %arg24[%c24_146, %c0_147], %348 {strides = array<i32>} : memref<64x128xf32, #tpu.memory_space<vmem>>, vector<8x128xf32>,
    %c40_148 = arith.constant 40 : index
    %c0_149 = arith.constant 0 : index
    %351 = vector.load %arg21[%c40_148, %c0_149] : memref<64x512xf32, #tpu.memory_space<vmem>>, vector<8x512xf32>
    %c0_150 = arith.constant 0 : index
    %c0_151 = arith.constant 0 : index
    %352 = vector.load %arg4[%c0_150, %c0_151] : memref<128x512xf32, #tpu.memory_space<vmem>>, vector<128x512xf32>
    %cst_152 = arith.constant dense<0.000000e+00> : vector<8x512xf32>
    %353 = tpu.matmul %316, %352, %cst_152 {dimension_numbers = #tpu.dot_dimension_numbers<[1], [0], [0], [1], [0, 0, 1, 1], [], []>} : vector<8x128xf32>, vector<128x512xf32>, vector<8x512xf32> -> vector<8x512xf32>
    %354 = arith.addf %353, %351 : vector<8x512xf32>
    %355 = vector.extract_strided_slice %354 {offsets = [0, 0], sizes = [8, 128], strides = [1, 1]} : vector<8x512xf32> to vector<8x128xf32>
    %cst_153 = arith.constant 0.000000e+00 : f32
    %356 = vector.broadcast %cst_153 : f32 to vector<8x128xf32>
    %357 = arith.subf %356, %355 : vector<8x128xf32>
    %358 = math.exp %357 : vector<8x128xf32>
    %cst_154 = arith.constant 1.000000e+00 : f32
    %359 = vector.broadcast %cst_154 : f32 to vector<8x128xf32>
    %360 = arith.addf %359, %358 : vector<8x128xf32>
    %361 = tpu.reciprocal %360 {approx = true} : vector<8x128xf32> -> vector<8x128xf32>
    %362 = vector.extract_strided_slice %354 {offsets = [0, 128], sizes = [8, 128], strides = [1, 1]} : vector<8x512xf32> to vector<8x128xf32>
    %cst_155 = arith.constant 0.000000e+00 : f32
    %363 = vector.broadcast %cst_155 : f32 to vector<8x128xf32>
    %364 = arith.subf %363, %362 : vector<8x128xf32>
    %365 = math.exp %364 : vector<8x128xf32>
    %cst_156 = arith.constant 1.000000e+00 : f32
    %366 = vector.broadcast %cst_156 : f32 to vector<8x128xf32>
    %367 = arith.addf %366, %365 : vector<8x128xf32>
    %368 = tpu.reciprocal %367 {approx = true} : vector<8x128xf32> -> vector<8x128xf32>
    %369 = vector.extract_strided_slice %354 {offsets = [0, 256], sizes = [8, 128], strides = [1, 1]} : vector<8x512xf32> to vector<8x128xf32>
    %370 = math.tanh %369 : vector<8x128xf32>
    %371 = vector.extract_strided_slice %354 {offsets = [0, 384], sizes = [8, 128], strides = [1, 1]} : vector<8x512xf32> to vector<8x128xf32>
    %cst_157 = arith.constant 0.000000e+00 : f32
    %372 = vector.broadcast %cst_157 : f32 to vector<8x128xf32>
    %373 = arith.subf %372, %371 : vector<8x128xf32>
    %374 = math.exp %373 : vector<8x128xf32>
    %cst_158 = arith.constant 1.000000e+00 : f32
    %375 = vector.broadcast %cst_158 : f32 to vector<8x128xf32>
    %376 = arith.addf %375, %374 : vector<8x128xf32>
    %377 = tpu.reciprocal %376 {approx = true} : vector<8x128xf32> -> vector<8x128xf32>
    %378 = arith.mulf %368, %314 : vector<8x128xf32>
    %379 = arith.mulf %361, %370 : vector<8x128xf32>
    %380 = arith.addf %378, %379 : vector<8x128xf32>
    %381 = math.tanh %380 : vector<8x128xf32>
    %382 = arith.mulf %377, %381 : vector<8x128xf32>
    %c16_159 = arith.constant 16 : index
    %c0_160 = arith.constant 0 : index
    %383 = vector.load %arg22[%c16_159, %c0_160] : memref<64x512xf32, #tpu.memory_space<vmem>>, vector<8x512xf32>
    %c0_161 = arith.constant 0 : index
    %c0_162 = arith.constant 0 : index
    %384 = vector.load %arg7[%c0_161, %c0_162] : memref<128x512xf32, #tpu.memory_space<vmem>>, vector<128x512xf32>
    %cst_163 = arith.constant dense<0.000000e+00> : vector<8x512xf32>
    %385 = tpu.matmul %348, %384, %cst_163 {dimension_numbers = #tpu.dot_dimension_numbers<[1], [0], [0], [1], [0, 0, 1, 1], [], []>} : vector<8x128xf32>, vector<128x512xf32>, vector<8x512xf32> -> vector<8x512xf32>
    %386 = arith.addf %385, %383 : vector<8x512xf32>
    %387 = vector.extract_strided_slice %386 {offsets = [0, 0], sizes = [8, 128], strides = [1, 1]} : vector<8x512xf32> to vector<8x128xf32>
    %cst_164 = arith.constant 0.000000e+00 : f32
    %388 = vector.broadcast %cst_164 : f32 to vector<8x128xf32>
    %389 = arith.subf %388, %387 : vector<8x128xf32>
    %390 = math.exp %389 : vector<8x128xf32>
    %cst_165 = arith.constant 1.000000e+00 : f32
    %391 = vector.broadcast %cst_165 : f32 to vector<8x128xf32>
    %392 = arith.addf %391, %390 : vector<8x128xf32>
    %393 = tpu.reciprocal %392 {approx = true} : vector<8x128xf32> -> vector<8x128xf32>
    %394 = vector.extract_strided_slice %386 {offsets = [0, 128], sizes = [8, 128], strides = [1, 1]} : vector<8x512xf32> to vector<8x128xf32>
    %cst_166 = arith.constant 0.000000e+00 : f32
    %395 = vector.broadcast %cst_166 : f32 to vector<8x128xf32>
    %396 = arith.subf %395, %394 : vector<8x128xf32>
    %397 = math.exp %396 : vector<8x128xf32>
    %cst_167 = arith.constant 1.000000e+00 : f32
    %398 = vector.broadcast %cst_167 : f32 to vector<8x128xf32>
    %399 = arith.addf %398, %397 : vector<8x128xf32>
    %400 = tpu.reciprocal %399 {approx = true} : vector<8x128xf32> -> vector<8x128xf32>
    %401 = vector.extract_strided_slice %386 {offsets = [0, 256], sizes = [8, 128], strides = [1, 1]} : vector<8x512xf32> to vector<8x128xf32>
    %402 = math.tanh %401 : vector<8x128xf32>
    %403 = vector.extract_strided_slice %386 {offsets = [0, 384], sizes = [8, 128], strides = [1, 1]} : vector<8x512xf32> to vector<8x128xf32>
    %cst_168 = arith.constant 0.000000e+00 : f32
    %404 = vector.broadcast %cst_168 : f32 to vector<8x128xf32>
    %405 = arith.subf %404, %403 : vector<8x128xf32>
    %406 = math.exp %405 : vector<8x128xf32>
    %cst_169 = arith.constant 1.000000e+00 : f32
    %407 = vector.broadcast %cst_169 : f32 to vector<8x128xf32>
    %408 = arith.addf %407, %406 : vector<8x128xf32>
    %409 = tpu.reciprocal %408 {approx = true} : vector<8x128xf32> -> vector<8x128xf32>
    %410 = arith.mulf %400, %346 : vector<8x128xf32>
    %411 = arith.mulf %393, %402 : vector<8x128xf32>
    %412 = arith.addf %410, %411 : vector<8x128xf32>
    %413 = math.tanh %412 : vector<8x128xf32>
    %414 = arith.mulf %409, %413 : vector<8x128xf32>
    %c40_170 = arith.constant 40 : index
    %c0_171 = arith.constant 0 : index
    %415 = vector.load %arg23[%c40_170, %c0_171] : memref<64x128xf32, #tpu.memory_space<vmem>>, vector<8x128xf32>
    tpu.vector_store %arg23[%c40_170, %c0_171], %382 {strides = array<i32>} : memref<64x128xf32, #tpu.memory_space<vmem>>, vector<8x128xf32>,
    %c16_172 = arith.constant 16 : index
    %c0_173 = arith.constant 0 : index
    %416 = vector.load %arg24[%c16_172, %c0_173] : memref<64x128xf32, #tpu.memory_space<vmem>>, vector<8x128xf32>
    tpu.vector_store %arg24[%c16_172, %c0_173], %414 {strides = array<i32>} : memref<64x128xf32, #tpu.memory_space<vmem>>, vector<8x128xf32>,
    %c48_174 = arith.constant 48 : index
    %c0_175 = arith.constant 0 : index
    %417 = vector.load %arg21[%c48_174, %c0_175] : memref<64x512xf32, #tpu.memory_space<vmem>>, vector<8x512xf32>
    %c0_176 = arith.constant 0 : index
    %c0_177 = arith.constant 0 : index
    %418 = vector.load %arg4[%c0_176, %c0_177] : memref<128x512xf32, #tpu.memory_space<vmem>>, vector<128x512xf32>
    %cst_178 = arith.constant dense<0.000000e+00> : vector<8x512xf32>
    %419 = tpu.matmul %382, %418, %cst_178 {dimension_numbers = #tpu.dot_dimension_numbers<[1], [0], [0], [1], [0, 0, 1, 1], [], []>} : vector<8x128xf32>, vector<128x512xf32>, vector<8x512xf32> -> vector<8x512xf32>
    %420 = arith.addf %419, %417 : vector<8x512xf32>
    %421 = vector.extract_strided_slice %420 {offsets = [0, 0], sizes = [8, 128], strides = [1, 1]} : vector<8x512xf32> to vector<8x128xf32>
    %cst_179 = arith.constant 0.000000e+00 : f32
    %422 = vector.broadcast %cst_179 : f32 to vector<8x128xf32>
    %423 = arith.subf %422, %421 : vector<8x128xf32>
    %424 = math.exp %423 : vector<8x128xf32>
    %cst_180 = arith.constant 1.000000e+00 : f32
    %425 = vector.broadcast %cst_180 : f32 to vector<8x128xf32>
    %426 = arith.addf %425, %424 : vector<8x128xf32>
    %427 = tpu.reciprocal %426 {approx = true} : vector<8x128xf32> -> vector<8x128xf32>
    %428 = vector.extract_strided_slice %420 {offsets = [0, 128], sizes = [8, 128], strides = [1, 1]} : vector<8x512xf32> to vector<8x128xf32>
    %cst_181 = arith.constant 0.000000e+00 : f32
    %429 = vector.broadcast %cst_181 : f32 to vector<8x128xf32>
    %430 = arith.subf %429, %428 : vector<8x128xf32>
    %431 = math.exp %430 : vector<8x128xf32>
    %cst_182 = arith.constant 1.000000e+00 : f32
    %432 = vector.broadcast %cst_182 : f32 to vector<8x128xf32>
    %433 = arith.addf %432, %431 : vector<8x128xf32>
    %434 = tpu.reciprocal %433 {approx = true} : vector<8x128xf32> -> vector<8x128xf32>
    %435 = vector.extract_strided_slice %420 {offsets = [0, 256], sizes = [8, 128], strides = [1, 1]} : vector<8x512xf32> to vector<8x128xf32>
    %436 = math.tanh %435 : vector<8x128xf32>
    %437 = vector.extract_strided_slice %420 {offsets = [0, 384], sizes = [8, 128], strides = [1, 1]} : vector<8x512xf32> to vector<8x128xf32>
    %cst_183 = arith.constant 0.000000e+00 : f32
    %438 = vector.broadcast %cst_183 : f32 to vector<8x128xf32>
    %439 = arith.subf %438, %437 : vector<8x128xf32>
    %440 = math.exp %439 : vector<8x128xf32>
    %cst_184 = arith.constant 1.000000e+00 : f32
    %441 = vector.broadcast %cst_184 : f32 to vector<8x128xf32>
    %442 = arith.addf %441, %440 : vector<8x128xf32>
    %443 = tpu.reciprocal %442 {approx = true} : vector<8x128xf32> -> vector<8x128xf32>
    %444 = arith.mulf %434, %380 : vector<8x128xf32>
    %445 = arith.mulf %427, %436 : vector<8x128xf32>
    %446 = arith.addf %444, %445 : vector<8x128xf32>
    %447 = math.tanh %446 : vector<8x128xf32>
    %448 = arith.mulf %443, %447 : vector<8x128xf32>
    %c8_185 = arith.constant 8 : index
    %c0_186 = arith.constant 0 : index
    %449 = vector.load %arg22[%c8_185, %c0_186] : memref<64x512xf32, #tpu.memory_space<vmem>>, vector<8x512xf32>
    %c0_187 = arith.constant 0 : index
    %c0_188 = arith.constant 0 : index
    %450 = vector.load %arg7[%c0_187, %c0_188] : memref<128x512xf32, #tpu.memory_space<vmem>>, vector<128x512xf32>
    %cst_189 = arith.constant dense<0.000000e+00> : vector<8x512xf32>
    %451 = tpu.matmul %414, %450, %cst_189 {dimension_numbers = #tpu.dot_dimension_numbers<[1], [0], [0], [1], [0, 0, 1, 1], [], []>} : vector<8x128xf32>, vector<128x512xf32>, vector<8x512xf32> -> vector<8x512xf32>
    %452 = arith.addf %451, %449 : vector<8x512xf32>
    %453 = vector.extract_strided_slice %452 {offsets = [0, 0], sizes = [8, 128], strides = [1, 1]} : vector<8x512xf32> to vector<8x128xf32>
    %cst_190 = arith.constant 0.000000e+00 : f32
    %454 = vector.broadcast %cst_190 : f32 to vector<8x128xf32>
    %455 = arith.subf %454, %453 : vector<8x128xf32>
    %456 = math.exp %455 : vector<8x128xf32>
    %cst_191 = arith.constant 1.000000e+00 : f32
    %457 = vector.broadcast %cst_191 : f32 to vector<8x128xf32>
    %458 = arith.addf %457, %456 : vector<8x128xf32>
    %459 = tpu.reciprocal %458 {approx = true} : vector<8x128xf32> -> vector<8x128xf32>
    %460 = vector.extract_strided_slice %452 {offsets = [0, 128], sizes = [8, 128], strides = [1, 1]} : vector<8x512xf32> to vector<8x128xf32>
    %cst_192 = arith.constant 0.000000e+00 : f32
    %461 = vector.broadcast %cst_192 : f32 to vector<8x128xf32>
    %462 = arith.subf %461, %460 : vector<8x128xf32>
    %463 = math.exp %462 : vector<8x128xf32>
    %cst_193 = arith.constant 1.000000e+00 : f32
    %464 = vector.broadcast %cst_193 : f32 to vector<8x128xf32>
    %465 = arith.addf %464, %463 : vector<8x128xf32>
    %466 = tpu.reciprocal %465 {approx = true} : vector<8x128xf32> -> vector<8x128xf32>
    %467 = vector.extract_strided_slice %452 {offsets = [0, 256], sizes = [8, 128], strides = [1, 1]} : vector<8x512xf32> to vector<8x128xf32>
    %468 = math.tanh %467 : vector<8x128xf32>
    %469 = vector.extract_strided_slice %452 {offsets = [0, 384], sizes = [8, 128], strides = [1, 1]} : vector<8x512xf32> to vector<8x128xf32>
    %cst_194 = arith.constant 0.000000e+00 : f32
    %470 = vector.broadcast %cst_194 : f32 to vector<8x128xf32>
    %471 = arith.subf %470, %469 : vector<8x128xf32>
    %472 = math.exp %471 : vector<8x128xf32>
    %cst_195 = arith.constant 1.000000e+00 : f32
    %473 = vector.broadcast %cst_195 : f32 to vector<8x128xf32>
    %474 = arith.addf %473, %472 : vector<8x128xf32>
    %475 = tpu.reciprocal %474 {approx = true} : vector<8x128xf32> -> vector<8x128xf32>
    %476 = arith.mulf %466, %412 : vector<8x128xf32>
    %477 = arith.mulf %459, %468 : vector<8x128xf32>
    %478 = arith.addf %476, %477 : vector<8x128xf32>
    %479 = math.tanh %478 : vector<8x128xf32>
    %480 = arith.mulf %475, %479 : vector<8x128xf32>
    %c48_196 = arith.constant 48 : index
    %c0_197 = arith.constant 0 : index
    %481 = vector.load %arg23[%c48_196, %c0_197] : memref<64x128xf32, #tpu.memory_space<vmem>>, vector<8x128xf32>
    tpu.vector_store %arg23[%c48_196, %c0_197], %448 {strides = array<i32>} : memref<64x128xf32, #tpu.memory_space<vmem>>, vector<8x128xf32>,
    %c8_198 = arith.constant 8 : index
    %c0_199 = arith.constant 0 : index
    %482 = vector.load %arg24[%c8_198, %c0_199] : memref<64x128xf32, #tpu.memory_space<vmem>>, vector<8x128xf32>
    tpu.vector_store %arg24[%c8_198, %c0_199], %480 {strides = array<i32>} : memref<64x128xf32, #tpu.memory_space<vmem>>, vector<8x128xf32>,
    %c56_200 = arith.constant 56 : index
    %c0_201 = arith.constant 0 : index
    %483 = vector.load %arg21[%c56_200, %c0_201] : memref<64x512xf32, #tpu.memory_space<vmem>>, vector<8x512xf32>
    %c0_202 = arith.constant 0 : index
    %c0_203 = arith.constant 0 : index
    %484 = vector.load %arg4[%c0_202, %c0_203] : memref<128x512xf32, #tpu.memory_space<vmem>>, vector<128x512xf32>
    %cst_204 = arith.constant dense<0.000000e+00> : vector<8x512xf32>
    %485 = tpu.matmul %448, %484, %cst_204 {dimension_numbers = #tpu.dot_dimension_numbers<[1], [0], [0], [1], [0, 0, 1, 1], [], []>} : vector<8x128xf32>, vector<128x512xf32>, vector<8x512xf32> -> vector<8x512xf32>
    %486 = arith.addf %485, %483 : vector<8x512xf32>
    %487 = vector.extract_strided_slice %486 {offsets = [0, 0], sizes = [8, 128], strides = [1, 1]} : vector<8x512xf32> to vector<8x128xf32>
    %cst_205 = arith.constant 0.000000e+00 : f32
    %488 = vector.broadcast %cst_205 : f32 to vector<8x128xf32>
    %489 = arith.subf %488, %487 : vector<8x128xf32>
    %490 = math.exp %489 : vector<8x128xf32>
    %cst_206 = arith.constant 1.000000e+00 : f32
    %491 = vector.broadcast %cst_206 : f32 to vector<8x128xf32>
    %492 = arith.addf %491, %490 : vector<8x128xf32>
    %493 = tpu.reciprocal %492 {approx = true} : vector<8x128xf32> -> vector<8x128xf32>
    %494 = vector.extract_strided_slice %486 {offsets = [0, 128], sizes = [8, 128], strides = [1, 1]} : vector<8x512xf32> to vector<8x128xf32>
    %cst_207 = arith.constant 0.000000e+00 : f32
    %495 = vector.broadcast %cst_207 : f32 to vector<8x128xf32>
    %496 = arith.subf %495, %494 : vector<8x128xf32>
    %497 = math.exp %496 : vector<8x128xf32>
    %cst_208 = arith.constant 1.000000e+00 : f32
    %498 = vector.broadcast %cst_208 : f32 to vector<8x128xf32>
    %499 = arith.addf %498, %497 : vector<8x128xf32>
    %500 = tpu.reciprocal %499 {approx = true} : vector<8x128xf32> -> vector<8x128xf32>
    %501 = vector.extract_strided_slice %486 {offsets = [0, 256], sizes = [8, 128], strides = [1, 1]} : vector<8x512xf32> to vector<8x128xf32>
    %502 = math.tanh %501 : vector<8x128xf32>
    %503 = vector.extract_strided_slice %486 {offsets = [0, 384], sizes = [8, 128], strides = [1, 1]} : vector<8x512xf32> to vector<8x128xf32>
    %cst_209 = arith.constant 0.000000e+00 : f32
    %504 = vector.broadcast %cst_209 : f32 to vector<8x128xf32>
    %505 = arith.subf %504, %503 : vector<8x128xf32>
    %506 = math.exp %505 : vector<8x128xf32>
    %cst_210 = arith.constant 1.000000e+00 : f32
    %507 = vector.broadcast %cst_210 : f32 to vector<8x128xf32>
    %508 = arith.addf %507, %506 : vector<8x128xf32>
    %509 = tpu.reciprocal %508 {approx = true} : vector<8x128xf32> -> vector<8x128xf32>
    %510 = arith.mulf %500, %446 : vector<8x128xf32>
    %511 = arith.mulf %493, %502 : vector<8x128xf32>
    %512 = arith.addf %510, %511 : vector<8x128xf32>
    %513 = math.tanh %512 : vector<8x128xf32>
    %514 = arith.mulf %509, %513 : vector<8x128xf32>
    %c0_211 = arith.constant 0 : index
    %c0_212 = arith.constant 0 : index
    %515 = vector.load %arg22[%c0_211, %c0_212] : memref<64x512xf32, #tpu.memory_space<vmem>>, vector<8x512xf32>
    %c0_213 = arith.constant 0 : index
    %c0_214 = arith.constant 0 : index
    %516 = vector.load %arg7[%c0_213, %c0_214] : memref<128x512xf32, #tpu.memory_space<vmem>>, vector<128x512xf32>
    %cst_215 = arith.constant dense<0.000000e+00> : vector<8x512xf32>
    %517 = tpu.matmul %480, %516, %cst_215 {dimension_numbers = #tpu.dot_dimension_numbers<[1], [0], [0], [1], [0, 0, 1, 1], [], []>} : vector<8x128xf32>, vector<128x512xf32>, vector<8x512xf32> -> vector<8x512xf32>
    %518 = arith.addf %517, %515 : vector<8x512xf32>
    %519 = vector.extract_strided_slice %518 {offsets = [0, 0], sizes = [8, 128], strides = [1, 1]} : vector<8x512xf32> to vector<8x128xf32>
    %cst_216 = arith.constant 0.000000e+00 : f32
    %520 = vector.broadcast %cst_216 : f32 to vector<8x128xf32>
    %521 = arith.subf %520, %519 : vector<8x128xf32>
    %522 = math.exp %521 : vector<8x128xf32>
    %cst_217 = arith.constant 1.000000e+00 : f32
    %523 = vector.broadcast %cst_217 : f32 to vector<8x128xf32>
    %524 = arith.addf %523, %522 : vector<8x128xf32>
    %525 = tpu.reciprocal %524 {approx = true} : vector<8x128xf32> -> vector<8x128xf32>
    %526 = vector.extract_strided_slice %518 {offsets = [0, 128], sizes = [8, 128], strides = [1, 1]} : vector<8x512xf32> to vector<8x128xf32>
    %cst_218 = arith.constant 0.000000e+00 : f32
    %527 = vector.broadcast %cst_218 : f32 to vector<8x128xf32>
    %528 = arith.subf %527, %526 : vector<8x128xf32>
    %529 = math.exp %528 : vector<8x128xf32>
    %cst_219 = arith.constant 1.000000e+00 : f32
    %530 = vector.broadcast %cst_219 : f32 to vector<8x128xf32>
    %531 = arith.addf %530, %529 : vector<8x128xf32>
    %532 = tpu.reciprocal %531 {approx = true} : vector<8x128xf32> -> vector<8x128xf32>
    %533 = vector.extract_strided_slice %518 {offsets = [0, 256], sizes = [8, 128], strides = [1, 1]} : vector<8x512xf32> to vector<8x128xf32>
    %534 = math.tanh %533 : vector<8x128xf32>
    %535 = vector.extract_strided_slice %518 {offsets = [0, 384], sizes = [8, 128], strides = [1, 1]} : vector<8x512xf32> to vector<8x128xf32>
    %cst_220 = arith.constant 0.000000e+00 : f32
    %536 = vector.broadcast %cst_220 : f32 to vector<8x128xf32>
    %537 = arith.subf %536, %535 : vector<8x128xf32>
    %538 = math.exp %537 : vector<8x128xf32>
    %cst_221 = arith.constant 1.000000e+00 : f32
    %539 = vector.broadcast %cst_221 : f32 to vector<8x128xf32>
    %540 = arith.addf %539, %538 : vector<8x128xf32>
    %541 = tpu.reciprocal %540 {approx = true} : vector<8x128xf32> -> vector<8x128xf32>
    %542 = arith.mulf %532, %478 : vector<8x128xf32>
    %543 = arith.mulf %525, %534 : vector<8x128xf32>
    %544 = arith.addf %542, %543 : vector<8x128xf32>
    %545 = math.tanh %544 : vector<8x128xf32>
    %546 = arith.mulf %541, %545 : vector<8x128xf32>
    %c56_222 = arith.constant 56 : index
    %c0_223 = arith.constant 0 : index
    %547 = vector.load %arg23[%c56_222, %c0_223] : memref<64x128xf32, #tpu.memory_space<vmem>>, vector<8x128xf32>
    tpu.vector_store %arg23[%c56_222, %c0_223], %514 {strides = array<i32>} : memref<64x128xf32, #tpu.memory_space<vmem>>, vector<8x128xf32>,
    %c0_224 = arith.constant 0 : index
    %c0_225 = arith.constant 0 : index
    %548 = vector.load %arg24[%c0_224, %c0_225] : memref<64x128xf32, #tpu.memory_space<vmem>>, vector<8x128xf32>
    tpu.vector_store %arg24[%c0_224, %c0_225], %546 {strides = array<i32>} : memref<64x128xf32, #tpu.memory_space<vmem>>, vector<8x128xf32>,
    %c0_226 = arith.constant 0 : index
    %c0_227 = arith.constant 0 : index
    %549 = vector.load %arg23[%c0_226, %c0_227] : memref<64x128xf32, #tpu.memory_space<vmem>>, vector<64x128xf32>
    %c0_228 = arith.constant 0 : index
    %c0_229 = arith.constant 0 : index
    %550 = vector.load %arg24[%c0_228, %c0_229] : memref<64x128xf32, #tpu.memory_space<vmem>>, vector<64x128xf32>
    %c0_230 = arith.constant 0 : index
    %c0_231 = arith.constant 0 : index
    %551 = vector.load %arg13[%c0_230, %c0_231] : memref<128x512xf32, #tpu.memory_space<vmem>>, vector<128x512xf32>
    %cst_232 = arith.constant dense<0.000000e+00> : vector<64x512xf32>
    %552 = tpu.matmul %549, %551, %cst_232 {dimension_numbers = #tpu.dot_dimension_numbers<[1], [0], [0], [1], [0, 0, 1, 1], [], []>} : vector<64x128xf32>, vector<128x512xf32>, vector<64x512xf32> -> vector<64x512xf32>
    %c0_233 = arith.constant 0 : index
    %c0_234 = arith.constant 0 : index
    %553 = vector.load %arg14[%c0_233, %c0_234] : memref<128x512xf32, #tpu.memory_space<vmem>>, vector<128x512xf32>
    %cst_235 = arith.constant dense<0.000000e+00> : vector<64x512xf32>
    %554 = tpu.matmul %550, %553, %cst_235 {dimension_numbers = #tpu.dot_dimension_numbers<[1], [0], [0], [1], [0, 0, 1, 1], [], []>} : vector<64x128xf32>, vector<128x512xf32>, vector<64x512xf32> -> vector<64x512xf32>
    %555 = arith.addf %552, %554 : vector<64x512xf32>
    %c0_236 = arith.constant 0 : index
    %c0_237 = arith.constant 0 : index
    %556 = vector.load %arg16[%c0_236, %c0_237] : memref<1x512xf32, #tpu.memory_space<vmem>>, vector<1x512xf32>
    %557 = vector.broadcast %556 : vector<1x512xf32> to vector<64x512xf32>
    %558 = arith.addf %555, %557 : vector<64x512xf32>
    %c0_238 = arith.constant 0 : index
    %c0_239 = arith.constant 0 : index
    %559 = vector.load %arg25[%c0_238, %c0_239] : memref<64x512xf32, #tpu.memory_space<vmem>>, vector<64x512xf32>
    tpu.vector_store %arg25[%c0_238, %c0_239], %558 {strides = array<i32>} : memref<64x512xf32, #tpu.memory_space<vmem>>, vector<64x512xf32>,
    %c0_240 = arith.constant 0 : index
    %c0_241 = arith.constant 0 : index
    %560 = vector.load %arg23[%c0_240, %c0_241] : memref<64x128xf32, #tpu.memory_space<vmem>>, vector<8x128xf32>
    %c0_242 = arith.constant 0 : index
    %c0_243 = arith.constant 0 : index
    %561 = vector.load %arg9[%c0_242, %c0_243] : memref<128x512xf32, #tpu.memory_space<vmem>>, vector<128x512xf32>
    %cst_244 = arith.constant dense<0.000000e+00> : vector<8x512xf32>
    %562 = tpu.matmul %560, %561, %cst_244 {dimension_numbers = #tpu.dot_dimension_numbers<[1], [0], [0], [1], [0, 0, 1, 1], [], []>} : vector<8x128xf32>, vector<128x512xf32>, vector<8x512xf32> -> vector<8x512xf32>
    %c0_245 = arith.constant 0 : index
    %c0_246 = arith.constant 0 : index
    %563 = vector.load %arg24[%c0_245, %c0_246] : memref<64x128xf32, #tpu.memory_space<vmem>>, vector<8x128xf32>
    %c0_247 = arith.constant 0 : index
    %c0_248 = arith.constant 0 : index
    %564 = vector.load %arg10[%c0_247, %c0_248] : memref<128x512xf32, #tpu.memory_space<vmem>>, vector<128x512xf32>
    %cst_249 = arith.constant dense<0.000000e+00> : vector<8x512xf32>
    %565 = tpu.matmul %563, %564, %cst_249 {dimension_numbers = #tpu.dot_dimension_numbers<[1], [0], [0], [1], [0, 0, 1, 1], [], []>} : vector<8x128xf32>, vector<128x512xf32>, vector<8x512xf32> -> vector<8x512xf32>
    %566 = arith.addf %562, %565 : vector<8x512xf32>
    %c0_250 = arith.constant 0 : index
    %c0_251 = arith.constant 0 : index
    %567 = vector.load %arg12[%c0_250, %c0_251] : memref<1x512xf32, #tpu.memory_space<vmem>>, vector<1x512xf32>
    %568 = vector.broadcast %567 : vector<1x512xf32> to vector<8x512xf32>
    %569 = arith.addf %566, %568 : vector<8x512xf32>
    %c2 = arith.constant 2 : index
    %c0_252 = arith.constant 0 : index
    %c0_253 = arith.constant 0 : index
    %570 = vector.load %arg1[%c2, %c0_252, %c0_253] : memref<4x8x128xf32, #tpu.memory_space<vmem>>, vector<1x8x128xf32>
    %571 = vector.shape_cast %570 : vector<1x8x128xf32> to vector<8x128xf32>
    %c2_254 = arith.constant 2 : index
    %c0_255 = arith.constant 0 : index
    %c0_256 = arith.constant 0 : index
    %572 = vector.load %arg2[%c2_254, %c0_255, %c0_256] : memref<4x8x128xf32, #tpu.memory_space<vmem>>, vector<1x8x128xf32>
    %573 = vector.shape_cast %572 : vector<1x8x128xf32> to vector<8x128xf32>
    %c0_257 = arith.constant 0 : index
    %c0_258 = arith.constant 0 : index
    %574 = vector.load %arg11[%c0_257, %c0_258] : memref<128x512xf32, #tpu.memory_space<vmem>>, vector<128x512xf32>
    %cst_259 = arith.constant dense<0.000000e+00> : vector<8x512xf32>
    %575 = tpu.matmul %571, %574, %cst_259 {dimension_numbers = #tpu.dot_dimension_numbers<[1], [0], [0], [1], [0, 0, 1, 1], [], []>} : vector<8x128xf32>, vector<128x512xf32>, vector<8x512xf32> -> vector<8x512xf32>
    %576 = arith.addf %575, %569 : vector<8x512xf32>
    %577 = vector.extract_strided_slice %576 {offsets = [0, 0], sizes = [8, 128], strides = [1, 1]} : vector<8x512xf32> to vector<8x128xf32>
    %cst_260 = arith.constant 0.000000e+00 : f32
    %578 = vector.broadcast %cst_260 : f32 to vector<8x128xf32>
    %579 = arith.subf %578, %577 : vector<8x128xf32>
    %580 = math.exp %579 : vector<8x128xf32>
    %cst_261 = arith.constant 1.000000e+00 : f32
    %581 = vector.broadcast %cst_261 : f32 to vector<8x128xf32>
    %582 = arith.addf %581, %580 : vector<8x128xf32>
    %583 = tpu.reciprocal %582 {approx = true} : vector<8x128xf32> -> vector<8x128xf32>
    %584 = vector.extract_strided_slice %576 {offsets = [0, 128], sizes = [8, 128], strides = [1, 1]} : vector<8x512xf32> to vector<8x128xf32>
    %cst_262 = arith.constant 0.000000e+00 : f32
    %585 = vector.broadcast %cst_262 : f32 to vector<8x128xf32>
    %586 = arith.subf %585, %584 : vector<8x128xf32>
    %587 = math.exp %586 : vector<8x128xf32>
    %cst_263 = arith.constant 1.000000e+00 : f32
    %588 = vector.broadcast %cst_263 : f32 to vector<8x128xf32>
    %589 = arith.addf %588, %587 : vector<8x128xf32>
    %590 = tpu.reciprocal %589 {approx = true} : vector<8x128xf32> -> vector<8x128xf32>
    %591 = vector.extract_strided_slice %576 {offsets = [0, 256], sizes = [8, 128], strides = [1, 1]} : vector<8x512xf32> to vector<8x128xf32>
    %592 = math.tanh %591 : vector<8x128xf32>
    %593 = vector.extract_strided_slice %576 {offsets = [0, 384], sizes = [8, 128], strides = [1, 1]} : vector<8x512xf32> to vector<8x128xf32>
    %cst_264 = arith.constant 0.000000e+00 : f32
    %594 = vector.broadcast %cst_264 : f32 to vector<8x128xf32>
    %595 = arith.subf %594, %593 : vector<8x128xf32>
    %596 = math.exp %595 : vector<8x128xf32>
    %cst_265 = arith.constant 1.000000e+00 : f32
    %597 = vector.broadcast %cst_265 : f32 to vector<8x128xf32>
    %598 = arith.addf %597, %596 : vector<8x128xf32>
    %599 = tpu.reciprocal %598 {approx = true} : vector<8x128xf32> -> vector<8x128xf32>
    %600 = arith.mulf %590, %573 : vector<8x128xf32>
    %601 = arith.mulf %583, %592 : vector<8x128xf32>
    %602 = arith.addf %600, %601 : vector<8x128xf32>
    %603 = math.tanh %602 : vector<8x128xf32>
    %604 = arith.mulf %599, %603 : vector<8x128xf32>
    %c3 = arith.constant 3 : index
    %c0_266 = arith.constant 0 : index
    %c0_267 = arith.constant 0 : index
    %605 = vector.load %arg1[%c3, %c0_266, %c0_267] : memref<4x8x128xf32, #tpu.memory_space<vmem>>, vector<1x8x128xf32>
    %606 = vector.shape_cast %605 : vector<1x8x128xf32> to vector<8x128xf32>
    %c3_268 = arith.constant 3 : index
    %c0_269 = arith.constant 0 : index
    %c0_270 = arith.constant 0 : index
    %607 = vector.load %arg2[%c3_268, %c0_269, %c0_270] : memref<4x8x128xf32, #tpu.memory_space<vmem>>, vector<1x8x128xf32>
    %608 = vector.shape_cast %607 : vector<1x8x128xf32> to vector<8x128xf32>
    %c56_271 = arith.constant 56 : index
    %c0_272 = arith.constant 0 : index
    %609 = vector.load %arg25[%c56_271, %c0_272] : memref<64x512xf32, #tpu.memory_space<vmem>>, vector<8x512xf32>
    %c0_273 = arith.constant 0 : index
    %c0_274 = arith.constant 0 : index
    %610 = vector.load %arg15[%c0_273, %c0_274] : memref<128x512xf32, #tpu.memory_space<vmem>>, vector<128x512xf32>
    %cst_275 = arith.constant dense<0.000000e+00> : vector<8x512xf32>
    %611 = tpu.matmul %606, %610, %cst_275 {dimension_numbers = #tpu.dot_dimension_numbers<[1], [0], [0], [1], [0, 0, 1, 1], [], []>} : vector<8x128xf32>, vector<128x512xf32>, vector<8x512xf32> -> vector<8x512xf32>
    %612 = arith.addf %611, %609 : vector<8x512xf32>
    %613 = vector.extract_strided_slice %612 {offsets = [0, 0], sizes = [8, 128], strides = [1, 1]} : vector<8x512xf32> to vector<8x128xf32>
    %cst_276 = arith.constant 0.000000e+00 : f32
    %614 = vector.broadcast %cst_276 : f32 to vector<8x128xf32>
    %615 = arith.subf %614, %613 : vector<8x128xf32>
    %616 = math.exp %615 : vector<8x128xf32>
    %cst_277 = arith.constant 1.000000e+00 : f32
    %617 = vector.broadcast %cst_277 : f32 to vector<8x128xf32>
    %618 = arith.addf %617, %616 : vector<8x128xf32>
    %619 = tpu.reciprocal %618 {approx = true} : vector<8x128xf32> -> vector<8x128xf32>
    %620 = vector.extract_strided_slice %612 {offsets = [0, 128], sizes = [8, 128], strides = [1, 1]} : vector<8x512xf32> to vector<8x128xf32>
    %cst_278 = arith.constant 0.000000e+00 : f32
    %621 = vector.broadcast %cst_278 : f32 to vector<8x128xf32>
    %622 = arith.subf %621, %620 : vector<8x128xf32>
    %623 = math.exp %622 : vector<8x128xf32>
    %cst_279 = arith.constant 1.000000e+00 : f32
    %624 = vector.broadcast %cst_279 : f32 to vector<8x128xf32>
    %625 = arith.addf %624, %623 : vector<8x128xf32>
    %626 = tpu.reciprocal %625 {approx = true} : vector<8x128xf32> -> vector<8x128xf32>
    %627 = vector.extract_strided_slice %612 {offsets = [0, 256], sizes = [8, 128], strides = [1, 1]} : vector<8x512xf32> to vector<8x128xf32>
    %628 = math.tanh %627 : vector<8x128xf32>
    %629 = vector.extract_strided_slice %612 {offsets = [0, 384], sizes = [8, 128], strides = [1, 1]} : vector<8x512xf32> to vector<8x128xf32>
    %cst_280 = arith.constant 0.000000e+00 : f32
    %630 = vector.broadcast %cst_280 : f32 to vector<8x128xf32>
    %631 = arith.subf %630, %629 : vector<8x128xf32>
    %632 = math.exp %631 : vector<8x128xf32>
    %cst_281 = arith.constant 1.000000e+00 : f32
    %633 = vector.broadcast %cst_281 : f32 to vector<8x128xf32>
    %634 = arith.addf %633, %632 : vector<8x128xf32>
    %635 = tpu.reciprocal %634 {approx = true} : vector<8x128xf32> -> vector<8x128xf32>
    %636 = arith.mulf %626, %608 : vector<8x128xf32>
    %637 = arith.mulf %619, %628 : vector<8x128xf32>
    %638 = arith.addf %636, %637 : vector<8x128xf32>
    %639 = math.tanh %638 : vector<8x128xf32>
    %640 = arith.mulf %635, %639 : vector<8x128xf32>
    %c48_282 = arith.constant 48 : index
    %c0_283 = arith.constant 0 : index
    %641 = vector.load %arg25[%c48_282, %c0_283] : memref<64x512xf32, #tpu.memory_space<vmem>>, vector<8x512xf32>
    %c0_284 = arith.constant 0 : index
    %c0_285 = arith.constant 0 : index
    %642 = vector.load %arg15[%c0_284, %c0_285] : memref<128x512xf32, #tpu.memory_space<vmem>>, vector<128x512xf32>
    %cst_286 = arith.constant dense<0.000000e+00> : vector<8x512xf32>
    %643 = tpu.matmul %640, %642, %cst_286 {dimension_numbers = #tpu.dot_dimension_numbers<[1], [0], [0], [1], [0, 0, 1, 1], [], []>} : vector<8x128xf32>, vector<128x512xf32>, vector<8x512xf32> -> vector<8x512xf32>
    %644 = arith.addf %643, %641 : vector<8x512xf32>
    %645 = vector.extract_strided_slice %644 {offsets = [0, 0], sizes = [8, 128], strides = [1, 1]} : vector<8x512xf32> to vector<8x128xf32>
    %cst_287 = arith.constant 0.000000e+00 : f32
    %646 = vector.broadcast %cst_287 : f32 to vector<8x128xf32>
    %647 = arith.subf %646, %645 : vector<8x128xf32>
    %648 = math.exp %647 : vector<8x128xf32>
    %cst_288 = arith.constant 1.000000e+00 : f32
    %649 = vector.broadcast %cst_288 : f32 to vector<8x128xf32>
    %650 = arith.addf %649, %648 : vector<8x128xf32>
    %651 = tpu.reciprocal %650 {approx = true} : vector<8x128xf32> -> vector<8x128xf32>
    %652 = vector.extract_strided_slice %644 {offsets = [0, 128], sizes = [8, 128], strides = [1, 1]} : vector<8x512xf32> to vector<8x128xf32>
    %cst_289 = arith.constant 0.000000e+00 : f32
    %653 = vector.broadcast %cst_289 : f32 to vector<8x128xf32>
    %654 = arith.subf %653, %652 : vector<8x128xf32>
    %655 = math.exp %654 : vector<8x128xf32>
    %cst_290 = arith.constant 1.000000e+00 : f32
    %656 = vector.broadcast %cst_290 : f32 to vector<8x128xf32>
    %657 = arith.addf %656, %655 : vector<8x128xf32>
    %658 = tpu.reciprocal %657 {approx = true} : vector<8x128xf32> -> vector<8x128xf32>
    %659 = vector.extract_strided_slice %644 {offsets = [0, 256], sizes = [8, 128], strides = [1, 1]} : vector<8x512xf32> to vector<8x128xf32>
    %660 = math.tanh %659 : vector<8x128xf32>
    %661 = vector.extract_strided_slice %644 {offsets = [0, 384], sizes = [8, 128], strides = [1, 1]} : vector<8x512xf32> to vector<8x128xf32>
    %cst_291 = arith.constant 0.000000e+00 : f32
    %662 = vector.broadcast %cst_291 : f32 to vector<8x128xf32>
    %663 = arith.subf %662, %661 : vector<8x128xf32>
    %664 = math.exp %663 : vector<8x128xf32>
    %cst_292 = arith.constant 1.000000e+00 : f32
    %665 = vector.broadcast %cst_292 : f32 to vector<8x128xf32>
    %666 = arith.addf %665, %664 : vector<8x128xf32>
    %667 = tpu.reciprocal %666 {approx = true} : vector<8x128xf32> -> vector<8x128xf32>
    %668 = arith.mulf %658, %638 : vector<8x128xf32>
    %669 = arith.mulf %651, %660 : vector<8x128xf32>
    %670 = arith.addf %668, %669 : vector<8x128xf32>
    %671 = math.tanh %670 : vector<8x128xf32>
    %672 = arith.mulf %667, %671 : vector<8x128xf32>
    %c40_293 = arith.constant 40 : index
    %c0_294 = arith.constant 0 : index
    %673 = vector.load %arg25[%c40_293, %c0_294] : memref<64x512xf32, #tpu.memory_space<vmem>>, vector<8x512xf32>
    %c0_295 = arith.constant 0 : index
    %c0_296 = arith.constant 0 : index
    %674 = vector.load %arg15[%c0_295, %c0_296] : memref<128x512xf32, #tpu.memory_space<vmem>>, vector<128x512xf32>
    %cst_297 = arith.constant dense<0.000000e+00> : vector<8x512xf32>
    %675 = tpu.matmul %672, %674, %cst_297 {dimension_numbers = #tpu.dot_dimension_numbers<[1], [0], [0], [1], [0, 0, 1, 1], [], []>} : vector<8x128xf32>, vector<128x512xf32>, vector<8x512xf32> -> vector<8x512xf32>
    %676 = arith.addf %675, %673 : vector<8x512xf32>
    %677 = vector.extract_strided_slice %676 {offsets = [0, 0], sizes = [8, 128], strides = [1, 1]} : vector<8x512xf32> to vector<8x128xf32>
    %cst_298 = arith.constant 0.000000e+00 : f32
    %678 = vector.broadcast %cst_298 : f32 to vector<8x128xf32>
    %679 = arith.subf %678, %677 : vector<8x128xf32>
    %680 = math.exp %679 : vector<8x128xf32>
    %cst_299 = arith.constant 1.000000e+00 : f32
    %681 = vector.broadcast %cst_299 : f32 to vector<8x128xf32>
    %682 = arith.addf %681, %680 : vector<8x128xf32>
    %683 = tpu.reciprocal %682 {approx = true} : vector<8x128xf32> -> vector<8x128xf32>
    %684 = vector.extract_strided_slice %676 {offsets = [0, 128], sizes = [8, 128], strides = [1, 1]} : vector<8x512xf32> to vector<8x128xf32>
    %cst_300 = arith.constant 0.000000e+00 : f32
    %685 = vector.broadcast %cst_300 : f32 to vector<8x128xf32>
    %686 = arith.subf %685, %684 : vector<8x128xf32>
    %687 = math.exp %686 : vector<8x128xf32>
    %cst_301 = arith.constant 1.000000e+00 : f32
    %688 = vector.broadcast %cst_301 : f32 to vector<8x128xf32>
    %689 = arith.addf %688, %687 : vector<8x128xf32>
    %690 = tpu.reciprocal %689 {approx = true} : vector<8x128xf32> -> vector<8x128xf32>
    %691 = vector.extract_strided_slice %676 {offsets = [0, 256], sizes = [8, 128], strides = [1, 1]} : vector<8x512xf32> to vector<8x128xf32>
    %692 = math.tanh %691 : vector<8x128xf32>
    %693 = vector.extract_strided_slice %676 {offsets = [0, 384], sizes = [8, 128], strides = [1, 1]} : vector<8x512xf32> to vector<8x128xf32>
    %cst_302 = arith.constant 0.000000e+00 : f32
    %694 = vector.broadcast %cst_302 : f32 to vector<8x128xf32>
    %695 = arith.subf %694, %693 : vector<8x128xf32>
    %696 = math.exp %695 : vector<8x128xf32>
    %cst_303 = arith.constant 1.000000e+00 : f32
    %697 = vector.broadcast %cst_303 : f32 to vector<8x128xf32>
    %698 = arith.addf %697, %696 : vector<8x128xf32>
    %699 = tpu.reciprocal %698 {approx = true} : vector<8x128xf32> -> vector<8x128xf32>
    %700 = arith.mulf %690, %670 : vector<8x128xf32>
    %701 = arith.mulf %683, %692 : vector<8x128xf32>
    %702 = arith.addf %700, %701 : vector<8x128xf32>
    %703 = math.tanh %702 : vector<8x128xf32>
    %704 = arith.mulf %699, %703 : vector<8x128xf32>
    %c32_304 = arith.constant 32 : index
    %c0_305 = arith.constant 0 : index
    %705 = vector.load %arg25[%c32_304, %c0_305] : memref<64x512xf32, #tpu.memory_space<vmem>>, vector<8x512xf32>
    %c0_306 = arith.constant 0 : index
    %c0_307 = arith.constant 0 : index
    %706 = vector.load %arg15[%c0_306, %c0_307] : memref<128x512xf32, #tpu.memory_space<vmem>>, vector<128x512xf32>
    %cst_308 = arith.constant dense<0.000000e+00> : vector<8x512xf32>
    %707 = tpu.matmul %704, %706, %cst_308 {dimension_numbers = #tpu.dot_dimension_numbers<[1], [0], [0], [1], [0, 0, 1, 1], [], []>} : vector<8x128xf32>, vector<128x512xf32>, vector<8x512xf32> -> vector<8x512xf32>
    %708 = arith.addf %707, %705 : vector<8x512xf32>
    %709 = vector.extract_strided_slice %708 {offsets = [0, 0], sizes = [8, 128], strides = [1, 1]} : vector<8x512xf32> to vector<8x128xf32>
    %cst_309 = arith.constant 0.000000e+00 : f32
    %710 = vector.broadcast %cst_309 : f32 to vector<8x128xf32>
    %711 = arith.subf %710, %709 : vector<8x128xf32>
    %712 = math.exp %711 : vector<8x128xf32>
    %cst_310 = arith.constant 1.000000e+00 : f32
    %713 = vector.broadcast %cst_310 : f32 to vector<8x128xf32>
    %714 = arith.addf %713, %712 : vector<8x128xf32>
    %715 = tpu.reciprocal %714 {approx = true} : vector<8x128xf32> -> vector<8x128xf32>
    %716 = vector.extract_strided_slice %708 {offsets = [0, 128], sizes = [8, 128], strides = [1, 1]} : vector<8x512xf32> to vector<8x128xf32>
    %cst_311 = arith.constant 0.000000e+00 : f32
    %717 = vector.broadcast %cst_311 : f32 to vector<8x128xf32>
    %718 = arith.subf %717, %716 : vector<8x128xf32>
    %719 = math.exp %718 : vector<8x128xf32>
    %cst_312 = arith.constant 1.000000e+00 : f32
    %720 = vector.broadcast %cst_312 : f32 to vector<8x128xf32>
    %721 = arith.addf %720, %719 : vector<8x128xf32>
    %722 = tpu.reciprocal %721 {approx = true} : vector<8x128xf32> -> vector<8x128xf32>
    %723 = vector.extract_strided_slice %708 {offsets = [0, 256], sizes = [8, 128], strides = [1, 1]} : vector<8x512xf32> to vector<8x128xf32>
    %724 = math.tanh %723 : vector<8x128xf32>
    %725 = vector.extract_strided_slice %708 {offsets = [0, 384], sizes = [8, 128], strides = [1, 1]} : vector<8x512xf32> to vector<8x128xf32>
    %cst_313 = arith.constant 0.000000e+00 : f32
    %726 = vector.broadcast %cst_313 : f32 to vector<8x128xf32>
    %727 = arith.subf %726, %725 : vector<8x128xf32>
    %728 = math.exp %727 : vector<8x128xf32>
    %cst_314 = arith.constant 1.000000e+00 : f32
    %729 = vector.broadcast %cst_314 : f32 to vector<8x128xf32>
    %730 = arith.addf %729, %728 : vector<8x128xf32>
    %731 = tpu.reciprocal %730 {approx = true} : vector<8x128xf32> -> vector<8x128xf32>
    %732 = arith.mulf %722, %702 : vector<8x128xf32>
    %733 = arith.mulf %715, %724 : vector<8x128xf32>
    %734 = arith.addf %732, %733 : vector<8x128xf32>
    %735 = math.tanh %734 : vector<8x128xf32>
    %736 = arith.mulf %731, %735 : vector<8x128xf32>
    %c24_315 = arith.constant 24 : index
    %c0_316 = arith.constant 0 : index
    %737 = vector.load %arg25[%c24_315, %c0_316] : memref<64x512xf32, #tpu.memory_space<vmem>>, vector<8x512xf32>
    %c0_317 = arith.constant 0 : index
    %c0_318 = arith.constant 0 : index
    %738 = vector.load %arg15[%c0_317, %c0_318] : memref<128x512xf32, #tpu.memory_space<vmem>>, vector<128x512xf32>
    %cst_319 = arith.constant dense<0.000000e+00> : vector<8x512xf32>
    %739 = tpu.matmul %736, %738, %cst_319 {dimension_numbers = #tpu.dot_dimension_numbers<[1], [0], [0], [1], [0, 0, 1, 1], [], []>} : vector<8x128xf32>, vector<128x512xf32>, vector<8x512xf32> -> vector<8x512xf32>
    %740 = arith.addf %739, %737 : vector<8x512xf32>
    %741 = vector.extract_strided_slice %740 {offsets = [0, 0], sizes = [8, 128], strides = [1, 1]} : vector<8x512xf32> to vector<8x128xf32>
    %cst_320 = arith.constant 0.000000e+00 : f32
    %742 = vector.broadcast %cst_320 : f32 to vector<8x128xf32>
    %743 = arith.subf %742, %741 : vector<8x128xf32>
    %744 = math.exp %743 : vector<8x128xf32>
    %cst_321 = arith.constant 1.000000e+00 : f32
    %745 = vector.broadcast %cst_321 : f32 to vector<8x128xf32>
    %746 = arith.addf %745, %744 : vector<8x128xf32>
    %747 = tpu.reciprocal %746 {approx = true} : vector<8x128xf32> -> vector<8x128xf32>
    %748 = vector.extract_strided_slice %740 {offsets = [0, 128], sizes = [8, 128], strides = [1, 1]} : vector<8x512xf32> to vector<8x128xf32>
    %cst_322 = arith.constant 0.000000e+00 : f32
    %749 = vector.broadcast %cst_322 : f32 to vector<8x128xf32>
    %750 = arith.subf %749, %748 : vector<8x128xf32>
    %751 = math.exp %750 : vector<8x128xf32>
    %cst_323 = arith.constant 1.000000e+00 : f32
    %752 = vector.broadcast %cst_323 : f32 to vector<8x128xf32>
    %753 = arith.addf %752, %751 : vector<8x128xf32>
    %754 = tpu.reciprocal %753 {approx = true} : vector<8x128xf32> -> vector<8x128xf32>
    %755 = vector.extract_strided_slice %740 {offsets = [0, 256], sizes = [8, 128], strides = [1, 1]} : vector<8x512xf32> to vector<8x128xf32>
    %756 = math.tanh %755 : vector<8x128xf32>
    %757 = vector.extract_strided_slice %740 {offsets = [0, 384], sizes = [8, 128], strides = [1, 1]} : vector<8x512xf32> to vector<8x128xf32>
    %cst_324 = arith.constant 0.000000e+00 : f32
    %758 = vector.broadcast %cst_324 : f32 to vector<8x128xf32>
    %759 = arith.subf %758, %757 : vector<8x128xf32>
    %760 = math.exp %759 : vector<8x128xf32>
    %cst_325 = arith.constant 1.000000e+00 : f32
    %761 = vector.broadcast %cst_325 : f32 to vector<8x128xf32>
    %762 = arith.addf %761, %760 : vector<8x128xf32>
    %763 = tpu.reciprocal %762 {approx = true} : vector<8x128xf32> -> vector<8x128xf32>
    %764 = arith.mulf %754, %734 : vector<8x128xf32>
    %765 = arith.mulf %747, %756 : vector<8x128xf32>
    %766 = arith.addf %764, %765 : vector<8x128xf32>
    %767 = math.tanh %766 : vector<8x128xf32>
    %768 = arith.mulf %763, %767 : vector<8x128xf32>
    %c16_326 = arith.constant 16 : index
    %c0_327 = arith.constant 0 : index
    %769 = vector.load %arg25[%c16_326, %c0_327] : memref<64x512xf32, #tpu.memory_space<vmem>>, vector<8x512xf32>
    %c0_328 = arith.constant 0 : index
    %c0_329 = arith.constant 0 : index
    %770 = vector.load %arg15[%c0_328, %c0_329] : memref<128x512xf32, #tpu.memory_space<vmem>>, vector<128x512xf32>
    %cst_330 = arith.constant dense<0.000000e+00> : vector<8x512xf32>
    %771 = tpu.matmul %768, %770, %cst_330 {dimension_numbers = #tpu.dot_dimension_numbers<[1], [0], [0], [1], [0, 0, 1, 1], [], []>} : vector<8x128xf32>, vector<128x512xf32>, vector<8x512xf32> -> vector<8x512xf32>
    %772 = arith.addf %771, %769 : vector<8x512xf32>
    %773 = vector.extract_strided_slice %772 {offsets = [0, 0], sizes = [8, 128], strides = [1, 1]} : vector<8x512xf32> to vector<8x128xf32>
    %cst_331 = arith.constant 0.000000e+00 : f32
    %774 = vector.broadcast %cst_331 : f32 to vector<8x128xf32>
    %775 = arith.subf %774, %773 : vector<8x128xf32>
    %776 = math.exp %775 : vector<8x128xf32>
    %cst_332 = arith.constant 1.000000e+00 : f32
    %777 = vector.broadcast %cst_332 : f32 to vector<8x128xf32>
    %778 = arith.addf %777, %776 : vector<8x128xf32>
    %779 = tpu.reciprocal %778 {approx = true} : vector<8x128xf32> -> vector<8x128xf32>
    %780 = vector.extract_strided_slice %772 {offsets = [0, 128], sizes = [8, 128], strides = [1, 1]} : vector<8x512xf32> to vector<8x128xf32>
    %cst_333 = arith.constant 0.000000e+00 : f32
    %781 = vector.broadcast %cst_333 : f32 to vector<8x128xf32>
    %782 = arith.subf %781, %780 : vector<8x128xf32>
    %783 = math.exp %782 : vector<8x128xf32>
    %cst_334 = arith.constant 1.000000e+00 : f32
    %784 = vector.broadcast %cst_334 : f32 to vector<8x128xf32>
    %785 = arith.addf %784, %783 : vector<8x128xf32>
    %786 = tpu.reciprocal %785 {approx = true} : vector<8x128xf32> -> vector<8x128xf32>
    %787 = vector.extract_strided_slice %772 {offsets = [0, 256], sizes = [8, 128], strides = [1, 1]} : vector<8x512xf32> to vector<8x128xf32>
    %788 = math.tanh %787 : vector<8x128xf32>
    %789 = vector.extract_strided_slice %772 {offsets = [0, 384], sizes = [8, 128], strides = [1, 1]} : vector<8x512xf32> to vector<8x128xf32>
    %cst_335 = arith.constant 0.000000e+00 : f32
    %790 = vector.broadcast %cst_335 : f32 to vector<8x128xf32>
    %791 = arith.subf %790, %789 : vector<8x128xf32>
    %792 = math.exp %791 : vector<8x128xf32>
    %cst_336 = arith.constant 1.000000e+00 : f32
    %793 = vector.broadcast %cst_336 : f32 to vector<8x128xf32>
    %794 = arith.addf %793, %792 : vector<8x128xf32>
    %795 = tpu.reciprocal %794 {approx = true} : vector<8x128xf32> -> vector<8x128xf32>
    %796 = arith.mulf %786, %766 : vector<8x128xf32>
    %797 = arith.mulf %779, %788 : vector<8x128xf32>
    %798 = arith.addf %796, %797 : vector<8x128xf32>
    %799 = math.tanh %798 : vector<8x128xf32>
    %800 = arith.mulf %795, %799 : vector<8x128xf32>
    %c8_337 = arith.constant 8 : index
    %c0_338 = arith.constant 0 : index
    %801 = vector.load %arg25[%c8_337, %c0_338] : memref<64x512xf32, #tpu.memory_space<vmem>>, vector<8x512xf32>
    %c0_339 = arith.constant 0 : index
    %c0_340 = arith.constant 0 : index
    %802 = vector.load %arg15[%c0_339, %c0_340] : memref<128x512xf32, #tpu.memory_space<vmem>>, vector<128x512xf32>
    %cst_341 = arith.constant dense<0.000000e+00> : vector<8x512xf32>
    %803 = tpu.matmul %800, %802, %cst_341 {dimension_numbers = #tpu.dot_dimension_numbers<[1], [0], [0], [1], [0, 0, 1, 1], [], []>} : vector<8x128xf32>, vector<128x512xf32>, vector<8x512xf32> -> vector<8x512xf32>
    %804 = arith.addf %803, %801 : vector<8x512xf32>
    %805 = vector.extract_strided_slice %804 {offsets = [0, 0], sizes = [8, 128], strides = [1, 1]} : vector<8x512xf32> to vector<8x128xf32>
    %cst_342 = arith.constant 0.000000e+00 : f32
    %806 = vector.broadcast %cst_342 : f32 to vector<8x128xf32>
    %807 = arith.subf %806, %805 : vector<8x128xf32>
    %808 = math.exp %807 : vector<8x128xf32>
    %cst_343 = arith.constant 1.000000e+00 : f32
    %809 = vector.broadcast %cst_343 : f32 to vector<8x128xf32>
    %810 = arith.addf %809, %808 : vector<8x128xf32>
    %811 = tpu.reciprocal %810 {approx = true} : vector<8x128xf32> -> vector<8x128xf32>
    %812 = vector.extract_strided_slice %804 {offsets = [0, 128], sizes = [8, 128], strides = [1, 1]} : vector<8x512xf32> to vector<8x128xf32>
    %cst_344 = arith.constant 0.000000e+00 : f32
    %813 = vector.broadcast %cst_344 : f32 to vector<8x128xf32>
    %814 = arith.subf %813, %812 : vector<8x128xf32>
    %815 = math.exp %814 : vector<8x128xf32>
    %cst_345 = arith.constant 1.000000e+00 : f32
    %816 = vector.broadcast %cst_345 : f32 to vector<8x128xf32>
    %817 = arith.addf %816, %815 : vector<8x128xf32>
    %818 = tpu.reciprocal %817 {approx = true} : vector<8x128xf32> -> vector<8x128xf32>
    %819 = vector.extract_strided_slice %804 {offsets = [0, 256], sizes = [8, 128], strides = [1, 1]} : vector<8x512xf32> to vector<8x128xf32>
    %820 = math.tanh %819 : vector<8x128xf32>
    %821 = vector.extract_strided_slice %804 {offsets = [0, 384], sizes = [8, 128], strides = [1, 1]} : vector<8x512xf32> to vector<8x128xf32>
    %cst_346 = arith.constant 0.000000e+00 : f32
    %822 = vector.broadcast %cst_346 : f32 to vector<8x128xf32>
    %823 = arith.subf %822, %821 : vector<8x128xf32>
    %824 = math.exp %823 : vector<8x128xf32>
    %cst_347 = arith.constant 1.000000e+00 : f32
    %825 = vector.broadcast %cst_347 : f32 to vector<8x128xf32>
    %826 = arith.addf %825, %824 : vector<8x128xf32>
    %827 = tpu.reciprocal %826 {approx = true} : vector<8x128xf32> -> vector<8x128xf32>
    %828 = arith.mulf %818, %798 : vector<8x128xf32>
    %829 = arith.mulf %811, %820 : vector<8x128xf32>
    %830 = arith.addf %828, %829 : vector<8x128xf32>
    %831 = math.tanh %830 : vector<8x128xf32>
    %832 = arith.mulf %827, %831 : vector<8x128xf32>
    %c0_348 = arith.constant 0 : index
    %c0_349 = arith.constant 0 : index
    %833 = vector.load %arg25[%c0_348, %c0_349] : memref<64x512xf32, #tpu.memory_space<vmem>>, vector<8x512xf32>
    %c0_350 = arith.constant 0 : index
    %c0_351 = arith.constant 0 : index
    %834 = vector.load %arg15[%c0_350, %c0_351] : memref<128x512xf32, #tpu.memory_space<vmem>>, vector<128x512xf32>
    %cst_352 = arith.constant dense<0.000000e+00> : vector<8x512xf32>
    %835 = tpu.matmul %832, %834, %cst_352 {dimension_numbers = #tpu.dot_dimension_numbers<[1], [0], [0], [1], [0, 0, 1, 1], [], []>} : vector<8x128xf32>, vector<128x512xf32>, vector<8x512xf32> -> vector<8x512xf32>
    %836 = arith.addf %835, %833 : vector<8x512xf32>
    %837 = vector.extract_strided_slice %836 {offsets = [0, 0], sizes = [8, 128], strides = [1, 1]} : vector<8x512xf32> to vector<8x128xf32>
    %cst_353 = arith.constant 0.000000e+00 : f32
    %838 = vector.broadcast %cst_353 : f32 to vector<8x128xf32>
    %839 = arith.subf %838, %837 : vector<8x128xf32>
    %840 = math.exp %839 : vector<8x128xf32>
    %cst_354 = arith.constant 1.000000e+00 : f32
    %841 = vector.broadcast %cst_354 : f32 to vector<8x128xf32>
    %842 = arith.addf %841, %840 : vector<8x128xf32>
    %843 = tpu.reciprocal %842 {approx = true} : vector<8x128xf32> -> vector<8x128xf32>
    %844 = vector.extract_strided_slice %836 {offsets = [0, 128], sizes = [8, 128], strides = [1, 1]} : vector<8x512xf32> to vector<8x128xf32>
    %cst_355 = arith.constant 0.000000e+00 : f32
    %845 = vector.broadcast %cst_355 : f32 to vector<8x128xf32>
    %846 = arith.subf %845, %844 : vector<8x128xf32>
    %847 = math.exp %846 : vector<8x128xf32>
    %cst_356 = arith.constant 1.000000e+00 : f32
    %848 = vector.broadcast %cst_356 : f32 to vector<8x128xf32>
    %849 = arith.addf %848, %847 : vector<8x128xf32>
    %850 = tpu.reciprocal %849 {approx = true} : vector<8x128xf32> -> vector<8x128xf32>
    %851 = vector.extract_strided_slice %836 {offsets = [0, 256], sizes = [8, 128], strides = [1, 1]} : vector<8x512xf32> to vector<8x128xf32>
    %852 = math.tanh %851 : vector<8x128xf32>
    %853 = vector.extract_strided_slice %836 {offsets = [0, 384], sizes = [8, 128], strides = [1, 1]} : vector<8x512xf32> to vector<8x128xf32>
    %cst_357 = arith.constant 0.000000e+00 : f32
    %854 = vector.broadcast %cst_357 : f32 to vector<8x128xf32>
    %855 = arith.subf %854, %853 : vector<8x128xf32>
    %856 = math.exp %855 : vector<8x128xf32>
    %cst_358 = arith.constant 1.000000e+00 : f32
    %857 = vector.broadcast %cst_358 : f32 to vector<8x128xf32>
    %858 = arith.addf %857, %856 : vector<8x128xf32>
    %859 = tpu.reciprocal %858 {approx = true} : vector<8x128xf32> -> vector<8x128xf32>
    %860 = arith.mulf %850, %830 : vector<8x128xf32>
    %861 = arith.mulf %843, %852 : vector<8x128xf32>
    %862 = arith.addf %860, %861 : vector<8x128xf32>
    %863 = math.tanh %862 : vector<8x128xf32>
    %864 = arith.mulf %859, %863 : vector<8x128xf32>
    %c0_359 = arith.constant 0 : index
    %c0_360 = arith.constant 0 : index
    %865 = vector.load %arg17[%c0_359, %c0_360] : memref<1x128xf32, #tpu.memory_space<vmem>>, vector<1x128xf32>
    %866 = vector.broadcast %865 : vector<1x128xf32> to vector<8x128xf32>
    %867 = arith.mulf %604, %866 : vector<8x128xf32>
    %c0_361 = arith.constant 0 : index
    %c0_362 = arith.constant 0 : index
    %868 = vector.load %arg18[%c0_361, %c0_362] : memref<1x128xf32, #tpu.memory_space<vmem>>, vector<1x128xf32>
    %869 = vector.broadcast %868 : vector<1x128xf32> to vector<8x128xf32>
    %870 = arith.mulf %864, %869 : vector<8x128xf32>
    %871 = arith.addf %867, %870 : vector<8x128xf32>
    %cst_363 = arith.constant dense<0.000000e+00> : vector<8xf32>
    %872 = vector.multi_reduction <add>, %871, %cst_363 [1] : vector<8x128xf32> to vector<8xf32>
    %873 = vector.shape_cast %872 : vector<8xf32> to vector<8x1xf32>
    %c0_364 = arith.constant 0 : index
    %c0_365 = arith.constant 0 : index
    %874 = vector.load %arg19[%c0_364, %c0_365] : memref<1x1xf32, #tpu.memory_space<vmem>>, vector<1x1xf32>
    %875 = vector.broadcast %874 : vector<1x1xf32> to vector<8x1xf32>
    %876 = arith.addf %873, %875 : vector<8x1xf32>
    %c0_366 = arith.constant 0 : index
    %c0_367 = arith.constant 0 : index
    %877 = vector.load %arg20[%c0_366, %c0_367] : memref<8x1xf32, #tpu.memory_space<vmem>>, vector<8x1xf32>
    tpu.vector_store %arg20[%c0_366, %c0_367], %876 {strides = array<i32>} : memref<8x1xf32, #tpu.memory_space<vmem>>, vector<8x1xf32>,
    return
  }
}

</mosaic_0001>

<llo_original>
// kernel: tpu_custom_call.1
$region0: #{tpu_custom_call.1}
  #allocation0 [shape = 'u32[]', space=smem, size = 0x4, offset = 0x4, fixed_abs, tag = 'smem constant byte address 0x4 - core index']
  #allocation1 [shape = 'u32[144,128]{1,0:T(1,128)}', space=vmem, size = 0x12000, scoped, tag = 'internal scratch']
  #allocation2 [shape = 'f32[64,512]{1,0:T(8,128)}', space=vmem, size = 0x20000, scoped, tag = 'scratch operand']
  #allocation3 [shape = 'f32[64,512]{1,0:T(8,128)}', space=vmem, size = 0x20000, scoped, tag = 'scratch operand']
  #allocation4 [shape = 'f32[64,128]{1,0:T(8,128)}', space=vmem, size = 0x8000, scoped, tag = 'scratch operand']
  #allocation5 [shape = 'f32[64,128]{1,0:T(8,128)}', space=vmem, size = 0x8000, scoped, tag = 'scratch operand']
  #allocation6 [shape = 'f32[64,512]{1,0:T(8,128)}', space=vmem, size = 0x20000, scoped, tag = 'scratch operand']
  #allocation7 [shape = 'f32[1,1]{1,0:T(1,128)S(1)}', space=vmem, size = 0x200, scoped, tag = 'scoped memory for tpu_custom_call.1']
  %s0 = inlined_call_operand.hbm [shape: f32[64,512], index: 0, kind: input, shape index: {}]
  %s1 = inlined_call_operand.hbm [shape: f32[4,8,128], index: 1, kind: input, shape index: {}]
  %s2 = inlined_call_operand.hbm [shape: f32[4,8,128], index: 2, kind: input, shape index: {}]
  %s3 = inlined_call_operand.hbm [shape: f32[512,512], index: 3, kind: input, shape index: {}]
  %s4 = inlined_call_operand.hbm [shape: f32[128,512], index: 4, kind: input, shape index: {}]
  %s5 = inlined_call_operand.vmem [shape: f32[1,512], index: 5, kind: input, shape index: {}]
  %s6 = inlined_call_operand.hbm [shape: f32[512,512], index: 6, kind: input, shape index: {}]
  %s7 = inlined_call_operand.hbm [shape: f32[128,512], index: 7, kind: input, shape index: {}]
  %s8 = inlined_call_operand.vmem [shape: f32[1,512], index: 8, kind: input, shape index: {}]
  %s9 = inlined_call_operand.hbm [shape: f32[128,512], index: 9, kind: input, shape index: {}]
  %s10 = inlined_call_operand.hbm [shape: f32[128,512], index: 10, kind: input, shape index: {}]
  %s11 = inlined_call_operand.hbm [shape: f32[128,512], index: 11, kind: input, shape index: {}]
  %s12 = inlined_call_operand.vmem [shape: f32[1,512], index: 12, kind: input, shape index: {}]
  %s13 = inlined_call_operand.hbm [shape: f32[128,512], index: 13, kind: input, shape index: {}]
  %s14 = inlined_call_operand.hbm [shape: f32[128,512], index: 14, kind: input, shape index: {}]
  %s15 = inlined_call_operand.hbm [shape: f32[128,512], index: 15, kind: input, shape index: {}]
  %s16 = inlined_call_operand.vmem [shape: f32[1,512], index: 16, kind: input, shape index: {}]
  %s17 = inlined_call_operand.vmem [shape: f32[1,128], index: 17, kind: input, shape index: {}]
  %s18 = inlined_call_operand.vmem [shape: f32[1,128], index: 18, kind: input, shape index: {}]
  %s19 = inlined_call_operand.<no memory space> [shape: f32[1,1], index: 19, kind: input, shape index: {}]
  %s20 = inlined_call_operand.vmem [shape: f32[8,1], index: 20, kind: output, shape index: {}]
  %s21 = sld [smem:[#allocation0]]
  $region142: #{tpu_custom_call.1} parent=0
    _
  %s23 = ssub.s32 1, %s21
  %s24 = scalar_select 0, %s23, %s21
  %v25 = vstv %s19
  %26 = vst [vmem:[#allocation7] sm:$0x1] %v25
  $region1: #{tpu_custom_call.1} parent=0
    #allocation8 [shape = 'u8[131072]{0}', space=vmem, size = 0x20000, scoped, tag = 'input window, operand 0, single buffered']
    #allocation9 [shape = 's32[1]{0}', space=sflag, size = 0x4, scoped, tag = 'scoped memory for tpu_custom_call.1']
    #allocation10 [shape = 'u8[16384]{0}', space=vmem, size = 0x4000, scoped, tag = 'input window, operand 1, single buffered']
    #allocation11 [shape = 's32[1]{0}', space=sflag, size = 0x4, scoped, tag = 'scoped memory for tpu_custom_call.1']
    #allocation12 [shape = 'u8[16384]{0}', space=vmem, size = 0x4000, scoped, tag = 'input window, operand 2, single buffered']
    #allocation13 [shape = 'u8[1048576]{0}', space=vmem, size = 0x100000, scoped, tag = 'input window, operand 3, single buffered']
    #allocation14 [shape = 's32[1]{0}', space=sflag, size = 0x4, scoped, tag = 'scoped memory for tpu_custom_call.1']
    #allocation15 [shape = 'u8[262144]{0}', space=vmem, size = 0x40000, scoped, tag = 'input window, operand 4, single buffered']
    #allocation16 [shape = 'u8[1048576]{0}', space=vmem, size = 0x100000, scoped, tag = 'input window, operand 6, single buffered']
    #allocation17 [shape = 's32[1]{0}', space=sflag, size = 0x4, scoped, tag = 'scoped memory for tpu_custom_call.1']
    #allocation18 [shape = 'u8[262144]{0}', space=vmem, size = 0x40000, scoped, tag = 'input window, operand 7, single buffered']
    #allocation19 [shape = 'u8[262144]{0}', space=vmem, size = 0x40000, scoped, tag = 'input window, operand 9, single buffered']
    #allocation20 [shape = 's32[1]{0}', space=sflag, size = 0x4, scoped, tag = 'scoped memory for tpu_custom_call.1']
    #allocation21 [shape = 'u8[262144]{0}', space=vmem, size = 0x40000, scoped, tag = 'input window, operand 10, single buffered']
    #allocation22 [shape = 'u8[262144]{0}', space=vmem, size = 0x40000, scoped, tag = 'input window, operand 11, single buffered']
    #allocation23 [shape = 's32[1]{0}', space=sflag, size = 0x4, scoped, tag = 'scoped memory for tpu_custom_call.1']
    #allocation24 [shape = 'u8[262144]{0}', space=vmem, size = 0x40000, scoped, tag = 'input window, operand 13, single buffered']
    #allocation25 [shape = 'u8[262144]{0}', space=vmem, size = 0x40000, scoped, tag = 'input window, operand 14, single buffered']
    #allocation26 [shape = 's32[1]{0}', space=sflag, size = 0x4, scoped, tag = 'scoped memory for tpu_custom_call.1']
    #allocation27 [shape = 'u8[262144]{0}', space=vmem, size = 0x40000, scoped, tag = 'input window, operand 15, single buffered']
    %27 = vsyncpa [#allocation9], 0
    %28 = vsyncpa [#allocation11], 0
    %29 = vsyncpa [#allocation14], 0
    %30 = vsyncpa [#allocation17], 0
    %31 = vsyncpa [#allocation20], 0
    %32 = vsyncpa [#allocation23], 0
    %33 = vsyncpa [#allocation26], 0
    // Predicated region
    $region2: #{tpu_custom_call.1} parent=1 // pred_check
      _
    $region3: #{tpu_custom_call.1} parent=1 // pred_check_branch
      %35 = sbr.rel (0) target = $region5
    $region4: #{tpu_custom_call.1} parent=1 // pred_region
      %s37 = ssub.s32 4096, 4096
      %38 = vsyncadd [#allocation9], %s37
      %s39 = sshll.u32 [#allocation8], 4
      %s40 = int_to_ptr.vmem [resolvable:$true] %s39
      %45 = dma.hbm_to_vmem [thread:$0]  %s0, 4096, %s40, [#allocation9], 512, 512, 32
    $region5: #{tpu_custom_call.1} parent=1 // pred_fallthru
      _
    // Predicated region
    $region6: #{tpu_custom_call.1} parent=1 // pred_check
      _
    $region7: #{tpu_custom_call.1} parent=1 // pred_check_branch
      %47 = sbr.rel (0) target = $region9
    $region8: #{tpu_custom_call.1} parent=1 // pred_region
      %s49 = ssub.s32 512, 512
      %50 = vsyncadd [#allocation11], %s49
      %s51 = sshll.u32 [#allocation10], 4
      %s52 = int_to_ptr.vmem [resolvable:$true] %s51
      %57 = dma.hbm_to_vmem [thread:$0]  %s1, 512, %s52, [#allocation11], 128, 128, 8
    $region9: #{tpu_custom_call.1} parent=1 // pred_fallthru
      _
    // Predicated region
    $region10: #{tpu_custom_call.1} parent=1 // pred_check
      _
    $region11: #{tpu_custom_call.1} parent=1 // pred_check_branch
      %59 = sbr.rel (0) target = $region13
    $region12: #{tpu_custom_call.1} parent=1 // pred_region
      %s61 = ssub.s32 512, 512
      %62 = vsyncadd [#allocation11], %s61
      %s63 = sshll.u32 [#allocation12], 4
      %s64 = int_to_ptr.vmem [resolvable:$true] %s63
      %69 = dma.hbm_to_vmem [thread:$0]  %s2, 512, %s64, [#allocation11], 128, 128, 8
    $region13: #{tpu_custom_call.1} parent=1 // pred_fallthru
      _
    // Predicated region
    $region14: #{tpu_custom_call.1} parent=1 // pred_check
      _
    $region15: #{tpu_custom_call.1} parent=1 // pred_check_branch
      %71 = sbr.rel (0) target = $region17
    $region16: #{tpu_custom_call.1} parent=1 // pred_region
      %s73 = ssub.s32 32768, 32768
      %74 = vsyncadd [#allocation14], %s73
      %s75 = sshll.u32 [#allocation13], 4
      %s76 = int_to_ptr.vmem [resolvable:$true] %s75
      %81 = dma.hbm_to_vmem [thread:$0]  %s3, 32768, %s76, [#allocation14], 512, 512, 32
    $region17: #{tpu_custom_call.1} parent=1 // pred_fallthru
      _
    // Predicated region
    $region18: #{tpu_custom_call.1} parent=1 // pred_check
      _
    $region19: #{tpu_custom_call.1} parent=1 // pred_check_branch
      %83 = sbr.rel (0) target = $region21
    $region20: #{tpu_custom_call.1} parent=1 // pred_region
      %s85 = ssub.s32 8192, 8192
      %86 = vsyncadd [#allocation14], %s85
      %s87 = sshll.u32 [#allocation15], 4
      %s88 = int_to_ptr.vmem [resolvable:$true] %s87
      %93 = dma.hbm_to_vmem [thread:$0]  %s4, 8192, %s88, [#allocation14], 512, 512, 32
    $region21: #{tpu_custom_call.1} parent=1 // pred_fallthru
      _
    // Predicated region
    $region22: #{tpu_custom_call.1} parent=1 // pred_check
      _
    $region23: #{tpu_custom_call.1} parent=1 // pred_check_branch
      %95 = sbr.rel (0) target = $region25
    $region24: #{tpu_custom_call.1} parent=1 // pred_region
      _
    $region25: #{tpu_custom_call.1} parent=1 // pred_fallthru
      _
    // Predicated region
    $region26: #{tpu_custom_call.1} parent=1 // pred_check
      _
    $region27: #{tpu_custom_call.1} parent=1 // pred_check_branch
      %97 = sbr.rel (0) target = $region29
    $region28: #{tpu_custom_call.1} parent=1 // pred_region
      %s99 = ssub.s32 32768, 32768
      %100 = vsyncadd [#allocation17], %s99
      %s101 = sshll.u32 [#allocation16], 4
      %s102 = int_to_ptr.vmem [resolvable:$true] %s101
      %107 = dma.hbm_to_vmem [thread:$0]  %s6, 32768, %s102, [#allocation17], 512, 512, 32
    $region29: #{tpu_custom_call.1} parent=1 // pred_fallthru
      _
    // Predicated region
    $region30: #{tpu_custom_call.1} parent=1 // pred_check
      _
    $region31: #{tpu_custom_call.1} parent=1 // pred_check_branch
      %109 = sbr.rel (0) target = $region33
    $region32: #{tpu_custom_call.1} parent=1 // pred_region
      %s111 = ssub.s32 8192, 8192
      %112 = vsyncadd [#allocation17], %s111
      %s113 = sshll.u32 [#allocation18], 4
      %s114 = int_to_ptr.vmem [resolvable:$true] %s113
      %119 = dma.hbm_to_vmem [thread:$0]  %s7, 8192, %s114, [#allocation17], 512, 512, 32
    $region33: #{tpu_custom_call.1} parent=1 // pred_fallthru
      _
    // Predicated region
    $region34: #{tpu_custom_call.1} parent=1 // pred_check
      _
    $region35: #{tpu_custom_call.1} parent=1 // pred_check_branch
      %121 = sbr.rel (0) target = $region37
    $region36: #{tpu_custom_call.1} parent=1 // pred_region
      _
    $region37: #{tpu_custom_call.1} parent=1 // pred_fallthru
      _
    // Predicated region
    $region38: #{tpu_custom_call.1} parent=1 // pred_check
      _
    $region39: #{tpu_custom_call.1} parent=1 // pred_check_branch
      %123 = sbr.rel (0) target = $region41
    $region40: #{tpu_custom_call.1} parent=1 // pred_region
      %s125 = ssub.s32 8192, 8192
      %126 = vsyncadd [#allocation20], %s125
      %s127 = sshll.u32 [#allocation19], 4
      %s128 = int_to_ptr.vmem [resolvable:$true] %s127
      %133 = dma.hbm_to_vmem [thread:$0]  %s9, 8192, %s128, [#allocation20], 512, 512, 32
    $region41: #{tpu_custom_call.1} parent=1 // pred_fallthru
      _
    // Predicated region
    $region42: #{tpu_custom_call.1} parent=1 // pred_check
      _
    $region43: #{tpu_custom_call.1} parent=1 // pred_check_branch
      %135 = sbr.rel (0) target = $region45
    $region44: #{tpu_custom_call.1} parent=1 // pred_region
      %s137 = ssub.s32 8192, 8192
      %138 = vsyncadd [#allocation20], %s137
      %s139 = sshll.u32 [#allocation21], 4
      %s140 = int_to_ptr.vmem [resolvable:$true] %s139
      %145 = dma.hbm_to_vmem [thread:$0]  %s10, 8192, %s140, [#allocation20], 512, 512, 32
    $region45: #{tpu_custom_call.1} parent=1 // pred_fallthru
      _
    // Predicated region
    $region46: #{tpu_custom_call.1} parent=1 // pred_check
      _
    $region47: #{tpu_custom_call.1} parent=1 // pred_check_branch
      %147 = sbr.rel (0) target = $region49
    $region48: #{tpu_custom_call.1} parent=1 // pred_region
      %s149 = ssub.s32 8192, 8192
      %150 = vsyncadd [#allocation23], %s149
      %s151 = sshll.u32 [#allocation22], 4
      %s152 = int_to_ptr.vmem [resolvable:$true] %s151
      %157 = dma.hbm_to_vmem [thread:$0]  %s11, 8192, %s152, [#allocation23], 512, 512, 32
    $region49: #{tpu_custom_call.1} parent=1 // pred_fallthru
      _
    // Predicated region
    $region50: #{tpu_custom_call.1} parent=1 // pred_check
      _
    $region51: #{tpu_custom_call.1} parent=1 // pred_check_branch
      %159 = sbr.rel (0) target = $region53
    $region52: #{tpu_custom_call.1} parent=1 // pred_region
      _
    $region53: #{tpu_custom_call.1} parent=1 // pred_fallthru
      _
    // Predicated region
    $region54: #{tpu_custom_call.1} parent=1 // pred_check
      _
    $region55: #{tpu_custom_call.1} parent=1 // pred_check_branch
      %161 = sbr.rel (0) target = $region57
    $region56: #{tpu_custom_call.1} parent=1 // pred_region
      %s163 = ssub.s32 8192, 8192
      %164 = vsyncadd [#allocation23], %s163
      %s165 = sshll.u32 [#allocation24], 4
      %s166 = int_to_ptr.vmem [resolvable:$true] %s165
      %171 = dma.hbm_to_vmem [thread:$0]  %s13, 8192, %s166, [#allocation23], 512, 512, 32
    $region57: #{tpu_custom_call.1} parent=1 // pred_fallthru
      _
    // Predicated region
    $region58: #{tpu_custom_call.1} parent=1 // pred_check
      _
    $region59: #{tpu_custom_call.1} parent=1 // pred_check_branch
      %173 = sbr.rel (0) target = $region61
    $region60: #{tpu_custom_call.1} parent=1 // pred_region
      %s175 = ssub.s32 8192, 8192
      %176 = vsyncadd [#allocation26], %s175
      %s177 = sshll.u32 [#allocation25], 4
      %s178 = int_to_ptr.vmem [resolvable:$true] %s177
      %183 = dma.hbm_to_vmem [thread:$0]  %s14, 8192, %s178, [#allocation26], 512, 512, 32
    $region61: #{tpu_custom_call.1} parent=1 // pred_fallthru
      _
    // Predicated region
    $region62: #{tpu_custom_call.1} parent=1 // pred_check
      _
    $region63: #{tpu_custom_call.1} parent=1 // pred_check_branch
      %185 = sbr.rel (0) target = $region65
    $region64: #{tpu_custom_call.1} parent=1 // pred_region
      %s187 = ssub.s32 8192, 8192
      %188 = vsyncadd [#allocation26], %s187
      %s189 = sshll.u32 [#allocation27], 4
      %s190 = int_to_ptr.vmem [resolvable:$true] %s189
      %195 = dma.hbm_to_vmem [thread:$0]  %s15, 8192, %s190, [#allocation26], 512, 512, 32
    $region65: #{tpu_custom_call.1} parent=1 // pred_fallthru
      _
    // Predicated region
    $region66: #{tpu_custom_call.1} parent=1 // pred_check
      _
    $region67: #{tpu_custom_call.1} parent=1 // pred_check_branch
      %197 = sbr.rel (0) target = $region69
    $region68: #{tpu_custom_call.1} parent=1 // pred_region
      _
    $region69: #{tpu_custom_call.1} parent=1 // pred_fallthru
      _
    // Predicated region
    $region70: #{tpu_custom_call.1} parent=1 // pred_check
      _
    $region71: #{tpu_custom_call.1} parent=1 // pred_check_branch
      %199 = sbr.rel (0) target = $region73
    $region72: #{tpu_custom_call.1} parent=1 // pred_region
      _
    $region73: #{tpu_custom_call.1} parent=1 // pred_fallthru
      _
    // Predicated region
    $region74: #{tpu_custom_call.1} parent=1 // pred_check
      _
    $region75: #{tpu_custom_call.1} parent=1 // pred_check_branch
      %201 = sbr.rel (0) target = $region77
    $region76: #{tpu_custom_call.1} parent=1 // pred_region
      _
    $region77: #{tpu_custom_call.1} parent=1 // pred_fallthru
      _
    // Predicated region
    $region78: #{tpu_custom_call.1} parent=1 // pred_check
      _
    $region79: #{tpu_custom_call.1} parent=1 // pred_check_branch
      %203 = sbr.rel (0) target = $region81
    $region80: #{tpu_custom_call.1} parent=1 // pred_region
      _
    $region81: #{tpu_custom_call.1} parent=1 // pred_fallthru
      _
    // Predicated region
    $region82: #{tpu_custom_call.1} parent=1 // pred_check
      _
    $region83: #{tpu_custom_call.1} parent=1 // pred_check_branch
      %205 = sbr.rel (0) target = $region85
    $region84: #{tpu_custom_call.1} parent=1 // pred_region
      %206 = dma.done [#allocation9], 4096
    $region85: #{tpu_custom_call.1} parent=1 // pred_fallthru
      _
    // Predicated region
    $region86: #{tpu_custom_call.1} parent=1 // pred_check
      _
    $region87: #{tpu_custom_call.1} parent=1 // pred_check_branch
      %208 = sbr.rel (0) target = $region89
    $region88: #{tpu_custom_call.1} parent=1 // pred_region
      %209 = dma.done [#allocation11], 512
    $region89: #{tpu_custom_call.1} parent=1 // pred_fallthru
      _
    // Predicated region
    $region90: #{tpu_custom_call.1} parent=1 // pred_check
      _
    $region91: #{tpu_custom_call.1} parent=1 // pred_check_branch
      %211 = sbr.rel (0) target = $region93
    $region92: #{tpu_custom_call.1} parent=1 // pred_region
      %212 = dma.done [#allocation11], 512
    $region93: #{tpu_custom_call.1} parent=1 // pred_fallthru
      _
    // Predicated region
    $region94: #{tpu_custom_call.1} parent=1 // pred_check
      _
    $region95: #{tpu_custom_call.1} parent=1 // pred_check_branch
      %214 = sbr.rel (0) target = $region97
    $region96: #{tpu_custom_call.1} parent=1 // pred_region
      %215 = dma.done [#allocation14], 32768
    $region97: #{tpu_custom_call.1} parent=1 // pred_fallthru
      _
    // Predicated region
    $region98: #{tpu_custom_call.1} parent=1 // pred_check
      _
    $region99: #{tpu_custom_call.1} parent=1 // pred_check_branch
      %217 = sbr.rel (0) target = $region101
    $region100: #{tpu_custom_call.1} parent=1 // pred_region
      %218 = dma.done [#allocation14], 8192
    $region101: #{tpu_custom_call.1} parent=1 // pred_fallthru
      _
    // Predicated region
    $region102: #{tpu_custom_call.1} parent=1 // pred_check
      _
    $region103: #{tpu_custom_call.1} parent=1 // pred_check_branch
      %220 = sbr.rel (0) target = $region105
    $region104: #{tpu_custom_call.1} parent=1 // pred_region
      %221 = dma.done [#allocation17], 32768
    $region105: #{tpu_custom_call.1} parent=1 // pred_fallthru
      _
    // Predicated region
    $region106: #{tpu_custom_call.1} parent=1 // pred_check
      _
    $region107: #{tpu_custom_call.1} parent=1 // pred_check_branch
      %223 = sbr.rel (0) target = $region109
    $region108: #{tpu_custom_call.1} parent=1 // pred_region
      %224 = dma.done [#allocation17], 8192
    $region109: #{tpu_custom_call.1} parent=1 // pred_fallthru
      _
    // Predicated region
    $region110: #{tpu_custom_call.1} parent=1 // pred_check
      _
    $region111: #{tpu_custom_call.1} parent=1 // pred_check_branch
      %226 = sbr.rel (0) target = $region113
    $region112: #{tpu_custom_call.1} parent=1 // pred_region
      %227 = dma.done [#allocation20], 8192
    $region113: #{tpu_custom_call.1} parent=1 // pred_fallthru
      _
    // Predicated region
    $region114: #{tpu_custom_call.1} parent=1 // pred_check
      _
    $region115: #{tpu_custom_call.1} parent=1 // pred_check_branch
      %229 = sbr.rel (0) target = $region117
    $region116: #{tpu_custom_call.1} parent=1 // pred_region
      %230 = dma.done [#allocation20], 8192
    $region117: #{tpu_custom_call.1} parent=1 // pred_fallthru
      _
    // Predicated region
    $region118: #{tpu_custom_call.1} parent=1 // pred_check
      _
    $region119: #{tpu_custom_call.1} parent=1 // pred_check_branch
      %232 = sbr.rel (0) target = $region121
    $region120: #{tpu_custom_call.1} parent=1 // pred_region
      %233 = dma.done [#allocation23], 8192
    $region121: #{tpu_custom_call.1} parent=1 // pred_fallthru
      _
    // Predicated region
    $region122: #{tpu_custom_call.1} parent=1 // pred_check
      _
    $region123: #{tpu_custom_call.1} parent=1 // pred_check_branch
      %235 = sbr.rel (0) target = $region125
    $region124: #{tpu_custom_call.1} parent=1 // pred_region
      %236 = dma.done [#allocation23], 8192
    $region125: #{tpu_custom_call.1} parent=1 // pred_fallthru
      _
    // Predicated region
    $region126: #{tpu_custom_call.1} parent=1 // pred_check
      _
    $region127: #{tpu_custom_call.1} parent=1 // pred_check_branch
      %238 = sbr.rel (0) target = $region129
    $region128: #{tpu_custom_call.1} parent=1 // pred_region
      %239 = dma.done [#allocation26], 8192
    $region129: #{tpu_custom_call.1} parent=1 // pred_fallthru
      _
    // Predicated region
    $region130: #{tpu_custom_call.1} parent=1 // pred_check
      _
    $region131: #{tpu_custom_call.1} parent=1 // pred_check_branch
      %241 = sbr.rel (0) target = $region133
    $region132: #{tpu_custom_call.1} parent=1 // pred_region
      %242 = dma.done [#allocation26], 8192
    $region133: #{tpu_custom_call.1} parent=1 // pred_fallthru
      _
    %v243 = vld [vmem:[#allocation8] sm:$0xff]
    %v244 = vld [vmem:[#allocation8 + $0x8] sm:$0xff]
    %v245 = vld [vmem:[#allocation8 + $0x10] sm:$0xff]
    %v246 = vld [vmem:[#allocation8 + $0x18] sm:$0xff]
    %v247 = vld [vmem:[#allocation8 + $0x20] sm:$0xff]
    %v248 = vld [vmem:[#allocation8 + $0x28] sm:$0xff]
    %v249 = vld [vmem:[#allocation8 + $0x30] sm:$0xff]
    %v250 = vld [vmem:[#allocation8 + $0x38] sm:$0xff]
    %v251 = vld [vmem:[#allocation8 + $0x40] sm:$0xff]
    %v252 = vld [vmem:[#allocation8 + $0x48] sm:$0xff]
    %v253 = vld [vmem:[#allocation8 + $0x50] sm:$0xff]
    %v254 = vld [vmem:[#allocation8 + $0x58] sm:$0xff]
    %v255 = vld [vmem:[#allocation8 + $0x60] sm:$0xff]
    %v256 = vld [vmem:[#allocation8 + $0x68] sm:$0xff]
    %v257 = vld [vmem:[#allocation8 + $0x70] sm:$0xff]
    %v258 = vld [vmem:[#allocation8 + $0x78] sm:$0xff]
    %v259 = vld [vmem:[#allocation8 + $0x80] sm:$0xff]
    %v260 = vld [vmem:[#allocation8 + $0x88] sm:$0xff]
    %v261 = vld [vmem:[#allocation8 + $0x90] sm:$0xff]
    %v262 = vld [vmem:[#allocation8 + $0x98] sm:$0xff]
    %v263 = vld [vmem:[#allocation8 + $0xa0] sm:$0xff]
    %v264 = vld [vmem:[#allocation8 + $0xa8] sm:$0xff]
    %v265 = vld [vmem:[#allocation8 + $0xb0] sm:$0xff]
    %v266 = vld [vmem:[#allocation8 + $0xb8] sm:$0xff]
    %v267 = vld [vmem:[#allocation8 + $0xc0] sm:$0xff]
    %v268 = vld [vmem:[#allocation8 + $0xc8] sm:$0xff]
    %v269 = vld [vmem:[#allocation8 + $0xd0] sm:$0xff]
    %v270 = vld [vmem:[#allocation8 + $0xd8] sm:$0xff]
    %v271 = vld [vmem:[#allocation8 + $0xe0] sm:$0xff]
    %v272 = vld [vmem:[#allocation8 + $0xe8] sm:$0xff]
    %v273 = vld [vmem:[#allocation8 + $0xf0] sm:$0xff]
    %v274 = vld [vmem:[#allocation8 + $0xf8] sm:$0xff]
    %v275 = vld [vmem:[#allocation13] sm:$0xff]
    %v276 = vld [vmem:[#allocation13 + $0x8] sm:$0xff]
    %v277 = vld [vmem:[#allocation13 + $0x10] sm:$0xff]
    %v278 = vld [vmem:[#allocation13 + $0x18] sm:$0xff]
    %v279 = vld [vmem:[#allocation13 + $0x20] sm:$0xff]
    %v280 = vld [vmem:[#allocation13 + $0x28] sm:$0xff]
    %v281 = vld [vmem:[#allocation13 + $0x30] sm:$0xff]
    %v282 = vld [vmem:[#allocation13 + $0x38] sm:$0xff]
    %v283 = vld [vmem:[#allocation13 + $0x40] sm:$0xff]
    %v284 = vld [vmem:[#allocation13 + $0x48] sm:$0xff]
    %v285 = vld [vmem:[#allocation13 + $0x50] sm:$0xff]
    %v286 = vld [vmem:[#allocation13 + $0x58] sm:$0xff]
    %v287 = vld [vmem:[#allocation13 + $0x60] sm:$0xff]
    %v288 = vld [vmem:[#allocation13 + $0x68] sm:$0xff]
    %v289 = vld [vmem:[#allocation13 + $0x70] sm:$0xff]
    %v290 = vld [vmem:[#allocation13 + $0x78] sm:$0xff]
    %v291 = vld [vmem:[#allocation13 + $0x80] sm:$0xff]
    %v292 = vld [vmem:[#allocation13 + $0x88] sm:$0xff]
    %v293 = vld [vmem:[#allocation13 + $0x90] sm:$0xff]
    %v294 = vld [vmem:[#allocation13 + $0x98] sm:$0xff]
    %v295 = vld [vmem:[#allocation13 + $0xa0] sm:$0xff]
    %v296 = vld [vmem:[#allocation13 + $0xa8] sm:$0xff]
    %v297 = vld [vmem:[#allocation13 + $0xb0] sm:$0xff]
    %v298 = vld [vmem:[#allocation13 + $0xb8] sm:$0xff]
    %v299 = vld [vmem:[#allocation13 + $0xc0] sm:$0xff]
    %v300 = vld [vmem:[#allocation13 + $0xc8] sm:$0xff]
    %v301 = vld [vmem:[#allocation13 + $0xd0] sm:$0xff]
    %v302 = vld [vmem:[#allocation13 + $0xd8] sm:$0xff]
    %v303 = vld [vmem:[#allocation13 + $0xe0] sm:$0xff]
    %v304 = vld [vmem:[#allocation13 + $0xe8] sm:$0xff]
    %v305 = vld [vmem:[#allocation13 + $0xf0] sm:$0xff]
    %v306 = vld [vmem:[#allocation13 + $0xf8] sm:$0xff]
    %v307 = vld [vmem:[#allocation13 + $0x100] sm:$0xff]
    %v308 = vld [vmem:[#allocation13 + $0x108] sm:$0xff]
    %v309 = vld [vmem:[#allocation13 + $0x110] sm:$0xff]
    %v310 = vld [vmem:[#allocation13 + $0x118] sm:$0xff]
    %v311 = vld [vmem:[#allocation13 + $0x120] sm:$0xff]
    %v312 = vld [vmem:[#allocation13 + $0x128] sm:$0xff]
    %v313 = vld [vmem:[#allocation13 + $0x130] sm:$0xff]
    %v314 = vld [vmem:[#allocation13 + $0x138] sm:$0xff]
    %v315 = vld [vmem:[#allocation13 + $0x140] sm:$0xff]
    %v316 = vld [vmem:[#allocation13 + $0x148] sm:$0xff]
    %v317 = vld [vmem:[#allocation13 + $0x150] sm:$0xff]
    %v318 = vld [vmem:[#allocation13 + $0x158] sm:$0xff]
    %v319 = vld [vmem:[#allocation13 + $0x160] sm:$0xff]
    %v320 = vld [vmem:[#allocation13 + $0x168] sm:$0xff]
    %v321 = vld [vmem:[#allocation13 + $0x170] sm:$0xff]
    %v322 = vld [vmem:[#allocation13 + $0x178] sm:$0xff]
    %v323 = vld [vmem:[#allocation13 + $0x180] sm:$0xff]
    %v324 = vld [vmem:[#allocation13 + $0x188] sm:$0xff]
    %v325 = vld [vmem:[#allocation13 + $0x190] sm:$0xff]
    %v326 = vld [vmem:[#allocation13 + $0x198] sm:$0xff]
    %v327 = vld [vmem:[#allocation13 + $0x1a0] sm:$0xff]
    %v328 = vld [vmem:[#allocation13 + $0x1a8] sm:$0xff]
    %v329 = vld [vmem:[#allocation13 + $0x1b0] sm:$0xff]
    %v330 = vld [vmem:[#allocation13 + $0x1b8] sm:$0xff]
    %v331 = vld [vmem:[#allocation13 + $0x1c0] sm:$0xff]
    %v332 = vld [vmem:[#allocation13 + $0x1c8] sm:$0xff]
    %v333 = vld [vmem:[#allocation13 + $0x1d0] sm:$0xff]
    %v334 = vld [vmem:[#allocation13 + $0x1d8] sm:$0xff]
    %v335 = vld [vmem:[#allocation13 + $0x1e0] sm:$0xff]
    %v336 = vld [vmem:[#allocation13 + $0x1e8] sm:$0xff]
    %v337 = vld [vmem:[#allocation13 + $0x1f0] sm:$0xff]
    %v338 = vld [vmem:[#allocation13 + $0x1f8] sm:$0xff]
    %v339 = vld [vmem:[#allocation13 + $0x200] sm:$0xff]
    %v340 = vld [vmem:[#allocation13 + $0x208] sm:$0xff]
    %v341 = vld [vmem:[#allocation13 + $0x210] sm:$0xff]
    %v342 = vld [vmem:[#allocation13 + $0x218] sm:$0xff]
    %v343 = vld [vmem:[#allocation13 + $0x220] sm:$0xff]
    %v344 = vld [vmem:[#allocation13 + $0x228] sm:$0xff]
    %v345 = vld [vmem:[#allocation13 + $0x230] sm:$0xff]
    %v346 = vld [vmem:[#allocation13 + $0x238] sm:$0xff]
    %v347 = vld [vmem:[#allocation13 + $0x240] sm:$0xff]
    %v348 = vld [vmem:[#allocation13 + $0x248] sm:$0xff]
    %v349 = vld [vmem:[#allocation13 + $0x250] sm:$0xff]
    %v350 = vld [vmem:[#allocation13 + $0x258] sm:$0xff]
    %v351 = vld [vmem:[#allocation13 + $0x260] sm:$0xff]
    %v352 = vld [vmem:[#allocation13 + $0x268] sm:$0xff]
    %v353 = vld [vmem:[#allocation13 + $0x270] sm:$0xff]
    %v354 = vld [vmem:[#allocation13 + $0x278] sm:$0xff]
    %v355 = vld [vmem:[#allocation13 + $0x280] sm:$0xff]
    %v356 = vld [vmem:[#allocation13 + $0x288] sm:$0xff]
    %v357 = vld [vmem:[#allocation13 + $0x290] sm:$0xff]
    %v358 = vld [vmem:[#allocation13 + $0x298] sm:$0xff]
    %v359 = vld [vmem:[#allocation13 + $0x2a0] sm:$0xff]
    %v360 = vld [vmem:[#allocation13 + $0x2a8] sm:$0xff]
    %v361 = vld [vmem:[#allocation13 + $0x2b0] sm:$0xff]
    %v362 = vld [vmem:[#allocation13 + $0x2b8] sm:$0xff]
    %v363 = vld [vmem:[#allocation13 + $0x2c0] sm:$0xff]
    %v364 = vld [vmem:[#allocation13 + $0x2c8] sm:$0xff]
    %v365 = vld [vmem:[#allocation13 + $0x2d0] sm:$0xff]
    %v366 = vld [vmem:[#allocation13 + $0x2d8] sm:$0xff]
    %v367 = vld [vmem:[#allocation13 + $0x2e0] sm:$0xff]
    %v368 = vld [vmem:[#allocation13 + $0x2e8] sm:$0xff]
    %v369 = vld [vmem:[#allocation13 + $0x2f0] sm:$0xff]
    %v370 = vld [vmem:[#allocation13 + $0x2f8] sm:$0xff]
    %v371 = vld [vmem:[#allocation13 + $0x300] sm:$0xff]
    %v372 = vld [vmem:[#allocation13 + $0x308] sm:$0xff]
    %v373 = vld [vmem:[#allocation13 + $0x310] sm:$0xff]
    %v374 = vld [vmem:[#allocation13 + $0x318] sm:$0xff]
    %v375 = vld [vmem:[#allocation13 + $0x320] sm:$0xff]
    %v376 = vld [vmem:[#allocation13 + $0x328] sm:$0xff]
    %v377 = vld [vmem:[#allocation13 + $0x330] sm:$0xff]
    %v378 = vld [vmem:[#allocation13 + $0x338] sm:$0xff]
    %v379 = vld [vmem:[#allocation13 + $0x340] sm:$0xff]
    %v380 = vld [vmem:[#allocation13 + $0x348] sm:$0xff]
    %v381 = vld [vmem:[#allocation13 + $0x350] sm:$0xff]
    %v382 = vld [vmem:[#allocation13 + $0x358] sm:$0xff]
    %v383 = vld [vmem:[#allocation13 + $0x360] sm:$0xff]
    %v384 = vld [vmem:[#allocation13 + $0x368] sm:$0xff]
    %v385 = vld [vmem:[#allocation13 + $0x370] sm:$0xff]
    %v386 = vld [vmem:[#allocation13 + $0x378] sm:$0xff]
    %v387 = vld [vmem:[#allocation13 + $0x380] sm:$0xff]
    %v388 = vld [vmem:[#allocation13 + $0x388] sm:$0xff]
    %v389 = vld [vmem:[#allocation13 + $0x390] sm:$0xff]
    %v390 = vld [vmem:[#allocation13 + $0x398] sm:$0xff]
    %v391 = vld [vmem:[#allocation13 + $0x3a0] sm:$0xff]
    %v392 = vld [vmem:[#allocation13 + $0x3a8] sm:$0xff]
    %v393 = vld [vmem:[#allocation13 + $0x3b0] sm:$0xff]
    %v394 = vld [vmem:[#allocation13 + $0x3b8] sm:$0xff]
    %v395 = vld [vmem:[#allocation13 + $0x3c0] sm:$0xff]
    %v396 = vld [vmem:[#allocation13 + $0x3c8] sm:$0xff]
    %v397 = vld [vmem:[#allocation13 + $0x3d0] sm:$0xff]
    %v398 = vld [vmem:[#allocation13 + $0x3d8] sm:$0xff]
    %v399 = vld [vmem:[#allocation13 + $0x3e0] sm:$0xff]
    %v400 = vld [vmem:[#allocation13 + $0x3e8] sm:$0xff]
    %v401 = vld [vmem:[#allocation13 + $0x3f0] sm:$0xff]
    %v402 = vld [vmem:[#allocation13 + $0x3f8] sm:$0xff]
    %v403 = vld [vmem:[#allocation13 + $0x400] sm:$0xff]
    %v404 = vld [vmem:[#allocation13 + $0x408] sm:$0xff]
    %v405 = vld [vmem:[#allocation13 + $0x410] sm:$0xff]
    %v406 = vld [vmem:[#allocation13 + $0x418] sm:$0xff]
    %v407 = vld [vmem:[#allocation13 + $0x420] sm:$0xff]
    %v408 = vld [vmem:[#allocation13 + $0x428] sm:$0xff]
    %v409 = vld [vmem:[#allocation13 + $0x430] sm:$0xff]
    %v410 = vld [vmem:[#allocation13 + $0x438] sm:$0xff]
    %v411 = vld [vmem:[#allocation13 + $0x440] sm:$0xff]
    %v412 = vld [vmem:[#allocation13 + $0x448] sm:$0xff]
    %v413 = vld [vmem:[#allocation13 + $0x450] sm:$0xff]
    %v414 = vld [vmem:[#allocation13 + $0x458] sm:$0xff]
    %v415 = vld [vmem:[#allocation13 + $0x460] sm:$0xff]
    %v416 = vld [vmem:[#allocation13 + $0x468] sm:$0xff]
    %v417 = vld [vmem:[#allocation13 + $0x470] sm:$0xff]
    %v418 = vld [vmem:[#allocation13 + $0x478] sm:$0xff]
    %v419 = vld [vmem:[#allocation13 + $0x480] sm:$0xff]
    %v420 = vld [vmem:[#allocation13 + $0x488] sm:$0xff]
    %v421 = vld [vmem:[#allocation13 + $0x490] sm:$0xff]
    %v422 = vld [vmem:[#allocation13 + $0x498] sm:$0xff]
    %v423 = vld [vmem:[#allocation13 + $0x4a0] sm:$0xff]
    %v424 = vld [vmem:[#allocation13 + $0x4a8] sm:$0xff]
    %v425 = vld [vmem:[#allocation13 + $0x4b0] sm:$0xff]
    %v426 = vld [vmem:[#allocation13 + $0x4b8] sm:$0xff]
    %v427 = vld [vmem:[#allocation13 + $0x4c0] sm:$0xff]
    %v428 = vld [vmem:[#allocation13 + $0x4c8] sm:$0xff]
    %v429 = vld [vmem:[#allocation13 + $0x4d0] sm:$0xff]
    %v430 = vld [vmem:[#allocation13 + $0x4d8] sm:$0xff]
    %v431 = vld [vmem:[#allocation13 + $0x4e0] sm:$0xff]
    %v432 = vld [vmem:[#allocation13 + $0x4e8] sm:$0xff]
    %v433 = vld [vmem:[#allocation13 + $0x4f0] sm:$0xff]
    %v434 = vld [vmem:[#allocation13 + $0x4f8] sm:$0xff]
    %v435 = vld [vmem:[#allocation13 + $0x500] sm:$0xff]
    %v436 = vld [vmem:[#allocation13 + $0x508] sm:$0xff]
    %v437 = vld [vmem:[#allocation13 + $0x510] sm:$0xff]
    %v438 = vld [vmem:[#allocation13 + $0x518] sm:$0xff]
    %v439 = vld [vmem:[#allocation13 + $0x520] sm:$0xff]
    %v440 = vld [vmem:[#allocation13 + $0x528] sm:$0xff]
    %v441 = vld [vmem:[#allocation13 + $0x530] sm:$0xff]
    %v442 = vld [vmem:[#allocation13 + $0x538] sm:$0xff]
    %v443 = vld [vmem:[#allocation13 + $0x540] sm:$0xff]
    %v444 = vld [vmem:[#allocation13 + $0x548] sm:$0xff]
    %v445 = vld [vmem:[#allocation13 + $0x550] sm:$0xff]
    %v446 = vld [vmem:[#allocation13 + $0x558] sm:$0xff]
    %v447 = vld [vmem:[#allocation13 + $0x560] sm:$0xff]
    %v448 = vld [vmem:[#allocation13 + $0x568] sm:$0xff]
    %v449 = vld [vmem:[#allocation13 + $0x570] sm:$0xff]
    %v450 = vld [vmem:[#allocation13 + $0x578] sm:$0xff]
    %v451 = vld [vmem:[#allocation13 + $0x580] sm:$0xff]
    %v452 = vld [vmem:[#allocation13 + $0x588] sm:$0xff]
    %v453 = vld [vmem:[#allocation13 + $0x590] sm:$0xff]
    %v454 = vld [vmem:[#allocation13 + $0x598] sm:$0xff]
    %v455 = vld [vmem:[#allocation13 + $0x5a0] sm:$0xff]
    %v456 = vld [vmem:[#allocation13 + $0x5a8] sm:$0xff]
    %v457 = vld [vmem:[#allocation13 + $0x5b0] sm:$0xff]
    %v458 = vld [vmem:[#allocation13 + $0x5b8] sm:$0xff]
    %v459 = vld [vmem:[#allocation13 + $0x5c0] sm:$0xff]
    %v460 = vld [vmem:[#allocation13 + $0x5c8] sm:$0xff]
    %v461 = vld [vmem:[#allocation13 + $0x5d0] sm:$0xff]
    %v462 = vld [vmem:[#allocation13 + $0x5d8] sm:$0xff]
    %v463 = vld [vmem:[#allocation13 + $0x5e0] sm:$0xff]
    %v464 = vld [vmem:[#allocation13 + $0x5e8] sm:$0xff]
    %v465 = vld [vmem:[#allocation13 + $0x5f0] sm:$0xff]
    %v466 = vld [vmem:[#allocation13 + $0x5f8] sm:$0xff]
    %v467 = vld [vmem:[#allocation13 + $0x600] sm:$0xff]
    %v468 = vld [vmem:[#allocation13 + $0x608] sm:$0xff]
    %v469 = vld [vmem:[#allocation13 + $0x610] sm:$0xff]
    %v470 = vld [vmem:[#allocation13 + $0x618] sm:$0xff]
    %v471 = vld [vmem:[#allocation13 + $0x620] sm:$0xff]
    %v472 = vld [vmem:[#allocation13 + $0x628] sm:$0xff]
    %v473 = vld [vmem:[#allocation13 + $0x630] sm:$0xff]
    %v474 = vld [vmem:[#allocation13 + $0x638] sm:$0xff]
    %v475 = vld [vmem:[#allocation13 + $0x640] sm:$0xff]
    %v476 = vld [vmem:[#allocation13 + $0x648] sm:$0xff]
    %v477 = vld [vmem:[#allocation13 + $0x650] sm:$0xff]
    %v478 = vld [vmem:[#allocation13 + $0x658] sm:$0xff]
    %v479 = vld [vmem:[#allocation13 + $0x660] sm:$0xff]
    %v480 = vld [vmem:[#allocation13 + $0x668] sm:$0xff]
    %v481 = vld [vmem:[#allocation13 + $0x670] sm:$0xff]
    %v482 = vld [vmem:[#allocation13 + $0x678] sm:$0xff]
    %v483 = vld [vmem:[#allocation13 + $0x680] sm:$0xff]
    %v484 = vld [vmem:[#allocation13 + $0x688] sm:$0xff]
    %v485 = vld [vmem:[#allocation13 + $0x690] sm:$0xff]
    %v486 = vld [vmem:[#allocation13 + $0x698] sm:$0xff]
    %v487 = vld [vmem:[#allocation13 + $0x6a0] sm:$0xff]
    %v488 = vld [vmem:[#allocation13 + $0x6a8] sm:$0xff]
    %v489 = vld [vmem:[#allocation13 + $0x6b0] sm:$0xff]
    %v490 = vld [vmem:[#allocation13 + $0x6b8] sm:$0xff]
    %v491 = vld [vmem:[#allocation13 + $0x6c0] sm:$0xff]
    %v492 = vld [vmem:[#allocation13 + $0x6c8] sm:$0xff]
    %v493 = vld [vmem:[#allocation13 + $0x6d0] sm:$0xff]
    %v494 = vld [vmem:[#allocation13 + $0x6d8] sm:$0xff]
    %v495 = vld [vmem:[#allocation13 + $0x6e0] sm:$0xff]
    %v496 = vld [vmem:[#allocation13 + $0x6e8] sm:$0xff]
    %v497 = vld [vmem:[#allocation13 + $0x6f0] sm:$0xff]
    %v498 = vld [vmem:[#allocation13 + $0x6f8] sm:$0xff]
    %v499 = vld [vmem:[#allocation13 + $0x700] sm:$0xff]
    %v500 = vld [vmem:[#allocation13 + $0x708] sm:$0xff]
    %v501 = vld [vmem:[#allocation13 + $0x710] sm:$0xff]
    %v502 = vld [vmem:[#allocation13 + $0x718] sm:$0xff]
    %v503 = vld [vmem:[#allocation13 + $0x720] sm:$0xff]
    %v504 = vld [vmem:[#allocation13 + $0x728] sm:$0xff]
    %v505 = vld [vmem:[#allocation13 + $0x730] sm:$0xff]
    %v506 = vld [vmem:[#allocation13 + $0x738] sm:$0xff]
    %v507 = vld [vmem:[#allocation13 + $0x740] sm:$0xff]
    %v508 = vld [vmem:[#allocation13 + $0x748] sm:$0xff]
    %v509 = vld [vmem:[#allocation13 + $0x750] sm:$0xff]
    %v510 = vld [vmem:[#allocation13 + $0x758] sm:$0xff]
    %v511 = vld [vmem:[#allocation13 + $0x760] sm:$0xff]
    %v512 = vld [vmem:[#allocation13 + $0x768] sm:$0xff]
    %v513 = vld [vmem:[#allocation13 + $0x770] sm:$0xff]
    %v514 = vld [vmem:[#allocation13 + $0x778] sm:$0xff]
    %v515 = vld [vmem:[#allocation13 + $0x780] sm:$0xff]
    %v516 = vld [vmem:[#allocation13 + $0x788] sm:$0xff]
    %v517 = vld [vmem:[#allocation13 + $0x790] sm:$0xff]
    %v518 = vld [vmem:[#allocation13 + $0x798] sm:$0xff]
    %v519 = vld [vmem:[#allocation13 + $0x7a0] sm:$0xff]
    %v520 = vld [vmem:[#allocation13 + $0x7a8] sm:$0xff]
    %v521 = vld [vmem:[#allocation13 + $0x7b0] sm:$0xff]
    %v522 = vld [vmem:[#allocation13 + $0x7b8] sm:$0xff]
    %v523 = vld [vmem:[#allocation13 + $0x7c0] sm:$0xff]
    %v524 = vld [vmem:[#allocation13 + $0x7c8] sm:$0xff]
    %v525 = vld [vmem:[#allocation13 + $0x7d0] sm:$0xff]
    %v526 = vld [vmem:[#allocation13 + $0x7d8] sm:$0xff]
    %v527 = vld [vmem:[#allocation13 + $0x7e0] sm:$0xff]
    %v528 = vld [vmem:[#allocation13 + $0x7e8] sm:$0xff]
    %v529 = vld [vmem:[#allocation13 + $0x7f0] sm:$0xff]
    %v530 = vld [vmem:[#allocation13 + $0x7f8] sm:$0xff]
    %v531 = vld [vmem:[%s5] sm:$0xf]
    %v533 = vlaneseq
    %v534 = vshrl.u32 %v533, 7
    %v535 = vsub.s32 0, %v534
    %v536 = vrot.slane %v531, %v535
    %v537 = vlaneseq
    %v538 = vshrl.u32 %v537, 7
    %v539 = vsub.s32 1, %v538
    %v540 = vrot.slane %v531, %v539
    %v541 = vlaneseq
    %v542 = vshrl.u32 %v541, 7
    %v543 = vsub.s32 2, %v542
    %v544 = vrot.slane %v531, %v543
    %v545 = vlaneseq
    %v546 = vshrl.u32 %v545, 7
    %v547 = vsub.s32 3, %v546
    %v548 = vrot.slane %v531, %v547
    %553 = vmatprep.subr.mxu0 %v336
    %554 = vmatpush1.msra.mxu0 %v335
    %555 = vmatprep.subr.mxu0 %v332
    %556 = vmatpush1.msra.mxu0 %v331
    %557 = vmatprep.subr.mxu0 %v328
    %558 = vmatpush1.msra.mxu0 %v327
    %559 = vmatprep.subr.mxu0 %v324
    %560 = vmatpush1.msra.mxu0 %v323
    %561 = vmatprep.subr.mxu0 %v320
    %562 = vmatpush1.msra.mxu0 %v319
    %563 = vmatprep.subr.mxu0 %v316
    %564 = vmatpush1.msra.mxu0 %v315
    %565 = vmatprep.subr.mxu0 %v312
    %566 = vmatpush1.msra.mxu0 %v311
    %567 = vmatprep.subr.mxu0 %v308
    %568 = vmatpush1.msra.mxu0 %v307
    %569 = vmatprep.subr.mxu0 %v304
    %570 = vmatpush1.msra.mxu0 %v303
    %571 = vmatprep.subr.mxu0 %v300
    %572 = vmatpush1.msra.mxu0 %v299
    %573 = vmatprep.subr.mxu0 %v296
    %574 = vmatpush1.msra.mxu0 %v295
    %575 = vmatprep.subr.mxu0 %v292
    %576 = vmatpush1.msra.mxu0 %v291
    %577 = vmatprep.subr.mxu0 %v288
    %578 = vmatpush1.msra.mxu0 %v287
    %579 = vmatprep.subr.mxu0 %v284
    %580 = vmatpush1.msra.mxu0 %v283
    %581 = vmatprep.subr.mxu0 %v280
    %582 = vmatpush1.msra.mxu0 %v279
    %583 = vmatprep.subr.mxu0 %v276
    %584 = vmatpush1.msra.mxu0 %v275
    %585 = vmatprep.subr.mxu0 %v400
    %586 = vmatpush2.msra.mxu0 %v399
    %587 = vmatprep.subr.mxu0 %v396
    %588 = vmatpush2.msra.mxu0 %v395
    %589 = vmatprep.subr.mxu0 %v392
    %590 = vmatpush2.msra.mxu0 %v391
    %591 = vmatprep.subr.mxu0 %v388
    %592 = vmatpush2.msra.mxu0 %v387
    %593 = vmatprep.subr.mxu0 %v384
    %594 = vmatpush2.msra.mxu0 %v383
    %595 = vmatprep.subr.mxu0 %v380
    %596 = vmatpush2.msra.mxu0 %v379
    %597 = vmatprep.subr.mxu0 %v376
    %598 = vmatpush2.msra.mxu0 %v375
    %599 = vmatprep.subr.mxu0 %v372
    %600 = vmatpush2.msra.mxu0 %v371
    %601 = vmatprep.subr.mxu0 %v368
    %602 = vmatpush2.msra.mxu0 %v367
    %603 = vmatprep.subr.mxu0 %v364
    %604 = vmatpush2.msra.mxu0 %v363
    %605 = vmatprep.subr.mxu0 %v360
    %606 = vmatpush2.msra.mxu0 %v359
    %607 = vmatprep.subr.mxu0 %v356
    %608 = vmatpush2.msra.mxu0 %v355
    %609 = vmatprep.subr.mxu0 %v352
    %610 = vmatpush2.msra.mxu0 %v351
    %611 = vmatprep.subr.mxu0 %v348
    %612 = vmatpush2.msra.mxu0 %v347
    %613 = vmatprep.subr.mxu0 %v344
    %614 = vmatpush2.msra.mxu0 %v343
    %615 = vmatprep.subr.mxu0 %v340
    %616 = vmatpush2.msra.mxu0 %v339
    %617 = vmatprep.mubr.f32.mxu0 %v244
    %618 = vmatmul.mubr.f32.gmra.mxu0 %v243
    %v619 = vpop.f32.mrf.mxu0
    %v620 = vadd.f32 %v536, %v619
    %v621 = vpop.f32.mrf.mxu0
    %v622 = vadd.f32 %v540, %v621
    %623 = vmatprep.mubr.f32.mxu0 %v248
    %624 = vmatmul.mubr.f32.gmra.mxu0 %v247
    %v625 = vpop.f32.mrf.mxu0
    %v626 = vadd.f32 %v536, %v625
    %v627 = vpop.f32.mrf.mxu0
    %v628 = vadd.f32 %v540, %v627
    %629 = vmatprep.mubr.f32.mxu0 %v252
    %630 = vmatmul.mubr.f32.gmra.mxu0 %v251
    %v631 = vpop.f32.mrf.mxu0
    %v632 = vadd.f32 %v536, %v631
    %v633 = vpop.f32.mrf.mxu0
    %v634 = vadd.f32 %v540, %v633
    %635 = vmatprep.mubr.f32.mxu0 %v256
    %636 = vmatmul.mubr.f32.gmra.mxu0 %v255
    %v637 = vpop.f32.mrf.mxu0
    %v638 = vadd.f32 %v536, %v637
    %v639 = vpop.f32.mrf.mxu0
    %v640 = vadd.f32 %v540, %v639
    %641 = vmatprep.mubr.f32.mxu0 %v260
    %642 = vmatmul.mubr.f32.gmra.mxu0 %v259
    %v643 = vpop.f32.mrf.mxu0
    %v644 = vadd.f32 %v536, %v643
    %v645 = vpop.f32.mrf.mxu0
    %v646 = vadd.f32 %v540, %v645
    %647 = vmatprep.mubr.f32.mxu0 %v264
    %648 = vmatmul.mubr.f32.gmra.mxu0 %v263
    %v649 = vpop.f32.mrf.mxu0
    %v650 = vadd.f32 %v536, %v649
    %v651 = vpop.f32.mrf.mxu0
    %v652 = vadd.f32 %v540, %v651
    %653 = vmatprep.mubr.f32.mxu0 %v268
    %654 = vmatmul.mubr.f32.gmra.mxu0 %v267
    %v655 = vpop.f32.mrf.mxu0
    %v656 = vadd.f32 %v536, %v655
    %v657 = vpop.f32.mrf.mxu0
    %v658 = vadd.f32 %v540, %v657
    %659 = vmatprep.mubr.f32.mxu0 %v272
    %660 = vmatmul.mubr.f32.gmra.mxu0 %v271
    %v661 = vpop.f32.mrf.mxu0
    %v662 = vadd.f32 %v536, %v661
    %v663 = vpop.f32.mrf.mxu0
    %v664 = vadd.f32 %v540, %v663
    %665 = vdwg.mxu0
    %666 = vmatprep.subr.mxu0 %v464
    %667 = vmatpush1.msra.mxu0 %v463
    %668 = vmatprep.subr.mxu0 %v460
    %669 = vmatpush1.msra.mxu0 %v459
    %670 = vmatprep.subr.mxu0 %v456
    %671 = vmatpush1.msra.mxu0 %v455
    %672 = vmatprep.subr.mxu0 %v452
    %673 = vmatpush1.msra.mxu0 %v451
    %674 = vmatprep.subr.mxu0 %v448
    %675 = vmatpush1.msra.mxu0 %v447
    %676 = vmatprep.subr.mxu0 %v444
    %677 = vmatpush1.msra.mxu0 %v443
    %678 = vmatprep.subr.mxu0 %v440
    %679 = vmatpush1.msra.mxu0 %v439
    %680 = vmatprep.subr.mxu0 %v436
    %681 = vmatpush1.msra.mxu0 %v435
    %682 = vmatprep.subr.mxu0 %v432
    %683 = vmatpush1.msra.mxu0 %v431
    %684 = vmatprep.subr.mxu0 %v428
    %685 = vmatpush1.msra.mxu0 %v427
    %686 = vmatprep.subr.mxu0 %v424
    %687 = vmatpush1.msra.mxu0 %v423
    %688 = vmatprep.subr.mxu0 %v420
    %689 = vmatpush1.msra.mxu0 %v419
    %690 = vmatprep.subr.mxu0 %v416
    %691 = vmatpush1.msra.mxu0 %v415
    %692 = vmatprep.subr.mxu0 %v412
    %693 = vmatpush1.msra.mxu0 %v411
    %694 = vmatprep.subr.mxu0 %v408
    %695 = vmatpush1.msra.mxu0 %v407
    %696 = vmatprep.subr.mxu0 %v404
    %697 = vmatpush1.msra.mxu0 %v403
    %698 = vmatprep.subr.mxu0 %v528
    %699 = vmatpush2.msra.mxu0 %v527
    %700 = vmatprep.subr.mxu0 %v524
    %701 = vmatpush2.msra.mxu0 %v523
    %702 = vmatprep.subr.mxu0 %v520
    %703 = vmatpush2.msra.mxu0 %v519
    %704 = vmatprep.subr.mxu0 %v516
    %705 = vmatpush2.msra.mxu0 %v515
    %706 = vmatprep.subr.mxu0 %v512
    %707 = vmatpush2.msra.mxu0 %v511
    %708 = vmatprep.subr.mxu0 %v508
    %709 = vmatpush2.msra.mxu0 %v507
    %710 = vmatprep.subr.mxu0 %v504
    %711 = vmatpush2.msra.mxu0 %v503
    %712 = vmatprep.subr.mxu0 %v500
    %713 = vmatpush2.msra.mxu0 %v499
    %714 = vmatprep.subr.mxu0 %v496
    %715 = vmatpush2.msra.mxu0 %v495
    %716 = vmatprep.subr.mxu0 %v492
    %717 = vmatpush2.msra.mxu0 %v491
    %718 = vmatprep.subr.mxu0 %v488
    %719 = vmatpush2.msra.mxu0 %v487
    %720 = vmatprep.subr.mxu0 %v484
    %721 = vmatpush2.msra.mxu0 %v483
    %722 = vmatprep.subr.mxu0 %v480
    %723 = vmatpush2.msra.mxu0 %v479
    %724 = vmatprep.subr.mxu0 %v476
    %725 = vmatpush2.msra.mxu0 %v475
    %726 = vmatprep.subr.mxu0 %v472
    %727 = vmatpush2.msra.mxu0 %v471
    %728 = vmatprep.subr.mxu0 %v468
    %729 = vmatpush2.msra.mxu0 %v467
    %730 = vmatprep.mubr.f32.mxu0 %v246
    %731 = vmatmul.mubr.f32.gmra.mxu0 %v245
    %v732 = vpop.f32.mrf.mxu0
    %v733 = vadd.f32 %v620, %v732
    %v734 = vpop.f32.mrf.mxu0
    %v735 = vadd.f32 %v622, %v734
    %736 = vmatprep.mubr.f32.mxu0 %v250
    %737 = vmatmul.mubr.f32.gmra.mxu0 %v249
    %v738 = vpop.f32.mrf.mxu0
    %v739 = vadd.f32 %v626, %v738
    %v740 = vpop.f32.mrf.mxu0
    %v741 = vadd.f32 %v628, %v740
    %742 = vmatprep.mubr.f32.mxu0 %v254
    %743 = vmatmul.mubr.f32.gmra.mxu0 %v253
    %v744 = vpop.f32.mrf.mxu0
    %v745 = vadd.f32 %v632, %v744
    %v746 = vpop.f32.mrf.mxu0
    %v747 = vadd.f32 %v634, %v746
    %748 = vmatprep.mubr.f32.mxu0 %v258
    %749 = vmatmul.mubr.f32.gmra.mxu0 %v257
    %v750 = vpop.f32.mrf.mxu0
    %v751 = vadd.f32 %v638, %v750
    %v752 = vpop.f32.mrf.mxu0
    %v753 = vadd.f32 %v640, %v752
    %754 = vmatprep.mubr.f32.mxu0 %v262
    %755 = vmatmul.mubr.f32.gmra.mxu0 %v261
    %v756 = vpop.f32.mrf.mxu0
    %v757 = vadd.f32 %v644, %v756
    %v758 = vpop.f32.mrf.mxu0
    %v759 = vadd.f32 %v646, %v758
    %760 = vmatprep.mubr.f32.mxu0 %v266
    %761 = vmatmul.mubr.f32.gmra.mxu0 %v265
    %v762 = vpop.f32.mrf.mxu0
    %v763 = vadd.f32 %v650, %v762
    %v764 = vpop.f32.mrf.mxu0
    %v765 = vadd.f32 %v652, %v764
    %766 = vmatprep.mubr.f32.mxu0 %v270
    %767 = vmatmul.mubr.f32.gmra.mxu0 %v269
    %v768 = vpop.f32.mrf.mxu0
    %v769 = vadd.f32 %v656, %v768
    %v770 = vpop.f32.mrf.mxu0
    %v771 = vadd.f32 %v658, %v770
    %772 = vmatprep.mubr.f32.mxu0 %v274
    %773 = vmatmul.mubr.f32.gmra.mxu0 %v273
    %v774 = vpop.f32.mrf.mxu0
    %v775 = vadd.f32 %v662, %v774
    %v776 = vpop.f32.mrf.mxu0
    %v777 = vadd.f32 %v664, %v776
    %778 = vdwg.mxu0
    %779 = vmatprep.subr.mxu0 %v338
    %780 = vmatpush1.msra.mxu0 %v337
    %781 = vmatprep.subr.mxu0 %v334
    %782 = vmatpush1.msra.mxu0 %v333
    %783 = vmatprep.subr.mxu0 %v330
    %784 = vmatpush1.msra.mxu0 %v329
    %785 = vmatprep.subr.mxu0 %v326
    %786 = vmatpush1.msra.mxu0 %v325
    %787 = vmatprep.subr.mxu0 %v322
    %788 = vmatpush1.msra.mxu0 %v321
    %789 = vmatprep.subr.mxu0 %v318
    %790 = vmatpush1.msra.mxu0 %v317
    %791 = vmatprep.subr.mxu0 %v314
    %792 = vmatpush1.msra.mxu0 %v313
    %793 = vmatprep.subr.mxu0 %v310
    %794 = vmatpush1.msra.mxu0 %v309
    %795 = vmatprep.subr.mxu0 %v306
    %796 = vmatpush1.msra.mxu0 %v305
    %797 = vmatprep.subr.mxu0 %v302
    %798 = vmatpush1.msra.mxu0 %v301
    %799 = vmatprep.subr.mxu0 %v298
    %800 = vmatpush1.msra.mxu0 %v297
    %801 = vmatprep.subr.mxu0 %v294
    %802 = vmatpush1.msra.mxu0 %v293
    %803 = vmatprep.subr.mxu0 %v290
    %804 = vmatpush1.msra.mxu0 %v289
    %805 = vmatprep.subr.mxu0 %v286
    %806 = vmatpush1.msra.mxu0 %v285
    %807 = vmatprep.subr.mxu0 %v282
    %808 = vmatpush1.msra.mxu0 %v281
    %809 = vmatprep.subr.mxu0 %v278
    %810 = vmatpush1.msra.mxu0 %v277
    %811 = vmatprep.subr.mxu0 %v402
    %812 = vmatpush2.msra.mxu0 %v401
    %813 = vmatprep.subr.mxu0 %v398
    %814 = vmatpush2.msra.mxu0 %v397
    %815 = vmatprep.subr.mxu0 %v394
    %816 = vmatpush2.msra.mxu0 %v393
    %817 = vmatprep.subr.mxu0 %v390
    %818 = vmatpush2.msra.mxu0 %v389
    %819 = vmatprep.subr.mxu0 %v386
    %820 = vmatpush2.msra.mxu0 %v385
    %821 = vmatprep.subr.mxu0 %v382
    %822 = vmatpush2.msra.mxu0 %v381
    %823 = vmatprep.subr.mxu0 %v378
    %824 = vmatpush2.msra.mxu0 %v377
    %825 = vmatprep.subr.mxu0 %v374
    %826 = vmatpush2.msra.mxu0 %v373
    %827 = vmatprep.subr.mxu0 %v370
    %828 = vmatpush2.msra.mxu0 %v369
    %829 = vmatprep.subr.mxu0 %v366
    %830 = vmatpush2.msra.mxu0 %v365
    %831 = vmatprep.subr.mxu0 %v362
    %832 = vmatpush2.msra.mxu0 %v361
    %833 = vmatprep.subr.mxu0 %v358
    %834 = vmatpush2.msra.mxu0 %v357
    %835 = vmatprep.subr.mxu0 %v354
    %836 = vmatpush2.msra.mxu0 %v353
    %837 = vmatprep.subr.mxu0 %v350
    %838 = vmatpush2.msra.mxu0 %v349
    %839 = vmatprep.subr.mxu0 %v346
    %840 = vmatpush2.msra.mxu0 %v345
    %841 = vmatprep.subr.mxu0 %v342
    %842 = vmatpush2.msra.mxu0 %v341
    %843 = vmatprep.mubr.f32.mxu0 %v244
    %844 = vmatmul.mubr.f32.gmra.mxu0 %v243
    %v845 = vpop.f32.mrf.mxu0
    %v846 = vadd.f32 %v544, %v845
    %v847 = vpop.f32.mrf.mxu0
    %v848 = vadd.f32 %v548, %v847
    %849 = vmatprep.mubr.f32.mxu0 %v248
    %850 = vmatmul.mubr.f32.gmra.mxu0 %v247
    %v851 = vpop.f32.mrf.mxu0
    %v852 = vadd.f32 %v544, %v851
    %v853 = vpop.f32.mrf.mxu0
    %v854 = vadd.f32 %v548, %v853
    %855 = vmatprep.mubr.f32.mxu0 %v252
    %856 = vmatmul.mubr.f32.gmra.mxu0 %v251
    %v857 = vpop.f32.mrf.mxu0
    %v858 = vadd.f32 %v544, %v857
    %v859 = vpop.f32.mrf.mxu0
    %v860 = vadd.f32 %v548, %v859
    %861 = vmatprep.mubr.f32.mxu0 %v256
    %862 = vmatmul.mubr.f32.gmra.mxu0 %v255
    %v863 = vpop.f32.mrf.mxu0
    %v864 = vadd.f32 %v544, %v863
    %v865 = vpop.f32.mrf.mxu0
    %v866 = vadd.f32 %v548, %v865
    %867 = vmatprep.mubr.f32.mxu0 %v260
    %868 = vmatmul.mubr.f32.gmra.mxu0 %v259
    %v869 = vpop.f32.mrf.mxu0
    %v870 = vadd.f32 %v544, %v869
    %v871 = vpop.f32.mrf.mxu0
    %v872 = vadd.f32 %v548, %v871
    %873 = vmatprep.mubr.f32.mxu0 %v264
    %874 = vmatmul.mubr.f32.gmra.mxu0 %v263
    %v875 = vpop.f32.mrf.mxu0
    %v876 = vadd.f32 %v544, %v875
    %v877 = vpop.f32.mrf.mxu0
    %v878 = vadd.f32 %v548, %v877
    %879 = vmatprep.mubr.f32.mxu0 %v268
    %880 = vmatmul.mubr.f32.gmra.mxu0 %v267
    %v881 = vpop.f32.mrf.mxu0
    %v882 = vadd.f32 %v544, %v881
    %v883 = vpop.f32.mrf.mxu0
    %v884 = vadd.f32 %v548, %v883
    %885 = vmatprep.mubr.f32.mxu0 %v272
    %886 = vmatmul.mubr.f32.gmra.mxu0 %v271
    %v887 = vpop.f32.mrf.mxu0
    %v888 = vadd.f32 %v544, %v887
    %v889 = vpop.f32.mrf.mxu0
    %v890 = vadd.f32 %v548, %v889
    %891 = vdwg.mxu0
    %892 = vmatprep.subr.mxu0 %v466
    %893 = vmatpush1.msra.mxu0 %v465
    %894 = vmatprep.subr.mxu0 %v462
    %895 = vmatpush1.msra.mxu0 %v461
    %896 = vmatprep.subr.mxu0 %v458
    %897 = vmatpush1.msra.mxu0 %v457
    %898 = vmatprep.subr.mxu0 %v454
    %899 = vmatpush1.msra.mxu0 %v453
    %900 = vmatprep.subr.mxu0 %v450
    %901 = vmatpush1.msra.mxu0 %v449
    %902 = vmatprep.subr.mxu0 %v446
    %903 = vmatpush1.msra.mxu0 %v445
    %904 = vmatprep.subr.mxu0 %v442
    %905 = vmatpush1.msra.mxu0 %v441
    %906 = vmatprep.subr.mxu0 %v438
    %907 = vmatpush1.msra.mxu0 %v437
    %908 = vmatprep.subr.mxu0 %v434
    %909 = vmatpush1.msra.mxu0 %v433
    %910 = vmatprep.subr.mxu0 %v430
    %911 = vmatpush1.msra.mxu0 %v429
    %912 = vmatprep.subr.mxu0 %v426
    %913 = vmatpush1.msra.mxu0 %v425
    %914 = vmatprep.subr.mxu0 %v422
    %915 = vmatpush1.msra.mxu0 %v421
    %916 = vmatprep.subr.mxu0 %v418
    %917 = vmatpush1.msra.mxu0 %v417
    %918 = vmatprep.subr.mxu0 %v414
    %919 = vmatpush1.msra.mxu0 %v413
    %920 = vmatprep.subr.mxu0 %v410
    %921 = vmatpush1.msra.mxu0 %v409
    %922 = vmatprep.subr.mxu0 %v406
    %923 = vmatpush1.msra.mxu0 %v405
    %924 = vmatprep.subr.mxu0 %v530
    %925 = vmatpush2.msra.mxu0 %v529
    %926 = vmatprep.subr.mxu0 %v526
    %927 = vmatpush2.msra.mxu0 %v525
    %928 = vmatprep.subr.mxu0 %v522
    %929 = vmatpush2.msra.mxu0 %v521
    %930 = vmatprep.subr.mxu0 %v518
    %931 = vmatpush2.msra.mxu0 %v517
    %932 = vmatprep.subr.mxu0 %v514
    %933 = vmatpush2.msra.mxu0 %v513
    %934 = vmatprep.subr.mxu0 %v510
    %935 = vmatpush2.msra.mxu0 %v509
    %936 = vmatprep.subr.mxu0 %v506
    %937 = vmatpush2.msra.mxu0 %v505
    %938 = vmatprep.subr.mxu0 %v502
    %939 = vmatpush2.msra.mxu0 %v501
    %940 = vmatprep.subr.mxu0 %v498
    %941 = vmatpush2.msra.mxu0 %v497
    %942 = vmatprep.subr.mxu0 %v494
    %943 = vmatpush2.msra.mxu0 %v493
    %944 = vmatprep.subr.mxu0 %v490
    %945 = vmatpush2.msra.mxu0 %v489
    %946 = vmatprep.subr.mxu0 %v486
    %947 = vmatpush2.msra.mxu0 %v485
    %948 = vmatprep.subr.mxu0 %v482
    %949 = vmatpush2.msra.mxu0 %v481
    %950 = vmatprep.subr.mxu0 %v478
    %951 = vmatpush2.msra.mxu0 %v477
    %952 = vmatprep.subr.mxu0 %v474
    %953 = vmatpush2.msra.mxu0 %v473
    %954 = vmatprep.subr.mxu0 %v470
    %955 = vmatpush2.msra.mxu0 %v469
    %956 = vmatprep.mubr.f32.mxu0 %v246
    %957 = vmatmul.mubr.f32.gmra.mxu0 %v245
    %v958 = vpop.f32.mrf.mxu0
    %v959 = vadd.f32 %v846, %v958
    %v960 = vpop.f32.mrf.mxu0
    %v961 = vadd.f32 %v848, %v960
    %962 = vmatprep.mubr.f32.mxu0 %v250
    %963 = vmatmul.mubr.f32.gmra.mxu0 %v249
    %v964 = vpop.f32.mrf.mxu0
    %v965 = vadd.f32 %v852, %v964
    %v966 = vpop.f32.mrf.mxu0
    %v967 = vadd.f32 %v854, %v966
    %968 = vmatprep.mubr.f32.mxu0 %v254
    %969 = vmatmul.mubr.f32.gmra.mxu0 %v253
    %v970 = vpop.f32.mrf.mxu0
    %v971 = vadd.f32 %v858, %v970
    %v972 = vpop.f32.mrf.mxu0
    %v973 = vadd.f32 %v860, %v972
    %974 = vmatprep.mubr.f32.mxu0 %v258
    %975 = vmatmul.mubr.f32.gmra.mxu0 %v257
    %v976 = vpop.f32.mrf.mxu0
    %v977 = vadd.f32 %v864, %v976
    %v978 = vpop.f32.mrf.mxu0
    %v979 = vadd.f32 %v866, %v978
    %980 = vmatprep.mubr.f32.mxu0 %v262
    %981 = vmatmul.mubr.f32.gmra.mxu0 %v261
    %v982 = vpop.f32.mrf.mxu0
    %v983 = vadd.f32 %v870, %v982
    %v984 = vpop.f32.mrf.mxu0
    %v985 = vadd.f32 %v872, %v984
    %986 = vmatprep.mubr.f32.mxu0 %v266
    %987 = vmatmul.mubr.f32.gmra.mxu0 %v265
    %v988 = vpop.f32.mrf.mxu0
    %v989 = vadd.f32 %v876, %v988
    %v990 = vpop.f32.mrf.mxu0
    %v991 = vadd.f32 %v878, %v990
    %992 = vmatprep.mubr.f32.mxu0 %v270
    %993 = vmatmul.mubr.f32.gmra.mxu0 %v269
    %v994 = vpop.f32.mrf.mxu0
    %v995 = vadd.f32 %v882, %v994
    %v996 = vpop.f32.mrf.mxu0
    %v997 = vadd.f32 %v884, %v996
    %998 = vmatprep.mubr.f32.mxu0 %v274
    %999 = vmatmul.mubr.f32.gmra.mxu0 %v273
    %v1000 = vpop.f32.mrf.mxu0
    %v1001 = vadd.f32 %v888, %v1000
    %v1002 = vpop.f32.mrf.mxu0
    %v1003 = vadd.f32 %v890, %v1002
    %1004 = vdwg.mxu0
    %1005 = vst [vmem:[#allocation2] sm:$0xff] %v733
    %1006 = vst [vmem:[#allocation2 + $0x8] sm:$0xff] %v735
    %1007 = vst [vmem:[#allocation2 + $0x10] sm:$0xff] %v959
    %1008 = vst [vmem:[#allocation2 + $0x18] sm:$0xff] %v961
    %1009 = vst [vmem:[#allocation2 + $0x20] sm:$0xff] %v739
    %1010 = vst [vmem:[#allocation2 + $0x28] sm:$0xff] %v741
    %1011 = vst [vmem:[#allocation2 + $0x30] sm:$0xff] %v965
    %1012 = vst [vmem:[#allocation2 + $0x38] sm:$0xff] %v967
    %1013 = vst [vmem:[#allocation2 + $0x40] sm:$0xff] %v745
    %1014 = vst [vmem:[#allocation2 + $0x48] sm:$0xff] %v747
    %1015 = vst [vmem:[#allocation2 + $0x50] sm:$0xff] %v971
    %1016 = vst [vmem:[#allocation2 + $0x58] sm:$0xff] %v973
    %1017 = vst [vmem:[#allocation2 + $0x60] sm:$0xff] %v751
    %1018 = vst [vmem:[#allocation2 + $0x68] sm:$0xff] %v753
    %1019 = vst [vmem:[#allocation2 + $0x70] sm:$0xff] %v977
    %1020 = vst [vmem:[#allocation2 + $0x78] sm:$0xff] %v979
    %1021 = vst [vmem:[#allocation2 + $0x80] sm:$0xff] %v757
    %1022 = vst [vmem:[#allocation2 + $0x88] sm:$0xff] %v759
    %1023 = vst [vmem:[#allocation2 + $0x90] sm:$0xff] %v983
    %1024 = vst [vmem:[#allocation2 + $0x98] sm:$0xff] %v985
    %1025 = vst [vmem:[#allocation2 + $0xa0] sm:$0xff] %v763
    %1026 = vst [vmem:[#allocation2 + $0xa8] sm:$0xff] %v765
    %1027 = vst [vmem:[#allocation2 + $0xb0] sm:$0xff] %v989
    %1028 = vst [vmem:[#allocation2 + $0xb8] sm:$0xff] %v991
    %1029 = vst [vmem:[#allocation2 + $0xc0] sm:$0xff] %v769
    %1030 = vst [vmem:[#allocation2 + $0xc8] sm:$0xff] %v771
    %1031 = vst [vmem:[#allocation2 + $0xd0] sm:$0xff] %v995
    %1032 = vst [vmem:[#allocation2 + $0xd8] sm:$0xff] %v997
    %1033 = vst [vmem:[#allocation2 + $0xe0] sm:$0xff] %v775
    %1034 = vst [vmem:[#allocation2 + $0xe8] sm:$0xff] %v777
    %1035 = vst [vmem:[#allocation2 + $0xf0] sm:$0xff] %v1001
    %1036 = vst [vmem:[#allocation2 + $0xf8] sm:$0xff] %v1003
    %v1037 = vld [vmem:[#allocation16] sm:$0xff]
    %v1038 = vld [vmem:[#allocation16 + $0x8] sm:$0xff]
    %v1039 = vld [vmem:[#allocation16 + $0x10] sm:$0xff]
    %v1040 = vld [vmem:[#allocation16 + $0x18] sm:$0xff]
    %v1041 = vld [vmem:[#allocation16 + $0x20] sm:$0xff]
    %v1042 = vld [vmem:[#allocation16 + $0x28] sm:$0xff]
    %v1043 = vld [vmem:[#allocation16 + $0x30] sm:$0xff]
    %v1044 = vld [vmem:[#allocation16 + $0x38] sm:$0xff]
    %v1045 = vld [vmem:[#allocation16 + $0x40] sm:$0xff]
    %v1046 = vld [vmem:[#allocation16 + $0x48] sm:$0xff]
    %v1047 = vld [vmem:[#allocation16 + $0x50] sm:$0xff]
    %v1048 = vld [vmem:[#allocation16 + $0x58] sm:$0xff]
    %v1049 = vld [vmem:[#allocation16 + $0x60] sm:$0xff]
    %v1050 = vld [vmem:[#allocation16 + $0x68] sm:$0xff]
    %v1051 = vld [vmem:[#allocation16 + $0x70] sm:$0xff]
    %v1052 = vld [vmem:[#allocation16 + $0x78] sm:$0xff]
    %v1053 = vld [vmem:[#allocation16 + $0x80] sm:$0xff]
    %v1054 = vld [vmem:[#allocation16 + $0x88] sm:$0xff]
    %v1055 = vld [vmem:[#allocation16 + $0x90] sm:$0xff]
    %v1056 = vld [vmem:[#allocation16 + $0x98] sm:$0xff]
    %v1057 = vld [vmem:[#allocation16 + $0xa0] sm:$0xff]
    %v1058 = vld [vmem:[#allocation16 + $0xa8] sm:$0xff]
    %v1059 = vld [vmem:[#allocation16 + $0xb0] sm:$0xff]
    %v1060 = vld [vmem:[#allocation16 + $0xb8] sm:$0xff]
    %v1061 = vld [vmem:[#allocation16 + $0xc0] sm:$0xff]
    %v1062 = vld [vmem:[#allocation16 + $0xc8] sm:$0xff]
    %v1063 = vld [vmem:[#allocation16 + $0xd0] sm:$0xff]
    %v1064 = vld [vmem:[#allocation16 + $0xd8] sm:$0xff]
    %v1065 = vld [vmem:[#allocation16 + $0xe0] sm:$0xff]
    %v1066 = vld [vmem:[#allocation16 + $0xe8] sm:$0xff]
    %v1067 = vld [vmem:[#allocation16 + $0xf0] sm:$0xff]
    %v1068 = vld [vmem:[#allocation16 + $0xf8] sm:$0xff]
    %v1069 = vld [vmem:[#allocation16 + $0x100] sm:$0xff]
    %v1070 = vld [vmem:[#allocation16 + $0x108] sm:$0xff]
    %v1071 = vld [vmem:[#allocation16 + $0x110] sm:$0xff]
    %v1072 = vld [vmem:[#allocation16 + $0x118] sm:$0xff]
    %v1073 = vld [vmem:[#allocation16 + $0x120] sm:$0xff]
    %v1074 = vld [vmem:[#allocation16 + $0x128] sm:$0xff]
    %v1075 = vld [vmem:[#allocation16 + $0x130] sm:$0xff]
    %v1076 = vld [vmem:[#allocation16 + $0x138] sm:$0xff]
    %v1077 = vld [vmem:[#allocation16 + $0x140] sm:$0xff]
    %v1078 = vld [vmem:[#allocation16 + $0x148] sm:$0xff]
    %v1079 = vld [vmem:[#allocation16 + $0x150] sm:$0xff]
    %v1080 = vld [vmem:[#allocation16 + $0x158] sm:$0xff]
    %v1081 = vld [vmem:[#allocation16 + $0x160] sm:$0xff]
    %v1082 = vld [vmem:[#allocation16 + $0x168] sm:$0xff]
    %v1083 = vld [vmem:[#allocation16 + $0x170] sm:$0xff]
    %v1084 = vld [vmem:[#allocation16 + $0x178] sm:$0xff]
    %v1085 = vld [vmem:[#allocation16 + $0x180] sm:$0xff]
    %v1086 = vld [vmem:[#allocation16 + $0x188] sm:$0xff]
    %v1087 = vld [vmem:[#allocation16 + $0x190] sm:$0xff]
    %v1088 = vld [vmem:[#allocation16 + $0x198] sm:$0xff]
    %v1089 = vld [vmem:[#allocation16 + $0x1a0] sm:$0xff]
    %v1090 = vld [vmem:[#allocation16 + $0x1a8] sm:$0xff]
    %v1091 = vld [vmem:[#allocation16 + $0x1b0] sm:$0xff]
    %v1092 = vld [vmem:[#allocation16 + $0x1b8] sm:$0xff]
    %v1093 = vld [vmem:[#allocation16 + $0x1c0] sm:$0xff]
    %v1094 = vld [vmem:[#allocation16 + $0x1c8] sm:$0xff]
    %v1095 = vld [vmem:[#allocation16 + $0x1d0] sm:$0xff]
    %v1096 = vld [vmem:[#allocation16 + $0x1d8] sm:$0xff]
    %v1097 = vld [vmem:[#allocation16 + $0x1e0] sm:$0xff]
    %v1098 = vld [vmem:[#allocation16 + $0x1e8] sm:$0xff]
    %v1099 = vld [vmem:[#allocation16 + $0x1f0] sm:$0xff]
    %v1100 = vld [vmem:[#allocation16 + $0x1f8] sm:$0xff]
    %v1101 = vld [vmem:[#allocation16 + $0x200] sm:$0xff]
    %v1102 = vld [vmem:[#allocation16 + $0x208] sm:$0xff]
    %v1103 = vld [vmem:[#allocation16 + $0x210] sm:$0xff]
    %v1104 = vld [vmem:[#allocation16 + $0x218] sm:$0xff]
    %v1105 = vld [vmem:[#allocation16 + $0x220] sm:$0xff]
    %v1106 = vld [vmem:[#allocation16 + $0x228] sm:$0xff]
    %v1107 = vld [vmem:[#allocation16 + $0x230] sm:$0xff]
    %v1108 = vld [vmem:[#allocation16 + $0x238] sm:$0xff]
    %v1109 = vld [vmem:[#allocation16 + $0x240] sm:$0xff]
    %v1110 = vld [vmem:[#allocation16 + $0x248] sm:$0xff]
    %v1111 = vld [vmem:[#allocation16 + $0x250] sm:$0xff]
    %v1112 = vld [vmem:[#allocation16 + $0x258] sm:$0xff]
    %v1113 = vld [vmem:[#allocation16 + $0x260] sm:$0xff]
    %v1114 = vld [vmem:[#allocation16 + $0x268] sm:$0xff]
    %v1115 = vld [vmem:[#allocation16 + $0x270] sm:$0xff]
    %v1116 = vld [vmem:[#allocation16 + $0x278] sm:$0xff]
    %v1117 = vld [vmem:[#allocation16 + $0x280] sm:$0xff]
    %v1118 = vld [vmem:[#allocation16 + $0x288] sm:$0xff]
    %v1119 = vld [vmem:[#allocation16 + $0x290] sm:$0xff]
    %v1120 = vld [vmem:[#allocation16 + $0x298] sm:$0xff]
    %v1121 = vld [vmem:[#allocation16 + $0x2a0] sm:$0xff]
    %v1122 = vld [vmem:[#allocation16 + $0x2a8] sm:$0xff]
    %v1123 = vld [vmem:[#allocation16 + $0x2b0] sm:$0xff]
    %v1124 = vld [vmem:[#allocation16 + $0x2b8] sm:$0xff]
    %v1125 = vld [vmem:[#allocation16 + $0x2c0] sm:$0xff]
    %v1126 = vld [vmem:[#allocation16 + $0x2c8] sm:$0xff]
    %v1127 = vld [vmem:[#allocation16 + $0x2d0] sm:$0xff]
    %v1128 = vld [vmem:[#allocation16 + $0x2d8] sm:$0xff]
    %v1129 = vld [vmem:[#allocation16 + $0x2e0] sm:$0xff]
    %v1130 = vld [vmem:[#allocation16 + $0x2e8] sm:$0xff]
    %v1131 = vld [vmem:[#allocation16 + $0x2f0] sm:$0xff]
    %v1132 = vld [vmem:[#allocation16 + $0x2f8] sm:$0xff]
    %v1133 = vld [vmem:[#allocation16 + $0x300] sm:$0xff]
    %v1134 = vld [vmem:[#allocation16 + $0x308] sm:$0xff]
    %v1135 = vld [vmem:[#allocation16 + $0x310] sm:$0xff]
    %v1136 = vld [vmem:[#allocation16 + $0x318] sm:$0xff]
    %v1137 = vld [vmem:[#allocation16 + $0x320] sm:$0xff]
    %v1138 = vld [vmem:[#allocation16 + $0x328] sm:$0xff]
    %v1139 = vld [vmem:[#allocation16 + $0x330] sm:$0xff]
    %v1140 = vld [vmem:[#allocation16 + $0x338] sm:$0xff]
    %v1141 = vld [vmem:[#allocation16 + $0x340] sm:$0xff]
    %v1142 = vld [vmem:[#allocation16 + $0x348] sm:$0xff]
    %v1143 = vld [vmem:[#allocation16 + $0x350] sm:$0xff]
    %v1144 = vld [vmem:[#allocation16 + $0x358] sm:$0xff]
    %v1145 = vld [vmem:[#allocation16 + $0x360] sm:$0xff]
    %v1146 = vld [vmem:[#allocation16 + $0x368] sm:$0xff]
    %v1147 = vld [vmem:[#allocation16 + $0x370] sm:$0xff]
    %v1148 = vld [vmem:[#allocation16 + $0x378] sm:$0xff]
    %v1149 = vld [vmem:[#allocation16 + $0x380] sm:$0xff]
    %v1150 = vld [vmem:[#allocation16 + $0x388] sm:$0xff]
    %v1151 = vld [vmem:[#allocation16 + $0x390] sm:$0xff]
    %v1152 = vld [vmem:[#allocation16 + $0x398] sm:$0xff]
    %v1153 = vld [vmem:[#allocation16 + $0x3a0] sm:$0xff]
    %v1154 = vld [vmem:[#allocation16 + $0x3a8] sm:$0xff]
    %v1155 = vld [vmem:[#allocation16 + $0x3b0] sm:$0xff]
    %v1156 = vld [vmem:[#allocation16 + $0x3b8] sm:$0xff]
    %v1157 = vld [vmem:[#allocation16 + $0x3c0] sm:$0xff]
    %v1158 = vld [vmem:[#allocation16 + $0x3c8] sm:$0xff]
    %v1159 = vld [vmem:[#allocation16 + $0x3d0] sm:$0xff]
    %v1160 = vld [vmem:[#allocation16 + $0x3d8] sm:$0xff]
    %v1161 = vld [vmem:[#allocation16 + $0x3e0] sm:$0xff]
    %v1162 = vld [vmem:[#allocation16 + $0x3e8] sm:$0xff]
    %v1163 = vld [vmem:[#allocation16 + $0x3f0] sm:$0xff]
    %v1164 = vld [vmem:[#allocation16 + $0x3f8] sm:$0xff]
    %v1165 = vld [vmem:[#allocation16 + $0x400] sm:$0xff]
    %v1166 = vld [vmem:[#allocation16 + $0x408] sm:$0xff]
    %v1167 = vld [vmem:[#allocation16 + $0x410] sm:$0xff]
    %v1168 = vld [vmem:[#allocation16 + $0x418] sm:$0xff]
    %v1169 = vld [vmem:[#allocation16 + $0x420] sm:$0xff]
    %v1170 = vld [vmem:[#allocation16 + $0x428] sm:$0xff]
    %v1171 = vld [vmem:[#allocation16 + $0x430] sm:$0xff]
    %v1172 = vld [vmem:[#allocation16 + $0x438] sm:$0xff]
    %v1173 = vld [vmem:[#allocation16 + $0x440] sm:$0xff]
    %v1174 = vld [vmem:[#allocation16 + $0x448] sm:$0xff]
    %v1175 = vld [vmem:[#allocation16 + $0x450] sm:$0xff]
    %v1176 = vld [vmem:[#allocation16 + $0x458] sm:$0xff]
    %v1177 = vld [vmem:[#allocation16 + $0x460] sm:$0xff]
    %v1178 = vld [vmem:[#allocation16 + $0x468] sm:$0xff]
    %v1179 = vld [vmem:[#allocation16 + $0x470] sm:$0xff]
    %v1180 = vld [vmem:[#allocation16 + $0x478] sm:$0xff]
    %v1181 = vld [vmem:[#allocation16 + $0x480] sm:$0xff]
    %v1182 = vld [vmem:[#allocation16 + $0x488] sm:$0xff]
    %v1183 = vld [vmem:[#allocation16 + $0x490] sm:$0xff]
    %v1184 = vld [vmem:[#allocation16 + $0x498] sm:$0xff]
    %v1185 = vld [vmem:[#allocation16 + $0x4a0] sm:$0xff]
    %v1186 = vld [vmem:[#allocation16 + $0x4a8] sm:$0xff]
    %v1187 = vld [vmem:[#allocation16 + $0x4b0] sm:$0xff]
    %v1188 = vld [vmem:[#allocation16 + $0x4b8] sm:$0xff]
    %v1189 = vld [vmem:[#allocation16 + $0x4c0] sm:$0xff]
    %v1190 = vld [vmem:[#allocation16 + $0x4c8] sm:$0xff]
    %v1191 = vld [vmem:[#allocation16 + $0x4d0] sm:$0xff]
    %v1192 = vld [vmem:[#allocation16 + $0x4d8] sm:$0xff]
    %v1193 = vld [vmem:[#allocation16 + $0x4e0] sm:$0xff]
    %v1194 = vld [vmem:[#allocation16 + $0x4e8] sm:$0xff]
    %v1195 = vld [vmem:[#allocation16 + $0x4f0] sm:$0xff]
    %v1196 = vld [vmem:[#allocation16 + $0x4f8] sm:$0xff]
    %v1197 = vld [vmem:[#allocation16 + $0x500] sm:$0xff]
    %v1198 = vld [vmem:[#allocation16 + $0x508] sm:$0xff]
    %v1199 = vld [vmem:[#allocation16 + $0x510] sm:$0xff]
    %v1200 = vld [vmem:[#allocation16 + $0x518] sm:$0xff]
    %v1201 = vld [vmem:[#allocation16 + $0x520] sm:$0xff]
    %v1202 = vld [vmem:[#allocation16 + $0x528] sm:$0xff]
    %v1203 = vld [vmem:[#allocation16 + $0x530] sm:$0xff]
    %v1204 = vld [vmem:[#allocation16 + $0x538] sm:$0xff]
    %v1205 = vld [vmem:[#allocation16 + $0x540] sm:$0xff]
    %v1206 = vld [vmem:[#allocation16 + $0x548] sm:$0xff]
    %v1207 = vld [vmem:[#allocation16 + $0x550] sm:$0xff]
    %v1208 = vld [vmem:[#allocation16 + $0x558] sm:$0xff]
    %v1209 = vld [vmem:[#allocation16 + $0x560] sm:$0xff]
    %v1210 = vld [vmem:[#allocation16 + $0x568] sm:$0xff]
    %v1211 = vld [vmem:[#allocation16 + $0x570] sm:$0xff]
    %v1212 = vld [vmem:[#allocation16 + $0x578] sm:$0xff]
    %v1213 = vld [vmem:[#allocation16 + $0x580] sm:$0xff]
    %v1214 = vld [vmem:[#allocation16 + $0x588] sm:$0xff]
    %v1215 = vld [vmem:[#allocation16 + $0x590] sm:$0xff]
    %v1216 = vld [vmem:[#allocation16 + $0x598] sm:$0xff]
    %v1217 = vld [vmem:[#allocation16 + $0x5a0] sm:$0xff]
    %v1218 = vld [vmem:[#allocation16 + $0x5a8] sm:$0xff]
    %v1219 = vld [vmem:[#allocation16 + $0x5b0] sm:$0xff]
    %v1220 = vld [vmem:[#allocation16 + $0x5b8] sm:$0xff]
    %v1221 = vld [vmem:[#allocation16 + $0x5c0] sm:$0xff]
    %v1222 = vld [vmem:[#allocation16 + $0x5c8] sm:$0xff]
    %v1223 = vld [vmem:[#allocation16 + $0x5d0] sm:$0xff]
    %v1224 = vld [vmem:[#allocation16 + $0x5d8] sm:$0xff]
    %v1225 = vld [vmem:[#allocation16 + $0x5e0] sm:$0xff]
    %v1226 = vld [vmem:[#allocation16 + $0x5e8] sm:$0xff]
    %v1227 = vld [vmem:[#allocation16 + $0x5f0] sm:$0xff]
    %v1228 = vld [vmem:[#allocation16 + $0x5f8] sm:$0xff]
    %v1229 = vld [vmem:[#allocation16 + $0x600] sm:$0xff]
    %v1230 = vld [vmem:[#allocation16 + $0x608] sm:$0xff]
    %v1231 = vld [vmem:[#allocation16 + $0x610] sm:$0xff]
    %v1232 = vld [vmem:[#allocation16 + $0x618] sm:$0xff]
    %v1233 = vld [vmem:[#allocation16 + $0x620] sm:$0xff]
    %v1234 = vld [vmem:[#allocation16 + $0x628] sm:$0xff]
    %v1235 = vld [vmem:[#allocation16 + $0x630] sm:$0xff]
    %v1236 = vld [vmem:[#allocation16 + $0x638] sm:$0xff]
    %v1237 = vld [vmem:[#allocation16 + $0x640] sm:$0xff]
    %v1238 = vld [vmem:[#allocation16 + $0x648] sm:$0xff]
    %v1239 = vld [vmem:[#allocation16 + $0x650] sm:$0xff]
    %v1240 = vld [vmem:[#allocation16 + $0x658] sm:$0xff]
    %v1241 = vld [vmem:[#allocation16 + $0x660] sm:$0xff]
    %v1242 = vld [vmem:[#allocation16 + $0x668] sm:$0xff]
    %v1243 = vld [vmem:[#allocation16 + $0x670] sm:$0xff]
    %v1244 = vld [vmem:[#allocation16 + $0x678] sm:$0xff]
    %v1245 = vld [vmem:[#allocation16 + $0x680] sm:$0xff]
    %v1246 = vld [vmem:[#allocation16 + $0x688] sm:$0xff]
    %v1247 = vld [vmem:[#allocation16 + $0x690] sm:$0xff]
    %v1248 = vld [vmem:[#allocation16 + $0x698] sm:$0xff]
    %v1249 = vld [vmem:[#allocation16 + $0x6a0] sm:$0xff]
    %v1250 = vld [vmem:[#allocation16 + $0x6a8] sm:$0xff]
    %v1251 = vld [vmem:[#allocation16 + $0x6b0] sm:$0xff]
    %v1252 = vld [vmem:[#allocation16 + $0x6b8] sm:$0xff]
    %v1253 = vld [vmem:[#allocation16 + $0x6c0] sm:$0xff]
    %v1254 = vld [vmem:[#allocation16 + $0x6c8] sm:$0xff]
    %v1255 = vld [vmem:[#allocation16 + $0x6d0] sm:$0xff]
    %v1256 = vld [vmem:[#allocation16 + $0x6d8] sm:$0xff]
    %v1257 = vld [vmem:[#allocation16 + $0x6e0] sm:$0xff]
    %v1258 = vld [vmem:[#allocation16 + $0x6e8] sm:$0xff]
    %v1259 = vld [vmem:[#allocation16 + $0x6f0] sm:$0xff]
    %v1260 = vld [vmem:[#allocation16 + $0x6f8] sm:$0xff]
    %v1261 = vld [vmem:[#allocation16 + $0x700] sm:$0xff]
    %v1262 = vld [vmem:[#allocation16 + $0x708] sm:$0xff]
    %v1263 = vld [vmem:[#allocation16 + $0x710] sm:$0xff]
    %v1264 = vld [vmem:[#allocation16 + $0x718] sm:$0xff]
    %v1265 = vld [vmem:[#allocation16 + $0x720] sm:$0xff]
    %v1266 = vld [vmem:[#allocation16 + $0x728] sm:$0xff]
    %v1267 = vld [vmem:[#allocation16 + $0x730] sm:$0xff]
    %v1268 = vld [vmem:[#allocation16 + $0x738] sm:$0xff]
    %v1269 = vld [vmem:[#allocation16 + $0x740] sm:$0xff]
    %v1270 = vld [vmem:[#allocation16 + $0x748] sm:$0xff]
    %v1271 = vld [vmem:[#allocation16 + $0x750] sm:$0xff]
    %v1272 = vld [vmem:[#allocation16 + $0x758] sm:$0xff]
    %v1273 = vld [vmem:[#allocation16 + $0x760] sm:$0xff]
    %v1274 = vld [vmem:[#allocation16 + $0x768] sm:$0xff]
    %v1275 = vld [vmem:[#allocation16 + $0x770] sm:$0xff]
    %v1276 = vld [vmem:[#allocation16 + $0x778] sm:$0xff]
    %v1277 = vld [vmem:[#allocation16 + $0x780] sm:$0xff]
    %v1278 = vld [vmem:[#allocation16 + $0x788] sm:$0xff]
    %v1279 = vld [vmem:[#allocation16 + $0x790] sm:$0xff]
    %v1280 = vld [vmem:[#allocation16 + $0x798] sm:$0xff]
    %v1281 = vld [vmem:[#allocation16 + $0x7a0] sm:$0xff]
    %v1282 = vld [vmem:[#allocation16 + $0x7a8] sm:$0xff]
    %v1283 = vld [vmem:[#allocation16 + $0x7b0] sm:$0xff]
    %v1284 = vld [vmem:[#allocation16 + $0x7b8] sm:$0xff]
    %v1285 = vld [vmem:[#allocation16 + $0x7c0] sm:$0xff]
    %v1286 = vld [vmem:[#allocation16 + $0x7c8] sm:$0xff]
    %v1287 = vld [vmem:[#allocation16 + $0x7d0] sm:$0xff]
    %v1288 = vld [vmem:[#allocation16 + $0x7d8] sm:$0xff]
    %v1289 = vld [vmem:[#allocation16 + $0x7e0] sm:$0xff]
    %v1290 = vld [vmem:[#allocation16 + $0x7e8] sm:$0xff]
    %v1291 = vld [vmem:[#allocation16 + $0x7f0] sm:$0xff]
    %v1292 = vld [vmem:[#allocation16 + $0x7f8] sm:$0xff]
    %v1293 = vld [vmem:[%s8] sm:$0xf]
    %v1295 = vlaneseq
    %v1296 = vshrl.u32 %v1295, 7
    %v1297 = vsub.s32 0, %v1296
    %v1298 = vrot.slane %v1293, %v1297
    %v1299 = vlaneseq
    %v1300 = vshrl.u32 %v1299, 7
    %v1301 = vsub.s32 1, %v1300
    %v1302 = vrot.slane %v1293, %v1301
    %v1303 = vlaneseq
    %v1304 = vshrl.u32 %v1303, 7
    %v1305 = vsub.s32 2, %v1304
    %v1306 = vrot.slane %v1293, %v1305
    %v1307 = vlaneseq
    %v1308 = vshrl.u32 %v1307, 7
    %v1309 = vsub.s32 3, %v1308
    %v1310 = vrot.slane %v1293, %v1309
    %1315 = vmatprep.subr.mxu0 %v1098
    %1316 = vmatpush1.msra.mxu0 %v1097
    %1317 = vmatprep.subr.mxu0 %v1094
    %1318 = vmatpush1.msra.mxu0 %v1093
    %1319 = vmatprep.subr.mxu0 %v1090
    %1320 = vmatpush1.msra.mxu0 %v1089
    %1321 = vmatprep.subr.mxu0 %v1086
    %1322 = vmatpush1.msra.mxu0 %v1085
    %1323 = vmatprep.subr.mxu0 %v1082
    %1324 = vmatpush1.msra.mxu0 %v1081
    %1325 = vmatprep.subr.mxu0 %v1078
    %1326 = vmatpush1.msra.mxu0 %v1077
    %1327 = vmatprep.subr.mxu0 %v1074
    %1328 = vmatpush1.msra.mxu0 %v1073
    %1329 = vmatprep.subr.mxu0 %v1070
    %1330 = vmatpush1.msra.mxu0 %v1069
    %1331 = vmatprep.subr.mxu0 %v1066
    %1332 = vmatpush1.msra.mxu0 %v1065
    %1333 = vmatprep.subr.mxu0 %v1062
    %1334 = vmatpush1.msra.mxu0 %v1061
    %1335 = vmatprep.subr.mxu0 %v1058
    %1336 = vmatpush1.msra.mxu0 %v1057
    %1337 = vmatprep.subr.mxu0 %v1054
    %1338 = vmatpush1.msra.mxu0 %v1053
    %1339 = vmatprep.subr.mxu0 %v1050
    %1340 = vmatpush1.msra.mxu0 %v1049
    %1341 = vmatprep.subr.mxu0 %v1046
    %1342 = vmatpush1.msra.mxu0 %v1045
    %1343 = vmatprep.subr.mxu0 %v1042
    %1344 = vmatpush1.msra.mxu0 %v1041
    %1345 = vmatprep.subr.mxu0 %v1038
    %1346 = vmatpush1.msra.mxu0 %v1037
    %1347 = vmatprep.subr.mxu0 %v1162
    %1348 = vmatpush2.msra.mxu0 %v1161
    %1349 = vmatprep.subr.mxu0 %v1158
    %1350 = vmatpush2.msra.mxu0 %v1157
    %1351 = vmatprep.subr.mxu0 %v1154
    %1352 = vmatpush2.msra.mxu0 %v1153
    %1353 = vmatprep.subr.mxu0 %v1150
    %1354 = vmatpush2.msra.mxu0 %v1149
    %1355 = vmatprep.subr.mxu0 %v1146
    %1356 = vmatpush2.msra.mxu0 %v1145
    %1357 = vmatprep.subr.mxu0 %v1142
    %1358 = vmatpush2.msra.mxu0 %v1141
    %1359 = vmatprep.subr.mxu0 %v1138
    %1360 = vmatpush2.msra.mxu0 %v1137
    %1361 = vmatprep.subr.mxu0 %v1134
    %1362 = vmatpush2.msra.mxu0 %v1133
    %1363 = vmatprep.subr.mxu0 %v1130
    %1364 = vmatpush2.msra.mxu0 %v1129
    %1365 = vmatprep.subr.mxu0 %v1126
    %1366 = vmatpush2.msra.mxu0 %v1125
    %1367 = vmatprep.subr.mxu0 %v1122
    %1368 = vmatpush2.msra.mxu0 %v1121
    %1369 = vmatprep.subr.mxu0 %v1118
    %1370 = vmatpush2.msra.mxu0 %v1117
    %1371 = vmatprep.subr.mxu0 %v1114
    %1372 = vmatpush2.msra.mxu0 %v1113
    %1373 = vmatprep.subr.mxu0 %v1110
    %1374 = vmatpush2.msra.mxu0 %v1109
    %1375 = vmatprep.subr.mxu0 %v1106
    %1376 = vmatpush2.msra.mxu0 %v1105
    %1377 = vmatprep.subr.mxu0 %v1102
    %1378 = vmatpush2.msra.mxu0 %v1101
    %1379 = vmatprep.mubr.f32.mxu0 %v244
    %1380 = vmatmul.mubr.f32.gmra.mxu0 %v243
    %v1381 = vpop.f32.mrf.mxu0
    %v1382 = vadd.f32 %v1298, %v1381
    %v1383 = vpop.f32.mrf.mxu0
    %v1384 = vadd.f32 %v1302, %v1383
    %1385 = vmatprep.mubr.f32.mxu0 %v248
    %1386 = vmatmul.mubr.f32.gmra.mxu0 %v247
    %v1387 = vpop.f32.mrf.mxu0
    %v1388 = vadd.f32 %v1298, %v1387
    %v1389 = vpop.f32.mrf.mxu0
    %v1390 = vadd.f32 %v1302, %v1389
    %1391 = vmatprep.mubr.f32.mxu0 %v252
    %1392 = vmatmul.mubr.f32.gmra.mxu0 %v251
    %v1393 = vpop.f32.mrf.mxu0
    %v1394 = vadd.f32 %v1298, %v1393
    %v1395 = vpop.f32.mrf.mxu0
    %v1396 = vadd.f32 %v1302, %v1395
    %1397 = vmatprep.mubr.f32.mxu0 %v256
    %1398 = vmatmul.mubr.f32.gmra.mxu0 %v255
    %v1399 = vpop.f32.mrf.mxu0
    %v1400 = vadd.f32 %v1298, %v1399
    %v1401 = vpop.f32.mrf.mxu0
    %v1402 = vadd.f32 %v1302, %v1401
    %1403 = vmatprep.mubr.f32.mxu0 %v260
    %1404 = vmatmul.mubr.f32.gmra.mxu0 %v259
    %v1405 = vpop.f32.mrf.mxu0
    %v1406 = vadd.f32 %v1298, %v1405
    %v1407 = vpop.f32.mrf.mxu0
    %v1408 = vadd.f32 %v1302, %v1407
    %1409 = vmatprep.mubr.f32.mxu0 %v264
    %1410 = vmatmul.mubr.f32.gmra.mxu0 %v263
    %v1411 = vpop.f32.mrf.mxu0
    %v1412 = vadd.f32 %v1298, %v1411
    %v1413 = vpop.f32.mrf.mxu0
    %v1414 = vadd.f32 %v1302, %v1413
    %1415 = vmatprep.mubr.f32.mxu0 %v268
    %1416 = vmatmul.mubr.f32.gmra.mxu0 %v267
    %v1417 = vpop.f32.mrf.mxu0
    %v1418 = vadd.f32 %v1298, %v1417
    %v1419 = vpop.f32.mrf.mxu0
    %v1420 = vadd.f32 %v1302, %v1419
    %1421 = vmatprep.mubr.f32.mxu0 %v272
    %1422 = vmatmul.mubr.f32.gmra.mxu0 %v271
    %v1423 = vpop.f32.mrf.mxu0
    %v1424 = vadd.f32 %v1298, %v1423
    %v1425 = vpop.f32.mrf.mxu0
    %v1426 = vadd.f32 %v1302, %v1425
    %1427 = vdwg.mxu0
    %1428 = vmatprep.subr.mxu0 %v1226
    %1429 = vmatpush1.msra.mxu0 %v1225
    %1430 = vmatprep.subr.mxu0 %v1222
    %1431 = vmatpush1.msra.mxu0 %v1221
    %1432 = vmatprep.subr.mxu0 %v1218
    %1433 = vmatpush1.msra.mxu0 %v1217
    %1434 = vmatprep.subr.mxu0 %v1214
    %1435 = vmatpush1.msra.mxu0 %v1213
    %1436 = vmatprep.subr.mxu0 %v1210
    %1437 = vmatpush1.msra.mxu0 %v1209
    %1438 = vmatprep.subr.mxu0 %v1206
    %1439 = vmatpush1.msra.mxu0 %v1205
    %1440 = vmatprep.subr.mxu0 %v1202
    %1441 = vmatpush1.msra.mxu0 %v1201
    %1442 = vmatprep.subr.mxu0 %v1198
    %1443 = vmatpush1.msra.mxu0 %v1197
    %1444 = vmatprep.subr.mxu0 %v1194
    %1445 = vmatpush1.msra.mxu0 %v1193
    %1446 = vmatprep.subr.mxu0 %v1190
    %1447 = vmatpush1.msra.mxu0 %v1189
    %1448 = vmatprep.subr.mxu0 %v1186
    %1449 = vmatpush1.msra.mxu0 %v1185
    %1450 = vmatprep.subr.mxu0 %v1182
    %1451 = vmatpush1.msra.mxu0 %v1181
    %1452 = vmatprep.subr.mxu0 %v1178
    %1453 = vmatpush1.msra.mxu0 %v1177
    %1454 = vmatprep.subr.mxu0 %v1174
    %1455 = vmatpush1.msra.mxu0 %v1173
    %1456 = vmatprep.subr.mxu0 %v1170
    %1457 = vmatpush1.msra.mxu0 %v1169
    %1458 = vmatprep.subr.mxu0 %v1166
    %1459 = vmatpush1.msra.mxu0 %v1165
    %1460 = vmatprep.subr.mxu0 %v1290
    %1461 = vmatpush2.msra.mxu0 %v1289
    %1462 = vmatprep.subr.mxu0 %v1286
    %1463 = vmatpush2.msra.mxu0 %v1285
    %1464 = vmatprep.subr.mxu0 %v1282
    %1465 = vmatpush2.msra.mxu0 %v1281
    %1466 = vmatprep.subr.mxu0 %v1278
    %1467 = vmatpush2.msra.mxu0 %v1277
    %1468 = vmatprep.subr.mxu0 %v1274
    %1469 = vmatpush2.msra.mxu0 %v1273
    %1470 = vmatprep.subr.mxu0 %v1270
    %1471 = vmatpush2.msra.mxu0 %v1269
    %1472 = vmatprep.subr.mxu0 %v1266
    %1473 = vmatpush2.msra.mxu0 %v1265
    %1474 = vmatprep.subr.mxu0 %v1262
    %1475 = vmatpush2.msra.mxu0 %v1261
    %1476 = vmatprep.subr.mxu0 %v1258
    %1477 = vmatpush2.msra.mxu0 %v1257
    %1478 = vmatprep.subr.mxu0 %v1254
    %1479 = vmatpush2.msra.mxu0 %v1253
    %1480 = vmatprep.subr.mxu0 %v1250
    %1481 = vmatpush2.msra.mxu0 %v1249
    %1482 = vmatprep.subr.mxu0 %v1246
    %1483 = vmatpush2.msra.mxu0 %v1245
    %1484 = vmatprep.subr.mxu0 %v1242
    %1485 = vmatpush2.msra.mxu0 %v1241
    %1486 = vmatprep.subr.mxu0 %v1238
    %1487 = vmatpush2.msra.mxu0 %v1237
    %1488 = vmatprep.subr.mxu0 %v1234
    %1489 = vmatpush2.msra.mxu0 %v1233
    %1490 = vmatprep.subr.mxu0 %v1230
    %1491 = vmatpush2.msra.mxu0 %v1229
    %1492 = vmatprep.mubr.f32.mxu0 %v246
    %1493 = vmatmul.mubr.f32.gmra.mxu0 %v245
    %v1494 = vpop.f32.mrf.mxu0
    %v1495 = vadd.f32 %v1382, %v1494
    %v1496 = vpop.f32.mrf.mxu0
    %v1497 = vadd.f32 %v1384, %v1496
    %1498 = vmatprep.mubr.f32.mxu0 %v250
    %1499 = vmatmul.mubr.f32.gmra.mxu0 %v249
    %v1500 = vpop.f32.mrf.mxu0
    %v1501 = vadd.f32 %v1388, %v1500
    %v1502 = vpop.f32.mrf.mxu0
    %v1503 = vadd.f32 %v1390, %v1502
    %1504 = vmatprep.mubr.f32.mxu0 %v254
    %1505 = vmatmul.mubr.f32.gmra.mxu0 %v253
    %v1506 = vpop.f32.mrf.mxu0
    %v1507 = vadd.f32 %v1394, %v1506
    %v1508 = vpop.f32.mrf.mxu0
    %v1509 = vadd.f32 %v1396, %v1508
    %1510 = vmatprep.mubr.f32.mxu0 %v258
    %1511 = vmatmul.mubr.f32.gmra.mxu0 %v257
    %v1512 = vpop.f32.mrf.mxu0
    %v1513 = vadd.f32 %v1400, %v1512
    %v1514 = vpop.f32.mrf.mxu0
    %v1515 = vadd.f32 %v1402, %v1514
    %1516 = vmatprep.mubr.f32.mxu0 %v262
    %1517 = vmatmul.mubr.f32.gmra.mxu0 %v261
    %v1518 = vpop.f32.mrf.mxu0
    %v1519 = vadd.f32 %v1406, %v1518
    %v1520 = vpop.f32.mrf.mxu0
    %v1521 = vadd.f32 %v1408, %v1520
    %1522 = vmatprep.mubr.f32.mxu0 %v266
    %1523 = vmatmul.mubr.f32.gmra.mxu0 %v265
    %v1524 = vpop.f32.mrf.mxu0
    %v1525 = vadd.f32 %v1412, %v1524
    %v1526 = vpop.f32.mrf.mxu0
    %v1527 = vadd.f32 %v1414, %v1526
    %1528 = vmatprep.mubr.f32.mxu0 %v270
    %1529 = vmatmul.mubr.f32.gmra.mxu0 %v269
    %v1530 = vpop.f32.mrf.mxu0
    %v1531 = vadd.f32 %v1418, %v1530
    %v1532 = vpop.f32.mrf.mxu0
    %v1533 = vadd.f32 %v1420, %v1532
    %1534 = vmatprep.mubr.f32.mxu0 %v274
    %1535 = vmatmul.mubr.f32.gmra.mxu0 %v273
    %v1536 = vpop.f32.mrf.mxu0
    %v1537 = vadd.f32 %v1424, %v1536
    %v1538 = vpop.f32.mrf.mxu0
    %v1539 = vadd.f32 %v1426, %v1538
    %1540 = vdwg.mxu0
    %1541 = vmatprep.subr.mxu0 %v1100
    %1542 = vmatpush1.msra.mxu0 %v1099
    %1543 = vmatprep.subr.mxu0 %v1096
    %1544 = vmatpush1.msra.mxu0 %v1095
    %1545 = vmatprep.subr.mxu0 %v1092
    %1546 = vmatpush1.msra.mxu0 %v1091
    %1547 = vmatprep.subr.mxu0 %v1088
    %1548 = vmatpush1.msra.mxu0 %v1087
    %1549 = vmatprep.subr.mxu0 %v1084
    %1550 = vmatpush1.msra.mxu0 %v1083
    %1551 = vmatprep.subr.mxu0 %v1080
    %1552 = vmatpush1.msra.mxu0 %v1079
    %1553 = vmatprep.subr.mxu0 %v1076
    %1554 = vmatpush1.msra.mxu0 %v1075
    %1555 = vmatprep.subr.mxu0 %v1072
    %1556 = vmatpush1.msra.mxu0 %v1071
    %1557 = vmatprep.subr.mxu0 %v1068
    %1558 = vmatpush1.msra.mxu0 %v1067
    %1559 = vmatprep.subr.mxu0 %v1064
    %1560 = vmatpush1.msra.mxu0 %v1063
    %1561 = vmatprep.subr.mxu0 %v1060
    %1562 = vmatpush1.msra.mxu0 %v1059
    %1563 = vmatprep.subr.mxu0 %v1056
    %1564 = vmatpush1.msra.mxu0 %v1055
    %1565 = vmatprep.subr.mxu0 %v1052
    %1566 = vmatpush1.msra.mxu0 %v1051
    %1567 = vmatprep.subr.mxu0 %v1048
    %1568 = vmatpush1.msra.mxu0 %v1047
    %1569 = vmatprep.subr.mxu0 %v1044
    %1570 = vmatpush1.msra.mxu0 %v1043
    %1571 = vmatprep.subr.mxu0 %v1040
    %1572 = vmatpush1.msra.mxu0 %v1039
    %1573 = vmatprep.subr.mxu0 %v1164
    %1574 = vmatpush2.msra.mxu0 %v1163
    %1575 = vmatprep.subr.mxu0 %v1160
    %1576 = vmatpush2.msra.mxu0 %v1159
    %1577 = vmatprep.subr.mxu0 %v1156
    %1578 = vmatpush2.msra.mxu0 %v1155
    %1579 = vmatprep.subr.mxu0 %v1152
    %1580 = vmatpush2.msra.mxu0 %v1151
    %1581 = vmatprep.subr.mxu0 %v1148
    %1582 = vmatpush2.msra.mxu0 %v1147
    %1583 = vmatprep.subr.mxu0 %v1144
    %1584 = vmatpush2.msra.mxu0 %v1143
    %1585 = vmatprep.subr.mxu0 %v1140
    %1586 = vmatpush2.msra.mxu0 %v1139
    %1587 = vmatprep.subr.mxu0 %v1136
    %1588 = vmatpush2.msra.mxu0 %v1135
    %1589 = vmatprep.subr.mxu0 %v1132
    %1590 = vmatpush2.msra.mxu0 %v1131
    %1591 = vmatprep.subr.mxu0 %v1128
    %1592 = vmatpush2.msra.mxu0 %v1127
    %1593 = vmatprep.subr.mxu0 %v1124
    %1594 = vmatpush2.msra.mxu0 %v1123
    %1595 = vmatprep.subr.mxu0 %v1120
    %1596 = vmatpush2.msra.mxu0 %v1119
    %1597 = vmatprep.subr.mxu0 %v1116
    %1598 = vmatpush2.msra.mxu0 %v1115
    %1599 = vmatprep.subr.mxu0 %v1112
    %1600 = vmatpush2.msra.mxu0 %v1111
    %1601 = vmatprep.subr.mxu0 %v1108
    %1602 = vmatpush2.msra.mxu0 %v1107
    %1603 = vmatprep.subr.mxu0 %v1104
    %1604 = vmatpush2.msra.mxu0 %v1103
    %1605 = vmatprep.mubr.f32.mxu0 %v244
    %1606 = vmatmul.mubr.f32.gmra.mxu0 %v243
    %v1607 = vpop.f32.mrf.mxu0
    %v1608 = vadd.f32 %v1306, %v1607
    %v1609 = vpop.f32.mrf.mxu0
    %v1610 = vadd.f32 %v1310, %v1609
    %1611 = vmatprep.mubr.f32.mxu0 %v248
    %1612 = vmatmul.mubr.f32.gmra.mxu0 %v247
    %v1613 = vpop.f32.mrf.mxu0
    %v1614 = vadd.f32 %v1306, %v1613
    %v1615 = vpop.f32.mrf.mxu0
    %v1616 = vadd.f32 %v1310, %v1615
    %1617 = vmatprep.mubr.f32.mxu0 %v252
    %1618 = vmatmul.mubr.f32.gmra.mxu0 %v251
    %v1619 = vpop.f32.mrf.mxu0
    %v1620 = vadd.f32 %v1306, %v1619
    %v1621 = vpop.f32.mrf.mxu0
    %v1622 = vadd.f32 %v1310, %v1621
    %1623 = vmatprep.mubr.f32.mxu0 %v256
    %1624 = vmatmul.mubr.f32.gmra.mxu0 %v255
    %v1625 = vpop.f32.mrf.mxu0
    %v1626 = vadd.f32 %v1306, %v1625
    %v1627 = vpop.f32.mrf.mxu0
    %v1628 = vadd.f32 %v1310, %v1627
    %1629 = vmatprep.mubr.f32.mxu0 %v260
    %1630 = vmatmul.mubr.f32.gmra.mxu0 %v259
    %v1631 = vpop.f32.mrf.mxu0
    %v1632 = vadd.f32 %v1306, %v1631
    %v1633 = vpop.f32.mrf.mxu0
    %v1634 = vadd.f32 %v1310, %v1633
    %1635 = vmatprep.mubr.f32.mxu0 %v264
    %1636 = vmatmul.mubr.f32.gmra.mxu0 %v263
    %v1637 = vpop.f32.mrf.mxu0
    %v1638 = vadd.f32 %v1306, %v1637
    %v1639 = vpop.f32.mrf.mxu0
    %v1640 = vadd.f32 %v1310, %v1639
    %1641 = vmatprep.mubr.f32.mxu0 %v268
    %1642 = vmatmul.mubr.f32.gmra.mxu0 %v267
    %v1643 = vpop.f32.mrf.mxu0
    %v1644 = vadd.f32 %v1306, %v1643
    %v1645 = vpop.f32.mrf.mxu0
    %v1646 = vadd.f32 %v1310, %v1645
    %1647 = vmatprep.mubr.f32.mxu0 %v272
    %1648 = vmatmul.mubr.f32.gmra.mxu0 %v271
    %v1649 = vpop.f32.mrf.mxu0
    %v1650 = vadd.f32 %v1306, %v1649
    %v1651 = vpop.f32.mrf.mxu0
    %v1652 = vadd.f32 %v1310, %v1651
    %1653 = vdwg.mxu0
    %1654 = vmatprep.subr.mxu0 %v1228
    %1655 = vmatpush1.msra.mxu0 %v1227
    %1656 = vmatprep.subr.mxu0 %v1224
    %1657 = vmatpush1.msra.mxu0 %v1223
    %1658 = vmatprep.subr.mxu0 %v1220
    %1659 = vmatpush1.msra.mxu0 %v1219
    %1660 = vmatprep.subr.mxu0 %v1216
    %1661 = vmatpush1.msra.mxu0 %v1215
    %1662 = vmatprep.subr.mxu0 %v1212
    %1663 = vmatpush1.msra.mxu0 %v1211
    %1664 = vmatprep.subr.mxu0 %v1208
    %1665 = vmatpush1.msra.mxu0 %v1207
    %1666 = vmatprep.subr.mxu0 %v1204
    %1667 = vmatpush1.msra.mxu0 %v1203
    %1668 = vmatprep.subr.mxu0 %v1200
    %1669 = vmatpush1.msra.mxu0 %v1199
    %1670 = vmatprep.subr.mxu0 %v1196
    %1671 = vmatpush1.msra.mxu0 %v1195
    %1672 = vmatprep.subr.mxu0 %v1192
    %1673 = vmatpush1.msra.mxu0 %v1191
    %1674 = vmatprep.subr.mxu0 %v1188
    %1675 = vmatpush1.msra.mxu0 %v1187
    %1676 = vmatprep.subr.mxu0 %v1184
    %1677 = vmatpush1.msra.mxu0 %v1183
    %1678 = vmatprep.subr.mxu0 %v1180
    %1679 = vmatpush1.msra.mxu0 %v1179
    %1680 = vmatprep.subr.mxu0 %v1176
    %1681 = vmatpush1.msra.mxu0 %v1175
    %1682 = vmatprep.subr.mxu0 %v1172
    %1683 = vmatpush1.msra.mxu0 %v1171
    %1684 = vmatprep.subr.mxu0 %v1168
    %1685 = vmatpush1.msra.mxu0 %v1167
    %1686 = vmatprep.subr.mxu0 %v1292
    %1687 = vmatpush2.msra.mxu0 %v1291
    %1688 = vmatprep.subr.mxu0 %v1288
    %1689 = vmatpush2.msra.mxu0 %v1287
    %1690 = vmatprep.subr.mxu0 %v1284
    %1691 = vmatpush2.msra.mxu0 %v1283
    %1692 = vmatprep.subr.mxu0 %v1280
    %1693 = vmatpush2.msra.mxu0 %v1279
    %1694 = vmatprep.subr.mxu0 %v1276
    %1695 = vmatpush2.msra.mxu0 %v1275
    %1696 = vmatprep.subr.mxu0 %v1272
    %1697 = vmatpush2.msra.mxu0 %v1271
    %1698 = vmatprep.subr.mxu0 %v1268
    %1699 = vmatpush2.msra.mxu0 %v1267
    %1700 = vmatprep.subr.mxu0 %v1264
    %1701 = vmatpush2.msra.mxu0 %v1263
    %1702 = vmatprep.subr.mxu0 %v1260
    %1703 = vmatpush2.msra.mxu0 %v1259
    %1704 = vmatprep.subr.mxu0 %v1256
    %1705 = vmatpush2.msra.mxu0 %v1255
    %1706 = vmatprep.subr.mxu0 %v1252
    %1707 = vmatpush2.msra.mxu0 %v1251
    %1708 = vmatprep.subr.mxu0 %v1248
    %1709 = vmatpush2.msra.mxu0 %v1247
    %1710 = vmatprep.subr.mxu0 %v1244
    %1711 = vmatpush2.msra.mxu0 %v1243
    %1712 = vmatprep.subr.mxu0 %v1240
    %1713 = vmatpush2.msra.mxu0 %v1239
    %1714 = vmatprep.subr.mxu0 %v1236
    %1715 = vmatpush2.msra.mxu0 %v1235
    %1716 = vmatprep.subr.mxu0 %v1232
    %1717 = vmatpush2.msra.mxu0 %v1231
    %1718 = vmatprep.mubr.f32.mxu0 %v246
    %1719 = vmatmul.mubr.f32.gmra.mxu0 %v245
    %v1720 = vpop.f32.mrf.mxu0
    %v1721 = vadd.f32 %v1608, %v1720
    %v1722 = vpop.f32.mrf.mxu0
    %v1723 = vadd.f32 %v1610, %v1722
    %1724 = vmatprep.mubr.f32.mxu0 %v250
    %1725 = vmatmul.mubr.f32.gmra.mxu0 %v249
    %v1726 = vpop.f32.mrf.mxu0
    %v1727 = vadd.f32 %v1614, %v1726
    %v1728 = vpop.f32.mrf.mxu0
    %v1729 = vadd.f32 %v1616, %v1728
    %1730 = vmatprep.mubr.f32.mxu0 %v254
    %1731 = vmatmul.mubr.f32.gmra.mxu0 %v253
    %v1732 = vpop.f32.mrf.mxu0
    %v1733 = vadd.f32 %v1620, %v1732
    %v1734 = vpop.f32.mrf.mxu0
    %v1735 = vadd.f32 %v1622, %v1734
    %1736 = vmatprep.mubr.f32.mxu0 %v258
    %1737 = vmatmul.mubr.f32.gmra.mxu0 %v257
    %v1738 = vpop.f32.mrf.mxu0
    %v1739 = vadd.f32 %v1626, %v1738
    %v1740 = vpop.f32.mrf.mxu0
    %v1741 = vadd.f32 %v1628, %v1740
    %1742 = vmatprep.mubr.f32.mxu0 %v262
    %1743 = vmatmul.mubr.f32.gmra.mxu0 %v261
    %v1744 = vpop.f32.mrf.mxu0
    %v1745 = vadd.f32 %v1632, %v1744
    %v1746 = vpop.f32.mrf.mxu0
    %v1747 = vadd.f32 %v1634, %v1746
    %1748 = vmatprep.mubr.f32.mxu0 %v266
    %1749 = vmatmul.mubr.f32.gmra.mxu0 %v265
    %v1750 = vpop.f32.mrf.mxu0
    %v1751 = vadd.f32 %v1638, %v1750
    %v1752 = vpop.f32.mrf.mxu0
    %v1753 = vadd.f32 %v1640, %v1752
    %1754 = vmatprep.mubr.f32.mxu0 %v270
    %1755 = vmatmul.mubr.f32.gmra.mxu0 %v269
    %v1756 = vpop.f32.mrf.mxu0
    %v1757 = vadd.f32 %v1644, %v1756
    %v1758 = vpop.f32.mrf.mxu0
    %v1759 = vadd.f32 %v1646, %v1758
    %1760 = vmatprep.mubr.f32.mxu0 %v274
    %1761 = vmatmul.mubr.f32.gmra.mxu0 %v273
    %v1762 = vpop.f32.mrf.mxu0
    %v1763 = vadd.f32 %v1650, %v1762
    %v1764 = vpop.f32.mrf.mxu0
    %v1765 = vadd.f32 %v1652, %v1764
    %1766 = vdwg.mxu0
    %1767 = vst [vmem:[#allocation3] sm:$0xff] %v1495
    %1768 = vst [vmem:[#allocation3 + $0x8] sm:$0xff] %v1497
    %1769 = vst [vmem:[#allocation3 + $0x10] sm:$0xff] %v1721
    %1770 = vst [vmem:[#allocation3 + $0x18] sm:$0xff] %v1723
    %1771 = vst [vmem:[#allocation3 + $0x20] sm:$0xff] %v1501
    %1772 = vst [vmem:[#allocation3 + $0x28] sm:$0xff] %v1503
    %1773 = vst [vmem:[#allocation3 + $0x30] sm:$0xff] %v1727
    %1774 = vst [vmem:[#allocation3 + $0x38] sm:$0xff] %v1729
    %1775 = vst [vmem:[#allocation3 + $0x40] sm:$0xff] %v1507
    %1776 = vst [vmem:[#allocation3 + $0x48] sm:$0xff] %v1509
    %1777 = vst [vmem:[#allocation3 + $0x50] sm:$0xff] %v1733
    %1778 = vst [vmem:[#allocation3 + $0x58] sm:$0xff] %v1735
    %1779 = vst [vmem:[#allocation3 + $0x60] sm:$0xff] %v1513
    %1780 = vst [vmem:[#allocation3 + $0x68] sm:$0xff] %v1515
    %1781 = vst [vmem:[#allocation3 + $0x70] sm:$0xff] %v1739
    %1782 = vst [vmem:[#allocation3 + $0x78] sm:$0xff] %v1741
    %1783 = vst [vmem:[#allocation3 + $0x80] sm:$0xff] %v1519
    %1784 = vst [vmem:[#allocation3 + $0x88] sm:$0xff] %v1521
    %1785 = vst [vmem:[#allocation3 + $0x90] sm:$0xff] %v1745
    %1786 = vst [vmem:[#allocation3 + $0x98] sm:$0xff] %v1747
    %1787 = vst [vmem:[#allocation3 + $0xa0] sm:$0xff] %v1525
    %1788 = vst [vmem:[#allocation3 + $0xa8] sm:$0xff] %v1527
    %1789 = vst [vmem:[#allocation3 + $0xb0] sm:$0xff] %v1751
    %1790 = vst [vmem:[#allocation3 + $0xb8] sm:$0xff] %v1753
    %1791 = vst [vmem:[#allocation3 + $0xc0] sm:$0xff] %v1531
    %1792 = vst [vmem:[#allocation3 + $0xc8] sm:$0xff] %v1533
    %1793 = vst [vmem:[#allocation3 + $0xd0] sm:$0xff] %v1757
    %1794 = vst [vmem:[#allocation3 + $0xd8] sm:$0xff] %v1759
    %1795 = vst [vmem:[#allocation3 + $0xe0] sm:$0xff] %v1537
    %1796 = vst [vmem:[#allocation3 + $0xe8] sm:$0xff] %v1539
    %1797 = vst [vmem:[#allocation3 + $0xf0] sm:$0xff] %v1763
    %1798 = vst [vmem:[#allocation3 + $0xf8] sm:$0xff] %v1765
    %v1799 = vld [vmem:[#allocation10] sm:$0xff]
    %v1800 = vld [vmem:[#allocation12] sm:$0xff]
    %s1801 = scalar_lea.vmem [#allocation10], 8
    %v1802 = vld [vmem:[%s1801] sm:$0xff]
    %s1803 = scalar_lea.vmem [#allocation12], 8
    %v1804 = vld [vmem:[%s1803] sm:$0xff]
    %v1805 = vld [vmem:[#allocation2] sm:$0xff]
    %v1806 = vld [vmem:[#allocation2 + $0x8] sm:$0xff]
    %v1807 = vld [vmem:[#allocation2 + $0x10] sm:$0xff]
    %v1808 = vld [vmem:[#allocation2 + $0x18] sm:$0xff]
    %v1809 = vld [vmem:[#allocation15] sm:$0xff]
    %v1810 = vld [vmem:[#allocation15 + $0x8] sm:$0xff]
    %v1811 = vld [vmem:[#allocation15 + $0x10] sm:$0xff]
    %v1812 = vld [vmem:[#allocation15 + $0x18] sm:$0xff]
    %v1813 = vld [vmem:[#allocation15 + $0x20] sm:$0xff]
    %v1814 = vld [vmem:[#allocation15 + $0x28] sm:$0xff]
    %v1815 = vld [vmem:[#allocation15 + $0x30] sm:$0xff]
    %v1816 = vld [vmem:[#allocation15 + $0x38] sm:$0xff]
    %v1817 = vld [vmem:[#allocation15 + $0x40] sm:$0xff]
    %v1818 = vld [vmem:[#allocation15 + $0x48] sm:$0xff]
    %v1819 = vld [vmem:[#allocation15 + $0x50] sm:$0xff]
    %v1820 = vld [vmem:[#allocation15 + $0x58] sm:$0xff]
    %v1821 = vld [vmem:[#allocation15 + $0x60] sm:$0xff]
    %v1822 = vld [vmem:[#allocation15 + $0x68] sm:$0xff]
    %v1823 = vld [vmem:[#allocation15 + $0x70] sm:$0xff]
    %v1824 = vld [vmem:[#allocation15 + $0x78] sm:$0xff]
    %v1825 = vld [vmem:[#allocation15 + $0x80] sm:$0xff]
    %v1826 = vld [vmem:[#allocation15 + $0x88] sm:$0xff]
    %v1827 = vld [vmem:[#allocation15 + $0x90] sm:$0xff]
    %v1828 = vld [vmem:[#allocation15 + $0x98] sm:$0xff]
    %v1829 = vld [vmem:[#allocation15 + $0xa0] sm:$0xff]
    %v1830 = vld [vmem:[#allocation15 + $0xa8] sm:$0xff]
    %v1831 = vld [vmem:[#allocation15 + $0xb0] sm:$0xff]
    %v1832 = vld [vmem:[#allocation15 + $0xb8] sm:$0xff]
    %v1833 = vld [vmem:[#allocation15 + $0xc0] sm:$0xff]
    %v1834 = vld [vmem:[#allocation15 + $0xc8] sm:$0xff]
    %v1835 = vld [vmem:[#allocation15 + $0xd0] sm:$0xff]
    %v1836 = vld [vmem:[#allocation15 + $0xd8] sm:$0xff]
    %v1837 = vld [vmem:[#allocation15 + $0xe0] sm:$0xff]
    %v1838 = vld [vmem:[#allocation15 + $0xe8] sm:$0xff]
    %v1839 = vld [vmem:[#allocation15 + $0xf0] sm:$0xff]
    %v1840 = vld [vmem:[#allocation15 + $0xf8] sm:$0xff]
    %v1841 = vld [vmem:[#allocation15 + $0x100] sm:$0xff]
    %v1842 = vld [vmem:[#allocation15 + $0x108] sm:$0xff]
    %v1843 = vld [vmem:[#allocation15 + $0x110] sm:$0xff]
    %v1844 = vld [vmem:[#allocation15 + $0x118] sm:$0xff]
    %v1845 = vld [vmem:[#allocation15 + $0x120] sm:$0xff]
    %v1846 = vld [vmem:[#allocation15 + $0x128] sm:$0xff]
    %v1847 = vld [vmem:[#allocation15 + $0x130] sm:$0xff]
    %v1848 = vld [vmem:[#allocation15 + $0x138] sm:$0xff]
    %v1849 = vld [vmem:[#allocation15 + $0x140] sm:$0xff]
    %v1850 = vld [vmem:[#allocation15 + $0x148] sm:$0xff]
    %v1851 = vld [vmem:[#allocation15 + $0x150] sm:$0xff]
    %v1852 = vld [vmem:[#allocation15 + $0x158] sm:$0xff]
    %v1853 = vld [vmem:[#allocation15 + $0x160] sm:$0xff]
    %v1854 = vld [vmem:[#allocation15 + $0x168] sm:$0xff]
    %v1855 = vld [vmem:[#allocation15 + $0x170] sm:$0xff]
    %v1856 = vld [vmem:[#allocation15 + $0x178] sm:$0xff]
    %v1857 = vld [vmem:[#allocation15 + $0x180] sm:$0xff]
    %v1858 = vld [vmem:[#allocation15 + $0x188] sm:$0xff]
    %v1859 = vld [vmem:[#allocation15 + $0x190] sm:$0xff]
    %v1860 = vld [vmem:[#allocation15 + $0x198] sm:$0xff]
    %v1861 = vld [vmem:[#allocation15 + $0x1a0] sm:$0xff]
    %v1862 = vld [vmem:[#allocation15 + $0x1a8] sm:$0xff]
    %v1863 = vld [vmem:[#allocation15 + $0x1b0] sm:$0xff]
    %v1864 = vld [vmem:[#allocation15 + $0x1b8] sm:$0xff]
    %v1865 = vld [vmem:[#allocation15 + $0x1c0] sm:$0xff]
    %v1866 = vld [vmem:[#allocation15 + $0x1c8] sm:$0xff]
    %v1867 = vld [vmem:[#allocation15 + $0x1d0] sm:$0xff]
    %v1868 = vld [vmem:[#allocation15 + $0x1d8] sm:$0xff]
    %v1869 = vld [vmem:[#allocation15 + $0x1e0] sm:$0xff]
    %v1870 = vld [vmem:[#allocation15 + $0x1e8] sm:$0xff]
    %v1871 = vld [vmem:[#allocation15 + $0x1f0] sm:$0xff]
    %v1872 = vld [vmem:[#allocation15 + $0x1f8] sm:$0xff]
    %1873 = vmatprep.subr.mxu0 %v1870
    %1874 = vmatpush1.msra.mxu0 %v1869
    %1875 = vmatprep.subr.mxu0 %v1866
    %1876 = vmatpush1.msra.mxu0 %v1865
    %1877 = vmatprep.subr.mxu0 %v1862
    %1878 = vmatpush1.msra.mxu0 %v1861
    %1879 = vmatprep.subr.mxu0 %v1858
    %1880 = vmatpush1.msra.mxu0 %v1857
    %1881 = vmatprep.subr.mxu0 %v1854
    %1882 = vmatpush1.msra.mxu0 %v1853
    %1883 = vmatprep.subr.mxu0 %v1850
    %1884 = vmatpush1.msra.mxu0 %v1849
    %1885 = vmatprep.subr.mxu0 %v1846
    %1886 = vmatpush1.msra.mxu0 %v1845
    %1887 = vmatprep.subr.mxu0 %v1842
    %1888 = vmatpush1.msra.mxu0 %v1841
    %1889 = vmatprep.subr.mxu0 %v1838
    %1890 = vmatpush1.msra.mxu0 %v1837
    %1891 = vmatprep.subr.mxu0 %v1834
    %1892 = vmatpush1.msra.mxu0 %v1833
    %1893 = vmatprep.subr.mxu0 %v1830
    %1894 = vmatpush1.msra.mxu0 %v1829
    %1895 = vmatprep.subr.mxu0 %v1826
    %1896 = vmatpush1.msra.mxu0 %v1825
    %1897 = vmatprep.subr.mxu0 %v1822
    %1898 = vmatpush1.msra.mxu0 %v1821
    %1899 = vmatprep.subr.mxu0 %v1818
    %1900 = vmatpush1.msra.mxu0 %v1817
    %1901 = vmatprep.subr.mxu0 %v1814
    %1902 = vmatpush1.msra.mxu0 %v1813
    %1903 = vmatprep.subr.mxu0 %v1810
    %1904 = vmatpush1.msra.mxu0 %v1809
    %1905 = vmatprep.subr.mxu0 0.0
    %1906 = vmatpush2.msra.mxu0 0.0
    %1907 = vmatprep.subr.mxu0 0.0
    %1908 = vmatpush2.msra.mxu0 0.0
    %1909 = vmatprep.subr.mxu0 0.0
    %1910 = vmatpush2.msra.mxu0 0.0
    %1911 = vmatprep.subr.mxu0 0.0
    %1912 = vmatpush2.msra.mxu0 0.0
    %1913 = vmatprep.subr.mxu0 0.0
    %1914 = vmatpush2.msra.mxu0 0.0
    %1915 = vmatprep.subr.mxu0 0.0
    %1916 = vmatpush2.msra.mxu0 0.0
    %1917 = vmatprep.subr.mxu0 0.0
    %1918 = vmatpush2.msra.mxu0 0.0
    %1919 = vmatprep.subr.mxu0 0.0
    %1920 = vmatpush2.msra.mxu0 0.0
    %1921 = vmatprep.subr.mxu0 0.0
    %1922 = vmatpush2.msra.mxu0 0.0
    %1923 = vmatprep.subr.mxu0 0.0
    %1924 = vmatpush2.msra.mxu0 0.0
    %1925 = vmatprep.subr.mxu0 0.0
    %1926 = vmatpush2.msra.mxu0 0.0
    %1927 = vmatprep.subr.mxu0 0.0
    %1928 = vmatpush2.msra.mxu0 0.0
    %1929 = vmatprep.subr.mxu0 0.0
    %1930 = vmatpush2.msra.mxu0 0.0
    %1931 = vmatprep.subr.mxu0 0.0
    %1932 = vmatpush2.msra.mxu0 0.0
    %1933 = vmatprep.subr.mxu0 0.0
    %1934 = vmatpush2.msra.mxu0 0.0
    %1935 = vmatprep.subr.mxu0 0.0
    %1936 = vmatpush2.msra.mxu0 0.0
    %1937 = vmatprep.mubr.f32.mxu0 0.0
    %1938 = vmatmul.mubr.f32.gmra.mxu0 %v1799
    %v1939 = vpop.f32.mrf.mxu0
    %v1940 = vadd.f32 %v1805, %v1939
    %v1941 = vpop.f32.mrf.mxu0
    %v1942 = vadd.f32 %v1806, %v1941
    %1943 = vdwg.mxu0
    %1944 = vmatprep.subr.mxu0 %v1872
    %1945 = vmatpush1.msra.mxu0 %v1871
    %1946 = vmatprep.subr.mxu0 %v1868
    %1947 = vmatpush1.msra.mxu0 %v1867
    %1948 = vmatprep.subr.mxu0 %v1864
    %1949 = vmatpush1.msra.mxu0 %v1863
    %1950 = vmatprep.subr.mxu0 %v1860
    %1951 = vmatpush1.msra.mxu0 %v1859
    %1952 = vmatprep.subr.mxu0 %v1856
    %1953 = vmatpush1.msra.mxu0 %v1855
    %1954 = vmatprep.subr.mxu0 %v1852
    %1955 = vmatpush1.msra.mxu0 %v1851
    %1956 = vmatprep.subr.mxu0 %v1848
    %1957 = vmatpush1.msra.mxu0 %v1847
    %1958 = vmatprep.subr.mxu0 %v1844
    %1959 = vmatpush1.msra.mxu0 %v1843
    %1960 = vmatprep.subr.mxu0 %v1840
    %1961 = vmatpush1.msra.mxu0 %v1839
    %1962 = vmatprep.subr.mxu0 %v1836
    %1963 = vmatpush1.msra.mxu0 %v1835
    %1964 = vmatprep.subr.mxu0 %v1832
    %1965 = vmatpush1.msra.mxu0 %v1831
    %1966 = vmatprep.subr.mxu0 %v1828
    %1967 = vmatpush1.msra.mxu0 %v1827
    %1968 = vmatprep.subr.mxu0 %v1824
    %1969 = vmatpush1.msra.mxu0 %v1823
    %1970 = vmatprep.subr.mxu0 %v1820
    %1971 = vmatpush1.msra.mxu0 %v1819
    %1972 = vmatprep.subr.mxu0 %v1816
    %1973 = vmatpush1.msra.mxu0 %v1815
    %1974 = vmatprep.subr.mxu0 %v1812
    %1975 = vmatpush1.msra.mxu0 %v1811
    %1976 = vmatprep.subr.mxu0 0.0
    %1977 = vmatpush2.msra.mxu0 0.0
    %1978 = vmatprep.subr.mxu0 0.0
    %1979 = vmatpush2.msra.mxu0 0.0
    %1980 = vmatprep.subr.mxu0 0.0
    %1981 = vmatpush2.msra.mxu0 0.0
    %1982 = vmatprep.subr.mxu0 0.0
    %1983 = vmatpush2.msra.mxu0 0.0
    %1984 = vmatprep.subr.mxu0 0.0
    %1985 = vmatpush2.msra.mxu0 0.0
    %1986 = vmatprep.subr.mxu0 0.0
    %1987 = vmatpush2.msra.mxu0 0.0
    %1988 = vmatprep.subr.mxu0 0.0
    %1989 = vmatpush2.msra.mxu0 0.0
    %1990 = vmatprep.subr.mxu0 0.0
    %1991 = vmatpush2.msra.mxu0 0.0
    %1992 = vmatprep.subr.mxu0 0.0
    %1993 = vmatpush2.msra.mxu0 0.0
    %1994 = vmatprep.subr.mxu0 0.0
    %1995 = vmatpush2.msra.mxu0 0.0
    %1996 = vmatprep.subr.mxu0 0.0
    %1997 = vmatpush2.msra.mxu0 0.0
    %1998 = vmatprep.subr.mxu0 0.0
    %1999 = vmatpush2.msra.mxu0 0.0
    %2000 = vmatprep.subr.mxu0 0.0
    %2001 = vmatpush2.msra.mxu0 0.0
    %2002 = vmatprep.subr.mxu0 0.0
    %2003 = vmatpush2.msra.mxu0 0.0
    %2004 = vmatprep.subr.mxu0 0.0
    %2005 = vmatpush2.msra.mxu0 0.0
    %2006 = vmatprep.subr.mxu0 0.0
    %2007 = vmatpush2.msra.mxu0 0.0
    %2008 = vmatprep.mubr.f32.mxu0 0.0
    %2009 = vmatmul.mubr.f32.gmra.mxu0 %v1799
    %v2010 = vpop.f32.mrf.mxu0
    %v2011 = vadd.f32 %v1807, %v2010
    %v2012 = vpop.f32.mrf.mxu0
    %v2013 = vadd.f32 %v1808, %v2012
    %2014 = vdwg.mxu0
    %v2015 = vsub.f32 0.0, %v1940
    %v2016 = vmul.f32 %v2015, 1.442695
    %v2017 = vpow.pop %v2016
    %v2018 = vadd.f32 %v2017, 1.0
    %v2019 = vrcp.pop %v2018
    %v2020 = vsub.f32 0.0, %v1942
    %v2021 = vmul.f32 %v2020, 1.442695
    %v2022 = vpow.pop %v2021
    %v2023 = vadd.f32 %v2022, 1.0
    %v2024 = vrcp.pop %v2023
    %v2025 = vtanh.pop %v2011
    %v2026 = vsub.f32 0.0, %v2013
    %v2027 = vmul.f32 %v2026, 1.442695
    %v2028 = vpow.pop %v2027
    %v2029 = vadd.f32 %v2028, 1.0
    %v2030 = vrcp.pop %v2029
    %v2031 = vmul.f32 %v2024, %v1800
    %v2032 = vmul.f32 %v2019, %v2025
    %v2033 = vadd.f32 %v2031, %v2032
    %v2034 = vtanh.pop %v2033
    %v2035 = vmul.f32 %v2030, %v2034
    %v2036 = vld [vmem:[#allocation3 + $0xe0] sm:$0xff]
    %v2037 = vld [vmem:[#allocation3 + $0xe8] sm:$0xff]
    %v2038 = vld [vmem:[#allocation3 + $0xf0] sm:$0xff]
    %v2039 = vld [vmem:[#allocation3 + $0xf8] sm:$0xff]
    %v2040 = vld [vmem:[#allocation18] sm:$0xff]
    %v2041 = vld [vmem:[#allocation18 + $0x8] sm:$0xff]
    %v2042 = vld [vmem:[#allocation18 + $0x10] sm:$0xff]
    %v2043 = vld [vmem:[#allocation18 + $0x18] sm:$0xff]
    %v2044 = vld [vmem:[#allocation18 + $0x20] sm:$0xff]
    %v2045 = vld [vmem:[#allocation18 + $0x28] sm:$0xff]
    %v2046 = vld [vmem:[#allocation18 + $0x30] sm:$0xff]
    %v2047 = vld [vmem:[#allocation18 + $0x38] sm:$0xff]
    %v2048 = vld [vmem:[#allocation18 + $0x40] sm:$0xff]
    %v2049 = vld [vmem:[#allocation18 + $0x48] sm:$0xff]
    %v2050 = vld [vmem:[#allocation18 + $0x50] sm:$0xff]
    %v2051 = vld [vmem:[#allocation18 + $0x58] sm:$0xff]
    %v2052 = vld [vmem:[#allocation18 + $0x60] sm:$0xff]
    %v2053 = vld [vmem:[#allocation18 + $0x68] sm:$0xff]
    %v2054 = vld [vmem:[#allocation18 + $0x70] sm:$0xff]
    %v2055 = vld [vmem:[#allocation18 + $0x78] sm:$0xff]
    %v2056 = vld [vmem:[#allocation18 + $0x80] sm:$0xff]
    %v2057 = vld [vmem:[#allocation18 + $0x88] sm:$0xff]
    %v2058 = vld [vmem:[#allocation18 + $0x90] sm:$0xff]
    %v2059 = vld [vmem:[#allocation18 + $0x98] sm:$0xff]
    %v2060 = vld [vmem:[#allocation18 + $0xa0] sm:$0xff]
    %v2061 = vld [vmem:[#allocation18 + $0xa8] sm:$0xff]
    %v2062 = vld [vmem:[#allocation18 + $0xb0] sm:$0xff]
    %v2063 = vld [vmem:[#allocation18 + $0xb8] sm:$0xff]
    %v2064 = vld [vmem:[#allocation18 + $0xc0] sm:$0xff]
    %v2065 = vld [vmem:[#allocation18 + $0xc8] sm:$0xff]
    %v2066 = vld [vmem:[#allocation18 + $0xd0] sm:$0xff]
    %v2067 = vld [vmem:[#allocation18 + $0xd8] sm:$0xff]
    %v2068 = vld [vmem:[#allocation18 + $0xe0] sm:$0xff]
    %v2069 = vld [vmem:[#allocation18 + $0xe8] sm:$0xff]
    %v2070 = vld [vmem:[#allocation18 + $0xf0] sm:$0xff]
    %v2071 = vld [vmem:[#allocation18 + $0xf8] sm:$0xff]
    %v2072 = vld [vmem:[#allocation18 + $0x100] sm:$0xff]
    %v2073 = vld [vmem:[#allocation18 + $0x108] sm:$0xff]
    %v2074 = vld [vmem:[#allocation18 + $0x110] sm:$0xff]
    %v2075 = vld [vmem:[#allocation18 + $0x118] sm:$0xff]
    %v2076 = vld [vmem:[#allocation18 + $0x120] sm:$0xff]
    %v2077 = vld [vmem:[#allocation18 + $0x128] sm:$0xff]
    %v2078 = vld [vmem:[#allocation18 + $0x130] sm:$0xff]
    %v2079 = vld [vmem:[#allocation18 + $0x138] sm:$0xff]
    %v2080 = vld [vmem:[#allocation18 + $0x140] sm:$0xff]
    %v2081 = vld [vmem:[#allocation18 + $0x148] sm:$0xff]
    %v2082 = vld [vmem:[#allocation18 + $0x150] sm:$0xff]
    %v2083 = vld [vmem:[#allocation18 + $0x158] sm:$0xff]
    %v2084 = vld [vmem:[#allocation18 + $0x160] sm:$0xff]
    %v2085 = vld [vmem:[#allocation18 + $0x168] sm:$0xff]
    %v2086 = vld [vmem:[#allocation18 + $0x170] sm:$0xff]
    %v2087 = vld [vmem:[#allocation18 + $0x178] sm:$0xff]
    %v2088 = vld [vmem:[#allocation18 + $0x180] sm:$0xff]
    %v2089 = vld [vmem:[#allocation18 + $0x188] sm:$0xff]
    %v2090 = vld [vmem:[#allocation18 + $0x190] sm:$0xff]
    %v2091 = vld [vmem:[#allocation18 + $0x198] sm:$0xff]
    %v2092 = vld [vmem:[#allocation18 + $0x1a0] sm:$0xff]
    %v2093 = vld [vmem:[#allocation18 + $0x1a8] sm:$0xff]
    %v2094 = vld [vmem:[#allocation18 + $0x1b0] sm:$0xff]
    %v2095 = vld [vmem:[#allocation18 + $0x1b8] sm:$0xff]
    %v2096 = vld [vmem:[#allocation18 + $0x1c0] sm:$0xff]
    %v2097 = vld [vmem:[#allocation18 + $0x1c8] sm:$0xff]
    %v2098 = vld [vmem:[#allocation18 + $0x1d0] sm:$0xff]
    %v2099 = vld [vmem:[#allocation18 + $0x1d8] sm:$0xff]
    %v2100 = vld [vmem:[#allocation18 + $0x1e0] sm:$0xff]
    %v2101 = vld [vmem:[#allocation18 + $0x1e8] sm:$0xff]
    %v2102 = vld [vmem:[#allocation18 + $0x1f0] sm:$0xff]
    %v2103 = vld [vmem:[#allocation18 + $0x1f8] sm:$0xff]
    %2104 = vmatprep.subr.mxu0 %v2101
    %2105 = vmatpush1.msra.mxu0 %v2100
    %2106 = vmatprep.subr.mxu0 %v2097
    %2107 = vmatpush1.msra.mxu0 %v2096
    %2108 = vmatprep.subr.mxu0 %v2093
    %2109 = vmatpush1.msra.mxu0 %v2092
    %2110 = vmatprep.subr.mxu0 %v2089
    %2111 = vmatpush1.msra.mxu0 %v2088
    %2112 = vmatprep.subr.mxu0 %v2085
    %2113 = vmatpush1.msra.mxu0 %v2084
    %2114 = vmatprep.subr.mxu0 %v2081
    %2115 = vmatpush1.msra.mxu0 %v2080
    %2116 = vmatprep.subr.mxu0 %v2077
    %2117 = vmatpush1.msra.mxu0 %v2076
    %2118 = vmatprep.subr.mxu0 %v2073
    %2119 = vmatpush1.msra.mxu0 %v2072
    %2120 = vmatprep.subr.mxu0 %v2069
    %2121 = vmatpush1.msra.mxu0 %v2068
    %2122 = vmatprep.subr.mxu0 %v2065
    %2123 = vmatpush1.msra.mxu0 %v2064
    %2124 = vmatprep.subr.mxu0 %v2061
    %2125 = vmatpush1.msra.mxu0 %v2060
    %2126 = vmatprep.subr.mxu0 %v2057
    %2127 = vmatpush1.msra.mxu0 %v2056
    %2128 = vmatprep.subr.mxu0 %v2053
    %2129 = vmatpush1.msra.mxu0 %v2052
    %2130 = vmatprep.subr.mxu0 %v2049
    %2131 = vmatpush1.msra.mxu0 %v2048
    %2132 = vmatprep.subr.mxu0 %v2045
    %2133 = vmatpush1.msra.mxu0 %v2044
    %2134 = vmatprep.subr.mxu0 %v2041
    %2135 = vmatpush1.msra.mxu0 %v2040
    %2136 = vmatprep.subr.mxu0 0.0
    %2137 = vmatpush2.msra.mxu0 0.0
    %2138 = vmatprep.subr.mxu0 0.0
    %2139 = vmatpush2.msra.mxu0 0.0
    %2140 = vmatprep.subr.mxu0 0.0
    %2141 = vmatpush2.msra.mxu0 0.0
    %2142 = vmatprep.subr.mxu0 0.0
    %2143 = vmatpush2.msra.mxu0 0.0
    %2144 = vmatprep.subr.mxu0 0.0
    %2145 = vmatpush2.msra.mxu0 0.0
    %2146 = vmatprep.subr.mxu0 0.0
    %2147 = vmatpush2.msra.mxu0 0.0
    %2148 = vmatprep.subr.mxu0 0.0
    %2149 = vmatpush2.msra.mxu0 0.0
    %2150 = vmatprep.subr.mxu0 0.0
    %2151 = vmatpush2.msra.mxu0 0.0
    %2152 = vmatprep.subr.mxu0 0.0
    %2153 = vmatpush2.msra.mxu0 0.0
    %2154 = vmatprep.subr.mxu0 0.0
    %2155 = vmatpush2.msra.mxu0 0.0
    %2156 = vmatprep.subr.mxu0 0.0
    %2157 = vmatpush2.msra.mxu0 0.0
    %2158 = vmatprep.subr.mxu0 0.0
    %2159 = vmatpush2.msra.mxu0 0.0
    %2160 = vmatprep.subr.mxu0 0.0
    %2161 = vmatpush2.msra.mxu0 0.0
    %2162 = vmatprep.subr.mxu0 0.0
    %2163 = vmatpush2.msra.mxu0 0.0
    %2164 = vmatprep.subr.mxu0 0.0
    %2165 = vmatpush2.msra.mxu0 0.0
    %2166 = vmatprep.subr.mxu0 0.0
    %2167 = vmatpush2.msra.mxu0 0.0
    %2168 = vmatprep.mubr.f32.mxu0 0.0
    %2169 = vmatmul.mubr.f32.gmra.mxu0 %v1802
    %v2170 = vpop.f32.mrf.mxu0
    %v2171 = vadd.f32 %v2036, %v2170
    %v2172 = vpop.f32.mrf.mxu0
    %v2173 = vadd.f32 %v2037, %v2172
    %2174 = vdwg.mxu0
    %2175 = vmatprep.subr.mxu0 %v2103
    %2176 = vmatpush1.msra.mxu0 %v2102
    %2177 = vmatprep.subr.mxu0 %v2099
    %2178 = vmatpush1.msra.mxu0 %v2098
    %2179 = vmatprep.subr.mxu0 %v2095
    %2180 = vmatpush1.msra.mxu0 %v2094
    %2181 = vmatprep.subr.mxu0 %v2091
    %2182 = vmatpush1.msra.mxu0 %v2090
    %2183 = vmatprep.subr.mxu0 %v2087
    %2184 = vmatpush1.msra.mxu0 %v2086
    %2185 = vmatprep.subr.mxu0 %v2083
    %2186 = vmatpush1.msra.mxu0 %v2082
    %2187 = vmatprep.subr.mxu0 %v2079
    %2188 = vmatpush1.msra.mxu0 %v2078
    %2189 = vmatprep.subr.mxu0 %v2075
    %2190 = vmatpush1.msra.mxu0 %v2074
    %2191 = vmatprep.subr.mxu0 %v2071
    %2192 = vmatpush1.msra.mxu0 %v2070
    %2193 = vmatprep.subr.mxu0 %v2067
    %2194 = vmatpush1.msra.mxu0 %v2066
    %2195 = vmatprep.subr.mxu0 %v2063
    %2196 = vmatpush1.msra.mxu0 %v2062
    %2197 = vmatprep.subr.mxu0 %v2059
    %2198 = vmatpush1.msra.mxu0 %v2058
    %2199 = vmatprep.subr.mxu0 %v2055
    %2200 = vmatpush1.msra.mxu0 %v2054
    %2201 = vmatprep.subr.mxu0 %v2051
    %2202 = vmatpush1.msra.mxu0 %v2050
    %2203 = vmatprep.subr.mxu0 %v2047
    %2204 = vmatpush1.msra.mxu0 %v2046
    %2205 = vmatprep.subr.mxu0 %v2043
    %2206 = vmatpush1.msra.mxu0 %v2042
    %2207 = vmatprep.subr.mxu0 0.0
    %2208 = vmatpush2.msra.mxu0 0.0
    %2209 = vmatprep.subr.mxu0 0.0
    %2210 = vmatpush2.msra.mxu0 0.0
    %2211 = vmatprep.subr.mxu0 0.0
    %2212 = vmatpush2.msra.mxu0 0.0
    %2213 = vmatprep.subr.mxu0 0.0
    %2214 = vmatpush2.msra.mxu0 0.0
    %2215 = vmatprep.subr.mxu0 0.0
    %2216 = vmatpush2.msra.mxu0 0.0
    %2217 = vmatprep.subr.mxu0 0.0
    %2218 = vmatpush2.msra.mxu0 0.0
    %2219 = vmatprep.subr.mxu0 0.0
    %2220 = vmatpush2.msra.mxu0 0.0
    %2221 = vmatprep.subr.mxu0 0.0
    %2222 = vmatpush2.msra.mxu0 0.0
    %2223 = vmatprep.subr.mxu0 0.0
    %2224 = vmatpush2.msra.mxu0 0.0
    %2225 = vmatprep.subr.mxu0 0.0
    %2226 = vmatpush2.msra.mxu0 0.0
    %2227 = vmatprep.subr.mxu0 0.0
    %2228 = vmatpush2.msra.mxu0 0.0
    %2229 = vmatprep.subr.mxu0 0.0
    %2230 = vmatpush2.msra.mxu0 0.0
    %2231 = vmatprep.subr.mxu0 0.0
    %2232 = vmatpush2.msra.mxu0 0.0
    %2233 = vmatprep.subr.mxu0 0.0
    %2234 = vmatpush2.msra.mxu0 0.0
    %2235 = vmatprep.subr.mxu0 0.0
    %2236 = vmatpush2.msra.mxu0 0.0
    %2237 = vmatprep.subr.mxu0 0.0
    %2238 = vmatpush2.msra.mxu0 0.0
    %2239 = vmatprep.mubr.f32.mxu0 0.0
    %2240 = vmatmul.mubr.f32.gmra.mxu0 %v1802
    %v2241 = vpop.f32.mrf.mxu0
    %v2242 = vadd.f32 %v2038, %v2241
    %v2243 = vpop.f32.mrf.mxu0
    %v2244 = vadd.f32 %v2039, %v2243
    %2245 = vdwg.mxu0
    %v2246 = vsub.f32 0.0, %v2171
    %v2247 = vmul.f32 %v2246, 1.442695
    %v2248 = vpow.pop %v2247
    %v2249 = vadd.f32 %v2248, 1.0
    %v2250 = vrcp.pop %v2249
    %v2251 = vsub.f32 0.0, %v2173
    %v2252 = vmul.f32 %v2251, 1.442695
    %v2253 = vpow.pop %v2252
    %v2254 = vadd.f32 %v2253, 1.0
    %v2255 = vrcp.pop %v2254
    %v2256 = vtanh.pop %v2242
    %v2257 = vsub.f32 0.0, %v2244
    %v2258 = vmul.f32 %v2257, 1.442695
    %v2259 = vpow.pop %v2258
    %v2260 = vadd.f32 %v2259, 1.0
    %v2261 = vrcp.pop %v2260
    %v2262 = vmul.f32 %v2255, %v1804
    %v2263 = vmul.f32 %v2250, %v2256
    %v2264 = vadd.f32 %v2262, %v2263
    %v2265 = vtanh.pop %v2264
    %v2266 = vmul.f32 %v2261, %v2265
    %2267 = vst [vmem:[#allocation4] sm:$0xff] %v2035
    %2268 = vst [vmem:[#allocation5 + $0x38] sm:$0xff] %v2266
    %v2269 = vld [vmem:[#allocation2 + $0x20] sm:$0xff]
    %v2270 = vld [vmem:[#allocation2 + $0x28] sm:$0xff]
    %v2271 = vld [vmem:[#allocation2 + $0x30] sm:$0xff]
    %v2272 = vld [vmem:[#allocation2 + $0x38] sm:$0xff]
    %v2273 = vld [vmem:[#allocation15] sm:$0xff]
    %v2274 = vld [vmem:[#allocation15 + $0x8] sm:$0xff]
    %v2275 = vld [vmem:[#allocation15 + $0x10] sm:$0xff]
    %v2276 = vld [vmem:[#allocation15 + $0x18] sm:$0xff]
    %v2277 = vld [vmem:[#allocation15 + $0x20] sm:$0xff]
    %v2278 = vld [vmem:[#allocation15 + $0x28] sm:$0xff]
    %v2279 = vld [vmem:[#allocation15 + $0x30] sm:$0xff]
    %v2280 = vld [vmem:[#allocation15 + $0x38] sm:$0xff]
    %v2281 = vld [vmem:[#allocation15 + $0x40] sm:$0xff]
    %v2282 = vld [vmem:[#allocation15 + $0x48] sm:$0xff]
    %v2283 = vld [vmem:[#allocation15 + $0x50] sm:$0xff]
    %v2284 = vld [vmem:[#allocation15 + $0x58] sm:$0xff]
    %v2285 = vld [vmem:[#allocation15 + $0x60] sm:$0xff]
    %v2286 = vld [vmem:[#allocation15 + $0x68] sm:$0xff]
    %v2287 = vld [vmem:[#allocation15 + $0x70] sm:$0xff]
    %v2288 = vld [vmem:[#allocation15 + $0x78] sm:$0xff]
    %v2289 = vld [vmem:[#allocation15 + $0x80] sm:$0xff]
    %v2290 = vld [vmem:[#allocation15 + $0x88] sm:$0xff]
    %v2291 = vld [vmem:[#allocation15 + $0x90] sm:$0xff]
    %v2292 = vld [vmem:[#allocation15 + $0x98] sm:$0xff]
    %v2293 = vld [vmem:[#allocation15 + $0xa0] sm:$0xff]
    %v2294 = vld [vmem:[#allocation15 + $0xa8] sm:$0xff]
    %v2295 = vld [vmem:[#allocation15 + $0xb0] sm:$0xff]
    %v2296 = vld [vmem:[#allocation15 + $0xb8] sm:$0xff]
    %v2297 = vld [vmem:[#allocation15 + $0xc0] sm:$0xff]
    %v2298 = vld [vmem:[#allocation15 + $0xc8] sm:$0xff]
    %v2299 = vld [vmem:[#allocation15 + $0xd0] sm:$0xff]
    %v2300 = vld [vmem:[#allocation15 + $0xd8] sm:$0xff]
    %v2301 = vld [vmem:[#allocation15 + $0xe0] sm:$0xff]
    %v2302 = vld [vmem:[#allocation15 + $0xe8] sm:$0xff]
    %v2303 = vld [vmem:[#allocation15 + $0xf0] sm:$0xff]
    %v2304 = vld [vmem:[#allocation15 + $0xf8] sm:$0xff]
    %v2305 = vld [vmem:[#allocation15 + $0x100] sm:$0xff]
    %v2306 = vld [vmem:[#allocation15 + $0x108] sm:$0xff]
    %v2307 = vld [vmem:[#allocation15 + $0x110] sm:$0xff]
    %v2308 = vld [vmem:[#allocation15 + $0x118] sm:$0xff]
    %v2309 = vld [vmem:[#allocation15 + $0x120] sm:$0xff]
    %v2310 = vld [vmem:[#allocation15 + $0x128] sm:$0xff]
    %v2311 = vld [vmem:[#allocation15 + $0x130] sm:$0xff]
    %v2312 = vld [vmem:[#allocation15 + $0x138] sm:$0xff]
    %v2313 = vld [vmem:[#allocation15 + $0x140] sm:$0xff]
    %v2314 = vld [vmem:[#allocation15 + $0x148] sm:$0xff]
    %v2315 = vld [vmem:[#allocation15 + $0x150] sm:$0xff]
    %v2316 = vld [vmem:[#allocation15 + $0x158] sm:$0xff]
    %v2317 = vld [vmem:[#allocation15 + $0x160] sm:$0xff]
    %v2318 = vld [vmem:[#allocation15 + $0x168] sm:$0xff]
    %v2319 = vld [vmem:[#allocation15 + $0x170] sm:$0xff]
    %v2320 = vld [vmem:[#allocation15 + $0x178] sm:$0xff]
    %v2321 = vld [vmem:[#allocation15 + $0x180] sm:$0xff]
    %v2322 = vld [vmem:[#allocation15 + $0x188] sm:$0xff]
    %v2323 = vld [vmem:[#allocation15 + $0x190] sm:$0xff]
    %v2324 = vld [vmem:[#allocation15 + $0x198] sm:$0xff]
    %v2325 = vld [vmem:[#allocation15 + $0x1a0] sm:$0xff]
    %v2326 = vld [vmem:[#allocation15 + $0x1a8] sm:$0xff]
    %v2327 = vld [vmem:[#allocation15 + $0x1b0] sm:$0xff]
    %v2328 = vld [vmem:[#allocation15 + $0x1b8] sm:$0xff]
    %v2329 = vld [vmem:[#allocation15 + $0x1c0] sm:$0xff]
    %v2330 = vld [vmem:[#allocation15 + $0x1c8] sm:$0xff]
    %v2331 = vld [vmem:[#allocation15 + $0x1d0] sm:$0xff]
    %v2332 = vld [vmem:[#allocation15 + $0x1d8] sm:$0xff]
    %v2333 = vld [vmem:[#allocation15 + $0x1e0] sm:$0xff]
    %v2334 = vld [vmem:[#allocation15 + $0x1e8] sm:$0xff]
    %v2335 = vld [vmem:[#allocation15 + $0x1f0] sm:$0xff]
    %v2336 = vld [vmem:[#allocation15 + $0x1f8] sm:$0xff]
    %2337 = vmatprep.subr.mxu0 %v2334
    %2338 = vmatpush1.msra.mxu0 %v2333
    %2339 = vmatprep.subr.mxu0 %v2330
    %2340 = vmatpush1.msra.mxu0 %v2329
    %2341 = vmatprep.subr.mxu0 %v2326
    %2342 = vmatpush1.msra.mxu0 %v2325
    %2343 = vmatprep.subr.mxu0 %v2322
    %2344 = vmatpush1.msra.mxu0 %v2321
    %2345 = vmatprep.subr.mxu0 %v2318
    %2346 = vmatpush1.msra.mxu0 %v2317
    %2347 = vmatprep.subr.mxu0 %v2314
    %2348 = vmatpush1.msra.mxu0 %v2313
    %2349 = vmatprep.subr.mxu0 %v2310
    %2350 = vmatpush1.msra.mxu0 %v2309
    %2351 = vmatprep.subr.mxu0 %v2306
    %2352 = vmatpush1.msra.mxu0 %v2305
    %2353 = vmatprep.subr.mxu0 %v2302
    %2354 = vmatpush1.msra.mxu0 %v2301
    %2355 = vmatprep.subr.mxu0 %v2298
    %2356 = vmatpush1.msra.mxu0 %v2297
    %2357 = vmatprep.subr.mxu0 %v2294
    %2358 = vmatpush1.msra.mxu0 %v2293
    %2359 = vmatprep.subr.mxu0 %v2290
    %2360 = vmatpush1.msra.mxu0 %v2289
    %2361 = vmatprep.subr.mxu0 %v2286
    %2362 = vmatpush1.msra.mxu0 %v2285
    %2363 = vmatprep.subr.mxu0 %v2282
    %2364 = vmatpush1.msra.mxu0 %v2281
    %2365 = vmatprep.subr.mxu0 %v2278
    %2366 = vmatpush1.msra.mxu0 %v2277
    %2367 = vmatprep.subr.mxu0 %v2274
    %2368 = vmatpush1.msra.mxu0 %v2273
    %2369 = vmatprep.subr.mxu0 0.0
    %2370 = vmatpush2.msra.mxu0 0.0
    %2371 = vmatprep.subr.mxu0 0.0
    %2372 = vmatpush2.msra.mxu0 0.0
    %2373 = vmatprep.subr.mxu0 0.0
    %2374 = vmatpush2.msra.mxu0 0.0
    %2375 = vmatprep.subr.mxu0 0.0
    %2376 = vmatpush2.msra.mxu0 0.0
    %2377 = vmatprep.subr.mxu0 0.0
    %2378 = vmatpush2.msra.mxu0 0.0
    %2379 = vmatprep.subr.mxu0 0.0
    %2380 = vmatpush2.msra.mxu0 0.0
    %2381 = vmatprep.subr.mxu0 0.0
    %2382 = vmatpush2.msra.mxu0 0.0
    %2383 = vmatprep.subr.mxu0 0.0
    %2384 = vmatpush2.msra.mxu0 0.0
    %2385 = vmatprep.subr.mxu0 0.0
    %2386 = vmatpush2.msra.mxu0 0.0
    %2387 = vmatprep.subr.mxu0 0.0
    %2388 = vmatpush2.msra.mxu0 0.0
    %2389 = vmatprep.subr.mxu0 0.0
    %2390 = vmatpush2.msra.mxu0 0.0
    %2391 = vmatprep.subr.mxu0 0.0
    %2392 = vmatpush2.msra.mxu0 0.0
    %2393 = vmatprep.subr.mxu0 0.0
    %2394 = vmatpush2.msra.mxu0 0.0
    %2395 = vmatprep.subr.mxu0 0.0
    %2396 = vmatpush2.msra.mxu0 0.0
    %2397 = vmatprep.subr.mxu0 0.0
    %2398 = vmatpush2.msra.mxu0 0.0
    %2399 = vmatprep.subr.mxu0 0.0
    %2400 = vmatpush2.msra.mxu0 0.0
    %2401 = vmatprep.mubr.f32.mxu0 0.0
    %2402 = vmatmul.mubr.f32.gmra.mxu0 %v2035
    %v2403 = vpop.f32.mrf.mxu0
    %v2404 = vadd.f32 %v2269, %v2403
    %v2405 = vpop.f32.mrf.mxu0
    %v2406 = vadd.f32 %v2270, %v2405
    %2407 = vdwg.mxu0
    %2408 = vmatprep.subr.mxu0 %v2336
    %2409 = vmatpush1.msra.mxu0 %v2335
    %2410 = vmatprep.subr.mxu0 %v2332
    %2411 = vmatpush1.msra.mxu0 %v2331
    %2412 = vmatprep.subr.mxu0 %v2328
    %2413 = vmatpush1.msra.mxu0 %v2327
    %2414 = vmatprep.subr.mxu0 %v2324
    %2415 = vmatpush1.msra.mxu0 %v2323
    %2416 = vmatprep.subr.mxu0 %v2320
    %2417 = vmatpush1.msra.mxu0 %v2319
    %2418 = vmatprep.subr.mxu0 %v2316
    %2419 = vmatpush1.msra.mxu0 %v2315
    %2420 = vmatprep.subr.mxu0 %v2312
    %2421 = vmatpush1.msra.mxu0 %v2311
    %2422 = vmatprep.subr.mxu0 %v2308
    %2423 = vmatpush1.msra.mxu0 %v2307
    %2424 = vmatprep.subr.mxu0 %v2304
    %2425 = vmatpush1.msra.mxu0 %v2303
    %2426 = vmatprep.subr.mxu0 %v2300
    %2427 = vmatpush1.msra.mxu0 %v2299
    %2428 = vmatprep.subr.mxu0 %v2296
    %2429 = vmatpush1.msra.mxu0 %v2295
    %2430 = vmatprep.subr.mxu0 %v2292
    %2431 = vmatpush1.msra.mxu0 %v2291
    %2432 = vmatprep.subr.mxu0 %v2288
    %2433 = vmatpush1.msra.mxu0 %v2287
    %2434 = vmatprep.subr.mxu0 %v2284
    %2435 = vmatpush1.msra.mxu0 %v2283
    %2436 = vmatprep.subr.mxu0 %v2280
    %2437 = vmatpush1.msra.mxu0 %v2279
    %2438 = vmatprep.subr.mxu0 %v2276
    %2439 = vmatpush1.msra.mxu0 %v2275
    %2440 = vmatprep.subr.mxu0 0.0
    %2441 = vmatpush2.msra.mxu0 0.0
    %2442 = vmatprep.subr.mxu0 0.0
    %2443 = vmatpush2.msra.mxu0 0.0
    %2444 = vmatprep.subr.mxu0 0.0
    %2445 = vmatpush2.msra.mxu0 0.0
    %2446 = vmatprep.subr.mxu0 0.0
    %2447 = vmatpush2.msra.mxu0 0.0
    %2448 = vmatprep.subr.mxu0 0.0
    %2449 = vmatpush2.msra.mxu0 0.0
    %2450 = vmatprep.subr.mxu0 0.0
    %2451 = vmatpush2.msra.mxu0 0.0
    %2452 = vmatprep.subr.mxu0 0.0
    %2453 = vmatpush2.msra.mxu0 0.0
    %2454 = vmatprep.subr.mxu0 0.0
    %2455 = vmatpush2.msra.mxu0 0.0
    %2456 = vmatprep.subr.mxu0 0.0
    %2457 = vmatpush2.msra.mxu0 0.0
    %2458 = vmatprep.subr.mxu0 0.0
    %2459 = vmatpush2.msra.mxu0 0.0
    %2460 = vmatprep.subr.mxu0 0.0
    %2461 = vmatpush2.msra.mxu0 0.0
    %2462 = vmatprep.subr.mxu0 0.0
    %2463 = vmatpush2.msra.mxu0 0.0
    %2464 = vmatprep.subr.mxu0 0.0
    %2465 = vmatpush2.msra.mxu0 0.0
    %2466 = vmatprep.subr.mxu0 0.0
    %2467 = vmatpush2.msra.mxu0 0.0
    %2468 = vmatprep.subr.mxu0 0.0
    %2469 = vmatpush2.msra.mxu0 0.0
    %2470 = vmatprep.subr.mxu0 0.0
    %2471 = vmatpush2.msra.mxu0 0.0
    %2472 = vmatprep.mubr.f32.mxu0 0.0
    %2473 = vmatmul.mubr.f32.gmra.mxu0 %v2035
    %v2474 = vpop.f32.mrf.mxu0
    %v2475 = vadd.f32 %v2271, %v2474
    %v2476 = vpop.f32.mrf.mxu0
    %v2477 = vadd.f32 %v2272, %v2476
    %2478 = vdwg.mxu0
    %v2479 = vsub.f32 0.0, %v2404
    %v2480 = vmul.f32 %v2479, 1.442695
    %v2481 = vpow.pop %v2480
    %v2482 = vadd.f32 %v2481, 1.0
    %v2483 = vrcp.pop %v2482
    %v2484 = vsub.f32 0.0, %v2406
    %v2485 = vmul.f32 %v2484, 1.442695
    %v2486 = vpow.pop %v2485
    %v2487 = vadd.f32 %v2486, 1.0
    %v2488 = vrcp.pop %v2487
    %v2489 = vtanh.pop %v2475
    %v2490 = vsub.f32 0.0, %v2477
    %v2491 = vmul.f32 %v2490, 1.442695
    %v2492 = vpow.pop %v2491
    %v2493 = vadd.f32 %v2492, 1.0
    %v2494 = vrcp.pop %v2493
    %v2495 = vmul.f32 %v2488, %v2033
    %v2496 = vmul.f32 %v2483, %v2489
    %v2497 = vadd.f32 %v2495, %v2496
    %v2498 = vtanh.pop %v2497
    %v2499 = vmul.f32 %v2494, %v2498
    %v2500 = vld [vmem:[#allocation3 + $0xc0] sm:$0xff]
    %v2501 = vld [vmem:[#allocation3 + $0xc8] sm:$0xff]
    %v2502 = vld [vmem:[#allocation3 + $0xd0] sm:$0xff]
    %v2503 = vld [vmem:[#allocation3 + $0xd8] sm:$0xff]
    %v2504 = vld [vmem:[#allocation18] sm:$0xff]
    %v2505 = vld [vmem:[#allocation18 + $0x8] sm:$0xff]
    %v2506 = vld [vmem:[#allocation18 + $0x10] sm:$0xff]
    %v2507 = vld [vmem:[#allocation18 + $0x18] sm:$0xff]
    %v2508 = vld [vmem:[#allocation18 + $0x20] sm:$0xff]
    %v2509 = vld [vmem:[#allocation18 + $0x28] sm:$0xff]
    %v2510 = vld [vmem:[#allocation18 + $0x30] sm:$0xff]
    %v2511 = vld [vmem:[#allocation18 + $0x38] sm:$0xff]
    %v2512 = vld [vmem:[#allocation18 + $0x40] sm:$0xff]
    %v2513 = vld [vmem:[#allocation18 + $0x48] sm:$0xff]
    %v2514 = vld [vmem:[#allocation18 + $0x50] sm:$0xff]
    %v2515 = vld [vmem:[#allocation18 + $0x58] sm:$0xff]
    %v2516 = vld [vmem:[#allocation18 + $0x60] sm:$0xff]
    %v2517 = vld [vmem:[#allocation18 + $0x68] sm:$0xff]
    %v2518 = vld [vmem:[#allocation18 + $0x70] sm:$0xff]
    %v2519 = vld [vmem:[#allocation18 + $0x78] sm:$0xff]
    %v2520 = vld [vmem:[#allocation18 + $0x80] sm:$0xff]
    %v2521 = vld [vmem:[#allocation18 + $0x88] sm:$0xff]
    %v2522 = vld [vmem:[#allocation18 + $0x90] sm:$0xff]
    %v2523 = vld [vmem:[#allocation18 + $0x98] sm:$0xff]
    %v2524 = vld [vmem:[#allocation18 + $0xa0] sm:$0xff]
    %v2525 = vld [vmem:[#allocation18 + $0xa8] sm:$0xff]
    %v2526 = vld [vmem:[#allocation18 + $0xb0] sm:$0xff]
    %v2527 = vld [vmem:[#allocation18 + $0xb8] sm:$0xff]
    %v2528 = vld [vmem:[#allocation18 + $0xc0] sm:$0xff]
    %v2529 = vld [vmem:[#allocation18 + $0xc8] sm:$0xff]
    %v2530 = vld [vmem:[#allocation18 + $0xd0] sm:$0xff]
    %v2531 = vld [vmem:[#allocation18 + $0xd8] sm:$0xff]
    %v2532 = vld [vmem:[#allocation18 + $0xe0] sm:$0xff]
    %v2533 = vld [vmem:[#allocation18 + $0xe8] sm:$0xff]
    %v2534 = vld [vmem:[#allocation18 + $0xf0] sm:$0xff]
    %v2535 = vld [vmem:[#allocation18 + $0xf8] sm:$0xff]
    %v2536 = vld [vmem:[#allocation18 + $0x100] sm:$0xff]
    %v2537 = vld [vmem:[#allocation18 + $0x108] sm:$0xff]
    %v2538 = vld [vmem:[#allocation18 + $0x110] sm:$0xff]
    %v2539 = vld [vmem:[#allocation18 + $0x118] sm:$0xff]
    %v2540 = vld [vmem:[#allocation18 + $0x120] sm:$0xff]
    %v2541 = vld [vmem:[#allocation18 + $0x128] sm:$0xff]
    %v2542 = vld [vmem:[#allocation18 + $0x130] sm:$0xff]
    %v2543 = vld [vmem:[#allocation18 + $0x138] sm:$0xff]
    %v2544 = vld [vmem:[#allocation18 + $0x140] sm:$0xff]
    %v2545 = vld [vmem:[#allocation18 + $0x148] sm:$0xff]
    %v2546 = vld [vmem:[#allocation18 + $0x150] sm:$0xff]
    %v2547 = vld [vmem:[#allocation18 + $0x158] sm:$0xff]
    %v2548 = vld [vmem:[#allocation18 + $0x160] sm:$0xff]
    %v2549 = vld [vmem:[#allocation18 + $0x168] sm:$0xff]
    %v2550 = vld [vmem:[#allocation18 + $0x170] sm:$0xff]
    %v2551 = vld [vmem:[#allocation18 + $0x178] sm:$0xff]
    %v2552 = vld [vmem:[#allocation18 + $0x180] sm:$0xff]
    %v2553 = vld [vmem:[#allocation18 + $0x188] sm:$0xff]
    %v2554 = vld [vmem:[#allocation18 + $0x190] sm:$0xff]
    %v2555 = vld [vmem:[#allocation18 + $0x198] sm:$0xff]
    %v2556 = vld [vmem:[#allocation18 + $0x1a0] sm:$0xff]
    %v2557 = vld [vmem:[#allocation18 + $0x1a8] sm:$0xff]
    %v2558 = vld [vmem:[#allocation18 + $0x1b0] sm:$0xff]
    %v2559 = vld [vmem:[#allocation18 + $0x1b8] sm:$0xff]
    %v2560 = vld [vmem:[#allocation18 + $0x1c0] sm:$0xff]
    %v2561 = vld [vmem:[#allocation18 + $0x1c8] sm:$0xff]
    %v2562 = vld [vmem:[#allocation18 + $0x1d0] sm:$0xff]
    %v2563 = vld [vmem:[#allocation18 + $0x1d8] sm:$0xff]
    %v2564 = vld [vmem:[#allocation18 + $0x1e0] sm:$0xff]
    %v2565 = vld [vmem:[#allocation18 + $0x1e8] sm:$0xff]
    %v2566 = vld [vmem:[#allocation18 + $0x1f0] sm:$0xff]
    %v2567 = vld [vmem:[#allocation18 + $0x1f8] sm:$0xff]
    %2568 = vmatprep.subr.mxu0 %v2565
    %2569 = vmatpush1.msra.mxu0 %v2564
    %2570 = vmatprep.subr.mxu0 %v2561
    %2571 = vmatpush1.msra.mxu0 %v2560
    %2572 = vmatprep.subr.mxu0 %v2557
    %2573 = vmatpush1.msra.mxu0 %v2556
    %2574 = vmatprep.subr.mxu0 %v2553
    %2575 = vmatpush1.msra.mxu0 %v2552
    %2576 = vmatprep.subr.mxu0 %v2549
    %2577 = vmatpush1.msra.mxu0 %v2548
    %2578 = vmatprep.subr.mxu0 %v2545
    %2579 = vmatpush1.msra.mxu0 %v2544
    %2580 = vmatprep.subr.mxu0 %v2541
    %2581 = vmatpush1.msra.mxu0 %v2540
    %2582 = vmatprep.subr.mxu0 %v2537
    %2583 = vmatpush1.msra.mxu0 %v2536
    %2584 = vmatprep.subr.mxu0 %v2533
    %2585 = vmatpush1.msra.mxu0 %v2532
    %2586 = vmatprep.subr.mxu0 %v2529
    %2587 = vmatpush1.msra.mxu0 %v2528
    %2588 = vmatprep.subr.mxu0 %v2525
    %2589 = vmatpush1.msra.mxu0 %v2524
    %2590 = vmatprep.subr.mxu0 %v2521
    %2591 = vmatpush1.msra.mxu0 %v2520
    %2592 = vmatprep.subr.mxu0 %v2517
    %2593 = vmatpush1.msra.mxu0 %v2516
    %2594 = vmatprep.subr.mxu0 %v2513
    %2595 = vmatpush1.msra.mxu0 %v2512
    %2596 = vmatprep.subr.mxu0 %v2509
    %2597 = vmatpush1.msra.mxu0 %v2508
    %2598 = vmatprep.subr.mxu0 %v2505
    %2599 = vmatpush1.msra.mxu0 %v2504
    %2600 = vmatprep.subr.mxu0 0.0
    %2601 = vmatpush2.msra.mxu0 0.0
    %2602 = vmatprep.subr.mxu0 0.0
    %2603 = vmatpush2.msra.mxu0 0.0
    %2604 = vmatprep.subr.mxu0 0.0
    %2605 = vmatpush2.msra.mxu0 0.0
    %2606 = vmatprep.subr.mxu0 0.0
    %2607 = vmatpush2.msra.mxu0 0.0
    %2608 = vmatprep.subr.mxu0 0.0
    %2609 = vmatpush2.msra.mxu0 0.0
    %2610 = vmatprep.subr.mxu0 0.0
    %2611 = vmatpush2.msra.mxu0 0.0
    %2612 = vmatprep.subr.mxu0 0.0
    %2613 = vmatpush2.msra.mxu0 0.0
    %2614 = vmatprep.subr.mxu0 0.0
    %2615 = vmatpush2.msra.mxu0 0.0
    %2616 = vmatprep.subr.mxu0 0.0
    %2617 = vmatpush2.msra.mxu0 0.0
    %2618 = vmatprep.subr.mxu0 0.0
    %2619 = vmatpush2.msra.mxu0 0.0
    %2620 = vmatprep.subr.mxu0 0.0
    %2621 = vmatpush2.msra.mxu0 0.0
    %2622 = vmatprep.subr.mxu0 0.0
    %2623 = vmatpush2.msra.mxu0 0.0
    %2624 = vmatprep.subr.mxu0 0.0
    %2625 = vmatpush2.msra.mxu0 0.0
    %2626 = vmatprep.subr.mxu0 0.0
    %2627 = vmatpush2.msra.mxu0 0.0
    %2628 = vmatprep.subr.mxu0 0.0
    %2629 = vmatpush2.msra.mxu0 0.0
    %2630 = vmatprep.subr.mxu0 0.0
    %2631 = vmatpush2.msra.mxu0 0.0
    %2632 = vmatprep.mubr.f32.mxu0 0.0
    %2633 = vmatmul.mubr.f32.gmra.mxu0 %v2266
    %v2634 = vpop.f32.mrf.mxu0
    %v2635 = vadd.f32 %v2500, %v2634
    %v2636 = vpop.f32.mrf.mxu0
    %v2637 = vadd.f32 %v2501, %v2636
    %2638 = vdwg.mxu0
    %2639 = vmatprep.subr.mxu0 %v2567
    %2640 = vmatpush1.msra.mxu0 %v2566
    %2641 = vmatprep.subr.mxu0 %v2563
    %2642 = vmatpush1.msra.mxu0 %v2562
    %2643 = vmatprep.subr.mxu0 %v2559
    %2644 = vmatpush1.msra.mxu0 %v2558
    %2645 = vmatprep.subr.mxu0 %v2555
    %2646 = vmatpush1.msra.mxu0 %v2554
    %2647 = vmatprep.subr.mxu0 %v2551
    %2648 = vmatpush1.msra.mxu0 %v2550
    %2649 = vmatprep.subr.mxu0 %v2547
    %2650 = vmatpush1.msra.mxu0 %v2546
    %2651 = vmatprep.subr.mxu0 %v2543
    %2652 = vmatpush1.msra.mxu0 %v2542
    %2653 = vmatprep.subr.mxu0 %v2539
    %2654 = vmatpush1.msra.mxu0 %v2538
    %2655 = vmatprep.subr.mxu0 %v2535
    %2656 = vmatpush1.msra.mxu0 %v2534
    %2657 = vmatprep.subr.mxu0 %v2531
    %2658 = vmatpush1.msra.mxu0 %v2530
    %2659 = vmatprep.subr.mxu0 %v2527
    %2660 = vmatpush1.msra.mxu0 %v2526
    %2661 = vmatprep.subr.mxu0 %v2523
    %2662 = vmatpush1.msra.mxu0 %v2522
    %2663 = vmatprep.subr.mxu0 %v2519
    %2664 = vmatpush1.msra.mxu0 %v2518
    %2665 = vmatprep.subr.mxu0 %v2515
    %2666 = vmatpush1.msra.mxu0 %v2514
    %2667 = vmatprep.subr.mxu0 %v2511
    %2668 = vmatpush1.msra.mxu0 %v2510
    %2669 = vmatprep.subr.mxu0 %v2507
    %2670 = vmatpush1.msra.mxu0 %v2506
    %2671 = vmatprep.subr.mxu0 0.0
    %2672 = vmatpush2.msra.mxu0 0.0
    %2673 = vmatprep.subr.mxu0 0.0
    %2674 = vmatpush2.msra.mxu0 0.0
    %2675 = vmatprep.subr.mxu0 0.0
    %2676 = vmatpush2.msra.mxu0 0.0
    %2677 = vmatprep.subr.mxu0 0.0
    %2678 = vmatpush2.msra.mxu0 0.0
    %2679 = vmatprep.subr.mxu0 0.0
    %2680 = vmatpush2.msra.mxu0 0.0
    %2681 = vmatprep.subr.mxu0 0.0
    %2682 = vmatpush2.msra.mxu0 0.0
    %2683 = vmatprep.subr.mxu0 0.0
    %2684 = vmatpush2.msra.mxu0 0.0
    %2685 = vmatprep.subr.mxu0 0.0
    %2686 = vmatpush2.msra.mxu0 0.0
    %2687 = vmatprep.subr.mxu0 0.0
    %2688 = vmatpush2.msra.mxu0 0.0
    %2689 = vmatprep.subr.mxu0 0.0
    %2690 = vmatpush2.msra.mxu0 0.0
    %2691 = vmatprep.subr.mxu0 0.0
    %2692 = vmatpush2.msra.mxu0 0.0
    %2693 = vmatprep.subr.mxu0 0.0
    %2694 = vmatpush2.msra.mxu0 0.0
    %2695 = vmatprep.subr.mxu0 0.0
    %2696 = vmatpush2.msra.mxu0 0.0
    %2697 = vmatprep.subr.mxu0 0.0
    %2698 = vmatpush2.msra.mxu0 0.0
    %2699 = vmatprep.subr.mxu0 0.0
    %2700 = vmatpush2.msra.mxu0 0.0
    %2701 = vmatprep.subr.mxu0 0.0
    %2702 = vmatpush2.msra.mxu0 0.0
    %2703 = vmatprep.mubr.f32.mxu0 0.0
    %2704 = vmatmul.mubr.f32.gmra.mxu0 %v2266
    %v2705 = vpop.f32.mrf.mxu0
    %v2706 = vadd.f32 %v2502, %v2705
    %v2707 = vpop.f32.mrf.mxu0
    %v2708 = vadd.f32 %v2503, %v2707
    %2709 = vdwg.mxu0
    %v2710 = vsub.f32 0.0, %v2635
    %v2711 = vmul.f32 %v2710, 1.442695
    %v2712 = vpow.pop %v2711
    %v2713 = vadd.f32 %v2712, 1.0
    %v2714 = vrcp.pop %v2713
    %v2715 = vsub.f32 0.0, %v2637
    %v2716 = vmul.f32 %v2715, 1.442695
    %v2717 = vpow.pop %v2716
    %v2718 = vadd.f32 %v2717, 1.0
    %v2719 = vrcp.pop %v2718
    %v2720 = vtanh.pop %v2706
    %v2721 = vsub.f32 0.0, %v2708
    %v2722 = vmul.f32 %v2721, 1.442695
    %v2723 = vpow.pop %v2722
    %v2724 = vadd.f32 %v2723, 1.0
    %v2725 = vrcp.pop %v2724
    %v2726 = vmul.f32 %v2719, %v2264
    %v2727 = vmul.f32 %v2714, %v2720
    %v2728 = vadd.f32 %v2726, %v2727
    %v2729 = vtanh.pop %v2728
    %v2730 = vmul.f32 %v2725, %v2729
    %2731 = vst [vmem:[#allocation4 + $0x8] sm:$0xff] %v2499
    %2732 = vst [vmem:[#allocation5 + $0x30] sm:$0xff] %v2730
    %v2733 = vld [vmem:[#allocation2 + $0x40] sm:$0xff]
    %v2734 = vld [vmem:[#allocation2 + $0x48] sm:$0xff]
    %v2735 = vld [vmem:[#allocation2 + $0x50] sm:$0xff]
    %v2736 = vld [vmem:[#allocation2 + $0x58] sm:$0xff]
    %v2737 = vld [vmem:[#allocation15] sm:$0xff]
    %v2738 = vld [vmem:[#allocation15 + $0x8] sm:$0xff]
    %v2739 = vld [vmem:[#allocation15 + $0x10] sm:$0xff]
    %v2740 = vld [vmem:[#allocation15 + $0x18] sm:$0xff]
    %v2741 = vld [vmem:[#allocation15 + $0x20] sm:$0xff]
    %v2742 = vld [vmem:[#allocation15 + $0x28] sm:$0xff]
    %v2743 = vld [vmem:[#allocation15 + $0x30] sm:$0xff]
    %v2744 = vld [vmem:[#allocation15 + $0x38] sm:$0xff]
    %v2745 = vld [vmem:[#allocation15 + $0x40] sm:$0xff]
    %v2746 = vld [vmem:[#allocation15 + $0x48] sm:$0xff]
    %v2747 = vld [vmem:[#allocation15 + $0x50] sm:$0xff]
    %v2748 = vld [vmem:[#allocation15 + $0x58] sm:$0xff]
    %v2749 = vld [vmem:[#allocation15 + $0x60] sm:$0xff]
    %v2750 = vld [vmem:[#allocation15 + $0x68] sm:$0xff]
    %v2751 = vld [vmem:[#allocation15 + $0x70] sm:$0xff]
    %v2752 = vld [vmem:[#allocation15 + $0x78] sm:$0xff]
    %v2753 = vld [vmem:[#allocation15 + $0x80] sm:$0xff]
    %v2754 = vld [vmem:[#allocation15 + $0x88] sm:$0xff]
    %v2755 = vld [vmem:[#allocation15 + $0x90] sm:$0xff]
    %v2756 = vld [vmem:[#allocation15 + $0x98] sm:$0xff]
    %v2757 = vld [vmem:[#allocation15 + $0xa0] sm:$0xff]
    %v2758 = vld [vmem:[#allocation15 + $0xa8] sm:$0xff]
    %v2759 = vld [vmem:[#allocation15 + $0xb0] sm:$0xff]
    %v2760 = vld [vmem:[#allocation15 + $0xb8] sm:$0xff]
    %v2761 = vld [vmem:[#allocation15 + $0xc0] sm:$0xff]
    %v2762 = vld [vmem:[#allocation15 + $0xc8] sm:$0xff]
    %v2763 = vld [vmem:[#allocation15 + $0xd0] sm:$0xff]
    %v2764 = vld [vmem:[#allocation15 + $0xd8] sm:$0xff]
    %v2765 = vld [vmem:[#allocation15 + $0xe0] sm:$0xff]
    %v2766 = vld [vmem:[#allocation15 + $0xe8] sm:$0xff]
    %v2767 = vld [vmem:[#allocation15 + $0xf0] sm:$0xff]
    %v2768 = vld [vmem:[#allocation15 + $0xf8] sm:$0xff]
    %v2769 = vld [vmem:[#allocation15 + $0x100] sm:$0xff]
    %v2770 = vld [vmem:[#allocation15 + $0x108] sm:$0xff]
    %v2771 = vld [vmem:[#allocation15 + $0x110] sm:$0xff]
    %v2772 = vld [vmem:[#allocation15 + $0x118] sm:$0xff]
    %v2773 = vld [vmem:[#allocation15 + $0x120] sm:$0xff]
    %v2774 = vld [vmem:[#allocation15 + $0x128] sm:$0xff]
    %v2775 = vld [vmem:[#allocation15 + $0x130] sm:$0xff]
    %v2776 = vld [vmem:[#allocation15 + $0x138] sm:$0xff]
    %v2777 = vld [vmem:[#allocation15 + $0x140] sm:$0xff]
    %v2778 = vld [vmem:[#allocation15 + $0x148] sm:$0xff]
    %v2779 = vld [vmem:[#allocation15 + $0x150] sm:$0xff]
    %v2780 = vld [vmem:[#allocation15 + $0x158] sm:$0xff]
    %v2781 = vld [vmem:[#allocation15 + $0x160] sm:$0xff]
    %v2782 = vld [vmem:[#allocation15 + $0x168] sm:$0xff]
    %v2783 = vld [vmem:[#allocation15 + $0x170] sm:$0xff]
    %v2784 = vld [vmem:[#allocation15 + $0x178] sm:$0xff]
    %v2785 = vld [vmem:[#allocation15 + $0x180] sm:$0xff]
    %v2786 = vld [vmem:[#allocation15 + $0x188] sm:$0xff]
    %v2787 = vld [vmem:[#allocation15 + $0x190] sm:$0xff]
    %v2788 = vld [vmem:[#allocation15 + $0x198] sm:$0xff]
    %v2789 = vld [vmem:[#allocation15 + $0x1a0] sm:$0xff]
    %v2790 = vld [vmem:[#allocation15 + $0x1a8] sm:$0xff]
    %v2791 = vld [vmem:[#allocation15 + $0x1b0] sm:$0xff]
    %v2792 = vld [vmem:[#allocation15 + $0x1b8] sm:$0xff]
    %v2793 = vld [vmem:[#allocation15 + $0x1c0] sm:$0xff]
    %v2794 = vld [vmem:[#allocation15 + $0x1c8] sm:$0xff]
    %v2795 = vld [vmem:[#allocation15 + $0x1d0] sm:$0xff]
    %v2796 = vld [vmem:[#allocation15 + $0x1d8] sm:$0xff]
    %v2797 = vld [vmem:[#allocation15 + $0x1e0] sm:$0xff]
    %v2798 = vld [vmem:[#allocation15 + $0x1e8] sm:$0xff]
    %v2799 = vld [vmem:[#allocation15 + $0x1f0] sm:$0xff]
    %v2800 = vld [vmem:[#allocation15 + $0x1f8] sm:$0xff]
    %2801 = vmatprep.subr.mxu0 %v2798
    %2802 = vmatpush1.msra.mxu0 %v2797
    %2803 = vmatprep.subr.mxu0 %v2794
    %2804 = vmatpush1.msra.mxu0 %v2793
    %2805 = vmatprep.subr.mxu0 %v2790
    %2806 = vmatpush1.msra.mxu0 %v2789
    %2807 = vmatprep.subr.mxu0 %v2786
    %2808 = vmatpush1.msra.mxu0 %v2785
    %2809 = vmatprep.subr.mxu0 %v2782
    %2810 = vmatpush1.msra.mxu0 %v2781
    %2811 = vmatprep.subr.mxu0 %v2778
    %2812 = vmatpush1.msra.mxu0 %v2777
    %2813 = vmatprep.subr.mxu0 %v2774
    %2814 = vmatpush1.msra.mxu0 %v2773
    %2815 = vmatprep.subr.mxu0 %v2770
    %2816 = vmatpush1.msra.mxu0 %v2769
    %2817 = vmatprep.subr.mxu0 %v2766
    %2818 = vmatpush1.msra.mxu0 %v2765
    %2819 = vmatprep.subr.mxu0 %v2762
    %2820 = vmatpush1.msra.mxu0 %v2761
    %2821 = vmatprep.subr.mxu0 %v2758
    %2822 = vmatpush1.msra.mxu0 %v2757
    %2823 = vmatprep.subr.mxu0 %v2754
    %2824 = vmatpush1.msra.mxu0 %v2753
    %2825 = vmatprep.subr.mxu0 %v2750
    %2826 = vmatpush1.msra.mxu0 %v2749
    %2827 = vmatprep.subr.mxu0 %v2746
    %2828 = vmatpush1.msra.mxu0 %v2745
    %2829 = vmatprep.subr.mxu0 %v2742
    %2830 = vmatpush1.msra.mxu0 %v2741
    %2831 = vmatprep.subr.mxu0 %v2738
    %2832 = vmatpush1.msra.mxu0 %v2737
    %2833 = vmatprep.subr.mxu0 0.0
    %2834 = vmatpush2.msra.mxu0 0.0
    %2835 = vmatprep.subr.mxu0 0.0
    %2836 = vmatpush2.msra.mxu0 0.0
    %2837 = vmatprep.subr.mxu0 0.0
    %2838 = vmatpush2.msra.mxu0 0.0
    %2839 = vmatprep.subr.mxu0 0.0
    %2840 = vmatpush2.msra.mxu0 0.0
    %2841 = vmatprep.subr.mxu0 0.0
    %2842 = vmatpush2.msra.mxu0 0.0
    %2843 = vmatprep.subr.mxu0 0.0
    %2844 = vmatpush2.msra.mxu0 0.0
    %2845 = vmatprep.subr.mxu0 0.0
    %2846 = vmatpush2.msra.mxu0 0.0
    %2847 = vmatprep.subr.mxu0 0.0
    %2848 = vmatpush2.msra.mxu0 0.0
    %2849 = vmatprep.subr.mxu0 0.0
    %2850 = vmatpush2.msra.mxu0 0.0
    %2851 = vmatprep.subr.mxu0 0.0
    %2852 = vmatpush2.msra.mxu0 0.0
    %2853 = vmatprep.subr.mxu0 0.0
    %2854 = vmatpush2.msra.mxu0 0.0
    %2855 = vmatprep.subr.mxu0 0.0
    %2856 = vmatpush2.msra.mxu0 0.0
    %2857 = vmatprep.subr.mxu0 0.0
    %2858 = vmatpush2.msra.mxu0 0.0
    %2859 = vmatprep.subr.mxu0 0.0
    %2860 = vmatpush2.msra.mxu0 0.0
    %2861 = vmatprep.subr.mxu0 0.0
    %2862 = vmatpush2.msra.mxu0 0.0
    %2863 = vmatprep.subr.mxu0 0.0
    %2864 = vmatpush2.msra.mxu0 0.0
    %2865 = vmatprep.mubr.f32.mxu0 0.0
    %2866 = vmatmul.mubr.f32.gmra.mxu0 %v2499
    %v2867 = vpop.f32.mrf.mxu0
    %v2868 = vadd.f32 %v2733, %v2867
    %v2869 = vpop.f32.mrf.mxu0
    %v2870 = vadd.f32 %v2734, %v2869
    %2871 = vdwg.mxu0
    %2872 = vmatprep.subr.mxu0 %v2800
    %2873 = vmatpush1.msra.mxu0 %v2799
    %2874 = vmatprep.subr.mxu0 %v2796
    %2875 = vmatpush1.msra.mxu0 %v2795
    %2876 = vmatprep.subr.mxu0 %v2792
    %2877 = vmatpush1.msra.mxu0 %v2791
    %2878 = vmatprep.subr.mxu0 %v2788
    %2879 = vmatpush1.msra.mxu0 %v2787
    %2880 = vmatprep.subr.mxu0 %v2784
    %2881 = vmatpush1.msra.mxu0 %v2783
    %2882 = vmatprep.subr.mxu0 %v2780
    %2883 = vmatpush1.msra.mxu0 %v2779
    %2884 = vmatprep.subr.mxu0 %v2776
    %2885 = vmatpush1.msra.mxu0 %v2775
    %2886 = vmatprep.subr.mxu0 %v2772
    %2887 = vmatpush1.msra.mxu0 %v2771
    %2888 = vmatprep.subr.mxu0 %v2768
    %2889 = vmatpush1.msra.mxu0 %v2767
    %2890 = vmatprep.subr.mxu0 %v2764
    %2891 = vmatpush1.msra.mxu0 %v2763
    %2892 = vmatprep.subr.mxu0 %v2760
    %2893 = vmatpush1.msra.mxu0 %v2759
    %2894 = vmatprep.subr.mxu0 %v2756
    %2895 = vmatpush1.msra.mxu0 %v2755
    %2896 = vmatprep.subr.mxu0 %v2752
    %2897 = vmatpush1.msra.mxu0 %v2751
    %2898 = vmatprep.subr.mxu0 %v2748
    %2899 = vmatpush1.msra.mxu0 %v2747
    %2900 = vmatprep.subr.mxu0 %v2744
    %2901 = vmatpush1.msra.mxu0 %v2743
    %2902 = vmatprep.subr.mxu0 %v2740
    %2903 = vmatpush1.msra.mxu0 %v2739
    %2904 = vmatprep.subr.mxu0 0.0
    %2905 = vmatpush2.msra.mxu0 0.0
    %2906 = vmatprep.subr.mxu0 0.0
    %2907 = vmatpush2.msra.mxu0 0.0
    %2908 = vmatprep.subr.mxu0 0.0
    %2909 = vmatpush2.msra.mxu0 0.0
    %2910 = vmatprep.subr.mxu0 0.0
    %2911 = vmatpush2.msra.mxu0 0.0
    %2912 = vmatprep.subr.mxu0 0.0
    %2913 = vmatpush2.msra.mxu0 0.0
    %2914 = vmatprep.subr.mxu0 0.0
    %2915 = vmatpush2.msra.mxu0 0.0
    %2916 = vmatprep.subr.mxu0 0.0
    %2917 = vmatpush2.msra.mxu0 0.0
    %2918 = vmatprep.subr.mxu0 0.0
    %2919 = vmatpush2.msra.mxu0 0.0
    %2920 = vmatprep.subr.mxu0 0.0
    %2921 = vmatpush2.msra.mxu0 0.0
    %2922 = vmatprep.subr.mxu0 0.0
    %2923 = vmatpush2.msra.mxu0 0.0
    %2924 = vmatprep.subr.mxu0 0.0
    %2925 = vmatpush2.msra.mxu0 0.0
    %2926 = vmatprep.subr.mxu0 0.0
    %2927 = vmatpush2.msra.mxu0 0.0
    %2928 = vmatprep.subr.mxu0 0.0
    %2929 = vmatpush2.msra.mxu0 0.0
    %2930 = vmatprep.subr.mxu0 0.0
    %2931 = vmatpush2.msra.mxu0 0.0
    %2932 = vmatprep.subr.mxu0 0.0
    %2933 = vmatpush2.msra.mxu0 0.0
    %2934 = vmatprep.subr.mxu0 0.0
    %2935 = vmatpush2.msra.mxu0 0.0
    %2936 = vmatprep.mubr.f32.mxu0 0.0
    %2937 = vmatmul.mubr.f32.gmra.mxu0 %v2499
    %v2938 = vpop.f32.mrf.mxu0
    %v2939 = vadd.f32 %v2735, %v2938
    %v2940 = vpop.f32.mrf.mxu0
    %v2941 = vadd.f32 %v2736, %v2940
    %2942 = vdwg.mxu0
    %v2943 = vsub.f32 0.0, %v2868
    %v2944 = vmul.f32 %v2943, 1.442695
    %v2945 = vpow.pop %v2944
    %v2946 = vadd.f32 %v2945, 1.0
    %v2947 = vrcp.pop %v2946
    %v2948 = vsub.f32 0.0, %v2870
    %v2949 = vmul.f32 %v2948, 1.442695
    %v2950 = vpow.pop %v2949
    %v2951 = vadd.f32 %v2950, 1.0
    %v2952 = vrcp.pop %v2951
    %v2953 = vtanh.pop %v2939
    %v2954 = vsub.f32 0.0, %v2941
    %v2955 = vmul.f32 %v2954, 1.442695
    %v2956 = vpow.pop %v2955
    %v2957 = vadd.f32 %v2956, 1.0
    %v2958 = vrcp.pop %v2957
    %v2959 = vmul.f32 %v2952, %v2497
    %v2960 = vmul.f32 %v2947, %v2953
    %v2961 = vadd.f32 %v2959, %v2960
    %v2962 = vtanh.pop %v2961
    %v2963 = vmul.f32 %v2958, %v2962
    %v2964 = vld [vmem:[#allocation3 + $0xa0] sm:$0xff]
    %v2965 = vld [vmem:[#allocation3 + $0xa8] sm:$0xff]
    %v2966 = vld [vmem:[#allocation3 + $0xb0] sm:$0xff]
    %v2967 = vld [vmem:[#allocation3 + $0xb8] sm:$0xff]
    %v2968 = vld [vmem:[#allocation18] sm:$0xff]
    %v2969 = vld [vmem:[#allocation18 + $0x8] sm:$0xff]
    %v2970 = vld [vmem:[#allocation18 + $0x10] sm:$0xff]
    %v2971 = vld [vmem:[#allocation18 + $0x18] sm:$0xff]
    %v2972 = vld [vmem:[#allocation18 + $0x20] sm:$0xff]
    %v2973 = vld [vmem:[#allocation18 + $0x28] sm:$0xff]
    %v2974 = vld [vmem:[#allocation18 + $0x30] sm:$0xff]
    %v2975 = vld [vmem:[#allocation18 + $0x38] sm:$0xff]
    %v2976 = vld [vmem:[#allocation18 + $0x40] sm:$0xff]
    %v2977 = vld [vmem:[#allocation18 + $0x48] sm:$0xff]
    %v2978 = vld [vmem:[#allocation18 + $0x50] sm:$0xff]
    %v2979 = vld [vmem:[#allocation18 + $0x58] sm:$0xff]
    %v2980 = vld [vmem:[#allocation18 + $0x60] sm:$0xff]
    %v2981 = vld [vmem:[#allocation18 + $0x68] sm:$0xff]
    %v2982 = vld [vmem:[#allocation18 + $0x70] sm:$0xff]
    %v2983 = vld [vmem:[#allocation18 + $0x78] sm:$0xff]
    %v2984 = vld [vmem:[#allocation18 + $0x80] sm:$0xff]
    %v2985 = vld [vmem:[#allocation18 + $0x88] sm:$0xff]
    %v2986 = vld [vmem:[#allocation18 + $0x90] sm:$0xff]
    %v2987 = vld [vmem:[#allocation18 + $0x98] sm:$0xff]
    %v2988 = vld [vmem:[#allocation18 + $0xa0] sm:$0xff]
    %v2989 = vld [vmem:[#allocation18 + $0xa8] sm:$0xff]
    %v2990 = vld [vmem:[#allocation18 + $0xb0] sm:$0xff]
    %v2991 = vld [vmem:[#allocation18 + $0xb8] sm:$0xff]
    %v2992 = vld [vmem:[#allocation18 + $0xc0] sm:$0xff]
    %v2993 = vld [vmem:[#allocation18 + $0xc8] sm:$0xff]
    %v2994 = vld [vmem:[#allocation18 + $0xd0] sm:$0xff]
    %v2995 = vld [vmem:[#allocation18 + $0xd8] sm:$0xff]
    %v2996 = vld [vmem:[#allocation18 + $0xe0] sm:$0xff]
    %v2997 = vld [vmem:[#allocation18 + $0xe8] sm:$0xff]
    %v2998 = vld [vmem:[#allocation18 + $0xf0] sm:$0xff]
    %v2999 = vld [vmem:[#allocation18 + $0xf8] sm:$0xff]
    %v3000 = vld [vmem:[#allocation18 + $0x100] sm:$0xff]
    %v3001 = vld [vmem:[#allocation18 + $0x108] sm:$0xff]
    %v3002 = vld [vmem:[#allocation18 + $0x110] sm:$0xff]
    %v3003 = vld [vmem:[#allocation18 + $0x118] sm:$0xff]
    %v3004 = vld [vmem:[#allocation18 + $0x120] sm:$0xff]
    %v3005 = vld [vmem:[#allocation18 + $0x128] sm:$0xff]
    %v3006 = vld [vmem:[#allocation18 + $0x130] sm:$0xff]
    %v3007 = vld [vmem:[#allocation18 + $0x138] sm:$0xff]
    %v3008 = vld [vmem:[#allocation18 + $0x140] sm:$0xff]
    %v3009 = vld [vmem:[#allocation18 + $0x148] sm:$0xff]
    %v3010 = vld [vmem:[#allocation18 + $0x150] sm:$0xff]
    %v3011 = vld [vmem:[#allocation18 + $0x158] sm:$0xff]
    %v3012 = vld [vmem:[#allocation18 + $0x160] sm:$0xff]
    %v3013 = vld [vmem:[#allocation18 + $0x168] sm:$0xff]
    %v3014 = vld [vmem:[#allocation18 + $0x170] sm:$0xff]
    %v3015 = vld [vmem:[#allocation18 + $0x178] sm:$0xff]
    %v3016 = vld [vmem:[#allocation18 + $0x180] sm:$0xff]
    %v3017 = vld [vmem:[#allocation18 + $0x188] sm:$0xff]
    %v3018 = vld [vmem:[#allocation18 + $0x190] sm:$0xff]
    %v3019 = vld [vmem:[#allocation18 + $0x198] sm:$0xff]
    %v3020 = vld [vmem:[#allocation18 + $0x1a0] sm:$0xff]
    %v3021 = vld [vmem:[#allocation18 + $0x1a8] sm:$0xff]
    %v3022 = vld [vmem:[#allocation18 + $0x1b0] sm:$0xff]
    %v3023 = vld [vmem:[#allocation18 + $0x1b8] sm:$0xff]
    %v3024 = vld [vmem:[#allocation18 + $0x1c0] sm:$0xff]
    %v3025 = vld [vmem:[#allocation18 + $0x1c8] sm:$0xff]
    %v3026 = vld [vmem:[#allocation18 + $0x1d0] sm:$0xff]
    %v3027 = vld [vmem:[#allocation18 + $0x1d8] sm:$0xff]
    %v3028 = vld [vmem:[#allocation18 + $0x1e0] sm:$0xff]
    %v3029 = vld [vmem:[#allocation18 + $0x1e8] sm:$0xff]
    %v3030 = vld [vmem:[#allocation18 + $0x1f0] sm:$0xff]
    %v3031 = vld [vmem:[#allocation18 + $0x1f8] sm:$0xff]
    %3032 = vmatprep.subr.mxu0 %v3029
    %3033 = vmatpush1.msra.mxu0 %v3028
    %3034 = vmatprep.subr.mxu0 %v3025
    %3035 = vmatpush1.msra.mxu0 %v3024
    %3036 = vmatprep.subr.mxu0 %v3021
    %3037 = vmatpush1.msra.mxu0 %v3020
    %3038 = vmatprep.subr.mxu0 %v3017
    %3039 = vmatpush1.msra.mxu0 %v3016
    %3040 = vmatprep.subr.mxu0 %v3013
    %3041 = vmatpush1.msra.mxu0 %v3012
    %3042 = vmatprep.subr.mxu0 %v3009
    %3043 = vmatpush1.msra.mxu0 %v3008
    %3044 = vmatprep.subr.mxu0 %v3005
    %3045 = vmatpush1.msra.mxu0 %v3004
    %3046 = vmatprep.subr.mxu0 %v3001
    %3047 = vmatpush1.msra.mxu0 %v3000
    %3048 = vmatprep.subr.mxu0 %v2997
    %3049 = vmatpush1.msra.mxu0 %v2996
    %3050 = vmatprep.subr.mxu0 %v2993
    %3051 = vmatpush1.msra.mxu0 %v2992
    %3052 = vmatprep.subr.mxu0 %v2989
    %3053 = vmatpush1.msra.mxu0 %v2988
    %3054 = vmatprep.subr.mxu0 %v2985
    %3055 = vmatpush1.msra.mxu0 %v2984
    %3056 = vmatprep.subr.mxu0 %v2981
    %3057 = vmatpush1.msra.mxu0 %v2980
    %3058 = vmatprep.subr.mxu0 %v2977
    %3059 = vmatpush1.msra.mxu0 %v2976
    %3060 = vmatprep.subr.mxu0 %v2973
    %3061 = vmatpush1.msra.mxu0 %v2972
    %3062 = vmatprep.subr.mxu0 %v2969
    %3063 = vmatpush1.msra.mxu0 %v2968
    %3064 = vmatprep.subr.mxu0 0.0
    %3065 = vmatpush2.msra.mxu0 0.0
    %3066 = vmatprep.subr.mxu0 0.0
    %3067 = vmatpush2.msra.mxu0 0.0
    %3068 = vmatprep.subr.mxu0 0.0
    %3069 = vmatpush2.msra.mxu0 0.0
    %3070 = vmatprep.subr.mxu0 0.0
    %3071 = vmatpush2.msra.mxu0 0.0
    %3072 = vmatprep.subr.mxu0 0.0
    %3073 = vmatpush2.msra.mxu0 0.0
    %3074 = vmatprep.subr.mxu0 0.0
    %3075 = vmatpush2.msra.mxu0 0.0
    %3076 = vmatprep.subr.mxu0 0.0
    %3077 = vmatpush2.msra.mxu0 0.0
    %3078 = vmatprep.subr.mxu0 0.0
    %3079 = vmatpush2.msra.mxu0 0.0
    %3080 = vmatprep.subr.mxu0 0.0
    %3081 = vmatpush2.msra.mxu0 0.0
    %3082 = vmatprep.subr.mxu0 0.0
    %3083 = vmatpush2.msra.mxu0 0.0
    %3084 = vmatprep.subr.mxu0 0.0
    %3085 = vmatpush2.msra.mxu0 0.0
    %3086 = vmatprep.subr.mxu0 0.0
    %3087 = vmatpush2.msra.mxu0 0.0
    %3088 = vmatprep.subr.mxu0 0.0
    %3089 = vmatpush2.msra.mxu0 0.0
    %3090 = vmatprep.subr.mxu0 0.0
    %3091 = vmatpush2.msra.mxu0 0.0
    %3092 = vmatprep.subr.mxu0 0.0
    %3093 = vmatpush2.msra.mxu0 0.0
    %3094 = vmatprep.subr.mxu0 0.0
    %3095 = vmatpush2.msra.mxu0 0.0
    %3096 = vmatprep.mubr.f32.mxu0 0.0
    %3097 = vmatmul.mubr.f32.gmra.mxu0 %v2730
    %v3098 = vpop.f32.mrf.mxu0
    %v3099 = vadd.f32 %v2964, %v3098
    %v3100 = vpop.f32.mrf.mxu0
    %v3101 = vadd.f32 %v2965, %v3100
    %3102 = vdwg.mxu0
    %3103 = vmatprep.subr.mxu0 %v3031
    %3104 = vmatpush1.msra.mxu0 %v3030
    %3105 = vmatprep.subr.mxu0 %v3027
    %3106 = vmatpush1.msra.mxu0 %v3026
    %3107 = vmatprep.subr.mxu0 %v3023
    %3108 = vmatpush1.msra.mxu0 %v3022
    %3109 = vmatprep.subr.mxu0 %v3019
    %3110 = vmatpush1.msra.mxu0 %v3018
    %3111 = vmatprep.subr.mxu0 %v3015
    %3112 = vmatpush1.msra.mxu0 %v3014
    %3113 = vmatprep.subr.mxu0 %v3011
    %3114 = vmatpush1.msra.mxu0 %v3010
    %3115 = vmatprep.subr.mxu0 %v3007
    %3116 = vmatpush1.msra.mxu0 %v3006
    %3117 = vmatprep.subr.mxu0 %v3003
    %3118 = vmatpush1.msra.mxu0 %v3002
    %3119 = vmatprep.subr.mxu0 %v2999
    %3120 = vmatpush1.msra.mxu0 %v2998
    %3121 = vmatprep.subr.mxu0 %v2995
    %3122 = vmatpush1.msra.mxu0 %v2994
    %3123 = vmatprep.subr.mxu0 %v2991
    %3124 = vmatpush1.msra.mxu0 %v2990
    %3125 = vmatprep.subr.mxu0 %v2987
    %3126 = vmatpush1.msra.mxu0 %v2986
    %3127 = vmatprep.subr.mxu0 %v2983
    %3128 = vmatpush1.msra.mxu0 %v2982
    %3129 = vmatprep.subr.mxu0 %v2979
    %3130 = vmatpush1.msra.mxu0 %v2978
    %3131 = vmatprep.subr.mxu0 %v2975
    %3132 = vmatpush1.msra.mxu0 %v2974
    %3133 = vmatprep.subr.mxu0 %v2971
    %3134 = vmatpush1.msra.mxu0 %v2970
    %3135 = vmatprep.subr.mxu0 0.0
    %3136 = vmatpush2.msra.mxu0 0.0
    %3137 = vmatprep.subr.mxu0 0.0
    %3138 = vmatpush2.msra.mxu0 0.0
    %3139 = vmatprep.subr.mxu0 0.0
    %3140 = vmatpush2.msra.mxu0 0.0
    %3141 = vmatprep.subr.mxu0 0.0
    %3142 = vmatpush2.msra.mxu0 0.0
    %3143 = vmatprep.subr.mxu0 0.0
    %3144 = vmatpush2.msra.mxu0 0.0
    %3145 = vmatprep.subr.mxu0 0.0
    %3146 = vmatpush2.msra.mxu0 0.0
    %3147 = vmatprep.subr.mxu0 0.0
    %3148 = vmatpush2.msra.mxu0 0.0
    %3149 = vmatprep.subr.mxu0 0.0
    %3150 = vmatpush2.msra.mxu0 0.0
    %3151 = vmatprep.subr.mxu0 0.0
    %3152 = vmatpush2.msra.mxu0 0.0
    %3153 = vmatprep.subr.mxu0 0.0
    %3154 = vmatpush2.msra.mxu0 0.0
    %3155 = vmatprep.subr.mxu0 0.0
    %3156 = vmatpush2.msra.mxu0 0.0
    %3157 = vmatprep.subr.mxu0 0.0
    %3158 = vmatpush2.msra.mxu0 0.0
    %3159 = vmatprep.subr.mxu0 0.0
    %3160 = vmatpush2.msra.mxu0 0.0
    %3161 = vmatprep.subr.mxu0 0.0
    %3162 = vmatpush2.msra.mxu0 0.0
    %3163 = vmatprep.subr.mxu0 0.0
    %3164 = vmatpush2.msra.mxu0 0.0
    %3165 = vmatprep.subr.mxu0 0.0
    %3166 = vmatpush2.msra.mxu0 0.0
    %3167 = vmatprep.mubr.f32.mxu0 0.0
    %3168 = vmatmul.mubr.f32.gmra.mxu0 %v2730
    %v3169 = vpop.f32.mrf.mxu0
    %v3170 = vadd.f32 %v2966, %v3169
    %v3171 = vpop.f32.mrf.mxu0
    %v3172 = vadd.f32 %v2967, %v3171
    %3173 = vdwg.mxu0
    %v3174 = vsub.f32 0.0, %v3099
    %v3175 = vmul.f32 %v3174, 1.442695
    %v3176 = vpow.pop %v3175
    %v3177 = vadd.f32 %v3176, 1.0
    %v3178 = vrcp.pop %v3177
    %v3179 = vsub.f32 0.0, %v3101
    %v3180 = vmul.f32 %v3179, 1.442695
    %v3181 = vpow.pop %v3180
    %v3182 = vadd.f32 %v3181, 1.0
    %v3183 = vrcp.pop %v3182
    %v3184 = vtanh.pop %v3170
    %v3185 = vsub.f32 0.0, %v3172
    %v3186 = vmul.f32 %v3185, 1.442695
    %v3187 = vpow.pop %v3186
    %v3188 = vadd.f32 %v3187, 1.0
    %v3189 = vrcp.pop %v3188
    %v3190 = vmul.f32 %v3183, %v2728
    %v3191 = vmul.f32 %v3178, %v3184
    %v3192 = vadd.f32 %v3190, %v3191
    %v3193 = vtanh.pop %v3192
    %v3194 = vmul.f32 %v3189, %v3193
    %3195 = vst [vmem:[#allocation4 + $0x10] sm:$0xff] %v2963
    %3196 = vst [vmem:[#allocation5 + $0x28] sm:$0xff] %v3194
    %v3197 = vld [vmem:[#allocation2 + $0x60] sm:$0xff]
    %v3198 = vld [vmem:[#allocation2 + $0x68] sm:$0xff]
    %v3199 = vld [vmem:[#allocation2 + $0x70] sm:$0xff]
    %v3200 = vld [vmem:[#allocation2 + $0x78] sm:$0xff]
    %v3201 = vld [vmem:[#allocation15] sm:$0xff]
    %v3202 = vld [vmem:[#allocation15 + $0x8] sm:$0xff]
    %v3203 = vld [vmem:[#allocation15 + $0x10] sm:$0xff]
    %v3204 = vld [vmem:[#allocation15 + $0x18] sm:$0xff]
    %v3205 = vld [vmem:[#allocation15 + $0x20] sm:$0xff]
    %v3206 = vld [vmem:[#allocation15 + $0x28] sm:$0xff]
    %v3207 = vld [vmem:[#allocation15 + $0x30] sm:$0xff]
    %v3208 = vld [vmem:[#allocation15 + $0x38] sm:$0xff]
    %v3209 = vld [vmem:[#allocation15 + $0x40] sm:$0xff]
    %v3210 = vld [vmem:[#allocation15 + $0x48] sm:$0xff]
    %v3211 = vld [vmem:[#allocation15 + $0x50] sm:$0xff]
    %v3212 = vld [vmem:[#allocation15 + $0x58] sm:$0xff]
    %v3213 = vld [vmem:[#allocation15 + $0x60] sm:$0xff]
    %v3214 = vld [vmem:[#allocation15 + $0x68] sm:$0xff]
    %v3215 = vld [vmem:[#allocation15 + $0x70] sm:$0xff]
    %v3216 = vld [vmem:[#allocation15 + $0x78] sm:$0xff]
    %v3217 = vld [vmem:[#allocation15 + $0x80] sm:$0xff]
    %v3218 = vld [vmem:[#allocation15 + $0x88] sm:$0xff]
    %v3219 = vld [vmem:[#allocation15 + $0x90] sm:$0xff]
    %v3220 = vld [vmem:[#allocation15 + $0x98] sm:$0xff]
    %v3221 = vld [vmem:[#allocation15 + $0xa0] sm:$0xff]
    %v3222 = vld [vmem:[#allocation15 + $0xa8] sm:$0xff]
    %v3223 = vld [vmem:[#allocation15 + $0xb0] sm:$0xff]
    %v3224 = vld [vmem:[#allocation15 + $0xb8] sm:$0xff]
    %v3225 = vld [vmem:[#allocation15 + $0xc0] sm:$0xff]
    %v3226 = vld [vmem:[#allocation15 + $0xc8] sm:$0xff]
    %v3227 = vld [vmem:[#allocation15 + $0xd0] sm:$0xff]
    %v3228 = vld [vmem:[#allocation15 + $0xd8] sm:$0xff]
    %v3229 = vld [vmem:[#allocation15 + $0xe0] sm:$0xff]
    %v3230 = vld [vmem:[#allocation15 + $0xe8] sm:$0xff]
    %v3231 = vld [vmem:[#allocation15 + $0xf0] sm:$0xff]
    %v3232 = vld [vmem:[#allocation15 + $0xf8] sm:$0xff]
    %v3233 = vld [vmem:[#allocation15 + $0x100] sm:$0xff]
    %v3234 = vld [vmem:[#allocation15 + $0x108] sm:$0xff]
    %v3235 = vld [vmem:[#allocation15 + $0x110] sm:$0xff]
    %v3236 = vld [vmem:[#allocation15 + $0x118] sm:$0xff]
    %v3237 = vld [vmem:[#allocation15 + $0x120] sm:$0xff]
    %v3238 = vld [vmem:[#allocation15 + $0x128] sm:$0xff]
    %v3239 = vld [vmem:[#allocation15 + $0x130] sm:$0xff]
    %v3240 = vld [vmem:[#allocation15 + $0x138] sm:$0xff]
    %v3241 = vld [vmem:[#allocation15 + $0x140] sm:$0xff]
    %v3242 = vld [vmem:[#allocation15 + $0x148] sm:$0xff]
    %v3243 = vld [vmem:[#allocation15 + $0x150] sm:$0xff]
    %v3244 = vld [vmem:[#allocation15 + $0x158] sm:$0xff]
    %v3245 = vld [vmem:[#allocation15 + $0x160] sm:$0xff]
    %v3246 = vld [vmem:[#allocation15 + $0x168] sm:$0xff]
    %v3247 = vld [vmem:[#allocation15 + $0x170] sm:$0xff]
    %v3248 = vld [vmem:[#allocation15 + $0x178] sm:$0xff]
    %v3249 = vld [vmem:[#allocation15 + $0x180] sm:$0xff]
    %v3250 = vld [vmem:[#allocation15 + $0x188] sm:$0xff]
    %v3251 = vld [vmem:[#allocation15 + $0x190] sm:$0xff]
    %v3252 = vld [vmem:[#allocation15 + $0x198] sm:$0xff]
    %v3253 = vld [vmem:[#allocation15 + $0x1a0] sm:$0xff]
    %v3254 = vld [vmem:[#allocation15 + $0x1a8] sm:$0xff]
    %v3255 = vld [vmem:[#allocation15 + $0x1b0] sm:$0xff]
    %v3256 = vld [vmem:[#allocation15 + $0x1b8] sm:$0xff]
    %v3257 = vld [vmem:[#allocation15 + $0x1c0] sm:$0xff]
    %v3258 = vld [vmem:[#allocation15 + $0x1c8] sm:$0xff]
    %v3259 = vld [vmem:[#allocation15 + $0x1d0] sm:$0xff]
    %v3260 = vld [vmem:[#allocation15 + $0x1d8] sm:$0xff]
    %v3261 = vld [vmem:[#allocation15 + $0x1e0] sm:$0xff]
    %v3262 = vld [vmem:[#allocation15 + $0x1e8] sm:$0xff]
    %v3263 = vld [vmem:[#allocation15 + $0x1f0] sm:$0xff]
    %v3264 = vld [vmem:[#allocation15 + $0x1f8] sm:$0xff]
    %3265 = vmatprep.subr.mxu0 %v3262
    %3266 = vmatpush1.msra.mxu0 %v3261
    %3267 = vmatprep.subr.mxu0 %v3258
    %3268 = vmatpush1.msra.mxu0 %v3257
    %3269 = vmatprep.subr.mxu0 %v3254
    %3270 = vmatpush1.msra.mxu0 %v3253
    %3271 = vmatprep.subr.mxu0 %v3250
    %3272 = vmatpush1.msra.mxu0 %v3249
    %3273 = vmatprep.subr.mxu0 %v3246
    %3274 = vmatpush1.msra.mxu0 %v3245
    %3275 = vmatprep.subr.mxu0 %v3242
    %3276 = vmatpush1.msra.mxu0 %v3241
    %3277 = vmatprep.subr.mxu0 %v3238
    %3278 = vmatpush1.msra.mxu0 %v3237
    %3279 = vmatprep.subr.mxu0 %v3234
    %3280 = vmatpush1.msra.mxu0 %v3233
    %3281 = vmatprep.subr.mxu0 %v3230
    %3282 = vmatpush1.msra.mxu0 %v3229
    %3283 = vmatprep.subr.mxu0 %v3226
    %3284 = vmatpush1.msra.mxu0 %v3225
    %3285 = vmatprep.subr.mxu0 %v3222
    %3286 = vmatpush1.msra.mxu0 %v3221
    %3287 = vmatprep.subr.mxu0 %v3218
    %3288 = vmatpush1.msra.mxu0 %v3217
    %3289 = vmatprep.subr.mxu0 %v3214
    %3290 = vmatpush1.msra.mxu0 %v3213
    %3291 = vmatprep.subr.mxu0 %v3210
    %3292 = vmatpush1.msra.mxu0 %v3209
    %3293 = vmatprep.subr.mxu0 %v3206
    %3294 = vmatpush1.msra.mxu0 %v3205
    %3295 = vmatprep.subr.mxu0 %v3202
    %3296 = vmatpush1.msra.mxu0 %v3201
    %3297 = vmatprep.subr.mxu0 0.0
    %3298 = vmatpush2.msra.mxu0 0.0
    %3299 = vmatprep.subr.mxu0 0.0
    %3300 = vmatpush2.msra.mxu0 0.0
    %3301 = vmatprep.subr.mxu0 0.0
    %3302 = vmatpush2.msra.mxu0 0.0
    %3303 = vmatprep.subr.mxu0 0.0
    %3304 = vmatpush2.msra.mxu0 0.0
    %3305 = vmatprep.subr.mxu0 0.0
    %3306 = vmatpush2.msra.mxu0 0.0
    %3307 = vmatprep.subr.mxu0 0.0
    %3308 = vmatpush2.msra.mxu0 0.0
    %3309 = vmatprep.subr.mxu0 0.0
    %3310 = vmatpush2.msra.mxu0 0.0
    %3311 = vmatprep.subr.mxu0 0.0
    %3312 = vmatpush2.msra.mxu0 0.0
    %3313 = vmatprep.subr.mxu0 0.0
    %3314 = vmatpush2.msra.mxu0 0.0
    %3315 = vmatprep.subr.mxu0 0.0
    %3316 = vmatpush2.msra.mxu0 0.0
    %3317 = vmatprep.subr.mxu0 0.0
    %3318 = vmatpush2.msra.mxu0 0.0
    %3319 = vmatprep.subr.mxu0 0.0
    %3320 = vmatpush2.msra.mxu0 0.0
    %3321 = vmatprep.subr.mxu0 0.0
    %3322 = vmatpush2.msra.mxu0 0.0
    %3323 = vmatprep.subr.mxu0 0.0
    %3324 = vmatpush2.msra.mxu0 0.0
    %3325 = vmatprep.subr.mxu0 0.0
    %3326 = vmatpush2.msra.mxu0 0.0
    %3327 = vmatprep.subr.mxu0 0.0
    %3328 = vmatpush2.msra.mxu0 0.0
    %3329 = vmatprep.mubr.f32.mxu0 0.0
    %3330 = vmatmul.mubr.f32.gmra.mxu0 %v2963
    %v3331 = vpop.f32.mrf.mxu0
    %v3332 = vadd.f32 %v3197, %v3331
    %v3333 = vpop.f32.mrf.mxu0
    %v3334 = vadd.f32 %v3198, %v3333
    %3335 = vdwg.mxu0
    %3336 = vmatprep.subr.mxu0 %v3264
    %3337 = vmatpush1.msra.mxu0 %v3263
    %3338 = vmatprep.subr.mxu0 %v3260
    %3339 = vmatpush1.msra.mxu0 %v3259
    %3340 = vmatprep.subr.mxu0 %v3256
    %3341 = vmatpush1.msra.mxu0 %v3255
    %3342 = vmatprep.subr.mxu0 %v3252
    %3343 = vmatpush1.msra.mxu0 %v3251
    %3344 = vmatprep.subr.mxu0 %v3248
    %3345 = vmatpush1.msra.mxu0 %v3247
    %3346 = vmatprep.subr.mxu0 %v3244
    %3347 = vmatpush1.msra.mxu0 %v3243
    %3348 = vmatprep.subr.mxu0 %v3240
    %3349 = vmatpush1.msra.mxu0 %v3239
    %3350 = vmatprep.subr.mxu0 %v3236
    %3351 = vmatpush1.msra.mxu0 %v3235
    %3352 = vmatprep.subr.mxu0 %v3232
    %3353 = vmatpush1.msra.mxu0 %v3231
    %3354 = vmatprep.subr.mxu0 %v3228
    %3355 = vmatpush1.msra.mxu0 %v3227
    %3356 = vmatprep.subr.mxu0 %v3224
    %3357 = vmatpush1.msra.mxu0 %v3223
    %3358 = vmatprep.subr.mxu0 %v3220
    %3359 = vmatpush1.msra.mxu0 %v3219
    %3360 = vmatprep.subr.mxu0 %v3216
    %3361 = vmatpush1.msra.mxu0 %v3215
    %3362 = vmatprep.subr.mxu0 %v3212
    %3363 = vmatpush1.msra.mxu0 %v3211
    %3364 = vmatprep.subr.mxu0 %v3208
    %3365 = vmatpush1.msra.mxu0 %v3207
    %3366 = vmatprep.subr.mxu0 %v3204
    %3367 = vmatpush1.msra.mxu0 %v3203
    %3368 = vmatprep.subr.mxu0 0.0
    %3369 = vmatpush2.msra.mxu0 0.0
    %3370 = vmatprep.subr.mxu0 0.0
    %3371 = vmatpush2.msra.mxu0 0.0
    %3372 = vmatprep.subr.mxu0 0.0
    %3373 = vmatpush2.msra.mxu0 0.0
    %3374 = vmatprep.subr.mxu0 0.0
    %3375 = vmatpush2.msra.mxu0 0.0
    %3376 = vmatprep.subr.mxu0 0.0
    %3377 = vmatpush2.msra.mxu0 0.0
    %3378 = vmatprep.subr.mxu0 0.0
    %3379 = vmatpush2.msra.mxu0 0.0
    %3380 = vmatprep.subr.mxu0 0.0
    %3381 = vmatpush2.msra.mxu0 0.0
    %3382 = vmatprep.subr.mxu0 0.0
    %3383 = vmatpush2.msra.mxu0 0.0
    %3384 = vmatprep.subr.mxu0 0.0
    %3385 = vmatpush2.msra.mxu0 0.0
    %3386 = vmatprep.subr.mxu0 0.0
    %3387 = vmatpush2.msra.mxu0 0.0
    %3388 = vmatprep.subr.mxu0 0.0
    %3389 = vmatpush2.msra.mxu0 0.0
    %3390 = vmatprep.subr.mxu0 0.0
    %3391 = vmatpush2.msra.mxu0 0.0
    %3392 = vmatprep.subr.mxu0 0.0
    %3393 = vmatpush2.msra.mxu0 0.0
    %3394 = vmatprep.subr.mxu0 0.0
    %3395 = vmatpush2.msra.mxu0 0.0
    %3396 = vmatprep.subr.mxu0 0.0
    %3397 = vmatpush2.msra.mxu0 0.0
    %3398 = vmatprep.subr.mxu0 0.0
    %3399 = vmatpush2.msra.mxu0 0.0
    %3400 = vmatprep.mubr.f32.mxu0 0.0
    %3401 = vmatmul.mubr.f32.gmra.mxu0 %v2963
    %v3402 = vpop.f32.mrf.mxu0
    %v3403 = vadd.f32 %v3199, %v3402
    %v3404 = vpop.f32.mrf.mxu0
    %v3405 = vadd.f32 %v3200, %v3404
    %3406 = vdwg.mxu0
    %v3407 = vsub.f32 0.0, %v3332
    %v3408 = vmul.f32 %v3407, 1.442695
    %v3409 = vpow.pop %v3408
    %v3410 = vadd.f32 %v3409, 1.0
    %v3411 = vrcp.pop %v3410
    %v3412 = vsub.f32 0.0, %v3334
    %v3413 = vmul.f32 %v3412, 1.442695
    %v3414 = vpow.pop %v3413
    %v3415 = vadd.f32 %v3414, 1.0
    %v3416 = vrcp.pop %v3415
    %v3417 = vtanh.pop %v3403
    %v3418 = vsub.f32 0.0, %v3405
    %v3419 = vmul.f32 %v3418, 1.442695
    %v3420 = vpow.pop %v3419
    %v3421 = vadd.f32 %v3420, 1.0
    %v3422 = vrcp.pop %v3421
    %v3423 = vmul.f32 %v3416, %v2961
    %v3424 = vmul.f32 %v3411, %v3417
    %v3425 = vadd.f32 %v3423, %v3424
    %v3426 = vtanh.pop %v3425
    %v3427 = vmul.f32 %v3422, %v3426
    %v3428 = vld [vmem:[#allocation3 + $0x80] sm:$0xff]
    %v3429 = vld [vmem:[#allocation3 + $0x88] sm:$0xff]
    %v3430 = vld [vmem:[#allocation3 + $0x90] sm:$0xff]
    %v3431 = vld [vmem:[#allocation3 + $0x98] sm:$0xff]
    %v3432 = vld [vmem:[#allocation18] sm:$0xff]
    %v3433 = vld [vmem:[#allocation18 + $0x8] sm:$0xff]
    %v3434 = vld [vmem:[#allocation18 + $0x10] sm:$0xff]
    %v3435 = vld [vmem:[#allocation18 + $0x18] sm:$0xff]
    %v3436 = vld [vmem:[#allocation18 + $0x20] sm:$0xff]
    %v3437 = vld [vmem:[#allocation18 + $0x28] sm:$0xff]
    %v3438 = vld [vmem:[#allocation18 + $0x30] sm:$0xff]
    %v3439 = vld [vmem:[#allocation18 + $0x38] sm:$0xff]
    %v3440 = vld [vmem:[#allocation18 + $0x40] sm:$0xff]
    %v3441 = vld [vmem:[#allocation18 + $0x48] sm:$0xff]
    %v3442 = vld [vmem:[#allocation18 + $0x50] sm:$0xff]
    %v3443 = vld [vmem:[#allocation18 + $0x58] sm:$0xff]
    %v3444 = vld [vmem:[#allocation18 + $0x60] sm:$0xff]
    %v3445 = vld [vmem:[#allocation18 + $0x68] sm:$0xff]
    %v3446 = vld [vmem:[#allocation18 + $0x70] sm:$0xff]
    %v3447 = vld [vmem:[#allocation18 + $0x78] sm:$0xff]
    %v3448 = vld [vmem:[#allocation18 + $0x80] sm:$0xff]
    %v3449 = vld [vmem:[#allocation18 + $0x88] sm:$0xff]
    %v3450 = vld [vmem:[#allocation18 + $0x90] sm:$0xff]
    %v3451 = vld [vmem:[#allocation18 + $0x98] sm:$0xff]
    %v3452 = vld [vmem:[#allocation18 + $0xa0] sm:$0xff]
    %v3453 = vld [vmem:[#allocation18 + $0xa8] sm:$0xff]
    %v3454 = vld [vmem:[#allocation18 + $0xb0] sm:$0xff]
    %v3455 = vld [vmem:[#allocation18 + $0xb8] sm:$0xff]
    %v3456 = vld [vmem:[#allocation18 + $0xc0] sm:$0xff]
    %v3457 = vld [vmem:[#allocation18 + $0xc8] sm:$0xff]
    %v3458 = vld [vmem:[#allocation18 + $0xd0] sm:$0xff]
    %v3459 = vld [vmem:[#allocation18 + $0xd8] sm:$0xff]
    %v3460 = vld [vmem:[#allocation18 + $0xe0] sm:$0xff]
    %v3461 = vld [vmem:[#allocation18 + $0xe8] sm:$0xff]
    %v3462 = vld [vmem:[#allocation18 + $0xf0] sm:$0xff]
    %v3463 = vld [vmem:[#allocation18 + $0xf8] sm:$0xff]
    %v3464 = vld [vmem:[#allocation18 + $0x100] sm:$0xff]
    %v3465 = vld [vmem:[#allocation18 + $0x108] sm:$0xff]
    %v3466 = vld [vmem:[#allocation18 + $0x110] sm:$0xff]
    %v3467 = vld [vmem:[#allocation18 + $0x118] sm:$0xff]
    %v3468 = vld [vmem:[#allocation18 + $0x120] sm:$0xff]
    %v3469 = vld [vmem:[#allocation18 + $0x128] sm:$0xff]
    %v3470 = vld [vmem:[#allocation18 + $0x130] sm:$0xff]
    %v3471 = vld [vmem:[#allocation18 + $0x138] sm:$0xff]
    %v3472 = vld [vmem:[#allocation18 + $0x140] sm:$0xff]
    %v3473 = vld [vmem:[#allocation18 + $0x148] sm:$0xff]
    %v3474 = vld [vmem:[#allocation18 + $0x150] sm:$0xff]
    %v3475 = vld [vmem:[#allocation18 + $0x158] sm:$0xff]
    %v3476 = vld [vmem:[#allocation18 + $0x160] sm:$0xff]
    %v3477 = vld [vmem:[#allocation18 + $0x168] sm:$0xff]
    %v3478 = vld [vmem:[#allocation18 + $0x170] sm:$0xff]
    %v3479 = vld [vmem:[#allocation18 + $0x178] sm:$0xff]
    %v3480 = vld [vmem:[#allocation18 + $0x180] sm:$0xff]
    %v3481 = vld [vmem:[#allocation18 + $0x188] sm:$0xff]
    %v3482 = vld [vmem:[#allocation18 + $0x190] sm:$0xff]
    %v3483 = vld [vmem:[#allocation18 + $0x198] sm:$0xff]
    %v3484 = vld [vmem:[#allocation18 + $0x1a0] sm:$0xff]
    %v3485 = vld [vmem:[#allocation18 + $0x1a8] sm:$0xff]
    %v3486 = vld [vmem:[#allocation18 + $0x1b0] sm:$0xff]
    %v3487 = vld [vmem:[#allocation18 + $0x1b8] sm:$0xff]
    %v3488 = vld [vmem:[#allocation18 + $0x1c0] sm:$0xff]
    %v3489 = vld [vmem:[#allocation18 + $0x1c8] sm:$0xff]
    %v3490 = vld [vmem:[#allocation18 + $0x1d0] sm:$0xff]
    %v3491 = vld [vmem:[#allocation18 + $0x1d8] sm:$0xff]
    %v3492 = vld [vmem:[#allocation18 + $0x1e0] sm:$0xff]
    %v3493 = vld [vmem:[#allocation18 + $0x1e8] sm:$0xff]
    %v3494 = vld [vmem:[#allocation18 + $0x1f0] sm:$0xff]
    %v3495 = vld [vmem:[#allocation18 + $0x1f8] sm:$0xff]
    %3496 = vmatprep.subr.mxu0 %v3493
    %3497 = vmatpush1.msra.mxu0 %v3492
    %3498 = vmatprep.subr.mxu0 %v3489
    %3499 = vmatpush1.msra.mxu0 %v3488
    %3500 = vmatprep.subr.mxu0 %v3485
    %3501 = vmatpush1.msra.mxu0 %v3484
    %3502 = vmatprep.subr.mxu0 %v3481
    %3503 = vmatpush1.msra.mxu0 %v3480
    %3504 = vmatprep.subr.mxu0 %v3477
    %3505 = vmatpush1.msra.mxu0 %v3476
    %3506 = vmatprep.subr.mxu0 %v3473
    %3507 = vmatpush1.msra.mxu0 %v3472
    %3508 = vmatprep.subr.mxu0 %v3469
    %3509 = vmatpush1.msra.mxu0 %v3468
    %3510 = vmatprep.subr.mxu0 %v3465
    %3511 = vmatpush1.msra.mxu0 %v3464
    %3512 = vmatprep.subr.mxu0 %v3461
    %3513 = vmatpush1.msra.mxu0 %v3460
    %3514 = vmatprep.subr.mxu0 %v3457
    %3515 = vmatpush1.msra.mxu0 %v3456
    %3516 = vmatprep.subr.mxu0 %v3453
    %3517 = vmatpush1.msra.mxu0 %v3452
    %3518 = vmatprep.subr.mxu0 %v3449
    %3519 = vmatpush1.msra.mxu0 %v3448
    %3520 = vmatprep.subr.mxu0 %v3445
    %3521 = vmatpush1.msra.mxu0 %v3444
    %3522 = vmatprep.subr.mxu0 %v3441
    %3523 = vmatpush1.msra.mxu0 %v3440
    %3524 = vmatprep.subr.mxu0 %v3437
    %3525 = vmatpush1.msra.mxu0 %v3436
    %3526 = vmatprep.subr.mxu0 %v3433
    %3527 = vmatpush1.msra.mxu0 %v3432
    %3528 = vmatprep.subr.mxu0 0.0
    %3529 = vmatpush2.msra.mxu0 0.0
    %3530 = vmatprep.subr.mxu0 0.0
    %3531 = vmatpush2.msra.mxu0 0.0
    %3532 = vmatprep.subr.mxu0 0.0
    %3533 = vmatpush2.msra.mxu0 0.0
    %3534 = vmatprep.subr.mxu0 0.0
    %3535 = vmatpush2.msra.mxu0 0.0
    %3536 = vmatprep.subr.mxu0 0.0
    %3537 = vmatpush2.msra.mxu0 0.0
    %3538 = vmatprep.subr.mxu0 0.0
    %3539 = vmatpush2.msra.mxu0 0.0
    %3540 = vmatprep.subr.mxu0 0.0
    %3541 = vmatpush2.msra.mxu0 0.0
    %3542 = vmatprep.subr.mxu0 0.0
    %3543 = vmatpush2.msra.mxu0 0.0
    %3544 = vmatprep.subr.mxu0 0.0
    %3545 = vmatpush2.msra.mxu0 0.0
    %3546 = vmatprep.subr.mxu0 0.0
    %3547 = vmatpush2.msra.mxu0 0.0
    %3548 = vmatprep.subr.mxu0 0.0
    %3549 = vmatpush2.msra.mxu0 0.0
    %3550 = vmatprep.subr.mxu0 0.0
    %3551 = vmatpush2.msra.mxu0 0.0
    %3552 = vmatprep.subr.mxu0 0.0
    %3553 = vmatpush2.msra.mxu0 0.0
    %3554 = vmatprep.subr.mxu0 0.0
    %3555 = vmatpush2.msra.mxu0 0.0
    %3556 = vmatprep.subr.mxu0 0.0
    %3557 = vmatpush2.msra.mxu0 0.0
    %3558 = vmatprep.subr.mxu0 0.0
    %3559 = vmatpush2.msra.mxu0 0.0
    %3560 = vmatprep.mubr.f32.mxu0 0.0
    %3561 = vmatmul.mubr.f32.gmra.mxu0 %v3194
    %v3562 = vpop.f32.mrf.mxu0
    %v3563 = vadd.f32 %v3428, %v3562
    %v3564 = vpop.f32.mrf.mxu0
    %v3565 = vadd.f32 %v3429, %v3564
    %3566 = vdwg.mxu0
    %3567 = vmatprep.subr.mxu0 %v3495
    %3568 = vmatpush1.msra.mxu0 %v3494
    %3569 = vmatprep.subr.mxu0 %v3491
    %3570 = vmatpush1.msra.mxu0 %v3490
    %3571 = vmatprep.subr.mxu0 %v3487
    %3572 = vmatpush1.msra.mxu0 %v3486
    %3573 = vmatprep.subr.mxu0 %v3483
    %3574 = vmatpush1.msra.mxu0 %v3482
    %3575 = vmatprep.subr.mxu0 %v3479
    %3576 = vmatpush1.msra.mxu0 %v3478
    %3577 = vmatprep.subr.mxu0 %v3475
    %3578 = vmatpush1.msra.mxu0 %v3474
    %3579 = vmatprep.subr.mxu0 %v3471
    %3580 = vmatpush1.msra.mxu0 %v3470
    %3581 = vmatprep.subr.mxu0 %v3467
    %3582 = vmatpush1.msra.mxu0 %v3466
    %3583 = vmatprep.subr.mxu0 %v3463
    %3584 = vmatpush1.msra.mxu0 %v3462
    %3585 = vmatprep.subr.mxu0 %v3459
    %3586 = vmatpush1.msra.mxu0 %v3458
    %3587 = vmatprep.subr.mxu0 %v3455
    %3588 = vmatpush1.msra.mxu0 %v3454
    %3589 = vmatprep.subr.mxu0 %v3451
    %3590 = vmatpush1.msra.mxu0 %v3450
    %3591 = vmatprep.subr.mxu0 %v3447
    %3592 = vmatpush1.msra.mxu0 %v3446
    %3593 = vmatprep.subr.mxu0 %v3443
    %3594 = vmatpush1.msra.mxu0 %v3442
    %3595 = vmatprep.subr.mxu0 %v3439
    %3596 = vmatpush1.msra.mxu0 %v3438
    %3597 = vmatprep.subr.mxu0 %v3435
    %3598 = vmatpush1.msra.mxu0 %v3434
    %3599 = vmatprep.subr.mxu0 0.0
    %3600 = vmatpush2.msra.mxu0 0.0
    %3601 = vmatprep.subr.mxu0 0.0
    %3602 = vmatpush2.msra.mxu0 0.0
    %3603 = vmatprep.subr.mxu0 0.0
    %3604 = vmatpush2.msra.mxu0 0.0
    %3605 = vmatprep.subr.mxu0 0.0
    %3606 = vmatpush2.msra.mxu0 0.0
    %3607 = vmatprep.subr.mxu0 0.0
    %3608 = vmatpush2.msra.mxu0 0.0
    %3609 = vmatprep.subr.mxu0 0.0
    %3610 = vmatpush2.msra.mxu0 0.0
    %3611 = vmatprep.subr.mxu0 0.0
    %3612 = vmatpush2.msra.mxu0 0.0
    %3613 = vmatprep.subr.mxu0 0.0
    %3614 = vmatpush2.msra.mxu0 0.0
    %3615 = vmatprep.subr.mxu0 0.0
    %3616 = vmatpush2.msra.mxu0 0.0
    %3617 = vmatprep.subr.mxu0 0.0
    %3618 = vmatpush2.msra.mxu0 0.0
    %3619 = vmatprep.subr.mxu0 0.0
    %3620 = vmatpush2.msra.mxu0 0.0
    %3621 = vmatprep.subr.mxu0 0.0
    %3622 = vmatpush2.msra.mxu0 0.0
    %3623 = vmatprep.subr.mxu0 0.0
    %3624 = vmatpush2.msra.mxu0 0.0
    %3625 = vmatprep.subr.mxu0 0.0
    %3626 = vmatpush2.msra.mxu0 0.0
    %3627 = vmatprep.subr.mxu0 0.0
    %3628 = vmatpush2.msra.mxu0 0.0
    %3629 = vmatprep.subr.mxu0 0.0
    %3630 = vmatpush2.msra.mxu0 0.0
    %3631 = vmatprep.mubr.f32.mxu0 0.0
    %3632 = vmatmul.mubr.f32.gmra.mxu0 %v3194
    %v3633 = vpop.f32.mrf.mxu0
    %v3634 = vadd.f32 %v3430, %v3633
    %v3635 = vpop.f32.mrf.mxu0
    %v3636 = vadd.f32 %v3431, %v3635
    %3637 = vdwg.mxu0
    %v3638 = vsub.f32 0.0, %v3563
    %v3639 = vmul.f32 %v3638, 1.442695
    %v3640 = vpow.pop %v3639
    %v3641 = vadd.f32 %v3640, 1.0
    %v3642 = vrcp.pop %v3641
    %v3643 = vsub.f32 0.0, %v3565
    %v3644 = vmul.f32 %v3643, 1.442695
    %v3645 = vpow.pop %v3644
    %v3646 = vadd.f32 %v3645, 1.0
    %v3647 = vrcp.pop %v3646
    %v3648 = vtanh.pop %v3634
    %v3649 = vsub.f32 0.0, %v3636
    %v3650 = vmul.f32 %v3649, 1.442695
    %v3651 = vpow.pop %v3650
    %v3652 = vadd.f32 %v3651, 1.0
    %v3653 = vrcp.pop %v3652
    %v3654 = vmul.f32 %v3647, %v3192
    %v3655 = vmul.f32 %v3642, %v3648
    %v3656 = vadd.f32 %v3654, %v3655
    %v3657 = vtanh.pop %v3656
    %v3658 = vmul.f32 %v3653, %v3657
    %3659 = vst [vmem:[#allocation4 + $0x18] sm:$0xff] %v3427
    %3660 = vst [vmem:[#allocation5 + $0x20] sm:$0xff] %v3658
    %v3661 = vld [vmem:[#allocation2 + $0x80] sm:$0xff]
    %v3662 = vld [vmem:[#allocation2 + $0x88] sm:$0xff]
    %v3663 = vld [vmem:[#allocation2 + $0x90] sm:$0xff]
    %v3664 = vld [vmem:[#allocation2 + $0x98] sm:$0xff]
    %v3665 = vld [vmem:[#allocation15] sm:$0xff]
    %v3666 = vld [vmem:[#allocation15 + $0x8] sm:$0xff]
    %v3667 = vld [vmem:[#allocation15 + $0x10] sm:$0xff]
    %v3668 = vld [vmem:[#allocation15 + $0x18] sm:$0xff]
    %v3669 = vld [vmem:[#allocation15 + $0x20] sm:$0xff]
    %v3670 = vld [vmem:[#allocation15 + $0x28] sm:$0xff]
    %v3671 = vld [vmem:[#allocation15 + $0x30] sm:$0xff]
    %v3672 = vld [vmem:[#allocation15 + $0x38] sm:$0xff]
    %v3673 = vld [vmem:[#allocation15 + $0x40] sm:$0xff]
    %v3674 = vld [vmem:[#allocation15 + $0x48] sm:$0xff]
    %v3675 = vld [vmem:[#allocation15 + $0x50] sm:$0xff]
    %v3676 = vld [vmem:[#allocation15 + $0x58] sm:$0xff]
    %v3677 = vld [vmem:[#allocation15 + $0x60] sm:$0xff]
    %v3678 = vld [vmem:[#allocation15 + $0x68] sm:$0xff]
    %v3679 = vld [vmem:[#allocation15 + $0x70] sm:$0xff]
    %v3680 = vld [vmem:[#allocation15 + $0x78] sm:$0xff]
    %v3681 = vld [vmem:[#allocation15 + $0x80] sm:$0xff]
    %v3682 = vld [vmem:[#allocation15 + $0x88] sm:$0xff]
    %v3683 = vld [vmem:[#allocation15 + $0x90] sm:$0xff]
    %v3684 = vld [vmem:[#allocation15 + $0x98] sm:$0xff]
    %v3685 = vld [vmem:[#allocation15 + $0xa0] sm:$0xff]
    %v3686 = vld [vmem:[#allocation15 + $0xa8] sm:$0xff]
    %v3687 = vld [vmem:[#allocation15 + $0xb0] sm:$0xff]
    %v3688 = vld [vmem:[#allocation15 + $0xb8] sm:$0xff]
    %v3689 = vld [vmem:[#allocation15 + $0xc0] sm:$0xff]
    %v3690 = vld [vmem:[#allocation15 + $0xc8] sm:$0xff]
    %v3691 = vld [vmem:[#allocation15 + $0xd0] sm:$0xff]
    %v3692 = vld [vmem:[#allocation15 + $0xd8] sm:$0xff]
    %v3693 = vld [vmem:[#allocation15 + $0xe0] sm:$0xff]
    %v3694 = vld [vmem:[#allocation15 + $0xe8] sm:$0xff]
    %v3695 = vld [vmem:[#allocation15 + $0xf0] sm:$0xff]
    %v3696 = vld [vmem:[#allocation15 + $0xf8] sm:$0xff]
    %v3697 = vld [vmem:[#allocation15 + $0x100] sm:$0xff]
    %v3698 = vld [vmem:[#allocation15 + $0x108] sm:$0xff]
    %v3699 = vld [vmem:[#allocation15 + $0x110] sm:$0xff]
    %v3700 = vld [vmem:[#allocation15 + $0x118] sm:$0xff]
    %v3701 = vld [vmem:[#allocation15 + $0x120] sm:$0xff]
    %v3702 = vld [vmem:[#allocation15 + $0x128] sm:$0xff]
    %v3703 = vld [vmem:[#allocation15 + $0x130] sm:$0xff]
    %v3704 = vld [vmem:[#allocation15 + $0x138] sm:$0xff]
    %v3705 = vld [vmem:[#allocation15 + $0x140] sm:$0xff]
    %v3706 = vld [vmem:[#allocation15 + $0x148] sm:$0xff]
    %v3707 = vld [vmem:[#allocation15 + $0x150] sm:$0xff]
    %v3708 = vld [vmem:[#allocation15 + $0x158] sm:$0xff]
    %v3709 = vld [vmem:[#allocation15 + $0x160] sm:$0xff]
    %v3710 = vld [vmem:[#allocation15 + $0x168] sm:$0xff]
    %v3711 = vld [vmem:[#allocation15 + $0x170] sm:$0xff]
    %v3712 = vld [vmem:[#allocation15 + $0x178] sm:$0xff]
    %v3713 = vld [vmem:[#allocation15 + $0x180] sm:$0xff]
    %v3714 = vld [vmem:[#allocation15 + $0x188] sm:$0xff]
    %v3715 = vld [vmem:[#allocation15 + $0x190] sm:$0xff]
    %v3716 = vld [vmem:[#allocation15 + $0x198] sm:$0xff]
    %v3717 = vld [vmem:[#allocation15 + $0x1a0] sm:$0xff]
    %v3718 = vld [vmem:[#allocation15 + $0x1a8] sm:$0xff]
    %v3719 = vld [vmem:[#allocation15 + $0x1b0] sm:$0xff]
    %v3720 = vld [vmem:[#allocation15 + $0x1b8] sm:$0xff]
    %v3721 = vld [vmem:[#allocation15 + $0x1c0] sm:$0xff]
    %v3722 = vld [vmem:[#allocation15 + $0x1c8] sm:$0xff]
    %v3723 = vld [vmem:[#allocation15 + $0x1d0] sm:$0xff]
    %v3724 = vld [vmem:[#allocation15 + $0x1d8] sm:$0xff]
    %v3725 = vld [vmem:[#allocation15 + $0x1e0] sm:$0xff]
    %v3726 = vld [vmem:[#allocation15 + $0x1e8] sm:$0xff]
    %v3727 = vld [vmem:[#allocation15 + $0x1f0] sm:$0xff]
    %v3728 = vld [vmem:[#allocation15 + $0x1f8] sm:$0xff]
    %3729 = vmatprep.subr.mxu0 %v3726
    %3730 = vmatpush1.msra.mxu0 %v3725
    %3731 = vmatprep.subr.mxu0 %v3722
    %3732 = vmatpush1.msra.mxu0 %v3721
    %3733 = vmatprep.subr.mxu0 %v3718
    %3734 = vmatpush1.msra.mxu0 %v3717
    %3735 = vmatprep.subr.mxu0 %v3714
    %3736 = vmatpush1.msra.mxu0 %v3713
    %3737 = vmatprep.subr.mxu0 %v3710
    %3738 = vmatpush1.msra.mxu0 %v3709
    %3739 = vmatprep.subr.mxu0 %v3706
    %3740 = vmatpush1.msra.mxu0 %v3705
    %3741 = vmatprep.subr.mxu0 %v3702
    %3742 = vmatpush1.msra.mxu0 %v3701
    %3743 = vmatprep.subr.mxu0 %v3698
    %3744 = vmatpush1.msra.mxu0 %v3697
    %3745 = vmatprep.subr.mxu0 %v3694
    %3746 = vmatpush1.msra.mxu0 %v3693
    %3747 = vmatprep.subr.mxu0 %v3690
    %3748 = vmatpush1.msra.mxu0 %v3689
    %3749 = vmatprep.subr.mxu0 %v3686
    %3750 = vmatpush1.msra.mxu0 %v3685
    %3751 = vmatprep.subr.mxu0 %v3682
    %3752 = vmatpush1.msra.mxu0 %v3681
    %3753 = vmatprep.subr.mxu0 %v3678
    %3754 = vmatpush1.msra.mxu0 %v3677
    %3755 = vmatprep.subr.mxu0 %v3674
    %3756 = vmatpush1.msra.mxu0 %v3673
    %3757 = vmatprep.subr.mxu0 %v3670
    %3758 = vmatpush1.msra.mxu0 %v3669
    %3759 = vmatprep.subr.mxu0 %v3666
    %3760 = vmatpush1.msra.mxu0 %v3665
    %3761 = vmatprep.subr.mxu0 0.0
    %3762 = vmatpush2.msra.mxu0 0.0
    %3763 = vmatprep.subr.mxu0 0.0
    %3764 = vmatpush2.msra.mxu0 0.0
    %3765 = vmatprep.subr.mxu0 0.0
    %3766 = vmatpush2.msra.mxu0 0.0
    %3767 = vmatprep.subr.mxu0 0.0
    %3768 = vmatpush2.msra.mxu0 0.0
    %3769 = vmatprep.subr.mxu0 0.0
    %3770 = vmatpush2.msra.mxu0 0.0
    %3771 = vmatprep.subr.mxu0 0.0
    %3772 = vmatpush2.msra.mxu0 0.0
    %3773 = vmatprep.subr.mxu0 0.0
    %3774 = vmatpush2.msra.mxu0 0.0
    %3775 = vmatprep.subr.mxu0 0.0
    %3776 = vmatpush2.msra.mxu0 0.0
    %3777 = vmatprep.subr.mxu0 0.0
    %3778 = vmatpush2.msra.mxu0 0.0
    %3779 = vmatprep.subr.mxu0 0.0
    %3780 = vmatpush2.msra.mxu0 0.0
    %3781 = vmatprep.subr.mxu0 0.0
    %3782 = vmatpush2.msra.mxu0 0.0
    %3783 = vmatprep.subr.mxu0 0.0
    %3784 = vmatpush2.msra.mxu0 0.0
    %3785 = vmatprep.subr.mxu0 0.0
    %3786 = vmatpush2.msra.mxu0 0.0
    %3787 = vmatprep.subr.mxu0 0.0
    %3788 = vmatpush2.msra.mxu0 0.0
    %3789 = vmatprep.subr.mxu0 0.0
    %3790 = vmatpush2.msra.mxu0 0.0
    %3791 = vmatprep.subr.mxu0 0.0
    %3792 = vmatpush2.msra.mxu0 0.0
    %3793 = vmatprep.mubr.f32.mxu0 0.0
    %3794 = vmatmul.mubr.f32.gmra.mxu0 %v3427
    %v3795 = vpop.f32.mrf.mxu0
    %v3796 = vadd.f32 %v3661, %v3795
    %v3797 = vpop.f32.mrf.mxu0
    %v3798 = vadd.f32 %v3662, %v3797
    %3799 = vdwg.mxu0
    %3800 = vmatprep.subr.mxu0 %v3728
    %3801 = vmatpush1.msra.mxu0 %v3727
    %3802 = vmatprep.subr.mxu0 %v3724
    %3803 = vmatpush1.msra.mxu0 %v3723
    %3804 = vmatprep.subr.mxu0 %v3720
    %3805 = vmatpush1.msra.mxu0 %v3719
    %3806 = vmatprep.subr.mxu0 %v3716
    %3807 = vmatpush1.msra.mxu0 %v3715
    %3808 = vmatprep.subr.mxu0 %v3712
    %3809 = vmatpush1.msra.mxu0 %v3711
    %3810 = vmatprep.subr.mxu0 %v3708
    %3811 = vmatpush1.msra.mxu0 %v3707
    %3812 = vmatprep.subr.mxu0 %v3704
    %3813 = vmatpush1.msra.mxu0 %v3703
    %3814 = vmatprep.subr.mxu0 %v3700
    %3815 = vmatpush1.msra.mxu0 %v3699
    %3816 = vmatprep.subr.mxu0 %v3696
    %3817 = vmatpush1.msra.mxu0 %v3695
    %3818 = vmatprep.subr.mxu0 %v3692
    %3819 = vmatpush1.msra.mxu0 %v3691
    %3820 = vmatprep.subr.mxu0 %v3688
    %3821 = vmatpush1.msra.mxu0 %v3687
    %3822 = vmatprep.subr.mxu0 %v3684
    %3823 = vmatpush1.msra.mxu0 %v3683
    %3824 = vmatprep.subr.mxu0 %v3680
    %3825 = vmatpush1.msra.mxu0 %v3679
    %3826 = vmatprep.subr.mxu0 %v3676
    %3827 = vmatpush1.msra.mxu0 %v3675
    %3828 = vmatprep.subr.mxu0 %v3672
    %3829 = vmatpush1.msra.mxu0 %v3671
    %3830 = vmatprep.subr.mxu0 %v3668
    %3831 = vmatpush1.msra.mxu0 %v3667
    %3832 = vmatprep.subr.mxu0 0.0
    %3833 = vmatpush2.msra.mxu0 0.0
    %3834 = vmatprep.subr.mxu0 0.0
    %3835 = vmatpush2.msra.mxu0 0.0
    %3836 = vmatprep.subr.mxu0 0.0
    %3837 = vmatpush2.msra.mxu0 0.0
    %3838 = vmatprep.subr.mxu0 0.0
    %3839 = vmatpush2.msra.mxu0 0.0
    %3840 = vmatprep.subr.mxu0 0.0
    %3841 = vmatpush2.msra.mxu0 0.0
    %3842 = vmatprep.subr.mxu0 0.0
    %3843 = vmatpush2.msra.mxu0 0.0
    %3844 = vmatprep.subr.mxu0 0.0
    %3845 = vmatpush2.msra.mxu0 0.0
    %3846 = vmatprep.subr.mxu0 0.0
    %3847 = vmatpush2.msra.mxu0 0.0
    %3848 = vmatprep.subr.mxu0 0.0
    %3849 = vmatpush2.msra.mxu0 0.0
    %3850 = vmatprep.subr.mxu0 0.0
    %3851 = vmatpush2.msra.mxu0 0.0
    %3852 = vmatprep.subr.mxu0 0.0
    %3853 = vmatpush2.msra.mxu0 0.0
    %3854 = vmatprep.subr.mxu0 0.0
    %3855 = vmatpush2.msra.mxu0 0.0
    %3856 = vmatprep.subr.mxu0 0.0
    %3857 = vmatpush2.msra.mxu0 0.0
    %3858 = vmatprep.subr.mxu0 0.0
    %3859 = vmatpush2.msra.mxu0 0.0
    %3860 = vmatprep.subr.mxu0 0.0
    %3861 = vmatpush2.msra.mxu0 0.0
    %3862 = vmatprep.subr.mxu0 0.0
    %3863 = vmatpush2.msra.mxu0 0.0
    %3864 = vmatprep.mubr.f32.mxu0 0.0
    %3865 = vmatmul.mubr.f32.gmra.mxu0 %v3427
    %v3866 = vpop.f32.mrf.mxu0
    %v3867 = vadd.f32 %v3663, %v3866
    %v3868 = vpop.f32.mrf.mxu0
    %v3869 = vadd.f32 %v3664, %v3868
    %3870 = vdwg.mxu0
    %v3871 = vsub.f32 0.0, %v3796
    %v3872 = vmul.f32 %v3871, 1.442695
    %v3873 = vpow.pop %v3872
    %v3874 = vadd.f32 %v3873, 1.0
    %v3875 = vrcp.pop %v3874
    %v3876 = vsub.f32 0.0, %v3798
    %v3877 = vmul.f32 %v3876, 1.442695
    %v3878 = vpow.pop %v3877
    %v3879 = vadd.f32 %v3878, 1.0
    %v3880 = vrcp.pop %v3879
    %v3881 = vtanh.pop %v3867
    %v3882 = vsub.f32 0.0, %v3869
    %v3883 = vmul.f32 %v3882, 1.442695
    %v3884 = vpow.pop %v3883
    %v3885 = vadd.f32 %v3884, 1.0
    %v3886 = vrcp.pop %v3885
    %v3887 = vmul.f32 %v3880, %v3425
    %v3888 = vmul.f32 %v3875, %v3881
    %v3889 = vadd.f32 %v3887, %v3888
    %v3890 = vtanh.pop %v3889
    %v3891 = vmul.f32 %v3886, %v3890
    %v3892 = vld [vmem:[#allocation3 + $0x60] sm:$0xff]
    %v3893 = vld [vmem:[#allocation3 + $0x68] sm:$0xff]
    %v3894 = vld [vmem:[#allocation3 + $0x70] sm:$0xff]
    %v3895 = vld [vmem:[#allocation3 + $0x78] sm:$0xff]
    %v3896 = vld [vmem:[#allocation18] sm:$0xff]
    %v3897 = vld [vmem:[#allocation18 + $0x8] sm:$0xff]
    %v3898 = vld [vmem:[#allocation18 + $0x10] sm:$0xff]
    %v3899 = vld [vmem:[#allocation18 + $0x18] sm:$0xff]
    %v3900 = vld [vmem:[#allocation18 + $0x20] sm:$0xff]
    %v3901 = vld [vmem:[#allocation18 + $0x28] sm:$0xff]
    %v3902 = vld [vmem:[#allocation18 + $0x30] sm:$0xff]
    %v3903 = vld [vmem:[#allocation18 + $0x38] sm:$0xff]
    %v3904 = vld [vmem:[#allocation18 + $0x40] sm:$0xff]
    %v3905 = vld [vmem:[#allocation18 + $0x48] sm:$0xff]
    %v3906 = vld [vmem:[#allocation18 + $0x50] sm:$0xff]
    %v3907 = vld [vmem:[#allocation18 + $0x58] sm:$0xff]
    %v3908 = vld [vmem:[#allocation18 + $0x60] sm:$0xff]
    %v3909 = vld [vmem:[#allocation18 + $0x68] sm:$0xff]
    %v3910 = vld [vmem:[#allocation18 + $0x70] sm:$0xff]
    %v3911 = vld [vmem:[#allocation18 + $0x78] sm:$0xff]
    %v3912 = vld [vmem:[#allocation18 + $0x80] sm:$0xff]
    %v3913 = vld [vmem:[#allocation18 + $0x88] sm:$0xff]
    %v3914 = vld [vmem:[#allocation18 + $0x90] sm:$0xff]
    %v3915 = vld [vmem:[#allocation18 + $0x98] sm:$0xff]
    %v3916 = vld [vmem:[#allocation18 + $0xa0] sm:$0xff]
    %v3917 = vld [vmem:[#allocation18 + $0xa8] sm:$0xff]
    %v3918 = vld [vmem:[#allocation18 + $0xb0] sm:$0xff]
    %v3919 = vld [vmem:[#allocation18 + $0xb8] sm:$0xff]
    %v3920 = vld [vmem:[#allocation18 + $0xc0] sm:$0xff]
    %v3921 = vld [vmem:[#allocation18 + $0xc8] sm:$0xff]
    %v3922 = vld [vmem:[#allocation18 + $0xd0] sm:$0xff]
    %v3923 = vld [vmem:[#allocation18 + $0xd8] sm:$0xff]
    %v3924 = vld [vmem:[#allocation18 + $0xe0] sm:$0xff]
    %v3925 = vld [vmem:[#allocation18 + $0xe8] sm:$0xff]
    %v3926 = vld [vmem:[#allocation18 + $0xf0] sm:$0xff]
    %v3927 = vld [vmem:[#allocation18 + $0xf8] sm:$0xff]
    %v3928 = vld [vmem:[#allocation18 + $0x100] sm:$0xff]
    %v3929 = vld [vmem:[#allocation18 + $0x108] sm:$0xff]
    %v3930 = vld [vmem:[#allocation18 + $0x110] sm:$0xff]
    %v3931 = vld [vmem:[#allocation18 + $0x118] sm:$0xff]
    %v3932 = vld [vmem:[#allocation18 + $0x120] sm:$0xff]
    %v3933 = vld [vmem:[#allocation18 + $0x128] sm:$0xff]
    %v3934 = vld [vmem:[#allocation18 + $0x130] sm:$0xff]
    %v3935 = vld [vmem:[#allocation18 + $0x138] sm:$0xff]
    %v3936 = vld [vmem:[#allocation18 + $0x140] sm:$0xff]
    %v3937 = vld [vmem:[#allocation18 + $0x148] sm:$0xff]
    %v3938 = vld [vmem:[#allocation18 + $0x150] sm:$0xff]
    %v3939 = vld [vmem:[#allocation18 + $0x158] sm:$0xff]
    %v3940 = vld [vmem:[#allocation18 + $0x160] sm:$0xff]
    %v3941 = vld [vmem:[#allocation18 + $0x168] sm:$0xff]
    %v3942 = vld [vmem:[#allocation18 + $0x170] sm:$0xff]
    %v3943 = vld [vmem:[#allocation18 + $0x178] sm:$0xff]
    %v3944 = vld [vmem:[#allocation18 + $0x180] sm:$0xff]
    %v3945 = vld [vmem:[#allocation18 + $0x188] sm:$0xff]
    %v3946 = vld [vmem:[#allocation18 + $0x190] sm:$0xff]
    %v3947 = vld [vmem:[#allocation18 + $0x198] sm:$0xff]
    %v3948 = vld [vmem:[#allocation18 + $0x1a0] sm:$0xff]
    %v3949 = vld [vmem:[#allocation18 + $0x1a8] sm:$0xff]
    %v3950 = vld [vmem:[#allocation18 + $0x1b0] sm:$0xff]
    %v3951 = vld [vmem:[#allocation18 + $0x1b8] sm:$0xff]
    %v3952 = vld [vmem:[#allocation18 + $0x1c0] sm:$0xff]
    %v3953 = vld [vmem:[#allocation18 + $0x1c8] sm:$0xff]
    %v3954 = vld [vmem:[#allocation18 + $0x1d0] sm:$0xff]
    %v3955 = vld [vmem:[#allocation18 + $0x1d8] sm:$0xff]
    %v3956 = vld [vmem:[#allocation18 + $0x1e0] sm:$0xff]
    %v3957 = vld [vmem:[#allocation18 + $0x1e8] sm:$0xff]
    %v3958 = vld [vmem:[#allocation18 + $0x1f0] sm:$0xff]
    %v3959 = vld [vmem:[#allocation18 + $0x1f8] sm:$0xff]
    %3960 = vmatprep.subr.mxu0 %v3957
    %3961 = vmatpush1.msra.mxu0 %v3956
    %3962 = vmatprep.subr.mxu0 %v3953
    %3963 = vmatpush1.msra.mxu0 %v3952
    %3964 = vmatprep.subr.mxu0 %v3949
    %3965 = vmatpush1.msra.mxu0 %v3948
    %3966 = vmatprep.subr.mxu0 %v3945
    %3967 = vmatpush1.msra.mxu0 %v3944
    %3968 = vmatprep.subr.mxu0 %v3941
    %3969 = vmatpush1.msra.mxu0 %v3940
    %3970 = vmatprep.subr.mxu0 %v3937
    %3971 = vmatpush1.msra.mxu0 %v3936
    %3972 = vmatprep.subr.mxu0 %v3933
    %3973 = vmatpush1.msra.mxu0 %v3932
    %3974 = vmatprep.subr.mxu0 %v3929
    %3975 = vmatpush1.msra.mxu0 %v3928
    %3976 = vmatprep.subr.mxu0 %v3925
    %3977 = vmatpush1.msra.mxu0 %v3924
    %3978 = vmatprep.subr.mxu0 %v3921
    %3979 = vmatpush1.msra.mxu0 %v3920
    %3980 = vmatprep.subr.mxu0 %v3917
    %3981 = vmatpush1.msra.mxu0 %v3916
    %3982 = vmatprep.subr.mxu0 %v3913
    %3983 = vmatpush1.msra.mxu0 %v3912
    %3984 = vmatprep.subr.mxu0 %v3909
    %3985 = vmatpush1.msra.mxu0 %v3908
    %3986 = vmatprep.subr.mxu0 %v3905
    %3987 = vmatpush1.msra.mxu0 %v3904
    %3988 = vmatprep.subr.mxu0 %v3901
    %3989 = vmatpush1.msra.mxu0 %v3900
    %3990 = vmatprep.subr.mxu0 %v3897
    %3991 = vmatpush1.msra.mxu0 %v3896
    %3992 = vmatprep.subr.mxu0 0.0
    %3993 = vmatpush2.msra.mxu0 0.0
    %3994 = vmatprep.subr.mxu0 0.0
    %3995 = vmatpush2.msra.mxu0 0.0
    %3996 = vmatprep.subr.mxu0 0.0
    %3997 = vmatpush2.msra.mxu0 0.0
    %3998 = vmatprep.subr.mxu0 0.0
    %3999 = vmatpush2.msra.mxu0 0.0
    %4000 = vmatprep.subr.mxu0 0.0
    %4001 = vmatpush2.msra.mxu0 0.0
    %4002 = vmatprep.subr.mxu0 0.0
    %4003 = vmatpush2.msra.mxu0 0.0
    %4004 = vmatprep.subr.mxu0 0.0
    %4005 = vmatpush2.msra.mxu0 0.0
    %4006 = vmatprep.subr.mxu0 0.0
    %4007 = vmatpush2.msra.mxu0 0.0
    %4008 = vmatprep.subr.mxu0 0.0
    %4009 = vmatpush2.msra.mxu0 0.0
    %4010 = vmatprep.subr.mxu0 0.0
    %4011 = vmatpush2.msra.mxu0 0.0
    %4012 = vmatprep.subr.mxu0 0.0
    %4013 = vmatpush2.msra.mxu0 0.0
    %4014 = vmatprep.subr.mxu0 0.0
    %4015 = vmatpush2.msra.mxu0 0.0
    %4016 = vmatprep.subr.mxu0 0.0
    %4017 = vmatpush2.msra.mxu0 0.0
    %4018 = vmatprep.subr.mxu0 0.0
    %4019 = vmatpush2.msra.mxu0 0.0
    %4020 = vmatprep.subr.mxu0 0.0
    %4021 = vmatpush2.msra.mxu0 0.0
    %4022 = vmatprep.subr.mxu0 0.0
    %4023 = vmatpush2.msra.mxu0 0.0
    %4024 = vmatprep.mubr.f32.mxu0 0.0
    %4025 = vmatmul.mubr.f32.gmra.mxu0 %v3658
    %v4026 = vpop.f32.mrf.mxu0
    %v4027 = vadd.f32 %v3892, %v4026
    %v4028 = vpop.f32.mrf.mxu0
    %v4029 = vadd.f32 %v3893, %v4028
    %4030 = vdwg.mxu0
    %4031 = vmatprep.subr.mxu0 %v3959
    %4032 = vmatpush1.msra.mxu0 %v3958
    %4033 = vmatprep.subr.mxu0 %v3955
    %4034 = vmatpush1.msra.mxu0 %v3954
    %4035 = vmatprep.subr.mxu0 %v3951
    %4036 = vmatpush1.msra.mxu0 %v3950
    %4037 = vmatprep.subr.mxu0 %v3947
    %4038 = vmatpush1.msra.mxu0 %v3946
    %4039 = vmatprep.subr.mxu0 %v3943
    %4040 = vmatpush1.msra.mxu0 %v3942
    %4041 = vmatprep.subr.mxu0 %v3939
    %4042 = vmatpush1.msra.mxu0 %v3938
    %4043 = vmatprep.subr.mxu0 %v3935
    %4044 = vmatpush1.msra.mxu0 %v3934
    %4045 = vmatprep.subr.mxu0 %v3931
    %4046 = vmatpush1.msra.mxu0 %v3930
    %4047 = vmatprep.subr.mxu0 %v3927
    %4048 = vmatpush1.msra.mxu0 %v3926
    %4049 = vmatprep.subr.mxu0 %v3923
    %4050 = vmatpush1.msra.mxu0 %v3922
    %4051 = vmatprep.subr.mxu0 %v3919
    %4052 = vmatpush1.msra.mxu0 %v3918
    %4053 = vmatprep.subr.mxu0 %v3915
    %4054 = vmatpush1.msra.mxu0 %v3914
    %4055 = vmatprep.subr.mxu0 %v3911
    %4056 = vmatpush1.msra.mxu0 %v3910
    %4057 = vmatprep.subr.mxu0 %v3907
    %4058 = vmatpush1.msra.mxu0 %v3906
    %4059 = vmatprep.subr.mxu0 %v3903
    %4060 = vmatpush1.msra.mxu0 %v3902
    %4061 = vmatprep.subr.mxu0 %v3899
    %4062 = vmatpush1.msra.mxu0 %v3898
    %4063 = vmatprep.subr.mxu0 0.0
    %4064 = vmatpush2.msra.mxu0 0.0
    %4065 = vmatprep.subr.mxu0 0.0
    %4066 = vmatpush2.msra.mxu0 0.0
    %4067 = vmatprep.subr.mxu0 0.0
    %4068 = vmatpush2.msra.mxu0 0.0
    %4069 = vmatprep.subr.mxu0 0.0
    %4070 = vmatpush2.msra.mxu0 0.0
    %4071 = vmatprep.subr.mxu0 0.0
    %4072 = vmatpush2.msra.mxu0 0.0
    %4073 = vmatprep.subr.mxu0 0.0
    %4074 = vmatpush2.msra.mxu0 0.0
    %4075 = vmatprep.subr.mxu0 0.0
    %4076 = vmatpush2.msra.mxu0 0.0
    %4077 = vmatprep.subr.mxu0 0.0
    %4078 = vmatpush2.msra.mxu0 0.0
    %4079 = vmatprep.subr.mxu0 0.0
    %4080 = vmatpush2.msra.mxu0 0.0
    %4081 = vmatprep.subr.mxu0 0.0
    %4082 = vmatpush2.msra.mxu0 0.0
    %4083 = vmatprep.subr.mxu0 0.0
    %4084 = vmatpush2.msra.mxu0 0.0
    %4085 = vmatprep.subr.mxu0 0.0
    %4086 = vmatpush2.msra.mxu0 0.0
    %4087 = vmatprep.subr.mxu0 0.0
    %4088 = vmatpush2.msra.mxu0 0.0
    %4089 = vmatprep.subr.mxu0 0.0
    %4090 = vmatpush2.msra.mxu0 0.0
    %4091 = vmatprep.subr.mxu0 0.0
    %4092 = vmatpush2.msra.mxu0 0.0
    %4093 = vmatprep.subr.mxu0 0.0
    %4094 = vmatpush2.msra.mxu0 0.0
    %4095 = vmatprep.mubr.f32.mxu0 0.0
    %4096 = vmatmul.mubr.f32.gmra.mxu0 %v3658
    %v4097 = vpop.f32.mrf.mxu0
    %v4098 = vadd.f32 %v3894, %v4097
    %v4099 = vpop.f32.mrf.mxu0
    %v4100 = vadd.f32 %v3895, %v4099
    %4101 = vdwg.mxu0
    %v4102 = vsub.f32 0.0, %v4027
    %v4103 = vmul.f32 %v4102, 1.442695
    %v4104 = vpow.pop %v4103
    %v4105 = vadd.f32 %v4104, 1.0
    %v4106 = vrcp.pop %v4105
    %v4107 = vsub.f32 0.0, %v4029
    %v4108 = vmul.f32 %v4107, 1.442695
    %v4109 = vpow.pop %v4108
    %v4110 = vadd.f32 %v4109, 1.0
    %v4111 = vrcp.pop %v4110
    %v4112 = vtanh.pop %v4098
    %v4113 = vsub.f32 0.0, %v4100
    %v4114 = vmul.f32 %v4113, 1.442695
    %v4115 = vpow.pop %v4114
    %v4116 = vadd.f32 %v4115, 1.0
    %v4117 = vrcp.pop %v4116
    %v4118 = vmul.f32 %v4111, %v3656
    %v4119 = vmul.f32 %v4106, %v4112
    %v4120 = vadd.f32 %v4118, %v4119
    %v4121 = vtanh.pop %v4120
    %v4122 = vmul.f32 %v4117, %v4121
    %4123 = vst [vmem:[#allocation4 + $0x20] sm:$0xff] %v3891
    %4124 = vst [vmem:[#allocation5 + $0x18] sm:$0xff] %v4122
    %v4125 = vld [vmem:[#allocation2 + $0xa0] sm:$0xff]
    %v4126 = vld [vmem:[#allocation2 + $0xa8] sm:$0xff]
    %v4127 = vld [vmem:[#allocation2 + $0xb0] sm:$0xff]
    %v4128 = vld [vmem:[#allocation2 + $0xb8] sm:$0xff]
    %v4129 = vld [vmem:[#allocation15] sm:$0xff]
    %v4130 = vld [vmem:[#allocation15 + $0x8] sm:$0xff]
    %v4131 = vld [vmem:[#allocation15 + $0x10] sm:$0xff]
    %v4132 = vld [vmem:[#allocation15 + $0x18] sm:$0xff]
    %v4133 = vld [vmem:[#allocation15 + $0x20] sm:$0xff]
    %v4134 = vld [vmem:[#allocation15 + $0x28] sm:$0xff]
    %v4135 = vld [vmem:[#allocation15 + $0x30] sm:$0xff]
    %v4136 = vld [vmem:[#allocation15 + $0x38] sm:$0xff]
    %v4137 = vld [vmem:[#allocation15 + $0x40] sm:$0xff]
    %v4138 = vld [vmem:[#allocation15 + $0x48] sm:$0xff]
    %v4139 = vld [vmem:[#allocation15 + $0x50] sm:$0xff]
    %v4140 = vld [vmem:[#allocation15 + $0x58] sm:$0xff]
    %v4141 = vld [vmem:[#allocation15 + $0x60] sm:$0xff]
    %v4142 = vld [vmem:[#allocation15 + $0x68] sm:$0xff]
    %v4143 = vld [vmem:[#allocation15 + $0x70] sm:$0xff]
    %v4144 = vld [vmem:[#allocation15 + $0x78] sm:$0xff]
    %v4145 = vld [vmem:[#allocation15 + $0x80] sm:$0xff]
    %v4146 = vld [vmem:[#allocation15 + $0x88] sm:$0xff]
    %v4147 = vld [vmem:[#allocation15 + $0x90] sm:$0xff]
    %v4148 = vld [vmem:[#allocation15 + $0x98] sm:$0xff]
    %v4149 = vld [vmem:[#allocation15 + $0xa0] sm:$0xff]
    %v4150 = vld [vmem:[#allocation15 + $0xa8] sm:$0xff]
    %v4151 = vld [vmem:[#allocation15 + $0xb0] sm:$0xff]
    %v4152 = vld [vmem:[#allocation15 + $0xb8] sm:$0xff]
    %v4153 = vld [vmem:[#allocation15 + $0xc0] sm:$0xff]
    %v4154 = vld [vmem:[#allocation15 + $0xc8] sm:$0xff]
    %v4155 = vld [vmem:[#allocation15 + $0xd0] sm:$0xff]
    %v4156 = vld [vmem:[#allocation15 + $0xd8] sm:$0xff]
    %v4157 = vld [vmem:[#allocation15 + $0xe0] sm:$0xff]
    %v4158 = vld [vmem:[#allocation15 + $0xe8] sm:$0xff]
    %v4159 = vld [vmem:[#allocation15 + $0xf0] sm:$0xff]
    %v4160 = vld [vmem:[#allocation15 + $0xf8] sm:$0xff]
    %v4161 = vld [vmem:[#allocation15 + $0x100] sm:$0xff]
    %v4162 = vld [vmem:[#allocation15 + $0x108] sm:$0xff]
    %v4163 = vld [vmem:[#allocation15 + $0x110] sm:$0xff]
    %v4164 = vld [vmem:[#allocation15 + $0x118] sm:$0xff]
    %v4165 = vld [vmem:[#allocation15 + $0x120] sm:$0xff]
    %v4166 = vld [vmem:[#allocation15 + $0x128] sm:$0xff]
    %v4167 = vld [vmem:[#allocation15 + $0x130] sm:$0xff]
    %v4168 = vld [vmem:[#allocation15 + $0x138] sm:$0xff]
    %v4169 = vld [vmem:[#allocation15 + $0x140] sm:$0xff]
    %v4170 = vld [vmem:[#allocation15 + $0x148] sm:$0xff]
    %v4171 = vld [vmem:[#allocation15 + $0x150] sm:$0xff]
    %v4172 = vld [vmem:[#allocation15 + $0x158] sm:$0xff]
    %v4173 = vld [vmem:[#allocation15 + $0x160] sm:$0xff]
    %v4174 = vld [vmem:[#allocation15 + $0x168] sm:$0xff]
    %v4175 = vld [vmem:[#allocation15 + $0x170] sm:$0xff]
    %v4176 = vld [vmem:[#allocation15 + $0x178] sm:$0xff]
    %v4177 = vld [vmem:[#allocation15 + $0x180] sm:$0xff]
    %v4178 = vld [vmem:[#allocation15 + $0x188] sm:$0xff]
    %v4179 = vld [vmem:[#allocation15 + $0x190] sm:$0xff]
    %v4180 = vld [vmem:[#allocation15 + $0x198] sm:$0xff]
    %v4181 = vld [vmem:[#allocation15 + $0x1a0] sm:$0xff]
    %v4182 = vld [vmem:[#allocation15 + $0x1a8] sm:$0xff]
    %v4183 = vld [vmem:[#allocation15 + $0x1b0] sm:$0xff]
    %v4184 = vld [vmem:[#allocation15 + $0x1b8] sm:$0xff]
    %v4185 = vld [vmem:[#allocation15 + $0x1c0] sm:$0xff]
    %v4186 = vld [vmem:[#allocation15 + $0x1c8] sm:$0xff]
    %v4187 = vld [vmem:[#allocation15 + $0x1d0] sm:$0xff]
    %v4188 = vld [vmem:[#allocation15 + $0x1d8] sm:$0xff]
    %v4189 = vld [vmem:[#allocation15 + $0x1e0] sm:$0xff]
    %v4190 = vld [vmem:[#allocation15 + $0x1e8] sm:$0xff]
    %v4191 = vld [vmem:[#allocation15 + $0x1f0] sm:$0xff]
    %v4192 = vld [vmem:[#allocation15 + $0x1f8] sm:$0xff]
    %4193 = vmatprep.subr.mxu0 %v4190
    %4194 = vmatpush1.msra.mxu0 %v4189
    %4195 = vmatprep.subr.mxu0 %v4186
    %4196 = vmatpush1.msra.mxu0 %v4185
    %4197 = vmatprep.subr.mxu0 %v4182
    %4198 = vmatpush1.msra.mxu0 %v4181
    %4199 = vmatprep.subr.mxu0 %v4178
    %4200 = vmatpush1.msra.mxu0 %v4177
    %4201 = vmatprep.subr.mxu0 %v4174
    %4202 = vmatpush1.msra.mxu0 %v4173
    %4203 = vmatprep.subr.mxu0 %v4170
    %4204 = vmatpush1.msra.mxu0 %v4169
    %4205 = vmatprep.subr.mxu0 %v4166
    %4206 = vmatpush1.msra.mxu0 %v4165
    %4207 = vmatprep.subr.mxu0 %v4162
    %4208 = vmatpush1.msra.mxu0 %v4161
    %4209 = vmatprep.subr.mxu0 %v4158
    %4210 = vmatpush1.msra.mxu0 %v4157
    %4211 = vmatprep.subr.mxu0 %v4154
    %4212 = vmatpush1.msra.mxu0 %v4153
    %4213 = vmatprep.subr.mxu0 %v4150
    %4214 = vmatpush1.msra.mxu0 %v4149
    %4215 = vmatprep.subr.mxu0 %v4146
    %4216 = vmatpush1.msra.mxu0 %v4145
    %4217 = vmatprep.subr.mxu0 %v4142
    %4218 = vmatpush1.msra.mxu0 %v4141
    %4219 = vmatprep.subr.mxu0 %v4138
    %4220 = vmatpush1.msra.mxu0 %v4137
    %4221 = vmatprep.subr.mxu0 %v4134
    %4222 = vmatpush1.msra.mxu0 %v4133
    %4223 = vmatprep.subr.mxu0 %v4130
    %4224 = vmatpush1.msra.mxu0 %v4129
    %4225 = vmatprep.subr.mxu0 0.0
    %4226 = vmatpush2.msra.mxu0 0.0
    %4227 = vmatprep.subr.mxu0 0.0
    %4228 = vmatpush2.msra.mxu0 0.0
    %4229 = vmatprep.subr.mxu0 0.0
    %4230 = vmatpush2.msra.mxu0 0.0
    %4231 = vmatprep.subr.mxu0 0.0
    %4232 = vmatpush2.msra.mxu0 0.0
    %4233 = vmatprep.subr.mxu0 0.0
    %4234 = vmatpush2.msra.mxu0 0.0
    %4235 = vmatprep.subr.mxu0 0.0
    %4236 = vmatpush2.msra.mxu0 0.0
    %4237 = vmatprep.subr.mxu0 0.0
    %4238 = vmatpush2.msra.mxu0 0.0
    %4239 = vmatprep.subr.mxu0 0.0
    %4240 = vmatpush2.msra.mxu0 0.0
    %4241 = vmatprep.subr.mxu0 0.0
    %4242 = vmatpush2.msra.mxu0 0.0
    %4243 = vmatprep.subr.mxu0 0.0
    %4244 = vmatpush2.msra.mxu0 0.0
    %4245 = vmatprep.subr.mxu0 0.0
    %4246 = vmatpush2.msra.mxu0 0.0
    %4247 = vmatprep.subr.mxu0 0.0
    %4248 = vmatpush2.msra.mxu0 0.0
    %4249 = vmatprep.subr.mxu0 0.0
    %4250 = vmatpush2.msra.mxu0 0.0
    %4251 = vmatprep.subr.mxu0 0.0
    %4252 = vmatpush2.msra.mxu0 0.0
    %4253 = vmatprep.subr.mxu0 0.0
    %4254 = vmatpush2.msra.mxu0 0.0
    %4255 = vmatprep.subr.mxu0 0.0
    %4256 = vmatpush2.msra.mxu0 0.0
    %4257 = vmatprep.mubr.f32.mxu0 0.0
    %4258 = vmatmul.mubr.f32.gmra.mxu0 %v3891
    %v4259 = vpop.f32.mrf.mxu0
    %v4260 = vadd.f32 %v4125, %v4259
    %v4261 = vpop.f32.mrf.mxu0
    %v4262 = vadd.f32 %v4126, %v4261
    %4263 = vdwg.mxu0
    %4264 = vmatprep.subr.mxu0 %v4192
    %4265 = vmatpush1.msra.mxu0 %v4191
    %4266 = vmatprep.subr.mxu0 %v4188
    %4267 = vmatpush1.msra.mxu0 %v4187
    %4268 = vmatprep.subr.mxu0 %v4184
    %4269 = vmatpush1.msra.mxu0 %v4183
    %4270 = vmatprep.subr.mxu0 %v4180
    %4271 = vmatpush1.msra.mxu0 %v4179
    %4272 = vmatprep.subr.mxu0 %v4176
    %4273 = vmatpush1.msra.mxu0 %v4175
    %4274 = vmatprep.subr.mxu0 %v4172
    %4275 = vmatpush1.msra.mxu0 %v4171
    %4276 = vmatprep.subr.mxu0 %v4168
    %4277 = vmatpush1.msra.mxu0 %v4167
    %4278 = vmatprep.subr.mxu0 %v4164
    %4279 = vmatpush1.msra.mxu0 %v4163
    %4280 = vmatprep.subr.mxu0 %v4160
    %4281 = vmatpush1.msra.mxu0 %v4159
    %4282 = vmatprep.subr.mxu0 %v4156
    %4283 = vmatpush1.msra.mxu0 %v4155
    %4284 = vmatprep.subr.mxu0 %v4152
    %4285 = vmatpush1.msra.mxu0 %v4151
    %4286 = vmatprep.subr.mxu0 %v4148
    %4287 = vmatpush1.msra.mxu0 %v4147
    %4288 = vmatprep.subr.mxu0 %v4144
    %4289 = vmatpush1.msra.mxu0 %v4143
    %4290 = vmatprep.subr.mxu0 %v4140
    %4291 = vmatpush1.msra.mxu0 %v4139
    %4292 = vmatprep.subr.mxu0 %v4136
    %4293 = vmatpush1.msra.mxu0 %v4135
    %4294 = vmatprep.subr.mxu0 %v4132
    %4295 = vmatpush1.msra.mxu0 %v4131
    %4296 = vmatprep.subr.mxu0 0.0
    %4297 = vmatpush2.msra.mxu0 0.0
    %4298 = vmatprep.subr.mxu0 0.0
    %4299 = vmatpush2.msra.mxu0 0.0
    %4300 = vmatprep.subr.mxu0 0.0
    %4301 = vmatpush2.msra.mxu0 0.0
    %4302 = vmatprep.subr.mxu0 0.0
    %4303 = vmatpush2.msra.mxu0 0.0
    %4304 = vmatprep.subr.mxu0 0.0
    %4305 = vmatpush2.msra.mxu0 0.0
    %4306 = vmatprep.subr.mxu0 0.0
    %4307 = vmatpush2.msra.mxu0 0.0
    %4308 = vmatprep.subr.mxu0 0.0
    %4309 = vmatpush2.msra.mxu0 0.0
    %4310 = vmatprep.subr.mxu0 0.0
    %4311 = vmatpush2.msra.mxu0 0.0
    %4312 = vmatprep.subr.mxu0 0.0
    %4313 = vmatpush2.msra.mxu0 0.0
    %4314 = vmatprep.subr.mxu0 0.0
    %4315 = vmatpush2.msra.mxu0 0.0
    %4316 = vmatprep.subr.mxu0 0.0
    %4317 = vmatpush2.msra.mxu0 0.0
    %4318 = vmatprep.subr.mxu0 0.0
    %4319 = vmatpush2.msra.mxu0 0.0
    %4320 = vmatprep.subr.mxu0 0.0
    %4321 = vmatpush2.msra.mxu0 0.0
    %4322 = vmatprep.subr.mxu0 0.0
    %4323 = vmatpush2.msra.mxu0 0.0
    %4324 = vmatprep.subr.mxu0 0.0
    %4325 = vmatpush2.msra.mxu0 0.0
    %4326 = vmatprep.subr.mxu0 0.0
    %4327 = vmatpush2.msra.mxu0 0.0
    %4328 = vmatprep.mubr.f32.mxu0 0.0
    %4329 = vmatmul.mubr.f32.gmra.mxu0 %v3891
    %v4330 = vpop.f32.mrf.mxu0
    %v4331 = vadd.f32 %v4127, %v4330
    %v4332 = vpop.f32.mrf.mxu0
    %v4333 = vadd.f32 %v4128, %v4332
    %4334 = vdwg.mxu0
    %v4335 = vsub.f32 0.0, %v4260
    %v4336 = vmul.f32 %v4335, 1.442695
    %v4337 = vpow.pop %v4336
    %v4338 = vadd.f32 %v4337, 1.0
    %v4339 = vrcp.pop %v4338
    %v4340 = vsub.f32 0.0, %v4262
    %v4341 = vmul.f32 %v4340, 1.442695
    %v4342 = vpow.pop %v4341
    %v4343 = vadd.f32 %v4342, 1.0
    %v4344 = vrcp.pop %v4343
    %v4345 = vtanh.pop %v4331
    %v4346 = vsub.f32 0.0, %v4333
    %v4347 = vmul.f32 %v4346, 1.442695
    %v4348 = vpow.pop %v4347
    %v4349 = vadd.f32 %v4348, 1.0
    %v4350 = vrcp.pop %v4349
    %v4351 = vmul.f32 %v4344, %v3889
    %v4352 = vmul.f32 %v4339, %v4345
    %v4353 = vadd.f32 %v4351, %v4352
    %v4354 = vtanh.pop %v4353
    %v4355 = vmul.f32 %v4350, %v4354
    %v4356 = vld [vmem:[#allocation3 + $0x40] sm:$0xff]
    %v4357 = vld [vmem:[#allocation3 + $0x48] sm:$0xff]
    %v4358 = vld [vmem:[#allocation3 + $0x50] sm:$0xff]
    %v4359 = vld [vmem:[#allocation3 + $0x58] sm:$0xff]
    %v4360 = vld [vmem:[#allocation18] sm:$0xff]
    %v4361 = vld [vmem:[#allocation18 + $0x8] sm:$0xff]
    %v4362 = vld [vmem:[#allocation18 + $0x10] sm:$0xff]
    %v4363 = vld [vmem:[#allocation18 + $0x18] sm:$0xff]
    %v4364 = vld [vmem:[#allocation18 + $0x20] sm:$0xff]
    %v4365 = vld [vmem:[#allocation18 + $0x28] sm:$0xff]
    %v4366 = vld [vmem:[#allocation18 + $0x30] sm:$0xff]
    %v4367 = vld [vmem:[#allocation18 + $0x38] sm:$0xff]
    %v4368 = vld [vmem:[#allocation18 + $0x40] sm:$0xff]
    %v4369 = vld [vmem:[#allocation18 + $0x48] sm:$0xff]
    %v4370 = vld [vmem:[#allocation18 + $0x50] sm:$0xff]
    %v4371 = vld [vmem:[#allocation18 + $0x58] sm:$0xff]
    %v4372 = vld [vmem:[#allocation18 + $0x60] sm:$0xff]
    %v4373 = vld [vmem:[#allocation18 + $0x68] sm:$0xff]
    %v4374 = vld [vmem:[#allocation18 + $0x70] sm:$0xff]
    %v4375 = vld [vmem:[#allocation18 + $0x78] sm:$0xff]
    %v4376 = vld [vmem:[#allocation18 + $0x80] sm:$0xff]
    %v4377 = vld [vmem:[#allocation18 + $0x88] sm:$0xff]
    %v4378 = vld [vmem:[#allocation18 + $0x90] sm:$0xff]
    %v4379 = vld [vmem:[#allocation18 + $0x98] sm:$0xff]
    %v4380 = vld [vmem:[#allocation18 + $0xa0] sm:$0xff]
    %v4381 = vld [vmem:[#allocation18 + $0xa8] sm:$0xff]
    %v4382 = vld [vmem:[#allocation18 + $0xb0] sm:$0xff]
    %v4383 = vld [vmem:[#allocation18 + $0xb8] sm:$0xff]
    %v4384 = vld [vmem:[#allocation18 + $0xc0] sm:$0xff]
    %v4385 = vld [vmem:[#allocation18 + $0xc8] sm:$0xff]
    %v4386 = vld [vmem:[#allocation18 + $0xd0] sm:$0xff]
    %v4387 = vld [vmem:[#allocation18 + $0xd8] sm:$0xff]
    %v4388 = vld [vmem:[#allocation18 + $0xe0] sm:$0xff]
    %v4389 = vld [vmem:[#allocation18 + $0xe8] sm:$0xff]
    %v4390 = vld [vmem:[#allocation18 + $0xf0] sm:$0xff]
    %v4391 = vld [vmem:[#allocation18 + $0xf8] sm:$0xff]
    %v4392 = vld [vmem:[#allocation18 + $0x100] sm:$0xff]
    %v4393 = vld [vmem:[#allocation18 + $0x108] sm:$0xff]
    %v4394 = vld [vmem:[#allocation18 + $0x110] sm:$0xff]
    %v4395 = vld [vmem:[#allocation18 + $0x118] sm:$0xff]
    %v4396 = vld [vmem:[#allocation18 + $0x120] sm:$0xff]
    %v4397 = vld [vmem:[#allocation18 + $0x128] sm:$0xff]
    %v4398 = vld [vmem:[#allocation18 + $0x130] sm:$0xff]
    %v4399 = vld [vmem:[#allocation18 + $0x138] sm:$0xff]
    %v4400 = vld [vmem:[#allocation18 + $0x140] sm:$0xff]
    %v4401 = vld [vmem:[#allocation18 + $0x148] sm:$0xff]
    %v4402 = vld [vmem:[#allocation18 + $0x150] sm:$0xff]
    %v4403 = vld [vmem:[#allocation18 + $0x158] sm:$0xff]
    %v4404 = vld [vmem:[#allocation18 + $0x160] sm:$0xff]
    %v4405 = vld [vmem:[#allocation18 + $0x168] sm:$0xff]
    %v4406 = vld [vmem:[#allocation18 + $0x170] sm:$0xff]
    %v4407 = vld [vmem:[#allocation18 + $0x178] sm:$0xff]
    %v4408 = vld [vmem:[#allocation18 + $0x180] sm:$0xff]
    %v4409 = vld [vmem:[#allocation18 + $0x188] sm:$0xff]
    %v4410 = vld [vmem:[#allocation18 + $0x190] sm:$0xff]
    %v4411 = vld [vmem:[#allocation18 + $0x198] sm:$0xff]
    %v4412 = vld [vmem:[#allocation18 + $0x1a0] sm:$0xff]
    %v4413 = vld [vmem:[#allocation18 + $0x1a8] sm:$0xff]
    %v4414 = vld [vmem:[#allocation18 + $0x1b0] sm:$0xff]
    %v4415 = vld [vmem:[#allocation18 + $0x1b8] sm:$0xff]
    %v4416 = vld [vmem:[#allocation18 + $0x1c0] sm:$0xff]
    %v4417 = vld [vmem:[#allocation18 + $0x1c8] sm:$0xff]
    %v4418 = vld [vmem:[#allocation18 + $0x1d0] sm:$0xff]
    %v4419 = vld [vmem:[#allocation18 + $0x1d8] sm:$0xff]
    %v4420 = vld [vmem:[#allocation18 + $0x1e0] sm:$0xff]
    %v4421 = vld [vmem:[#allocation18 + $0x1e8] sm:$0xff]
    %v4422 = vld [vmem:[#allocation18 + $0x1f0] sm:$0xff]
    %v4423 = vld [vmem:[#allocation18 + $0x1f8] sm:$0xff]
    %4424 = vmatprep.subr.mxu0 %v4421
    %4425 = vmatpush1.msra.mxu0 %v4420
    %4426 = vmatprep.subr.mxu0 %v4417
    %4427 = vmatpush1.msra.mxu0 %v4416
    %4428 = vmatprep.subr.mxu0 %v4413
    %4429 = vmatpush1.msra.mxu0 %v4412
    %4430 = vmatprep.subr.mxu0 %v4409
    %4431 = vmatpush1.msra.mxu0 %v4408
    %4432 = vmatprep.subr.mxu0 %v4405
    %4433 = vmatpush1.msra.mxu0 %v4404
    %4434 = vmatprep.subr.mxu0 %v4401
    %4435 = vmatpush1.msra.mxu0 %v4400
    %4436 = vmatprep.subr.mxu0 %v4397
    %4437 = vmatpush1.msra.mxu0 %v4396
    %4438 = vmatprep.subr.mxu0 %v4393
    %4439 = vmatpush1.msra.mxu0 %v4392
    %4440 = vmatprep.subr.mxu0 %v4389
    %4441 = vmatpush1.msra.mxu0 %v4388
    %4442 = vmatprep.subr.mxu0 %v4385
    %4443 = vmatpush1.msra.mxu0 %v4384
    %4444 = vmatprep.subr.mxu0 %v4381
    %4445 = vmatpush1.msra.mxu0 %v4380
    %4446 = vmatprep.subr.mxu0 %v4377
    %4447 = vmatpush1.msra.mxu0 %v4376
    %4448 = vmatprep.subr.mxu0 %v4373
    %4449 = vmatpush1.msra.mxu0 %v4372
    %4450 = vmatprep.subr.mxu0 %v4369
    %4451 = vmatpush1.msra.mxu0 %v4368
    %4452 = vmatprep.subr.mxu0 %v4365
    %4453 = vmatpush1.msra.mxu0 %v4364
    %4454 = vmatprep.subr.mxu0 %v4361
    %4455 = vmatpush1.msra.mxu0 %v4360
    %4456 = vmatprep.subr.mxu0 0.0
    %4457 = vmatpush2.msra.mxu0 0.0
    %4458 = vmatprep.subr.mxu0 0.0
    %4459 = vmatpush2.msra.mxu0 0.0
    %4460 = vmatprep.subr.mxu0 0.0
    %4461 = vmatpush2.msra.mxu0 0.0
    %4462 = vmatprep.subr.mxu0 0.0
    %4463 = vmatpush2.msra.mxu0 0.0
    %4464 = vmatprep.subr.mxu0 0.0
    %4465 = vmatpush2.msra.mxu0 0.0
    %4466 = vmatprep.subr.mxu0 0.0
    %4467 = vmatpush2.msra.mxu0 0.0
    %4468 = vmatprep.subr.mxu0 0.0
    %4469 = vmatpush2.msra.mxu0 0.0
    %4470 = vmatprep.subr.mxu0 0.0
    %4471 = vmatpush2.msra.mxu0 0.0
    %4472 = vmatprep.subr.mxu0 0.0
    %4473 = vmatpush2.msra.mxu0 0.0
    %4474 = vmatprep.subr.mxu0 0.0
    %4475 = vmatpush2.msra.mxu0 0.0
    %4476 = vmatprep.subr.mxu0 0.0
    %4477 = vmatpush2.msra.mxu0 0.0
    %4478 = vmatprep.subr.mxu0 0.0
    %4479 = vmatpush2.msra.mxu0 0.0
    %4480 = vmatprep.subr.mxu0 0.0
    %4481 = vmatpush2.msra.mxu0 0.0
    %4482 = vmatprep.subr.mxu0 0.0
    %4483 = vmatpush2.msra.mxu0 0.0
    %4484 = vmatprep.subr.mxu0 0.0
    %4485 = vmatpush2.msra.mxu0 0.0
    %4486 = vmatprep.subr.mxu0 0.0
    %4487 = vmatpush2.msra.mxu0 0.0
    %4488 = vmatprep.mubr.f32.mxu0 0.0
    %4489 = vmatmul.mubr.f32.gmra.mxu0 %v4122
    %v4490 = vpop.f32.mrf.mxu0
    %v4491 = vadd.f32 %v4356, %v4490
    %v4492 = vpop.f32.mrf.mxu0
    %v4493 = vadd.f32 %v4357, %v4492
    %4494 = vdwg.mxu0
    %4495 = vmatprep.subr.mxu0 %v4423
    %4496 = vmatpush1.msra.mxu0 %v4422
    %4497 = vmatprep.subr.mxu0 %v4419
    %4498 = vmatpush1.msra.mxu0 %v4418
    %4499 = vmatprep.subr.mxu0 %v4415
    %4500 = vmatpush1.msra.mxu0 %v4414
    %4501 = vmatprep.subr.mxu0 %v4411
    %4502 = vmatpush1.msra.mxu0 %v4410
    %4503 = vmatprep.subr.mxu0 %v4407
    %4504 = vmatpush1.msra.mxu0 %v4406
    %4505 = vmatprep.subr.mxu0 %v4403
    %4506 = vmatpush1.msra.mxu0 %v4402
    %4507 = vmatprep.subr.mxu0 %v4399
    %4508 = vmatpush1.msra.mxu0 %v4398
    %4509 = vmatprep.subr.mxu0 %v4395
    %4510 = vmatpush1.msra.mxu0 %v4394
    %4511 = vmatprep.subr.mxu0 %v4391
    %4512 = vmatpush1.msra.mxu0 %v4390
    %4513 = vmatprep.subr.mxu0 %v4387
    %4514 = vmatpush1.msra.mxu0 %v4386
    %4515 = vmatprep.subr.mxu0 %v4383
    %4516 = vmatpush1.msra.mxu0 %v4382
    %4517 = vmatprep.subr.mxu0 %v4379
    %4518 = vmatpush1.msra.mxu0 %v4378
    %4519 = vmatprep.subr.mxu0 %v4375
    %4520 = vmatpush1.msra.mxu0 %v4374
    %4521 = vmatprep.subr.mxu0 %v4371
    %4522 = vmatpush1.msra.mxu0 %v4370
    %4523 = vmatprep.subr.mxu0 %v4367
    %4524 = vmatpush1.msra.mxu0 %v4366
    %4525 = vmatprep.subr.mxu0 %v4363
    %4526 = vmatpush1.msra.mxu0 %v4362
    %4527 = vmatprep.subr.mxu0 0.0
    %4528 = vmatpush2.msra.mxu0 0.0
    %4529 = vmatprep.subr.mxu0 0.0
    %4530 = vmatpush2.msra.mxu0 0.0
    %4531 = vmatprep.subr.mxu0 0.0
    %4532 = vmatpush2.msra.mxu0 0.0
    %4533 = vmatprep.subr.mxu0 0.0
    %4534 = vmatpush2.msra.mxu0 0.0
    %4535 = vmatprep.subr.mxu0 0.0
    %4536 = vmatpush2.msra.mxu0 0.0
    %4537 = vmatprep.subr.mxu0 0.0
    %4538 = vmatpush2.msra.mxu0 0.0
    %4539 = vmatprep.subr.mxu0 0.0
    %4540 = vmatpush2.msra.mxu0 0.0
    %4541 = vmatprep.subr.mxu0 0.0
    %4542 = vmatpush2.msra.mxu0 0.0
    %4543 = vmatprep.subr.mxu0 0.0
    %4544 = vmatpush2.msra.mxu0 0.0
    %4545 = vmatprep.subr.mxu0 0.0
    %4546 = vmatpush2.msra.mxu0 0.0
    %4547 = vmatprep.subr.mxu0 0.0
    %4548 = vmatpush2.msra.mxu0 0.0
    %4549 = vmatprep.subr.mxu0 0.0
    %4550 = vmatpush2.msra.mxu0 0.0
    %4551 = vmatprep.subr.mxu0 0.0
    %4552 = vmatpush2.msra.mxu0 0.0
    %4553 = vmatprep.subr.mxu0 0.0
    %4554 = vmatpush2.msra.mxu0 0.0
    %4555 = vmatprep.subr.mxu0 0.0
    %4556 = vmatpush2.msra.mxu0 0.0
    %4557 = vmatprep.subr.mxu0 0.0
    %4558 = vmatpush2.msra.mxu0 0.0
    %4559 = vmatprep.mubr.f32.mxu0 0.0
    %4560 = vmatmul.mubr.f32.gmra.mxu0 %v4122
    %v4561 = vpop.f32.mrf.mxu0
    %v4562 = vadd.f32 %v4358, %v4561
    %v4563 = vpop.f32.mrf.mxu0
    %v4564 = vadd.f32 %v4359, %v4563
    %4565 = vdwg.mxu0
    %v4566 = vsub.f32 0.0, %v4491
    %v4567 = vmul.f32 %v4566, 1.442695
    %v4568 = vpow.pop %v4567
    %v4569 = vadd.f32 %v4568, 1.0
    %v4570 = vrcp.pop %v4569
    %v4571 = vsub.f32 0.0, %v4493
    %v4572 = vmul.f32 %v4571, 1.442695
    %v4573 = vpow.pop %v4572
    %v4574 = vadd.f32 %v4573, 1.0
    %v4575 = vrcp.pop %v4574
    %v4576 = vtanh.pop %v4562
    %v4577 = vsub.f32 0.0, %v4564
    %v4578 = vmul.f32 %v4577, 1.442695
    %v4579 = vpow.pop %v4578
    %v4580 = vadd.f32 %v4579, 1.0
    %v4581 = vrcp.pop %v4580
    %v4582 = vmul.f32 %v4575, %v4120
    %v4583 = vmul.f32 %v4570, %v4576
    %v4584 = vadd.f32 %v4582, %v4583
    %v4585 = vtanh.pop %v4584
    %v4586 = vmul.f32 %v4581, %v4585
    %4587 = vst [vmem:[#allocation4 + $0x28] sm:$0xff] %v4355
    %4588 = vst [vmem:[#allocation5 + $0x10] sm:$0xff] %v4586
    %v4589 = vld [vmem:[#allocation2 + $0xc0] sm:$0xff]
    %v4590 = vld [vmem:[#allocation2 + $0xc8] sm:$0xff]
    %v4591 = vld [vmem:[#allocation2 + $0xd0] sm:$0xff]
    %v4592 = vld [vmem:[#allocation2 + $0xd8] sm:$0xff]
    %v4593 = vld [vmem:[#allocation15] sm:$0xff]
    %v4594 = vld [vmem:[#allocation15 + $0x8] sm:$0xff]
    %v4595 = vld [vmem:[#allocation15 + $0x10] sm:$0xff]
    %v4596 = vld [vmem:[#allocation15 + $0x18] sm:$0xff]
    %v4597 = vld [vmem:[#allocation15 + $0x20] sm:$0xff]
    %v4598 = vld [vmem:[#allocation15 + $0x28] sm:$0xff]
    %v4599 = vld [vmem:[#allocation15 + $0x30] sm:$0xff]
    %v4600 = vld [vmem:[#allocation15 + $0x38] sm:$0xff]
    %v4601 = vld [vmem:[#allocation15 + $0x40] sm:$0xff]
    %v4602 = vld [vmem:[#allocation15 + $0x48] sm:$0xff]
    %v4603 = vld [vmem:[#allocation15 + $0x50] sm:$0xff]
    %v4604 = vld [vmem:[#allocation15 + $0x58] sm:$0xff]
    %v4605 = vld [vmem:[#allocation15 + $0x60] sm:$0xff]
    %v4606 = vld [vmem:[#allocation15 + $0x68] sm:$0xff]
    %v4607 = vld [vmem:[#allocation15 + $0x70] sm:$0xff]
    %v4608 = vld [vmem:[#allocation15 + $0x78] sm:$0xff]
    %v4609 = vld [vmem:[#allocation15 + $0x80] sm:$0xff]
    %v4610 = vld [vmem:[#allocation15 + $0x88] sm:$0xff]
    %v4611 = vld [vmem:[#allocation15 + $0x90] sm:$0xff]
    %v4612 = vld [vmem:[#allocation15 + $0x98] sm:$0xff]
    %v4613 = vld [vmem:[#allocation15 + $0xa0] sm:$0xff]
    %v4614 = vld [vmem:[#allocation15 + $0xa8] sm:$0xff]
    %v4615 = vld [vmem:[#allocation15 + $0xb0] sm:$0xff]
    %v4616 = vld [vmem:[#allocation15 + $0xb8] sm:$0xff]
    %v4617 = vld [vmem:[#allocation15 + $0xc0] sm:$0xff]
    %v4618 = vld [vmem:[#allocation15 + $0xc8] sm:$0xff]
    %v4619 = vld [vmem:[#allocation15 + $0xd0] sm:$0xff]
    %v4620 = vld [vmem:[#allocation15 + $0xd8] sm:$0xff]
    %v4621 = vld [vmem:[#allocation15 + $0xe0] sm:$0xff]
    %v4622 = vld [vmem:[#allocation15 + $0xe8] sm:$0xff]
    %v4623 = vld [vmem:[#allocation15 + $0xf0] sm:$0xff]
    %v4624 = vld [vmem:[#allocation15 + $0xf8] sm:$0xff]
    %v4625 = vld [vmem:[#allocation15 + $0x100] sm:$0xff]
    %v4626 = vld [vmem:[#allocation15 + $0x108] sm:$0xff]
    %v4627 = vld [vmem:[#allocation15 + $0x110] sm:$0xff]
    %v4628 = vld [vmem:[#allocation15 + $0x118] sm:$0xff]
    %v4629 = vld [vmem:[#allocation15 + $0x120] sm:$0xff]
    %v4630 = vld [vmem:[#allocation15 + $0x128] sm:$0xff]
    %v4631 = vld [vmem:[#allocation15 + $0x130] sm:$0xff]
    %v4632 = vld [vmem:[#allocation15 + $0x138] sm:$0xff]
    %v4633 = vld [vmem:[#allocation15 + $0x140] sm:$0xff]
    %v4634 = vld [vmem:[#allocation15 + $0x148] sm:$0xff]
    %v4635 = vld [vmem:[#allocation15 + $0x150] sm:$0xff]
    %v4636 = vld [vmem:[#allocation15 + $0x158] sm:$0xff]
    %v4637 = vld [vmem:[#allocation15 + $0x160] sm:$0xff]
    %v4638 = vld [vmem:[#allocation15 + $0x168] sm:$0xff]
    %v4639 = vld [vmem:[#allocation15 + $0x170] sm:$0xff]
    %v4640 = vld [vmem:[#allocation15 + $0x178] sm:$0xff]
    %v4641 = vld [vmem:[#allocation15 + $0x180] sm:$0xff]
    %v4642 = vld [vmem:[#allocation15 + $0x188] sm:$0xff]
    %v4643 = vld [vmem:[#allocation15 + $0x190] sm:$0xff]
    %v4644 = vld [vmem:[#allocation15 + $0x198] sm:$0xff]
    %v4645 = vld [vmem:[#allocation15 + $0x1a0] sm:$0xff]
    %v4646 = vld [vmem:[#allocation15 + $0x1a8] sm:$0xff]
    %v4647 = vld [vmem:[#allocation15 + $0x1b0] sm:$0xff]
    %v4648 = vld [vmem:[#allocation15 + $0x1b8] sm:$0xff]
    %v4649 = vld [vmem:[#allocation15 + $0x1c0] sm:$0xff]
    %v4650 = vld [vmem:[#allocation15 + $0x1c8] sm:$0xff]
    %v4651 = vld [vmem:[#allocation15 + $0x1d0] sm:$0xff]
    %v4652 = vld [vmem:[#allocation15 + $0x1d8] sm:$0xff]
    %v4653 = vld [vmem:[#allocation15 + $0x1e0] sm:$0xff]
    %v4654 = vld [vmem:[#allocation15 + $0x1e8] sm:$0xff]
    %v4655 = vld [vmem:[#allocation15 + $0x1f0] sm:$0xff]
    %v4656 = vld [vmem:[#allocation15 + $0x1f8] sm:$0xff]
    %4657 = vmatprep.subr.mxu0 %v4654
    %4658 = vmatpush1.msra.mxu0 %v4653
    %4659 = vmatprep.subr.mxu0 %v4650
    %4660 = vmatpush1.msra.mxu0 %v4649
    %4661 = vmatprep.subr.mxu0 %v4646
    %4662 = vmatpush1.msra.mxu0 %v4645
    %4663 = vmatprep.subr.mxu0 %v4642
    %4664 = vmatpush1.msra.mxu0 %v4641
    %4665 = vmatprep.subr.mxu0 %v4638
    %4666 = vmatpush1.msra.mxu0 %v4637
    %4667 = vmatprep.subr.mxu0 %v4634
    %4668 = vmatpush1.msra.mxu0 %v4633
    %4669 = vmatprep.subr.mxu0 %v4630
    %4670 = vmatpush1.msra.mxu0 %v4629
    %4671 = vmatprep.subr.mxu0 %v4626
    %4672 = vmatpush1.msra.mxu0 %v4625
    %4673 = vmatprep.subr.mxu0 %v4622
    %4674 = vmatpush1.msra.mxu0 %v4621
    %4675 = vmatprep.subr.mxu0 %v4618
    %4676 = vmatpush1.msra.mxu0 %v4617
    %4677 = vmatprep.subr.mxu0 %v4614
    %4678 = vmatpush1.msra.mxu0 %v4613
    %4679 = vmatprep.subr.mxu0 %v4610
    %4680 = vmatpush1.msra.mxu0 %v4609
    %4681 = vmatprep.subr.mxu0 %v4606
    %4682 = vmatpush1.msra.mxu0 %v4605
    %4683 = vmatprep.subr.mxu0 %v4602
    %4684 = vmatpush1.msra.mxu0 %v4601
    %4685 = vmatprep.subr.mxu0 %v4598
    %4686 = vmatpush1.msra.mxu0 %v4597
    %4687 = vmatprep.subr.mxu0 %v4594
    %4688 = vmatpush1.msra.mxu0 %v4593
    %4689 = vmatprep.subr.mxu0 0.0
    %4690 = vmatpush2.msra.mxu0 0.0
    %4691 = vmatprep.subr.mxu0 0.0
    %4692 = vmatpush2.msra.mxu0 0.0
    %4693 = vmatprep.subr.mxu0 0.0
    %4694 = vmatpush2.msra.mxu0 0.0
    %4695 = vmatprep.subr.mxu0 0.0
    %4696 = vmatpush2.msra.mxu0 0.0
    %4697 = vmatprep.subr.mxu0 0.0
    %4698 = vmatpush2.msra.mxu0 0.0
    %4699 = vmatprep.subr.mxu0 0.0
    %4700 = vmatpush2.msra.mxu0 0.0
    %4701 = vmatprep.subr.mxu0 0.0
    %4702 = vmatpush2.msra.mxu0 0.0
    %4703 = vmatprep.subr.mxu0 0.0
    %4704 = vmatpush2.msra.mxu0 0.0
    %4705 = vmatprep.subr.mxu0 0.0
    %4706 = vmatpush2.msra.mxu0 0.0
    %4707 = vmatprep.subr.mxu0 0.0
    %4708 = vmatpush2.msra.mxu0 0.0
    %4709 = vmatprep.subr.mxu0 0.0
    %4710 = vmatpush2.msra.mxu0 0.0
    %4711 = vmatprep.subr.mxu0 0.0
    %4712 = vmatpush2.msra.mxu0 0.0
    %4713 = vmatprep.subr.mxu0 0.0
    %4714 = vmatpush2.msra.mxu0 0.0
    %4715 = vmatprep.subr.mxu0 0.0
    %4716 = vmatpush2.msra.mxu0 0.0
    %4717 = vmatprep.subr.mxu0 0.0
    %4718 = vmatpush2.msra.mxu0 0.0
    %4719 = vmatprep.subr.mxu0 0.0
    %4720 = vmatpush2.msra.mxu0 0.0
    %4721 = vmatprep.mubr.f32.mxu0 0.0
    %4722 = vmatmul.mubr.f32.gmra.mxu0 %v4355
    %v4723 = vpop.f32.mrf.mxu0
    %v4724 = vadd.f32 %v4589, %v4723
    %v4725 = vpop.f32.mrf.mxu0
    %v4726 = vadd.f32 %v4590, %v4725
    %4727 = vdwg.mxu0
    %4728 = vmatprep.subr.mxu0 %v4656
    %4729 = vmatpush1.msra.mxu0 %v4655
    %4730 = vmatprep.subr.mxu0 %v4652
    %4731 = vmatpush1.msra.mxu0 %v4651
    %4732 = vmatprep.subr.mxu0 %v4648
    %4733 = vmatpush1.msra.mxu0 %v4647
    %4734 = vmatprep.subr.mxu0 %v4644
    %4735 = vmatpush1.msra.mxu0 %v4643
    %4736 = vmatprep.subr.mxu0 %v4640
    %4737 = vmatpush1.msra.mxu0 %v4639
    %4738 = vmatprep.subr.mxu0 %v4636
    %4739 = vmatpush1.msra.mxu0 %v4635
    %4740 = vmatprep.subr.mxu0 %v4632
    %4741 = vmatpush1.msra.mxu0 %v4631
    %4742 = vmatprep.subr.mxu0 %v4628
    %4743 = vmatpush1.msra.mxu0 %v4627
    %4744 = vmatprep.subr.mxu0 %v4624
    %4745 = vmatpush1.msra.mxu0 %v4623
    %4746 = vmatprep.subr.mxu0 %v4620
    %4747 = vmatpush1.msra.mxu0 %v4619
    %4748 = vmatprep.subr.mxu0 %v4616
    %4749 = vmatpush1.msra.mxu0 %v4615
    %4750 = vmatprep.subr.mxu0 %v4612
    %4751 = vmatpush1.msra.mxu0 %v4611
    %4752 = vmatprep.subr.mxu0 %v4608
    %4753 = vmatpush1.msra.mxu0 %v4607
    %4754 = vmatprep.subr.mxu0 %v4604
    %4755 = vmatpush1.msra.mxu0 %v4603
    %4756 = vmatprep.subr.mxu0 %v4600
    %4757 = vmatpush1.msra.mxu0 %v4599
    %4758 = vmatprep.subr.mxu0 %v4596
    %4759 = vmatpush1.msra.mxu0 %v4595
    %4760 = vmatprep.subr.mxu0 0.0
    %4761 = vmatpush2.msra.mxu0 0.0
    %4762 = vmatprep.subr.mxu0 0.0
    %4763 = vmatpush2.msra.mxu0 0.0
    %4764 = vmatprep.subr.mxu0 0.0
    %4765 = vmatpush2.msra.mxu0 0.0
    %4766 = vmatprep.subr.mxu0 0.0
    %4767 = vmatpush2.msra.mxu0 0.0
    %4768 = vmatprep.subr.mxu0 0.0
    %4769 = vmatpush2.msra.mxu0 0.0
    %4770 = vmatprep.subr.mxu0 0.0
    %4771 = vmatpush2.msra.mxu0 0.0
    %4772 = vmatprep.subr.mxu0 0.0
    %4773 = vmatpush2.msra.mxu0 0.0
    %4774 = vmatprep.subr.mxu0 0.0
    %4775 = vmatpush2.msra.mxu0 0.0
    %4776 = vmatprep.subr.mxu0 0.0
    %4777 = vmatpush2.msra.mxu0 0.0
    %4778 = vmatprep.subr.mxu0 0.0
    %4779 = vmatpush2.msra.mxu0 0.0
    %4780 = vmatprep.subr.mxu0 0.0
    %4781 = vmatpush2.msra.mxu0 0.0
    %4782 = vmatprep.subr.mxu0 0.0
    %4783 = vmatpush2.msra.mxu0 0.0
    %4784 = vmatprep.subr.mxu0 0.0
    %4785 = vmatpush2.msra.mxu0 0.0
    %4786 = vmatprep.subr.mxu0 0.0
    %4787 = vmatpush2.msra.mxu0 0.0
    %4788 = vmatprep.subr.mxu0 0.0
    %4789 = vmatpush2.msra.mxu0 0.0
    %4790 = vmatprep.subr.mxu0 0.0
    %4791 = vmatpush2.msra.mxu0 0.0
    %4792 = vmatprep.mubr.f32.mxu0 0.0
    %4793 = vmatmul.mubr.f32.gmra.mxu0 %v4355
    %v4794 = vpop.f32.mrf.mxu0
    %v4795 = vadd.f32 %v4591, %v4794
    %v4796 = vpop.f32.mrf.mxu0
    %v4797 = vadd.f32 %v4592, %v4796
    %4798 = vdwg.mxu0
    %v4799 = vsub.f32 0.0, %v4724
    %v4800 = vmul.f32 %v4799, 1.442695
    %v4801 = vpow.pop %v4800
    %v4802 = vadd.f32 %v4801, 1.0
    %v4803 = vrcp.pop %v4802
    %v4804 = vsub.f32 0.0, %v4726
    %v4805 = vmul.f32 %v4804, 1.442695
    %v4806 = vpow.pop %v4805
    %v4807 = vadd.f32 %v4806, 1.0
    %v4808 = vrcp.pop %v4807
    %v4809 = vtanh.pop %v4795
    %v4810 = vsub.f32 0.0, %v4797
    %v4811 = vmul.f32 %v4810, 1.442695
    %v4812 = vpow.pop %v4811
    %v4813 = vadd.f32 %v4812, 1.0
    %v4814 = vrcp.pop %v4813
    %v4815 = vmul.f32 %v4808, %v4353
    %v4816 = vmul.f32 %v4803, %v4809
    %v4817 = vadd.f32 %v4815, %v4816
    %v4818 = vtanh.pop %v4817
    %v4819 = vmul.f32 %v4814, %v4818
    %v4820 = vld [vmem:[#allocation3 + $0x20] sm:$0xff]
    %v4821 = vld [vmem:[#allocation3 + $0x28] sm:$0xff]
    %v4822 = vld [vmem:[#allocation3 + $0x30] sm:$0xff]
    %v4823 = vld [vmem:[#allocation3 + $0x38] sm:$0xff]
    %v4824 = vld [vmem:[#allocation18] sm:$0xff]
    %v4825 = vld [vmem:[#allocation18 + $0x8] sm:$0xff]
    %v4826 = vld [vmem:[#allocation18 + $0x10] sm:$0xff]
    %v4827 = vld [vmem:[#allocation18 + $0x18] sm:$0xff]
    %v4828 = vld [vmem:[#allocation18 + $0x20] sm:$0xff]
    %v4829 = vld [vmem:[#allocation18 + $0x28] sm:$0xff]
    %v4830 = vld [vmem:[#allocation18 + $0x30] sm:$0xff]
    %v4831 = vld [vmem:[#allocation18 + $0x38] sm:$0xff]
    %v4832 = vld [vmem:[#allocation18 + $0x40] sm:$0xff]
    %v4833 = vld [vmem:[#allocation18 + $0x48] sm:$0xff]
    %v4834 = vld [vmem:[#allocation18 + $0x50] sm:$0xff]
    %v4835 = vld [vmem:[#allocation18 + $0x58] sm:$0xff]
    %v4836 = vld [vmem:[#allocation18 + $0x60] sm:$0xff]
    %v4837 = vld [vmem:[#allocation18 + $0x68] sm:$0xff]
    %v4838 = vld [vmem:[#allocation18 + $0x70] sm:$0xff]
    %v4839 = vld [vmem:[#allocation18 + $0x78] sm:$0xff]
    %v4840 = vld [vmem:[#allocation18 + $0x80] sm:$0xff]
    %v4841 = vld [vmem:[#allocation18 + $0x88] sm:$0xff]
    %v4842 = vld [vmem:[#allocation18 + $0x90] sm:$0xff]
    %v4843 = vld [vmem:[#allocation18 + $0x98] sm:$0xff]
    %v4844 = vld [vmem:[#allocation18 + $0xa0] sm:$0xff]
    %v4845 = vld [vmem:[#allocation18 + $0xa8] sm:$0xff]
    %v4846 = vld [vmem:[#allocation18 + $0xb0] sm:$0xff]
    %v4847 = vld [vmem:[#allocation18 + $0xb8] sm:$0xff]
    %v4848 = vld [vmem:[#allocation18 + $0xc0] sm:$0xff]
    %v4849 = vld [vmem:[#allocation18 + $0xc8] sm:$0xff]
    %v4850 = vld [vmem:[#allocation18 + $0xd0] sm:$0xff]
    %v4851 = vld [vmem:[#allocation18 + $0xd8] sm:$0xff]
    %v4852 = vld [vmem:[#allocation18 + $0xe0] sm:$0xff]
    %v4853 = vld [vmem:[#allocation18 + $0xe8] sm:$0xff]
    %v4854 = vld [vmem:[#allocation18 + $0xf0] sm:$0xff]
    %v4855 = vld [vmem:[#allocation18 + $0xf8] sm:$0xff]
    %v4856 = vld [vmem:[#allocation18 + $0x100] sm:$0xff]
    %v4857 = vld [vmem:[#allocation18 + $0x108] sm:$0xff]
    %v4858 = vld [vmem:[#allocation18 + $0x110] sm:$0xff]
    %v4859 = vld [vmem:[#allocation18 + $0x118] sm:$0xff]
    %v4860 = vld [vmem:[#allocation18 + $0x120] sm:$0xff]
    %v4861 = vld [vmem:[#allocation18 + $0x128] sm:$0xff]
    %v4862 = vld [vmem:[#allocation18 + $0x130] sm:$0xff]
    %v4863 = vld [vmem:[#allocation18 + $0x138] sm:$0xff]
    %v4864 = vld [vmem:[#allocation18 + $0x140] sm:$0xff]
    %v4865 = vld [vmem:[#allocation18 + $0x148] sm:$0xff]
    %v4866 = vld [vmem:[#allocation18 + $0x150] sm:$0xff]
    %v4867 = vld [vmem:[#allocation18 + $0x158] sm:$0xff]
    %v4868 = vld [vmem:[#allocation18 + $0x160] sm:$0xff]
    %v4869 = vld [vmem:[#allocation18 + $0x168] sm:$0xff]
    %v4870 = vld [vmem:[#allocation18 + $0x170] sm:$0xff]
    %v4871 = vld [vmem:[#allocation18 + $0x178] sm:$0xff]
    %v4872 = vld [vmem:[#allocation18 + $0x180] sm:$0xff]
    %v4873 = vld [vmem:[#allocation18 + $0x188] sm:$0xff]
    %v4874 = vld [vmem:[#allocation18 + $0x190] sm:$0xff]
    %v4875 = vld [vmem:[#allocation18 + $0x198] sm:$0xff]
    %v4876 = vld [vmem:[#allocation18 + $0x1a0] sm:$0xff]
    %v4877 = vld [vmem:[#allocation18 + $0x1a8] sm:$0xff]
    %v4878 = vld [vmem:[#allocation18 + $0x1b0] sm:$0xff]
    %v4879 = vld [vmem:[#allocation18 + $0x1b8] sm:$0xff]
    %v4880 = vld [vmem:[#allocation18 + $0x1c0] sm:$0xff]
    %v4881 = vld [vmem:[#allocation18 + $0x1c8] sm:$0xff]
    %v4882 = vld [vmem:[#allocation18 + $0x1d0] sm:$0xff]
    %v4883 = vld [vmem:[#allocation18 + $0x1d8] sm:$0xff]
    %v4884 = vld [vmem:[#allocation18 + $0x1e0] sm:$0xff]
    %v4885 = vld [vmem:[#allocation18 + $0x1e8] sm:$0xff]
    %v4886 = vld [vmem:[#allocation18 + $0x1f0] sm:$0xff]
    %v4887 = vld [vmem:[#allocation18 + $0x1f8] sm:$0xff]
    %4888 = vmatprep.subr.mxu0 %v4885
    %4889 = vmatpush1.msra.mxu0 %v4884
    %4890 = vmatprep.subr.mxu0 %v4881
    %4891 = vmatpush1.msra.mxu0 %v4880
    %4892 = vmatprep.subr.mxu0 %v4877
    %4893 = vmatpush1.msra.mxu0 %v4876
    %4894 = vmatprep.subr.mxu0 %v4873
    %4895 = vmatpush1.msra.mxu0 %v4872
    %4896 = vmatprep.subr.mxu0 %v4869
    %4897 = vmatpush1.msra.mxu0 %v4868
    %4898 = vmatprep.subr.mxu0 %v4865
    %4899 = vmatpush1.msra.mxu0 %v4864
    %4900 = vmatprep.subr.mxu0 %v4861
    %4901 = vmatpush1.msra.mxu0 %v4860
    %4902 = vmatprep.subr.mxu0 %v4857
    %4903 = vmatpush1.msra.mxu0 %v4856
    %4904 = vmatprep.subr.mxu0 %v4853
    %4905 = vmatpush1.msra.mxu0 %v4852
    %4906 = vmatprep.subr.mxu0 %v4849
    %4907 = vmatpush1.msra.mxu0 %v4848
    %4908 = vmatprep.subr.mxu0 %v4845
    %4909 = vmatpush1.msra.mxu0 %v4844
    %4910 = vmatprep.subr.mxu0 %v4841
    %4911 = vmatpush1.msra.mxu0 %v4840
    %4912 = vmatprep.subr.mxu0 %v4837
    %4913 = vmatpush1.msra.mxu0 %v4836
    %4914 = vmatprep.subr.mxu0 %v4833
    %4915 = vmatpush1.msra.mxu0 %v4832
    %4916 = vmatprep.subr.mxu0 %v4829
    %4917 = vmatpush1.msra.mxu0 %v4828
    %4918 = vmatprep.subr.mxu0 %v4825
    %4919 = vmatpush1.msra.mxu0 %v4824
    %4920 = vmatprep.subr.mxu0 0.0
    %4921 = vmatpush2.msra.mxu0 0.0
    %4922 = vmatprep.subr.mxu0 0.0
    %4923 = vmatpush2.msra.mxu0 0.0
    %4924 = vmatprep.subr.mxu0 0.0
    %4925 = vmatpush2.msra.mxu0 0.0
    %4926 = vmatprep.subr.mxu0 0.0
    %4927 = vmatpush2.msra.mxu0 0.0
    %4928 = vmatprep.subr.mxu0 0.0
    %4929 = vmatpush2.msra.mxu0 0.0
    %4930 = vmatprep.subr.mxu0 0.0
    %4931 = vmatpush2.msra.mxu0 0.0
    %4932 = vmatprep.subr.mxu0 0.0
    %4933 = vmatpush2.msra.mxu0 0.0
    %4934 = vmatprep.subr.mxu0 0.0
    %4935 = vmatpush2.msra.mxu0 0.0
    %4936 = vmatprep.subr.mxu0 0.0
    %4937 = vmatpush2.msra.mxu0 0.0
    %4938 = vmatprep.subr.mxu0 0.0
    %4939 = vmatpush2.msra.mxu0 0.0
    %4940 = vmatprep.subr.mxu0 0.0
    %4941 = vmatpush2.msra.mxu0 0.0
    %4942 = vmatprep.subr.mxu0 0.0
    %4943 = vmatpush2.msra.mxu0 0.0
    %4944 = vmatprep.subr.mxu0 0.0
    %4945 = vmatpush2.msra.mxu0 0.0
    %4946 = vmatprep.subr.mxu0 0.0
    %4947 = vmatpush2.msra.mxu0 0.0
    %4948 = vmatprep.subr.mxu0 0.0
    %4949 = vmatpush2.msra.mxu0 0.0
    %4950 = vmatprep.subr.mxu0 0.0
    %4951 = vmatpush2.msra.mxu0 0.0
    %4952 = vmatprep.mubr.f32.mxu0 0.0
    %4953 = vmatmul.mubr.f32.gmra.mxu0 %v4586
    %v4954 = vpop.f32.mrf.mxu0
    %v4955 = vadd.f32 %v4820, %v4954
    %v4956 = vpop.f32.mrf.mxu0
    %v4957 = vadd.f32 %v4821, %v4956
    %4958 = vdwg.mxu0
    %4959 = vmatprep.subr.mxu0 %v4887
    %4960 = vmatpush1.msra.mxu0 %v4886
    %4961 = vmatprep.subr.mxu0 %v4883
    %4962 = vmatpush1.msra.mxu0 %v4882
    %4963 = vmatprep.subr.mxu0 %v4879
    %4964 = vmatpush1.msra.mxu0 %v4878
    %4965 = vmatprep.subr.mxu0 %v4875
    %4966 = vmatpush1.msra.mxu0 %v4874
    %4967 = vmatprep.subr.mxu0 %v4871
    %4968 = vmatpush1.msra.mxu0 %v4870
    %4969 = vmatprep.subr.mxu0 %v4867
    %4970 = vmatpush1.msra.mxu0 %v4866
    %4971 = vmatprep.subr.mxu0 %v4863
    %4972 = vmatpush1.msra.mxu0 %v4862
    %4973 = vmatprep.subr.mxu0 %v4859
    %4974 = vmatpush1.msra.mxu0 %v4858
    %4975 = vmatprep.subr.mxu0 %v4855
    %4976 = vmatpush1.msra.mxu0 %v4854
    %4977 = vmatprep.subr.mxu0 %v4851
    %4978 = vmatpush1.msra.mxu0 %v4850
    %4979 = vmatprep.subr.mxu0 %v4847
    %4980 = vmatpush1.msra.mxu0 %v4846
    %4981 = vmatprep.subr.mxu0 %v4843
    %4982 = vmatpush1.msra.mxu0 %v4842
    %4983 = vmatprep.subr.mxu0 %v4839
    %4984 = vmatpush1.msra.mxu0 %v4838
    %4985 = vmatprep.subr.mxu0 %v4835
    %4986 = vmatpush1.msra.mxu0 %v4834
    %4987 = vmatprep.subr.mxu0 %v4831
    %4988 = vmatpush1.msra.mxu0 %v4830
    %4989 = vmatprep.subr.mxu0 %v4827
    %4990 = vmatpush1.msra.mxu0 %v4826
    %4991 = vmatprep.subr.mxu0 0.0
    %4992 = vmatpush2.msra.mxu0 0.0
    %4993 = vmatprep.subr.mxu0 0.0
    %4994 = vmatpush2.msra.mxu0 0.0
    %4995 = vmatprep.subr.mxu0 0.0
    %4996 = vmatpush2.msra.mxu0 0.0
    %4997 = vmatprep.subr.mxu0 0.0
    %4998 = vmatpush2.msra.mxu0 0.0
    %4999 = vmatprep.subr.mxu0 0.0
    %5000 = vmatpush2.msra.mxu0 0.0
    %5001 = vmatprep.subr.mxu0 0.0
    %5002 = vmatpush2.msra.mxu0 0.0
    %5003 = vmatprep.subr.mxu0 0.0
    %5004 = vmatpush2.msra.mxu0 0.0
    %5005 = vmatprep.subr.mxu0 0.0
    %5006 = vmatpush2.msra.mxu0 0.0
    %5007 = vmatprep.subr.mxu0 0.0
    %5008 = vmatpush2.msra.mxu0 0.0
    %5009 = vmatprep.subr.mxu0 0.0
    %5010 = vmatpush2.msra.mxu0 0.0
    %5011 = vmatprep.subr.mxu0 0.0
    %5012 = vmatpush2.msra.mxu0 0.0
    %5013 = vmatprep.subr.mxu0 0.0
    %5014 = vmatpush2.msra.mxu0 0.0
    %5015 = vmatprep.subr.mxu0 0.0
    %5016 = vmatpush2.msra.mxu0 0.0
    %5017 = vmatprep.subr.mxu0 0.0
    %5018 = vmatpush2.msra.mxu0 0.0
    %5019 = vmatprep.subr.mxu0 0.0
    %5020 = vmatpush2.msra.mxu0 0.0
    %5021 = vmatprep.subr.mxu0 0.0
    %5022 = vmatpush2.msra.mxu0 0.0
    %5023 = vmatprep.mubr.f32.mxu0 0.0
    %5024 = vmatmul.mubr.f32.gmra.mxu0 %v4586
    %v5025 = vpop.f32.mrf.mxu0
    %v5026 = vadd.f32 %v4822, %v5025
    %v5027 = vpop.f32.mrf.mxu0
    %v5028 = vadd.f32 %v4823, %v5027
    %5029 = vdwg.mxu0
    %v5030 = vsub.f32 0.0, %v4955
    %v5031 = vmul.f32 %v5030, 1.442695
    %v5032 = vpow.pop %v5031
    %v5033 = vadd.f32 %v5032, 1.0
    %v5034 = vrcp.pop %v5033
    %v5035 = vsub.f32 0.0, %v4957
    %v5036 = vmul.f32 %v5035, 1.442695
    %v5037 = vpow.pop %v5036
    %v5038 = vadd.f32 %v5037, 1.0
    %v5039 = vrcp.pop %v5038
    %v5040 = vtanh.pop %v5026
    %v5041 = vsub.f32 0.0, %v5028
    %v5042 = vmul.f32 %v5041, 1.442695
    %v5043 = vpow.pop %v5042
    %v5044 = vadd.f32 %v5043, 1.0
    %v5045 = vrcp.pop %v5044
    %v5046 = vmul.f32 %v5039, %v4584
    %v5047 = vmul.f32 %v5034, %v5040
    %v5048 = vadd.f32 %v5046, %v5047
    %v5049 = vtanh.pop %v5048
    %v5050 = vmul.f32 %v5045, %v5049
    %5051 = vst [vmem:[#allocation4 + $0x30] sm:$0xff] %v4819
    %5052 = vst [vmem:[#allocation5 + $0x8] sm:$0xff] %v5050
    %v5053 = vld [vmem:[#allocation2 + $0xe0] sm:$0xff]
    %v5054 = vld [vmem:[#allocation2 + $0xe8] sm:$0xff]
    %v5055 = vld [vmem:[#allocation2 + $0xf0] sm:$0xff]
    %v5056 = vld [vmem:[#allocation2 + $0xf8] sm:$0xff]
    %v5057 = vld [vmem:[#allocation15] sm:$0xff]
    %v5058 = vld [vmem:[#allocation15 + $0x8] sm:$0xff]
    %v5059 = vld [vmem:[#allocation15 + $0x10] sm:$0xff]
    %v5060 = vld [vmem:[#allocation15 + $0x18] sm:$0xff]
    %v5061 = vld [vmem:[#allocation15 + $0x20] sm:$0xff]
    %v5062 = vld [vmem:[#allocation15 + $0x28] sm:$0xff]
    %v5063 = vld [vmem:[#allocation15 + $0x30] sm:$0xff]
    %v5064 = vld [vmem:[#allocation15 + $0x38] sm:$0xff]
    %v5065 = vld [vmem:[#allocation15 + $0x40] sm:$0xff]
    %v5066 = vld [vmem:[#allocation15 + $0x48] sm:$0xff]
    %v5067 = vld [vmem:[#allocation15 + $0x50] sm:$0xff]
    %v5068 = vld [vmem:[#allocation15 + $0x58] sm:$0xff]
    %v5069 = vld [vmem:[#allocation15 + $0x60] sm:$0xff]
    %v5070 = vld [vmem:[#allocation15 + $0x68] sm:$0xff]
    %v5071 = vld [vmem:[#allocation15 + $0x70] sm:$0xff]
    %v5072 = vld [vmem:[#allocation15 + $0x78] sm:$0xff]
    %v5073 = vld [vmem:[#allocation15 + $0x80] sm:$0xff]
    %v5074 = vld [vmem:[#allocation15 + $0x88] sm:$0xff]
    %v5075 = vld [vmem:[#allocation15 + $0x90] sm:$0xff]
    %v5076 = vld [vmem:[#allocation15 + $0x98] sm:$0xff]
    %v5077 = vld [vmem:[#allocation15 + $0xa0] sm:$0xff]
    %v5078 = vld [vmem:[#allocation15 + $0xa8] sm:$0xff]
    %v5079 = vld [vmem:[#allocation15 + $0xb0] sm:$0xff]
    %v5080 = vld [vmem:[#allocation15 + $0xb8] sm:$0xff]
    %v5081 = vld [vmem:[#allocation15 + $0xc0] sm:$0xff]
    %v5082 = vld [vmem:[#allocation15 + $0xc8] sm:$0xff]
    %v5083 = vld [vmem:[#allocation15 + $0xd0] sm:$0xff]
    %v5084 = vld [vmem:[#allocation15 + $0xd8] sm:$0xff]
    %v5085 = vld [vmem:[#allocation15 + $0xe0] sm:$0xff]
    %v5086 = vld [vmem:[#allocation15 + $0xe8] sm:$0xff]
    %v5087 = vld [vmem:[#allocation15 + $0xf0] sm:$0xff]
    %v5088 = vld [vmem:[#allocation15 + $0xf8] sm:$0xff]
    %v5089 = vld [vmem:[#allocation15 + $0x100] sm:$0xff]
    %v5090 = vld [vmem:[#allocation15 + $0x108] sm:$0xff]
    %v5091 = vld [vmem:[#allocation15 + $0x110] sm:$0xff]
    %v5092 = vld [vmem:[#allocation15 + $0x118] sm:$0xff]
    %v5093 = vld [vmem:[#allocation15 + $0x120] sm:$0xff]
    %v5094 = vld [vmem:[#allocation15 + $0x128] sm:$0xff]
    %v5095 = vld [vmem:[#allocation15 + $0x130] sm:$0xff]
    %v5096 = vld [vmem:[#allocation15 + $0x138] sm:$0xff]
    %v5097 = vld [vmem:[#allocation15 + $0x140] sm:$0xff]
    %v5098 = vld [vmem:[#allocation15 + $0x148] sm:$0xff]
    %v5099 = vld [vmem:[#allocation15 + $0x150] sm:$0xff]
    %v5100 = vld [vmem:[#allocation15 + $0x158] sm:$0xff]
    %v5101 = vld [vmem:[#allocation15 + $0x160] sm:$0xff]
    %v5102 = vld [vmem:[#allocation15 + $0x168] sm:$0xff]
    %v5103 = vld [vmem:[#allocation15 + $0x170] sm:$0xff]
    %v5104 = vld [vmem:[#allocation15 + $0x178] sm:$0xff]
    %v5105 = vld [vmem:[#allocation15 + $0x180] sm:$0xff]
    %v5106 = vld [vmem:[#allocation15 + $0x188] sm:$0xff]
    %v5107 = vld [vmem:[#allocation15 + $0x190] sm:$0xff]
    %v5108 = vld [vmem:[#allocation15 + $0x198] sm:$0xff]
    %v5109 = vld [vmem:[#allocation15 + $0x1a0] sm:$0xff]
    %v5110 = vld [vmem:[#allocation15 + $0x1a8] sm:$0xff]
    %v5111 = vld [vmem:[#allocation15 + $0x1b0] sm:$0xff]
    %v5112 = vld [vmem:[#allocation15 + $0x1b8] sm:$0xff]
    %v5113 = vld [vmem:[#allocation15 + $0x1c0] sm:$0xff]
    %v5114 = vld [vmem:[#allocation15 + $0x1c8] sm:$0xff]
    %v5115 = vld [vmem:[#allocation15 + $0x1d0] sm:$0xff]
    %v5116 = vld [vmem:[#allocation15 + $0x1d8] sm:$0xff]
    %v5117 = vld [vmem:[#allocation15 + $0x1e0] sm:$0xff]
    %v5118 = vld [vmem:[#allocation15 + $0x1e8] sm:$0xff]
    %v5119 = vld [vmem:[#allocation15 + $0x1f0] sm:$0xff]
    %v5120 = vld [vmem:[#allocation15 + $0x1f8] sm:$0xff]
    %5121 = vmatprep.subr.mxu0 %v5118
    %5122 = vmatpush1.msra.mxu0 %v5117
    %5123 = vmatprep.subr.mxu0 %v5114
    %5124 = vmatpush1.msra.mxu0 %v5113
    %5125 = vmatprep.subr.mxu0 %v5110
    %5126 = vmatpush1.msra.mxu0 %v5109
    %5127 = vmatprep.subr.mxu0 %v5106
    %5128 = vmatpush1.msra.mxu0 %v5105
    %5129 = vmatprep.subr.mxu0 %v5102
    %5130 = vmatpush1.msra.mxu0 %v5101
    %5131 = vmatprep.subr.mxu0 %v5098
    %5132 = vmatpush1.msra.mxu0 %v5097
    %5133 = vmatprep.subr.mxu0 %v5094
    %5134 = vmatpush1.msra.mxu0 %v5093
    %5135 = vmatprep.subr.mxu0 %v5090
    %5136 = vmatpush1.msra.mxu0 %v5089
    %5137 = vmatprep.subr.mxu0 %v5086
    %5138 = vmatpush1.msra.mxu0 %v5085
    %5139 = vmatprep.subr.mxu0 %v5082
    %5140 = vmatpush1.msra.mxu0 %v5081
    %5141 = vmatprep.subr.mxu0 %v5078
    %5142 = vmatpush1.msra.mxu0 %v5077
    %5143 = vmatprep.subr.mxu0 %v5074
    %5144 = vmatpush1.msra.mxu0 %v5073
    %5145 = vmatprep.subr.mxu0 %v5070
    %5146 = vmatpush1.msra.mxu0 %v5069
    %5147 = vmatprep.subr.mxu0 %v5066
    %5148 = vmatpush1.msra.mxu0 %v5065
    %5149 = vmatprep.subr.mxu0 %v5062
    %5150 = vmatpush1.msra.mxu0 %v5061
    %5151 = vmatprep.subr.mxu0 %v5058
    %5152 = vmatpush1.msra.mxu0 %v5057
    %5153 = vmatprep.subr.mxu0 0.0
    %5154 = vmatpush2.msra.mxu0 0.0
    %5155 = vmatprep.subr.mxu0 0.0
    %5156 = vmatpush2.msra.mxu0 0.0
    %5157 = vmatprep.subr.mxu0 0.0
    %5158 = vmatpush2.msra.mxu0 0.0
    %5159 = vmatprep.subr.mxu0 0.0
    %5160 = vmatpush2.msra.mxu0 0.0
    %5161 = vmatprep.subr.mxu0 0.0
    %5162 = vmatpush2.msra.mxu0 0.0
    %5163 = vmatprep.subr.mxu0 0.0
    %5164 = vmatpush2.msra.mxu0 0.0
    %5165 = vmatprep.subr.mxu0 0.0
    %5166 = vmatpush2.msra.mxu0 0.0
    %5167 = vmatprep.subr.mxu0 0.0
    %5168 = vmatpush2.msra.mxu0 0.0
    %5169 = vmatprep.subr.mxu0 0.0
    %5170 = vmatpush2.msra.mxu0 0.0
    %5171 = vmatprep.subr.mxu0 0.0
    %5172 = vmatpush2.msra.mxu0 0.0
    %5173 = vmatprep.subr.mxu0 0.0
    %5174 = vmatpush2.msra.mxu0 0.0
    %5175 = vmatprep.subr.mxu0 0.0
    %5176 = vmatpush2.msra.mxu0 0.0
    %5177 = vmatprep.subr.mxu0 0.0
    %5178 = vmatpush2.msra.mxu0 0.0
    %5179 = vmatprep.subr.mxu0 0.0
    %5180 = vmatpush2.msra.mxu0 0.0
    %5181 = vmatprep.subr.mxu0 0.0
    %5182 = vmatpush2.msra.mxu0 0.0
    %5183 = vmatprep.subr.mxu0 0.0
    %5184 = vmatpush2.msra.mxu0 0.0
    %5185 = vmatprep.mubr.f32.mxu0 0.0
    %5186 = vmatmul.mubr.f32.gmra.mxu0 %v4819
    %v5187 = vpop.f32.mrf.mxu0
    %v5188 = vadd.f32 %v5053, %v5187
    %v5189 = vpop.f32.mrf.mxu0
    %v5190 = vadd.f32 %v5054, %v5189
    %5191 = vdwg.mxu0
    %5192 = vmatprep.subr.mxu0 %v5120
    %5193 = vmatpush1.msra.mxu0 %v5119
    %5194 = vmatprep.subr.mxu0 %v5116
    %5195 = vmatpush1.msra.mxu0 %v5115
    %5196 = vmatprep.subr.mxu0 %v5112
    %5197 = vmatpush1.msra.mxu0 %v5111
    %5198 = vmatprep.subr.mxu0 %v5108
    %5199 = vmatpush1.msra.mxu0 %v5107
    %5200 = vmatprep.subr.mxu0 %v5104
    %5201 = vmatpush1.msra.mxu0 %v5103
    %5202 = vmatprep.subr.mxu0 %v5100
    %5203 = vmatpush1.msra.mxu0 %v5099
    %5204 = vmatprep.subr.mxu0 %v5096
    %5205 = vmatpush1.msra.mxu0 %v5095
    %5206 = vmatprep.subr.mxu0 %v5092
    %5207 = vmatpush1.msra.mxu0 %v5091
    %5208 = vmatprep.subr.mxu0 %v5088
    %5209 = vmatpush1.msra.mxu0 %v5087
    %5210 = vmatprep.subr.mxu0 %v5084
    %5211 = vmatpush1.msra.mxu0 %v5083
    %5212 = vmatprep.subr.mxu0 %v5080
    %5213 = vmatpush1.msra.mxu0 %v5079
    %5214 = vmatprep.subr.mxu0 %v5076
    %5215 = vmatpush1.msra.mxu0 %v5075
    %5216 = vmatprep.subr.mxu0 %v5072
    %5217 = vmatpush1.msra.mxu0 %v5071
    %5218 = vmatprep.subr.mxu0 %v5068
    %5219 = vmatpush1.msra.mxu0 %v5067
    %5220 = vmatprep.subr.mxu0 %v5064
    %5221 = vmatpush1.msra.mxu0 %v5063
    %5222 = vmatprep.subr.mxu0 %v5060
    %5223 = vmatpush1.msra.mxu0 %v5059
    %5224 = vmatprep.subr.mxu0 0.0
    %5225 = vmatpush2.msra.mxu0 0.0
    %5226 = vmatprep.subr.mxu0 0.0
    %5227 = vmatpush2.msra.mxu0 0.0
    %5228 = vmatprep.subr.mxu0 0.0
    %5229 = vmatpush2.msra.mxu0 0.0
    %5230 = vmatprep.subr.mxu0 0.0
    %5231 = vmatpush2.msra.mxu0 0.0
    %5232 = vmatprep.subr.mxu0 0.0
    %5233 = vmatpush2.msra.mxu0 0.0
    %5234 = vmatprep.subr.mxu0 0.0
    %5235 = vmatpush2.msra.mxu0 0.0
    %5236 = vmatprep.subr.mxu0 0.0
    %5237 = vmatpush2.msra.mxu0 0.0
    %5238 = vmatprep.subr.mxu0 0.0
    %5239 = vmatpush2.msra.mxu0 0.0
    %5240 = vmatprep.subr.mxu0 0.0
    %5241 = vmatpush2.msra.mxu0 0.0
    %5242 = vmatprep.subr.mxu0 0.0
    %5243 = vmatpush2.msra.mxu0 0.0
    %5244 = vmatprep.subr.mxu0 0.0
    %5245 = vmatpush2.msra.mxu0 0.0
    %5246 = vmatprep.subr.mxu0 0.0
    %5247 = vmatpush2.msra.mxu0 0.0
    %5248 = vmatprep.subr.mxu0 0.0
    %5249 = vmatpush2.msra.mxu0 0.0
    %5250 = vmatprep.subr.mxu0 0.0
    %5251 = vmatpush2.msra.mxu0 0.0
    %5252 = vmatprep.subr.mxu0 0.0
    %5253 = vmatpush2.msra.mxu0 0.0
    %5254 = vmatprep.subr.mxu0 0.0
    %5255 = vmatpush2.msra.mxu0 0.0
    %5256 = vmatprep.mubr.f32.mxu0 0.0
    %5257 = vmatmul.mubr.f32.gmra.mxu0 %v4819
    %v5258 = vpop.f32.mrf.mxu0
    %v5259 = vadd.f32 %v5055, %v5258
    %v5260 = vpop.f32.mrf.mxu0
    %v5261 = vadd.f32 %v5056, %v5260
    %5262 = vdwg.mxu0
    %v5263 = vsub.f32 0.0, %v5188
    %v5264 = vmul.f32 %v5263, 1.442695
    %v5265 = vpow.pop %v5264
    %v5266 = vadd.f32 %v5265, 1.0
    %v5267 = vrcp.pop %v5266
    %v5268 = vsub.f32 0.0, %v5190
    %v5269 = vmul.f32 %v5268, 1.442695
    %v5270 = vpow.pop %v5269
    %v5271 = vadd.f32 %v5270, 1.0
    %v5272 = vrcp.pop %v5271
    %v5273 = vtanh.pop %v5259
    %v5274 = vsub.f32 0.0, %v5261
    %v5275 = vmul.f32 %v5274, 1.442695
    %v5276 = vpow.pop %v5275
    %v5277 = vadd.f32 %v5276, 1.0
    %v5278 = vrcp.pop %v5277
    %v5279 = vmul.f32 %v5272, %v4817
    %v5280 = vmul.f32 %v5267, %v5273
    %v5281 = vadd.f32 %v5279, %v5280
    %v5282 = vtanh.pop %v5281
    %v5283 = vmul.f32 %v5278, %v5282
    %v5284 = vld [vmem:[#allocation3] sm:$0xff]
    %v5285 = vld [vmem:[#allocation3 + $0x8] sm:$0xff]
    %v5286 = vld [vmem:[#allocation3 + $0x10] sm:$0xff]
    %v5287 = vld [vmem:[#allocation3 + $0x18] sm:$0xff]
    %v5288 = vld [vmem:[#allocation18] sm:$0xff]
    %v5289 = vld [vmem:[#allocation18 + $0x8] sm:$0xff]
    %v5290 = vld [vmem:[#allocation18 + $0x10] sm:$0xff]
    %v5291 = vld [vmem:[#allocation18 + $0x18] sm:$0xff]
    %v5292 = vld [vmem:[#allocation18 + $0x20] sm:$0xff]
    %v5293 = vld [vmem:[#allocation18 + $0x28] sm:$0xff]
    %v5294 = vld [vmem:[#allocation18 + $0x30] sm:$0xff]
    %v5295 = vld [vmem:[#allocation18 + $0x38] sm:$0xff]
    %v5296 = vld [vmem:[#allocation18 + $0x40] sm:$0xff]
    %v5297 = vld [vmem:[#allocation18 + $0x48] sm:$0xff]
    %v5298 = vld [vmem:[#allocation18 + $0x50] sm:$0xff]
    %v5299 = vld [vmem:[#allocation18 + $0x58] sm:$0xff]
    %v5300 = vld [vmem:[#allocation18 + $0x60] sm:$0xff]
    %v5301 = vld [vmem:[#allocation18 + $0x68] sm:$0xff]
    %v5302 = vld [vmem:[#allocation18 + $0x70] sm:$0xff]
    %v5303 = vld [vmem:[#allocation18 + $0x78] sm:$0xff]
    %v5304 = vld [vmem:[#allocation18 + $0x80] sm:$0xff]
    %v5305 = vld [vmem:[#allocation18 + $0x88] sm:$0xff]
    %v5306 = vld [vmem:[#allocation18 + $0x90] sm:$0xff]
    %v5307 = vld [vmem:[#allocation18 + $0x98] sm:$0xff]
    %v5308 = vld [vmem:[#allocation18 + $0xa0] sm:$0xff]
    %v5309 = vld [vmem:[#allocation18 + $0xa8] sm:$0xff]
    %v5310 = vld [vmem:[#allocation18 + $0xb0] sm:$0xff]
    %v5311 = vld [vmem:[#allocation18 + $0xb8] sm:$0xff]
    %v5312 = vld [vmem:[#allocation18 + $0xc0] sm:$0xff]
    %v5313 = vld [vmem:[#allocation18 + $0xc8] sm:$0xff]
    %v5314 = vld [vmem:[#allocation18 + $0xd0] sm:$0xff]
    %v5315 = vld [vmem:[#allocation18 + $0xd8] sm:$0xff]
    %v5316 = vld [vmem:[#allocation18 + $0xe0] sm:$0xff]
    %v5317 = vld [vmem:[#allocation18 + $0xe8] sm:$0xff]
    %v5318 = vld [vmem:[#allocation18 + $0xf0] sm:$0xff]
    %v5319 = vld [vmem:[#allocation18 + $0xf8] sm:$0xff]
    %v5320 = vld [vmem:[#allocation18 + $0x100] sm:$0xff]
    %v5321 = vld [vmem:[#allocation18 + $0x108] sm:$0xff]
    %v5322 = vld [vmem:[#allocation18 + $0x110] sm:$0xff]
    %v5323 = vld [vmem:[#allocation18 + $0x118] sm:$0xff]
    %v5324 = vld [vmem:[#allocation18 + $0x120] sm:$0xff]
    %v5325 = vld [vmem:[#allocation18 + $0x128] sm:$0xff]
    %v5326 = vld [vmem:[#allocation18 + $0x130] sm:$0xff]
    %v5327 = vld [vmem:[#allocation18 + $0x138] sm:$0xff]
    %v5328 = vld [vmem:[#allocation18 + $0x140] sm:$0xff]
    %v5329 = vld [vmem:[#allocation18 + $0x148] sm:$0xff]
    %v5330 = vld [vmem:[#allocation18 + $0x150] sm:$0xff]
    %v5331 = vld [vmem:[#allocation18 + $0x158] sm:$0xff]
    %v5332 = vld [vmem:[#allocation18 + $0x160] sm:$0xff]
    %v5333 = vld [vmem:[#allocation18 + $0x168] sm:$0xff]
    %v5334 = vld [vmem:[#allocation18 + $0x170] sm:$0xff]
    %v5335 = vld [vmem:[#allocation18 + $0x178] sm:$0xff]
    %v5336 = vld [vmem:[#allocation18 + $0x180] sm:$0xff]
    %v5337 = vld [vmem:[#allocation18 + $0x188] sm:$0xff]
    %v5338 = vld [vmem:[#allocation18 + $0x190] sm:$0xff]
    %v5339 = vld [vmem:[#allocation18 + $0x198] sm:$0xff]
    %v5340 = vld [vmem:[#allocation18 + $0x1a0] sm:$0xff]
    %v5341 = vld [vmem:[#allocation18 + $0x1a8] sm:$0xff]
    %v5342 = vld [vmem:[#allocation18 + $0x1b0] sm:$0xff]
    %v5343 = vld [vmem:[#allocation18 + $0x1b8] sm:$0xff]
    %v5344 = vld [vmem:[#allocation18 + $0x1c0] sm:$0xff]
    %v5345 = vld [vmem:[#allocation18 + $0x1c8] sm:$0xff]
    %v5346 = vld [vmem:[#allocation18 + $0x1d0] sm:$0xff]
    %v5347 = vld [vmem:[#allocation18 + $0x1d8] sm:$0xff]
    %v5348 = vld [vmem:[#allocation18 + $0x1e0] sm:$0xff]
    %v5349 = vld [vmem:[#allocation18 + $0x1e8] sm:$0xff]
    %v5350 = vld [vmem:[#allocation18 + $0x1f0] sm:$0xff]
    %v5351 = vld [vmem:[#allocation18 + $0x1f8] sm:$0xff]
    %5352 = vmatprep.subr.mxu0 %v5349
    %5353 = vmatpush1.msra.mxu0 %v5348
    %5354 = vmatprep.subr.mxu0 %v5345
    %5355 = vmatpush1.msra.mxu0 %v5344
    %5356 = vmatprep.subr.mxu0 %v5341
    %5357 = vmatpush1.msra.mxu0 %v5340
    %5358 = vmatprep.subr.mxu0 %v5337
    %5359 = vmatpush1.msra.mxu0 %v5336
    %5360 = vmatprep.subr.mxu0 %v5333
    %5361 = vmatpush1.msra.mxu0 %v5332
    %5362 = vmatprep.subr.mxu0 %v5329
    %5363 = vmatpush1.msra.mxu0 %v5328
    %5364 = vmatprep.subr.mxu0 %v5325
    %5365 = vmatpush1.msra.mxu0 %v5324
    %5366 = vmatprep.subr.mxu0 %v5321
    %5367 = vmatpush1.msra.mxu0 %v5320
    %5368 = vmatprep.subr.mxu0 %v5317
    %5369 = vmatpush1.msra.mxu0 %v5316
    %5370 = vmatprep.subr.mxu0 %v5313
    %5371 = vmatpush1.msra.mxu0 %v5312
    %5372 = vmatprep.subr.mxu0 %v5309
    %5373 = vmatpush1.msra.mxu0 %v5308
    %5374 = vmatprep.subr.mxu0 %v5305
    %5375 = vmatpush1.msra.mxu0 %v5304
    %5376 = vmatprep.subr.mxu0 %v5301
    %5377 = vmatpush1.msra.mxu0 %v5300
    %5378 = vmatprep.subr.mxu0 %v5297
    %5379 = vmatpush1.msra.mxu0 %v5296
    %5380 = vmatprep.subr.mxu0 %v5293
    %5381 = vmatpush1.msra.mxu0 %v5292
    %5382 = vmatprep.subr.mxu0 %v5289
    %5383 = vmatpush1.msra.mxu0 %v5288
    %5384 = vmatprep.subr.mxu0 0.0
    %5385 = vmatpush2.msra.mxu0 0.0
    %5386 = vmatprep.subr.mxu0 0.0
    %5387 = vmatpush2.msra.mxu0 0.0
    %5388 = vmatprep.subr.mxu0 0.0
    %5389 = vmatpush2.msra.mxu0 0.0
    %5390 = vmatprep.subr.mxu0 0.0
    %5391 = vmatpush2.msra.mxu0 0.0
    %5392 = vmatprep.subr.mxu0 0.0
    %5393 = vmatpush2.msra.mxu0 0.0
    %5394 = vmatprep.subr.mxu0 0.0
    %5395 = vmatpush2.msra.mxu0 0.0
    %5396 = vmatprep.subr.mxu0 0.0
    %5397 = vmatpush2.msra.mxu0 0.0
    %5398 = vmatprep.subr.mxu0 0.0
    %5399 = vmatpush2.msra.mxu0 0.0
    %5400 = vmatprep.subr.mxu0 0.0
    %5401 = vmatpush2.msra.mxu0 0.0
    %5402 = vmatprep.subr.mxu0 0.0
    %5403 = vmatpush2.msra.mxu0 0.0
    %5404 = vmatprep.subr.mxu0 0.0
    %5405 = vmatpush2.msra.mxu0 0.0
    %5406 = vmatprep.subr.mxu0 0.0
    %5407 = vmatpush2.msra.mxu0 0.0
    %5408 = vmatprep.subr.mxu0 0.0
    %5409 = vmatpush2.msra.mxu0 0.0
    %5410 = vmatprep.subr.mxu0 0.0
    %5411 = vmatpush2.msra.mxu0 0.0
    %5412 = vmatprep.subr.mxu0 0.0
    %5413 = vmatpush2.msra.mxu0 0.0
    %5414 = vmatprep.subr.mxu0 0.0
    %5415 = vmatpush2.msra.mxu0 0.0
    %5416 = vmatprep.mubr.f32.mxu0 0.0
    %5417 = vmatmul.mubr.f32.gmra.mxu0 %v5050
    %v5418 = vpop.f32.mrf.mxu0
    %v5419 = vadd.f32 %v5284, %v5418
    %v5420 = vpop.f32.mrf.mxu0
    %v5421 = vadd.f32 %v5285, %v5420
    %5422 = vdwg.mxu0
    %5423 = vmatprep.subr.mxu0 %v5351
    %5424 = vmatpush1.msra.mxu0 %v5350
    %5425 = vmatprep.subr.mxu0 %v5347
    %5426 = vmatpush1.msra.mxu0 %v5346
    %5427 = vmatprep.subr.mxu0 %v5343
    %5428 = vmatpush1.msra.mxu0 %v5342
    %5429 = vmatprep.subr.mxu0 %v5339
    %5430 = vmatpush1.msra.mxu0 %v5338
    %5431 = vmatprep.subr.mxu0 %v5335
    %5432 = vmatpush1.msra.mxu0 %v5334
    %5433 = vmatprep.subr.mxu0 %v5331
    %5434 = vmatpush1.msra.mxu0 %v5330
    %5435 = vmatprep.subr.mxu0 %v5327
    %5436 = vmatpush1.msra.mxu0 %v5326
    %5437 = vmatprep.subr.mxu0 %v5323
    %5438 = vmatpush1.msra.mxu0 %v5322
    %5439 = vmatprep.subr.mxu0 %v5319
    %5440 = vmatpush1.msra.mxu0 %v5318
    %5441 = vmatprep.subr.mxu0 %v5315
    %5442 = vmatpush1.msra.mxu0 %v5314
    %5443 = vmatprep.subr.mxu0 %v5311
    %5444 = vmatpush1.msra.mxu0 %v5310
    %5445 = vmatprep.subr.mxu0 %v5307
    %5446 = vmatpush1.msra.mxu0 %v5306
    %5447 = vmatprep.subr.mxu0 %v5303
    %5448 = vmatpush1.msra.mxu0 %v5302
    %5449 = vmatprep.subr.mxu0 %v5299
    %5450 = vmatpush1.msra.mxu0 %v5298
    %5451 = vmatprep.subr.mxu0 %v5295
    %5452 = vmatpush1.msra.mxu0 %v5294
    %5453 = vmatprep.subr.mxu0 %v5291
    %5454 = vmatpush1.msra.mxu0 %v5290
    %5455 = vmatprep.subr.mxu0 0.0
    %5456 = vmatpush2.msra.mxu0 0.0
    %5457 = vmatprep.subr.mxu0 0.0
    %5458 = vmatpush2.msra.mxu0 0.0
    %5459 = vmatprep.subr.mxu0 0.0
    %5460 = vmatpush2.msra.mxu0 0.0
    %5461 = vmatprep.subr.mxu0 0.0
    %5462 = vmatpush2.msra.mxu0 0.0
    %5463 = vmatprep.subr.mxu0 0.0
    %5464 = vmatpush2.msra.mxu0 0.0
    %5465 = vmatprep.subr.mxu0 0.0
    %5466 = vmatpush2.msra.mxu0 0.0
    %5467 = vmatprep.subr.mxu0 0.0
    %5468 = vmatpush2.msra.mxu0 0.0
    %5469 = vmatprep.subr.mxu0 0.0
    %5470 = vmatpush2.msra.mxu0 0.0
    %5471 = vmatprep.subr.mxu0 0.0
    %5472 = vmatpush2.msra.mxu0 0.0
    %5473 = vmatprep.subr.mxu0 0.0
    %5474 = vmatpush2.msra.mxu0 0.0
    %5475 = vmatprep.subr.mxu0 0.0
    %5476 = vmatpush2.msra.mxu0 0.0
    %5477 = vmatprep.subr.mxu0 0.0
    %5478 = vmatpush2.msra.mxu0 0.0
    %5479 = vmatprep.subr.mxu0 0.0
    %5480 = vmatpush2.msra.mxu0 0.0
    %5481 = vmatprep.subr.mxu0 0.0
    %5482 = vmatpush2.msra.mxu0 0.0
    %5483 = vmatprep.subr.mxu0 0.0
    %5484 = vmatpush2.msra.mxu0 0.0
    %5485 = vmatprep.subr.mxu0 0.0
    %5486 = vmatpush2.msra.mxu0 0.0
    %5487 = vmatprep.mubr.f32.mxu0 0.0
    %5488 = vmatmul.mubr.f32.gmra.mxu0 %v5050
    %v5489 = vpop.f32.mrf.mxu0
    %v5490 = vadd.f32 %v5286, %v5489
    %v5491 = vpop.f32.mrf.mxu0
    %v5492 = vadd.f32 %v5287, %v5491
    %5493 = vdwg.mxu0
    %v5494 = vsub.f32 0.0, %v5419
    %v5495 = vmul.f32 %v5494, 1.442695
    %v5496 = vpow.pop %v5495
    %v5497 = vadd.f32 %v5496, 1.0
    %v5498 = vrcp.pop %v5497
    %v5499 = vsub.f32 0.0, %v5421
    %v5500 = vmul.f32 %v5499, 1.442695
    %v5501 = vpow.pop %v5500
    %v5502 = vadd.f32 %v5501, 1.0
    %v5503 = vrcp.pop %v5502
    %v5504 = vtanh.pop %v5490
    %v5505 = vsub.f32 0.0, %v5492
    %v5506 = vmul.f32 %v5505, 1.442695
    %v5507 = vpow.pop %v5506
    %v5508 = vadd.f32 %v5507, 1.0
    %v5509 = vrcp.pop %v5508
    %v5510 = vmul.f32 %v5503, %v5048
    %v5511 = vmul.f32 %v5498, %v5504
    %v5512 = vadd.f32 %v5510, %v5511
    %v5513 = vtanh.pop %v5512
    %v5514 = vmul.f32 %v5509, %v5513
    %5515 = vst [vmem:[#allocation4 + $0x38] sm:$0xff] %v5283
    %5516 = vst [vmem:[#allocation5] sm:$0xff] %v5514
    %v5517 = vld [vmem:[#allocation4] sm:$0xff]
    %v5518 = vld [vmem:[#allocation4 + $0x8] sm:$0xff]
    %v5519 = vld [vmem:[#allocation4 + $0x10] sm:$0xff]
    %v5520 = vld [vmem:[#allocation4 + $0x18] sm:$0xff]
    %v5521 = vld [vmem:[#allocation4 + $0x20] sm:$0xff]
    %v5522 = vld [vmem:[#allocation4 + $0x28] sm:$0xff]
    %v5523 = vld [vmem:[#allocation4 + $0x30] sm:$0xff]
    %v5524 = vld [vmem:[#allocation4 + $0x38] sm:$0xff]
    %v5525 = vld [vmem:[#allocation5] sm:$0xff]
    %v5526 = vld [vmem:[#allocation5 + $0x8] sm:$0xff]
    %v5527 = vld [vmem:[#allocation5 + $0x10] sm:$0xff]
    %v5528 = vld [vmem:[#allocation5 + $0x18] sm:$0xff]
    %v5529 = vld [vmem:[#allocation5 + $0x20] sm:$0xff]
    %v5530 = vld [vmem:[#allocation5 + $0x28] sm:$0xff]
    %v5531 = vld [vmem:[#allocation5 + $0x30] sm:$0xff]
    %v5532 = vld [vmem:[#allocation5 + $0x38] sm:$0xff]
    %v5533 = vld [vmem:[#allocation24] sm:$0xff]
    %v5534 = vld [vmem:[#allocation24 + $0x8] sm:$0xff]
    %v5535 = vld [vmem:[#allocation24 + $0x10] sm:$0xff]
    %v5536 = vld [vmem:[#allocation24 + $0x18] sm:$0xff]
    %v5537 = vld [vmem:[#allocation24 + $0x20] sm:$0xff]
    %v5538 = vld [vmem:[#allocation24 + $0x28] sm:$0xff]
    %v5539 = vld [vmem:[#allocation24 + $0x30] sm:$0xff]
    %v5540 = vld [vmem:[#allocation24 + $0x38] sm:$0xff]
    %v5541 = vld [vmem:[#allocation24 + $0x40] sm:$0xff]
    %v5542 = vld [vmem:[#allocation24 + $0x48] sm:$0xff]
    %v5543 = vld [vmem:[#allocation24 + $0x50] sm:$0xff]
    %v5544 = vld [vmem:[#allocation24 + $0x58] sm:$0xff]
    %v5545 = vld [vmem:[#allocation24 + $0x60] sm:$0xff]
    %v5546 = vld [vmem:[#allocation24 + $0x68] sm:$0xff]
    %v5547 = vld [vmem:[#allocation24 + $0x70] sm:$0xff]
    %v5548 = vld [vmem:[#allocation24 + $0x78] sm:$0xff]
    %v5549 = vld [vmem:[#allocation24 + $0x80] sm:$0xff]
    %v5550 = vld [vmem:[#allocation24 + $0x88] sm:$0xff]
    %v5551 = vld [vmem:[#allocation24 + $0x90] sm:$0xff]
    %v5552 = vld [vmem:[#allocation24 + $0x98] sm:$0xff]
    %v5553 = vld [vmem:[#allocation24 + $0xa0] sm:$0xff]
    %v5554 = vld [vmem:[#allocation24 + $0xa8] sm:$0xff]
    %v5555 = vld [vmem:[#allocation24 + $0xb0] sm:$0xff]
    %v5556 = vld [vmem:[#allocation24 + $0xb8] sm:$0xff]
    %v5557 = vld [vmem:[#allocation24 + $0xc0] sm:$0xff]
    %v5558 = vld [vmem:[#allocation24 + $0xc8] sm:$0xff]
    %v5559 = vld [vmem:[#allocation24 + $0xd0] sm:$0xff]
    %v5560 = vld [vmem:[#allocation24 + $0xd8] sm:$0xff]
    %v5561 = vld [vmem:[#allocation24 + $0xe0] sm:$0xff]
    %v5562 = vld [vmem:[#allocation24 + $0xe8] sm:$0xff]
    %v5563 = vld [vmem:[#allocation24 + $0xf0] sm:$0xff]
    %v5564 = vld [vmem:[#allocation24 + $0xf8] sm:$0xff]
    %v5565 = vld [vmem:[#allocation24 + $0x100] sm:$0xff]
    %v5566 = vld [vmem:[#allocation24 + $0x108] sm:$0xff]
    %v5567 = vld [vmem:[#allocation24 + $0x110] sm:$0xff]
    %v5568 = vld [vmem:[#allocation24 + $0x118] sm:$0xff]
    %v5569 = vld [vmem:[#allocation24 + $0x120] sm:$0xff]
    %v5570 = vld [vmem:[#allocation24 + $0x128] sm:$0xff]
    %v5571 = vld [vmem:[#allocation24 + $0x130] sm:$0xff]
    %v5572 = vld [vmem:[#allocation24 + $0x138] sm:$0xff]
    %v5573 = vld [vmem:[#allocation24 + $0x140] sm:$0xff]
    %v5574 = vld [vmem:[#allocation24 + $0x148] sm:$0xff]
    %v5575 = vld [vmem:[#allocation24 + $0x150] sm:$0xff]
    %v5576 = vld [vmem:[#allocation24 + $0x158] sm:$0xff]
    %v5577 = vld [vmem:[#allocation24 + $0x160] sm:$0xff]
    %v5578 = vld [vmem:[#allocation24 + $0x168] sm:$0xff]
    %v5579 = vld [vmem:[#allocation24 + $0x170] sm:$0xff]
    %v5580 = vld [vmem:[#allocation24 + $0x178] sm:$0xff]
    %v5581 = vld [vmem:[#allocation24 + $0x180] sm:$0xff]
    %v5582 = vld [vmem:[#allocation24 + $0x188] sm:$0xff]
    %v5583 = vld [vmem:[#allocation24 + $0x190] sm:$0xff]
    %v5584 = vld [vmem:[#allocation24 + $0x198] sm:$0xff]
    %v5585 = vld [vmem:[#allocation24 + $0x1a0] sm:$0xff]
    %v5586 = vld [vmem:[#allocation24 + $0x1a8] sm:$0xff]
    %v5587 = vld [vmem:[#allocation24 + $0x1b0] sm:$0xff]
    %v5588 = vld [vmem:[#allocation24 + $0x1b8] sm:$0xff]
    %v5589 = vld [vmem:[#allocation24 + $0x1c0] sm:$0xff]
    %v5590 = vld [vmem:[#allocation24 + $0x1c8] sm:$0xff]
    %v5591 = vld [vmem:[#allocation24 + $0x1d0] sm:$0xff]
    %v5592 = vld [vmem:[#allocation24 + $0x1d8] sm:$0xff]
    %v5593 = vld [vmem:[#allocation24 + $0x1e0] sm:$0xff]
    %v5594 = vld [vmem:[#allocation24 + $0x1e8] sm:$0xff]
    %v5595 = vld [vmem:[#allocation24 + $0x1f0] sm:$0xff]
    %v5596 = vld [vmem:[#allocation24 + $0x1f8] sm:$0xff]
    %v5597 = vld [vmem:[#allocation25] sm:$0xff]
    %v5598 = vld [vmem:[#allocation25 + $0x8] sm:$0xff]
    %v5599 = vld [vmem:[#allocation25 + $0x10] sm:$0xff]
    %v5600 = vld [vmem:[#allocation25 + $0x18] sm:$0xff]
    %v5601 = vld [vmem:[#allocation25 + $0x20] sm:$0xff]
    %v5602 = vld [vmem:[#allocation25 + $0x28] sm:$0xff]
    %v5603 = vld [vmem:[#allocation25 + $0x30] sm:$0xff]
    %v5604 = vld [vmem:[#allocation25 + $0x38] sm:$0xff]
    %v5605 = vld [vmem:[#allocation25 + $0x40] sm:$0xff]
    %v5606 = vld [vmem:[#allocation25 + $0x48] sm:$0xff]
    %v5607 = vld [vmem:[#allocation25 + $0x50] sm:$0xff]
    %v5608 = vld [vmem:[#allocation25 + $0x58] sm:$0xff]
    %v5609 = vld [vmem:[#allocation25 + $0x60] sm:$0xff]
    %v5610 = vld [vmem:[#allocation25 + $0x68] sm:$0xff]
    %v5611 = vld [vmem:[#allocation25 + $0x70] sm:$0xff]
    %v5612 = vld [vmem:[#allocation25 + $0x78] sm:$0xff]
    %v5613 = vld [vmem:[#allocation25 + $0x80] sm:$0xff]
    %v5614 = vld [vmem:[#allocation25 + $0x88] sm:$0xff]
    %v5615 = vld [vmem:[#allocation25 + $0x90] sm:$0xff]
    %v5616 = vld [vmem:[#allocation25 + $0x98] sm:$0xff]
    %v5617 = vld [vmem:[#allocation25 + $0xa0] sm:$0xff]
    %v5618 = vld [vmem:[#allocation25 + $0xa8] sm:$0xff]
    %v5619 = vld [vmem:[#allocation25 + $0xb0] sm:$0xff]
    %v5620 = vld [vmem:[#allocation25 + $0xb8] sm:$0xff]
    %v5621 = vld [vmem:[#allocation25 + $0xc0] sm:$0xff]
    %v5622 = vld [vmem:[#allocation25 + $0xc8] sm:$0xff]
    %v5623 = vld [vmem:[#allocation25 + $0xd0] sm:$0xff]
    %v5624 = vld [vmem:[#allocation25 + $0xd8] sm:$0xff]
    %v5625 = vld [vmem:[#allocation25 + $0xe0] sm:$0xff]
    %v5626 = vld [vmem:[#allocation25 + $0xe8] sm:$0xff]
    %v5627 = vld [vmem:[#allocation25 + $0xf0] sm:$0xff]
    %v5628 = vld [vmem:[#allocation25 + $0xf8] sm:$0xff]
    %v5629 = vld [vmem:[#allocation25 + $0x100] sm:$0xff]
    %v5630 = vld [vmem:[#allocation25 + $0x108] sm:$0xff]
    %v5631 = vld [vmem:[#allocation25 + $0x110] sm:$0xff]
    %v5632 = vld [vmem:[#allocation25 + $0x118] sm:$0xff]
    %v5633 = vld [vmem:[#allocation25 + $0x120] sm:$0xff]
    %v5634 = vld [vmem:[#allocation25 + $0x128] sm:$0xff]
    %v5635 = vld [vmem:[#allocation25 + $0x130] sm:$0xff]
    %v5636 = vld [vmem:[#allocation25 + $0x138] sm:$0xff]
    %v5637 = vld [vmem:[#allocation25 + $0x140] sm:$0xff]
    %v5638 = vld [vmem:[#allocation25 + $0x148] sm:$0xff]
    %v5639 = vld [vmem:[#allocation25 + $0x150] sm:$0xff]
    %v5640 = vld [vmem:[#allocation25 + $0x158] sm:$0xff]
    %v5641 = vld [vmem:[#allocation25 + $0x160] sm:$0xff]
    %v5642 = vld [vmem:[#allocation25 + $0x168] sm:$0xff]
    %v5643 = vld [vmem:[#allocation25 + $0x170] sm:$0xff]
    %v5644 = vld [vmem:[#allocation25 + $0x178] sm:$0xff]
    %v5645 = vld [vmem:[#allocation25 + $0x180] sm:$0xff]
    %v5646 = vld [vmem:[#allocation25 + $0x188] sm:$0xff]
    %v5647 = vld [vmem:[#allocation25 + $0x190] sm:$0xff]
    %v5648 = vld [vmem:[#allocation25 + $0x198] sm:$0xff]
    %v5649 = vld [vmem:[#allocation25 + $0x1a0] sm:$0xff]
    %v5650 = vld [vmem:[#allocation25 + $0x1a8] sm:$0xff]
    %v5651 = vld [vmem:[#allocation25 + $0x1b0] sm:$0xff]
    %v5652 = vld [vmem:[#allocation25 + $0x1b8] sm:$0xff]
    %v5653 = vld [vmem:[#allocation25 + $0x1c0] sm:$0xff]
    %v5654 = vld [vmem:[#allocation25 + $0x1c8] sm:$0xff]
    %v5655 = vld [vmem:[#allocation25 + $0x1d0] sm:$0xff]
    %v5656 = vld [vmem:[#allocation25 + $0x1d8] sm:$0xff]
    %v5657 = vld [vmem:[#allocation25 + $0x1e0] sm:$0xff]
    %v5658 = vld [vmem:[#allocation25 + $0x1e8] sm:$0xff]
    %v5659 = vld [vmem:[#allocation25 + $0x1f0] sm:$0xff]
    %v5660 = vld [vmem:[#allocation25 + $0x1f8] sm:$0xff]
    %5661 = vmatprep.subr.mxu0 %v5658
    %5662 = vmatpush1.msra.mxu0 %v5657
    %5663 = vmatprep.subr.mxu0 %v5654
    %5664 = vmatpush1.msra.mxu0 %v5653
    %5665 = vmatprep.subr.mxu0 %v5650
    %5666 = vmatpush1.msra.mxu0 %v5649
    %5667 = vmatprep.subr.mxu0 %v5646
    %5668 = vmatpush1.msra.mxu0 %v5645
    %5669 = vmatprep.subr.mxu0 %v5642
    %5670 = vmatpush1.msra.mxu0 %v5641
    %5671 = vmatprep.subr.mxu0 %v5638
    %5672 = vmatpush1.msra.mxu0 %v5637
    %5673 = vmatprep.subr.mxu0 %v5634
    %5674 = vmatpush1.msra.mxu0 %v5633
    %5675 = vmatprep.subr.mxu0 %v5630
    %5676 = vmatpush1.msra.mxu0 %v5629
    %5677 = vmatprep.subr.mxu0 %v5626
    %5678 = vmatpush1.msra.mxu0 %v5625
    %5679 = vmatprep.subr.mxu0 %v5622
    %5680 = vmatpush1.msra.mxu0 %v5621
    %5681 = vmatprep.subr.mxu0 %v5618
    %5682 = vmatpush1.msra.mxu0 %v5617
    %5683 = vmatprep.subr.mxu0 %v5614
    %5684 = vmatpush1.msra.mxu0 %v5613
    %5685 = vmatprep.subr.mxu0 %v5610
    %5686 = vmatpush1.msra.mxu0 %v5609
    %5687 = vmatprep.subr.mxu0 %v5606
    %5688 = vmatpush1.msra.mxu0 %v5605
    %5689 = vmatprep.subr.mxu0 %v5602
    %5690 = vmatpush1.msra.mxu0 %v5601
    %5691 = vmatprep.subr.mxu0 %v5598
    %5692 = vmatpush1.msra.mxu0 %v5597
    %5693 = vmatprep.subr.mxu0 0.0
    %5694 = vmatpush2.msra.mxu0 0.0
    %5695 = vmatprep.subr.mxu0 0.0
    %5696 = vmatpush2.msra.mxu0 0.0
    %5697 = vmatprep.subr.mxu0 0.0
    %5698 = vmatpush2.msra.mxu0 0.0
    %5699 = vmatprep.subr.mxu0 0.0
    %5700 = vmatpush2.msra.mxu0 0.0
    %5701 = vmatprep.subr.mxu0 0.0
    %5702 = vmatpush2.msra.mxu0 0.0
    %5703 = vmatprep.subr.mxu0 0.0
    %5704 = vmatpush2.msra.mxu0 0.0
    %5705 = vmatprep.subr.mxu0 0.0
    %5706 = vmatpush2.msra.mxu0 0.0
    %5707 = vmatprep.subr.mxu0 0.0
    %5708 = vmatpush2.msra.mxu0 0.0
    %5709 = vmatprep.subr.mxu0 0.0
    %5710 = vmatpush2.msra.mxu0 0.0
    %5711 = vmatprep.subr.mxu0 0.0
    %5712 = vmatpush2.msra.mxu0 0.0
    %5713 = vmatprep.subr.mxu0 0.0
    %5714 = vmatpush2.msra.mxu0 0.0
    %5715 = vmatprep.subr.mxu0 0.0
    %5716 = vmatpush2.msra.mxu0 0.0
    %5717 = vmatprep.subr.mxu0 0.0
    %5718 = vmatpush2.msra.mxu0 0.0
    %5719 = vmatprep.subr.mxu0 0.0
    %5720 = vmatpush2.msra.mxu0 0.0
    %5721 = vmatprep.subr.mxu0 0.0
    %5722 = vmatpush2.msra.mxu0 0.0
    %5723 = vmatprep.subr.mxu0 0.0
    %5724 = vmatpush2.msra.mxu0 0.0
    %5725 = vmatprep.mubr.f32.mxu0 0.0
    %5726 = vmatmul.mubr.f32.gmra.mxu0 %v5525
    %v5727 = vpop.f32.mrf.mxu0
    %v5728 = vadd.f32 0.0, %v5727
    %v5729 = vpop.f32.mrf.mxu0
    %v5730 = vadd.f32 0.0, %v5729
    %5731 = vmatprep.mubr.f32.mxu0 0.0
    %5732 = vmatmul.mubr.f32.gmra.mxu0 %v5526
    %v5733 = vpop.f32.mrf.mxu0
    %v5734 = vadd.f32 0.0, %v5733
    %v5735 = vpop.f32.mrf.mxu0
    %v5736 = vadd.f32 0.0, %v5735
    %5737 = vmatprep.mubr.f32.mxu0 0.0
    %5738 = vmatmul.mubr.f32.gmra.mxu0 %v5527
    %v5739 = vpop.f32.mrf.mxu0
    %v5740 = vadd.f32 0.0, %v5739
    %v5741 = vpop.f32.mrf.mxu0
    %v5742 = vadd.f32 0.0, %v5741
    %5743 = vmatprep.mubr.f32.mxu0 0.0
    %5744 = vmatmul.mubr.f32.gmra.mxu0 %v5528
    %v5745 = vpop.f32.mrf.mxu0
    %v5746 = vadd.f32 0.0, %v5745
    %v5747 = vpop.f32.mrf.mxu0
    %v5748 = vadd.f32 0.0, %v5747
    %5749 = vmatprep.mubr.f32.mxu0 0.0
    %5750 = vmatmul.mubr.f32.gmra.mxu0 %v5529
    %v5751 = vpop.f32.mrf.mxu0
    %v5752 = vadd.f32 0.0, %v5751
    %v5753 = vpop.f32.mrf.mxu0
    %v5754 = vadd.f32 0.0, %v5753
    %5755 = vmatprep.mubr.f32.mxu0 0.0
    %5756 = vmatmul.mubr.f32.gmra.mxu0 %v5530
    %v5757 = vpop.f32.mrf.mxu0
    %v5758 = vadd.f32 0.0, %v5757
    %v5759 = vpop.f32.mrf.mxu0
    %v5760 = vadd.f32 0.0, %v5759
    %5761 = vmatprep.mubr.f32.mxu0 0.0
    %5762 = vmatmul.mubr.f32.gmra.mxu0 %v5531
    %v5763 = vpop.f32.mrf.mxu0
    %v5764 = vadd.f32 0.0, %v5763
    %v5765 = vpop.f32.mrf.mxu0
    %v5766 = vadd.f32 0.0, %v5765
    %5767 = vmatprep.mubr.f32.mxu0 0.0
    %5768 = vmatmul.mubr.f32.gmra.mxu0 %v5532
    %v5769 = vpop.f32.mrf.mxu0
    %v5770 = vadd.f32 0.0, %v5769
    %v5771 = vpop.f32.mrf.mxu0
    %v5772 = vadd.f32 0.0, %v5771
    %5773 = vdwg.mxu0
    %5774 = vmatprep.subr.mxu0 %v5660
    %5775 = vmatpush1.msra.mxu0 %v5659
    %5776 = vmatprep.subr.mxu0 %v5656
    %5777 = vmatpush1.msra.mxu0 %v5655
    %5778 = vmatprep.subr.mxu0 %v5652
    %5779 = vmatpush1.msra.mxu0 %v5651
    %5780 = vmatprep.subr.mxu0 %v5648
    %5781 = vmatpush1.msra.mxu0 %v5647
    %5782 = vmatprep.subr.mxu0 %v5644
    %5783 = vmatpush1.msra.mxu0 %v5643
    %5784 = vmatprep.subr.mxu0 %v5640
    %5785 = vmatpush1.msra.mxu0 %v5639
    %5786 = vmatprep.subr.mxu0 %v5636
    %5787 = vmatpush1.msra.mxu0 %v5635
    %5788 = vmatprep.subr.mxu0 %v5632
    %5789 = vmatpush1.msra.mxu0 %v5631
    %5790 = vmatprep.subr.mxu0 %v5628
    %5791 = vmatpush1.msra.mxu0 %v5627
    %5792 = vmatprep.subr.mxu0 %v5624
    %5793 = vmatpush1.msra.mxu0 %v5623
    %5794 = vmatprep.subr.mxu0 %v5620
    %5795 = vmatpush1.msra.mxu0 %v5619
    %5796 = vmatprep.subr.mxu0 %v5616
    %5797 = vmatpush1.msra.mxu0 %v5615
    %5798 = vmatprep.subr.mxu0 %v5612
    %5799 = vmatpush1.msra.mxu0 %v5611
    %5800 = vmatprep.subr.mxu0 %v5608
    %5801 = vmatpush1.msra.mxu0 %v5607
    %5802 = vmatprep.subr.mxu0 %v5604
    %5803 = vmatpush1.msra.mxu0 %v5603
    %5804 = vmatprep.subr.mxu0 %v5600
    %5805 = vmatpush1.msra.mxu0 %v5599
    %5806 = vmatprep.subr.mxu0 0.0
    %5807 = vmatpush2.msra.mxu0 0.0
    %5808 = vmatprep.subr.mxu0 0.0
    %5809 = vmatpush2.msra.mxu0 0.0
    %5810 = vmatprep.subr.mxu0 0.0
    %5811 = vmatpush2.msra.mxu0 0.0
    %5812 = vmatprep.subr.mxu0 0.0
    %5813 = vmatpush2.msra.mxu0 0.0
    %5814 = vmatprep.subr.mxu0 0.0
    %5815 = vmatpush2.msra.mxu0 0.0
    %5816 = vmatprep.subr.mxu0 0.0
    %5817 = vmatpush2.msra.mxu0 0.0
    %5818 = vmatprep.subr.mxu0 0.0
    %5819 = vmatpush2.msra.mxu0 0.0
    %5820 = vmatprep.subr.mxu0 0.0
    %5821 = vmatpush2.msra.mxu0 0.0
    %5822 = vmatprep.subr.mxu0 0.0
    %5823 = vmatpush2.msra.mxu0 0.0
    %5824 = vmatprep.subr.mxu0 0.0
    %5825 = vmatpush2.msra.mxu0 0.0
    %5826 = vmatprep.subr.mxu0 0.0
    %5827 = vmatpush2.msra.mxu0 0.0
    %5828 = vmatprep.subr.mxu0 0.0
    %5829 = vmatpush2.msra.mxu0 0.0
    %5830 = vmatprep.subr.mxu0 0.0
    %5831 = vmatpush2.msra.mxu0 0.0
    %5832 = vmatprep.subr.mxu0 0.0
    %5833 = vmatpush2.msra.mxu0 0.0
    %5834 = vmatprep.subr.mxu0 0.0
    %5835 = vmatpush2.msra.mxu0 0.0
    %5836 = vmatprep.subr.mxu0 0.0
    %5837 = vmatpush2.msra.mxu0 0.0
    %5838 = vmatprep.mubr.f32.mxu0 0.0
    %5839 = vmatmul.mubr.f32.gmra.mxu0 %v5525
    %v5840 = vpop.f32.mrf.mxu0
    %v5841 = vadd.f32 0.0, %v5840
    %v5842 = vpop.f32.mrf.mxu0
    %v5843 = vadd.f32 0.0, %v5842
    %5844 = vmatprep.mubr.f32.mxu0 0.0
    %5845 = vmatmul.mubr.f32.gmra.mxu0 %v5526
    %v5846 = vpop.f32.mrf.mxu0
    %v5847 = vadd.f32 0.0, %v5846
    %v5848 = vpop.f32.mrf.mxu0
    %v5849 = vadd.f32 0.0, %v5848
    %5850 = vmatprep.mubr.f32.mxu0 0.0
    %5851 = vmatmul.mubr.f32.gmra.mxu0 %v5527
    %v5852 = vpop.f32.mrf.mxu0
    %v5853 = vadd.f32 0.0, %v5852
    %v5854 = vpop.f32.mrf.mxu0
    %v5855 = vadd.f32 0.0, %v5854
    %5856 = vmatprep.mubr.f32.mxu0 0.0
    %5857 = vmatmul.mubr.f32.gmra.mxu0 %v5528
    %v5858 = vpop.f32.mrf.mxu0
    %v5859 = vadd.f32 0.0, %v5858
    %v5860 = vpop.f32.mrf.mxu0
    %v5861 = vadd.f32 0.0, %v5860
    %5862 = vmatprep.mubr.f32.mxu0 0.0
    %5863 = vmatmul.mubr.f32.gmra.mxu0 %v5529
    %v5864 = vpop.f32.mrf.mxu0
    %v5865 = vadd.f32 0.0, %v5864
    %v5866 = vpop.f32.mrf.mxu0
    %v5867 = vadd.f32 0.0, %v5866
    %5868 = vmatprep.mubr.f32.mxu0 0.0
    %5869 = vmatmul.mubr.f32.gmra.mxu0 %v5530
    %v5870 = vpop.f32.mrf.mxu0
    %v5871 = vadd.f32 0.0, %v5870
    %v5872 = vpop.f32.mrf.mxu0
    %v5873 = vadd.f32 0.0, %v5872
    %5874 = vmatprep.mubr.f32.mxu0 0.0
    %5875 = vmatmul.mubr.f32.gmra.mxu0 %v5531
    %v5876 = vpop.f32.mrf.mxu0
    %v5877 = vadd.f32 0.0, %v5876
    %v5878 = vpop.f32.mrf.mxu0
    %v5879 = vadd.f32 0.0, %v5878
    %5880 = vmatprep.mubr.f32.mxu0 0.0
    %5881 = vmatmul.mubr.f32.gmra.mxu0 %v5532
    %v5882 = vpop.f32.mrf.mxu0
    %v5883 = vadd.f32 0.0, %v5882
    %v5884 = vpop.f32.mrf.mxu0
    %v5885 = vadd.f32 0.0, %v5884
    %5886 = vdwg.mxu0
    %5887 = vmatprep.subr.mxu0 %v5594
    %5888 = vmatpush1.msra.mxu0 %v5593
    %5889 = vmatprep.subr.mxu0 %v5590
    %5890 = vmatpush1.msra.mxu0 %v5589
    %5891 = vmatprep.subr.mxu0 %v5586
    %5892 = vmatpush1.msra.mxu0 %v5585
    %5893 = vmatprep.subr.mxu0 %v5582
    %5894 = vmatpush1.msra.mxu0 %v5581
    %5895 = vmatprep.subr.mxu0 %v5578
    %5896 = vmatpush1.msra.mxu0 %v5577
    %5897 = vmatprep.subr.mxu0 %v5574
    %5898 = vmatpush1.msra.mxu0 %v5573
    %5899 = vmatprep.subr.mxu0 %v5570
    %5900 = vmatpush1.msra.mxu0 %v5569
    %5901 = vmatprep.subr.mxu0 %v5566
    %5902 = vmatpush1.msra.mxu0 %v5565
    %5903 = vmatprep.subr.mxu0 %v5562
    %5904 = vmatpush1.msra.mxu0 %v5561
    %5905 = vmatprep.subr.mxu0 %v5558
    %5906 = vmatpush1.msra.mxu0 %v5557
    %5907 = vmatprep.subr.mxu0 %v5554
    %5908 = vmatpush1.msra.mxu0 %v5553
    %5909 = vmatprep.subr.mxu0 %v5550
    %5910 = vmatpush1.msra.mxu0 %v5549
    %5911 = vmatprep.subr.mxu0 %v5546
    %5912 = vmatpush1.msra.mxu0 %v5545
    %5913 = vmatprep.subr.mxu0 %v5542
    %5914 = vmatpush1.msra.mxu0 %v5541
    %5915 = vmatprep.subr.mxu0 %v5538
    %5916 = vmatpush1.msra.mxu0 %v5537
    %5917 = vmatprep.subr.mxu0 %v5534
    %5918 = vmatpush1.msra.mxu0 %v5533
    %5919 = vmatprep.subr.mxu0 0.0
    %5920 = vmatpush2.msra.mxu0 0.0
    %5921 = vmatprep.subr.mxu0 0.0
    %5922 = vmatpush2.msra.mxu0 0.0
    %5923 = vmatprep.subr.mxu0 0.0
    %5924 = vmatpush2.msra.mxu0 0.0
    %5925 = vmatprep.subr.mxu0 0.0
    %5926 = vmatpush2.msra.mxu0 0.0
    %5927 = vmatprep.subr.mxu0 0.0
    %5928 = vmatpush2.msra.mxu0 0.0
    %5929 = vmatprep.subr.mxu0 0.0
    %5930 = vmatpush2.msra.mxu0 0.0
    %5931 = vmatprep.subr.mxu0 0.0
    %5932 = vmatpush2.msra.mxu0 0.0
    %5933 = vmatprep.subr.mxu0 0.0
    %5934 = vmatpush2.msra.mxu0 0.0
    %5935 = vmatprep.subr.mxu0 0.0
    %5936 = vmatpush2.msra.mxu0 0.0
    %5937 = vmatprep.subr.mxu0 0.0
    %5938 = vmatpush2.msra.mxu0 0.0
    %5939 = vmatprep.subr.mxu0 0.0
    %5940 = vmatpush2.msra.mxu0 0.0
    %5941 = vmatprep.subr.mxu0 0.0
    %5942 = vmatpush2.msra.mxu0 0.0
    %5943 = vmatprep.subr.mxu0 0.0
    %5944 = vmatpush2.msra.mxu0 0.0
    %5945 = vmatprep.subr.mxu0 0.0
    %5946 = vmatpush2.msra.mxu0 0.0
    %5947 = vmatprep.subr.mxu0 0.0
    %5948 = vmatpush2.msra.mxu0 0.0
    %5949 = vmatprep.subr.mxu0 0.0
    %5950 = vmatpush2.msra.mxu0 0.0
    %5951 = vmatprep.mubr.f32.mxu0 0.0
    %5952 = vmatmul.mubr.f32.gmra.mxu0 %v5517
    %v5953 = vpop.f32.mrf.mxu0
    %v5954 = vadd.f32 %v5728, %v5953
    %v5955 = vpop.f32.mrf.mxu0
    %v5956 = vadd.f32 %v5730, %v5955
    %5957 = vmatprep.mubr.f32.mxu0 0.0
    %5958 = vmatmul.mubr.f32.gmra.mxu0 %v5518
    %v5959 = vpop.f32.mrf.mxu0
    %v5960 = vadd.f32 %v5734, %v5959
    %v5961 = vpop.f32.mrf.mxu0
    %v5962 = vadd.f32 %v5736, %v5961
    %5963 = vmatprep.mubr.f32.mxu0 0.0
    %5964 = vmatmul.mubr.f32.gmra.mxu0 %v5519
    %v5965 = vpop.f32.mrf.mxu0
    %v5966 = vadd.f32 %v5740, %v5965
    %v5967 = vpop.f32.mrf.mxu0
    %v5968 = vadd.f32 %v5742, %v5967
    %5969 = vmatprep.mubr.f32.mxu0 0.0
    %5970 = vmatmul.mubr.f32.gmra.mxu0 %v5520
    %v5971 = vpop.f32.mrf.mxu0
    %v5972 = vadd.f32 %v5746, %v5971
    %v5973 = vpop.f32.mrf.mxu0
    %v5974 = vadd.f32 %v5748, %v5973
    %5975 = vmatprep.mubr.f32.mxu0 0.0
    %5976 = vmatmul.mubr.f32.gmra.mxu0 %v5521
    %v5977 = vpop.f32.mrf.mxu0
    %v5978 = vadd.f32 %v5752, %v5977
    %v5979 = vpop.f32.mrf.mxu0
    %v5980 = vadd.f32 %v5754, %v5979
    %5981 = vmatprep.mubr.f32.mxu0 0.0
    %5982 = vmatmul.mubr.f32.gmra.mxu0 %v5522
    %v5983 = vpop.f32.mrf.mxu0
    %v5984 = vadd.f32 %v5758, %v5983
    %v5985 = vpop.f32.mrf.mxu0
    %v5986 = vadd.f32 %v5760, %v5985
    %5987 = vmatprep.mubr.f32.mxu0 0.0
    %5988 = vmatmul.mubr.f32.gmra.mxu0 %v5523
    %v5989 = vpop.f32.mrf.mxu0
    %v5990 = vadd.f32 %v5764, %v5989
    %v5991 = vpop.f32.mrf.mxu0
    %v5992 = vadd.f32 %v5766, %v5991
    %5993 = vmatprep.mubr.f32.mxu0 0.0
    %5994 = vmatmul.mubr.f32.gmra.mxu0 %v5524
    %v5995 = vpop.f32.mrf.mxu0
    %v5996 = vadd.f32 %v5770, %v5995
    %v5997 = vpop.f32.mrf.mxu0
    %v5998 = vadd.f32 %v5772, %v5997
    %5999 = vdwg.mxu0
    %6000 = vmatprep.subr.mxu0 %v5596
    %6001 = vmatpush1.msra.mxu0 %v5595
    %6002 = vmatprep.subr.mxu0 %v5592
    %6003 = vmatpush1.msra.mxu0 %v5591
    %6004 = vmatprep.subr.mxu0 %v5588
    %6005 = vmatpush1.msra.mxu0 %v5587
    %6006 = vmatprep.subr.mxu0 %v5584
    %6007 = vmatpush1.msra.mxu0 %v5583
    %6008 = vmatprep.subr.mxu0 %v5580
    %6009 = vmatpush1.msra.mxu0 %v5579
    %6010 = vmatprep.subr.mxu0 %v5576
    %6011 = vmatpush1.msra.mxu0 %v5575
    %6012 = vmatprep.subr.mxu0 %v5572
    %6013 = vmatpush1.msra.mxu0 %v5571
    %6014 = vmatprep.subr.mxu0 %v5568
    %6015 = vmatpush1.msra.mxu0 %v5567
    %6016 = vmatprep.subr.mxu0 %v5564
    %6017 = vmatpush1.msra.mxu0 %v5563
    %6018 = vmatprep.subr.mxu0 %v5560
    %6019 = vmatpush1.msra.mxu0 %v5559
    %6020 = vmatprep.subr.mxu0 %v5556
    %6021 = vmatpush1.msra.mxu0 %v5555
    %6022 = vmatprep.subr.mxu0 %v5552
    %6023 = vmatpush1.msra.mxu0 %v5551
    %6024 = vmatprep.subr.mxu0 %v5548
    %6025 = vmatpush1.msra.mxu0 %v5547
    %6026 = vmatprep.subr.mxu0 %v5544
    %6027 = vmatpush1.msra.mxu0 %v5543
    %6028 = vmatprep.subr.mxu0 %v5540
    %6029 = vmatpush1.msra.mxu0 %v5539
    %6030 = vmatprep.subr.mxu0 %v5536
    %6031 = vmatpush1.msra.mxu0 %v5535
    %6032 = vmatprep.subr.mxu0 0.0
    %6033 = vmatpush2.msra.mxu0 0.0
    %6034 = vmatprep.subr.mxu0 0.0
    %6035 = vmatpush2.msra.mxu0 0.0
    %6036 = vmatprep.subr.mxu0 0.0
    %6037 = vmatpush2.msra.mxu0 0.0
    %6038 = vmatprep.subr.mxu0 0.0
    %6039 = vmatpush2.msra.mxu0 0.0
    %6040 = vmatprep.subr.mxu0 0.0
    %6041 = vmatpush2.msra.mxu0 0.0
    %6042 = vmatprep.subr.mxu0 0.0
    %6043 = vmatpush2.msra.mxu0 0.0
    %6044 = vmatprep.subr.mxu0 0.0
    %6045 = vmatpush2.msra.mxu0 0.0
    %6046 = vmatprep.subr.mxu0 0.0
    %6047 = vmatpush2.msra.mxu0 0.0
    %6048 = vmatprep.subr.mxu0 0.0
    %6049 = vmatpush2.msra.mxu0 0.0
    %6050 = vmatprep.subr.mxu0 0.0
    %6051 = vmatpush2.msra.mxu0 0.0
    %6052 = vmatprep.subr.mxu0 0.0
    %6053 = vmatpush2.msra.mxu0 0.0
    %6054 = vmatprep.subr.mxu0 0.0
    %6055 = vmatpush2.msra.mxu0 0.0
    %6056 = vmatprep.subr.mxu0 0.0
    %6057 = vmatpush2.msra.mxu0 0.0
    %6058 = vmatprep.subr.mxu0 0.0
    %6059 = vmatpush2.msra.mxu0 0.0
    %6060 = vmatprep.subr.mxu0 0.0
    %6061 = vmatpush2.msra.mxu0 0.0
    %6062 = vmatprep.subr.mxu0 0.0
    %6063 = vmatpush2.msra.mxu0 0.0
    %6064 = vmatprep.mubr.f32.mxu0 0.0
    %6065 = vmatmul.mubr.f32.gmra.mxu0 %v5517
    %v6066 = vpop.f32.mrf.mxu0
    %v6067 = vadd.f32 %v5841, %v6066
    %v6068 = vpop.f32.mrf.mxu0
    %v6069 = vadd.f32 %v5843, %v6068
    %6070 = vmatprep.mubr.f32.mxu0 0.0
    %6071 = vmatmul.mubr.f32.gmra.mxu0 %v5518
    %v6072 = vpop.f32.mrf.mxu0
    %v6073 = vadd.f32 %v5847, %v6072
    %v6074 = vpop.f32.mrf.mxu0
    %v6075 = vadd.f32 %v5849, %v6074
    %6076 = vmatprep.mubr.f32.mxu0 0.0
    %6077 = vmatmul.mubr.f32.gmra.mxu0 %v5519
    %v6078 = vpop.f32.mrf.mxu0
    %v6079 = vadd.f32 %v5853, %v6078
    %v6080 = vpop.f32.mrf.mxu0
    %v6081 = vadd.f32 %v5855, %v6080
    %6082 = vmatprep.mubr.f32.mxu0 0.0
    %6083 = vmatmul.mubr.f32.gmra.mxu0 %v5520
    %v6084 = vpop.f32.mrf.mxu0
    %v6085 = vadd.f32 %v5859, %v6084
    %v6086 = vpop.f32.mrf.mxu0
    %v6087 = vadd.f32 %v5861, %v6086
    %6088 = vmatprep.mubr.f32.mxu0 0.0
    %6089 = vmatmul.mubr.f32.gmra.mxu0 %v5521
    %v6090 = vpop.f32.mrf.mxu0
    %v6091 = vadd.f32 %v5865, %v6090
    %v6092 = vpop.f32.mrf.mxu0
    %v6093 = vadd.f32 %v5867, %v6092
    %6094 = vmatprep.mubr.f32.mxu0 0.0
    %6095 = vmatmul.mubr.f32.gmra.mxu0 %v5522
    %v6096 = vpop.f32.mrf.mxu0
    %v6097 = vadd.f32 %v5871, %v6096
    %v6098 = vpop.f32.mrf.mxu0
    %v6099 = vadd.f32 %v5873, %v6098
    %6100 = vmatprep.mubr.f32.mxu0 0.0
    %6101 = vmatmul.mubr.f32.gmra.mxu0 %v5523
    %v6102 = vpop.f32.mrf.mxu0
    %v6103 = vadd.f32 %v5877, %v6102
    %v6104 = vpop.f32.mrf.mxu0
    %v6105 = vadd.f32 %v5879, %v6104
    %6106 = vmatprep.mubr.f32.mxu0 0.0
    %6107 = vmatmul.mubr.f32.gmra.mxu0 %v5524
    %v6108 = vpop.f32.mrf.mxu0
    %v6109 = vadd.f32 %v5883, %v6108
    %v6110 = vpop.f32.mrf.mxu0
    %v6111 = vadd.f32 %v5885, %v6110
    %6112 = vdwg.mxu0
    %v6113 = vld [vmem:[%s16] sm:$0xf]
    %v6115 = vlaneseq
    %v6116 = vshrl.u32 %v6115, 7
    %v6117 = vsub.s32 0, %v6116
    %v6118 = vrot.slane %v6113, %v6117
    %v6119 = vlaneseq
    %v6120 = vshrl.u32 %v6119, 7
    %v6121 = vsub.s32 1, %v6120
    %v6122 = vrot.slane %v6113, %v6121
    %v6123 = vlaneseq
    %v6124 = vshrl.u32 %v6123, 7
    %v6125 = vsub.s32 2, %v6124
    %v6126 = vrot.slane %v6113, %v6125
    %v6127 = vlaneseq
    %v6128 = vshrl.u32 %v6127, 7
    %v6129 = vsub.s32 3, %v6128
    %v6130 = vrot.slane %v6113, %v6129
    %v6135 = vadd.f32 %v5954, %v6118
    %v6136 = vadd.f32 %v5956, %v6122
    %v6137 = vadd.f32 %v6067, %v6126
    %v6138 = vadd.f32 %v6069, %v6130
    %v6139 = vadd.f32 %v5960, %v6118
    %v6140 = vadd.f32 %v5962, %v6122
    %v6141 = vadd.f32 %v6073, %v6126
    %v6142 = vadd.f32 %v6075, %v6130
    %v6143 = vadd.f32 %v5966, %v6118
    %v6144 = vadd.f32 %v5968, %v6122
    %v6145 = vadd.f32 %v6079, %v6126
    %v6146 = vadd.f32 %v6081, %v6130
    %v6147 = vadd.f32 %v5972, %v6118
    %v6148 = vadd.f32 %v5974, %v6122
    %v6149 = vadd.f32 %v6085, %v6126
    %v6150 = vadd.f32 %v6087, %v6130
    %v6151 = vadd.f32 %v5978, %v6118
    %v6152 = vadd.f32 %v5980, %v6122
    %v6153 = vadd.f32 %v6091, %v6126
    %v6154 = vadd.f32 %v6093, %v6130
    %v6155 = vadd.f32 %v5984, %v6118
    %v6156 = vadd.f32 %v5986, %v6122
    %v6157 = vadd.f32 %v6097, %v6126
    %v6158 = vadd.f32 %v6099, %v6130
    %v6159 = vadd.f32 %v5990, %v6118
    %v6160 = vadd.f32 %v5992, %v6122
    %v6161 = vadd.f32 %v6103, %v6126
    %v6162 = vadd.f32 %v6105, %v6130
    %v6163 = vadd.f32 %v5996, %v6118
    %v6164 = vadd.f32 %v5998, %v6122
    %v6165 = vadd.f32 %v6109, %v6126
    %v6166 = vadd.f32 %v6111, %v6130
    %6167 = vst [vmem:[#allocation6] sm:$0xff] %v6135
    %6168 = vst [vmem:[#allocation6 + $0x8] sm:$0xff] %v6136
    %6169 = vst [vmem:[#allocation6 + $0x10] sm:$0xff] %v6137
    %6170 = vst [vmem:[#allocation6 + $0x18] sm:$0xff] %v6138
    %6171 = vst [vmem:[#allocation6 + $0x20] sm:$0xff] %v6139
    %6172 = vst [vmem:[#allocation6 + $0x28] sm:$0xff] %v6140
    %6173 = vst [vmem:[#allocation6 + $0x30] sm:$0xff] %v6141
    %6174 = vst [vmem:[#allocation6 + $0x38] sm:$0xff] %v6142
    %6175 = vst [vmem:[#allocation6 + $0x40] sm:$0xff] %v6143
    %6176 = vst [vmem:[#allocation6 + $0x48] sm:$0xff] %v6144
    %6177 = vst [vmem:[#allocation6 + $0x50] sm:$0xff] %v6145
    %6178 = vst [vmem:[#allocation6 + $0x58] sm:$0xff] %v6146
    %6179 = vst [vmem:[#allocation6 + $0x60] sm:$0xff] %v6147
    %6180 = vst [vmem:[#allocation6 + $0x68] sm:$0xff] %v6148
    %6181 = vst [vmem:[#allocation6 + $0x70] sm:$0xff] %v6149
    %6182 = vst [vmem:[#allocation6 + $0x78] sm:$0xff] %v6150
    %6183 = vst [vmem:[#allocation6 + $0x80] sm:$0xff] %v6151
    %6184 = vst [vmem:[#allocation6 + $0x88] sm:$0xff] %v6152
    %6185 = vst [vmem:[#allocation6 + $0x90] sm:$0xff] %v6153
    %6186 = vst [vmem:[#allocation6 + $0x98] sm:$0xff] %v6154
    %6187 = vst [vmem:[#allocation6 + $0xa0] sm:$0xff] %v6155
    %6188 = vst [vmem:[#allocation6 + $0xa8] sm:$0xff] %v6156
    %6189 = vst [vmem:[#allocation6 + $0xb0] sm:$0xff] %v6157
    %6190 = vst [vmem:[#allocation6 + $0xb8] sm:$0xff] %v6158
    %6191 = vst [vmem:[#allocation6 + $0xc0] sm:$0xff] %v6159
    %6192 = vst [vmem:[#allocation6 + $0xc8] sm:$0xff] %v6160
    %6193 = vst [vmem:[#allocation6 + $0xd0] sm:$0xff] %v6161
    %6194 = vst [vmem:[#allocation6 + $0xd8] sm:$0xff] %v6162
    %6195 = vst [vmem:[#allocation6 + $0xe0] sm:$0xff] %v6163
    %6196 = vst [vmem:[#allocation6 + $0xe8] sm:$0xff] %v6164
    %6197 = vst [vmem:[#allocation6 + $0xf0] sm:$0xff] %v6165
    %6198 = vst [vmem:[#allocation6 + $0xf8] sm:$0xff] %v6166
    %v6199 = vld [vmem:[#allocation4] sm:$0xff]
    %v6200 = vld [vmem:[#allocation19] sm:$0xff]
    %v6201 = vld [vmem:[#allocation19 + $0x8] sm:$0xff]
    %v6202 = vld [vmem:[#allocation19 + $0x10] sm:$0xff]
    %v6203 = vld [vmem:[#allocation19 + $0x18] sm:$0xff]
    %v6204 = vld [vmem:[#allocation19 + $0x20] sm:$0xff]
    %v6205 = vld [vmem:[#allocation19 + $0x28] sm:$0xff]
    %v6206 = vld [vmem:[#allocation19 + $0x30] sm:$0xff]
    %v6207 = vld [vmem:[#allocation19 + $0x38] sm:$0xff]
    %v6208 = vld [vmem:[#allocation19 + $0x40] sm:$0xff]
    %v6209 = vld [vmem:[#allocation19 + $0x48] sm:$0xff]
    %v6210 = vld [vmem:[#allocation19 + $0x50] sm:$0xff]
    %v6211 = vld [vmem:[#allocation19 + $0x58] sm:$0xff]
    %v6212 = vld [vmem:[#allocation19 + $0x60] sm:$0xff]
    %v6213 = vld [vmem:[#allocation19 + $0x68] sm:$0xff]
    %v6214 = vld [vmem:[#allocation19 + $0x70] sm:$0xff]
    %v6215 = vld [vmem:[#allocation19 + $0x78] sm:$0xff]
    %v6216 = vld [vmem:[#allocation19 + $0x80] sm:$0xff]
    %v6217 = vld [vmem:[#allocation19 + $0x88] sm:$0xff]
    %v6218 = vld [vmem:[#allocation19 + $0x90] sm:$0xff]
    %v6219 = vld [vmem:[#allocation19 + $0x98] sm:$0xff]
    %v6220 = vld [vmem:[#allocation19 + $0xa0] sm:$0xff]
    %v6221 = vld [vmem:[#allocation19 + $0xa8] sm:$0xff]
    %v6222 = vld [vmem:[#allocation19 + $0xb0] sm:$0xff]
    %v6223 = vld [vmem:[#allocation19 + $0xb8] sm:$0xff]
    %v6224 = vld [vmem:[#allocation19 + $0xc0] sm:$0xff]
    %v6225 = vld [vmem:[#allocation19 + $0xc8] sm:$0xff]
    %v6226 = vld [vmem:[#allocation19 + $0xd0] sm:$0xff]
    %v6227 = vld [vmem:[#allocation19 + $0xd8] sm:$0xff]
    %v6228 = vld [vmem:[#allocation19 + $0xe0] sm:$0xff]
    %v6229 = vld [vmem:[#allocation19 + $0xe8] sm:$0xff]
    %v6230 = vld [vmem:[#allocation19 + $0xf0] sm:$0xff]
    %v6231 = vld [vmem:[#allocation19 + $0xf8] sm:$0xff]
    %v6232 = vld [vmem:[#allocation19 + $0x100] sm:$0xff]
    %v6233 = vld [vmem:[#allocation19 + $0x108] sm:$0xff]
    %v6234 = vld [vmem:[#allocation19 + $0x110] sm:$0xff]
    %v6235 = vld [vmem:[#allocation19 + $0x118] sm:$0xff]
    %v6236 = vld [vmem:[#allocation19 + $0x120] sm:$0xff]
    %v6237 = vld [vmem:[#allocation19 + $0x128] sm:$0xff]
    %v6238 = vld [vmem:[#allocation19 + $0x130] sm:$0xff]
    %v6239 = vld [vmem:[#allocation19 + $0x138] sm:$0xff]
    %v6240 = vld [vmem:[#allocation19 + $0x140] sm:$0xff]
    %v6241 = vld [vmem:[#allocation19 + $0x148] sm:$0xff]
    %v6242 = vld [vmem:[#allocation19 + $0x150] sm:$0xff]
    %v6243 = vld [vmem:[#allocation19 + $0x158] sm:$0xff]
    %v6244 = vld [vmem:[#allocation19 + $0x160] sm:$0xff]
    %v6245 = vld [vmem:[#allocation19 + $0x168] sm:$0xff]
    %v6246 = vld [vmem:[#allocation19 + $0x170] sm:$0xff]
    %v6247 = vld [vmem:[#allocation19 + $0x178] sm:$0xff]
    %v6248 = vld [vmem:[#allocation19 + $0x180] sm:$0xff]
    %v6249 = vld [vmem:[#allocation19 + $0x188] sm:$0xff]
    %v6250 = vld [vmem:[#allocation19 + $0x190] sm:$0xff]
    %v6251 = vld [vmem:[#allocation19 + $0x198] sm:$0xff]
    %v6252 = vld [vmem:[#allocation19 + $0x1a0] sm:$0xff]
    %v6253 = vld [vmem:[#allocation19 + $0x1a8] sm:$0xff]
    %v6254 = vld [vmem:[#allocation19 + $0x1b0] sm:$0xff]
    %v6255 = vld [vmem:[#allocation19 + $0x1b8] sm:$0xff]
    %v6256 = vld [vmem:[#allocation19 + $0x1c0] sm:$0xff]
    %v6257 = vld [vmem:[#allocation19 + $0x1c8] sm:$0xff]
    %v6258 = vld [vmem:[#allocation19 + $0x1d0] sm:$0xff]
    %v6259 = vld [vmem:[#allocation19 + $0x1d8] sm:$0xff]
    %v6260 = vld [vmem:[#allocation19 + $0x1e0] sm:$0xff]
    %v6261 = vld [vmem:[#allocation19 + $0x1e8] sm:$0xff]
    %v6262 = vld [vmem:[#allocation19 + $0x1f0] sm:$0xff]
    %v6263 = vld [vmem:[#allocation19 + $0x1f8] sm:$0xff]
    %v6264 = vld [vmem:[#allocation5] sm:$0xff]
    %v6265 = vld [vmem:[#allocation21] sm:$0xff]
    %v6266 = vld [vmem:[#allocation21 + $0x8] sm:$0xff]
    %v6267 = vld [vmem:[#allocation21 + $0x10] sm:$0xff]
    %v6268 = vld [vmem:[#allocation21 + $0x18] sm:$0xff]
    %v6269 = vld [vmem:[#allocation21 + $0x20] sm:$0xff]
    %v6270 = vld [vmem:[#allocation21 + $0x28] sm:$0xff]
    %v6271 = vld [vmem:[#allocation21 + $0x30] sm:$0xff]
    %v6272 = vld [vmem:[#allocation21 + $0x38] sm:$0xff]
    %v6273 = vld [vmem:[#allocation21 + $0x40] sm:$0xff]
    %v6274 = vld [vmem:[#allocation21 + $0x48] sm:$0xff]
    %v6275 = vld [vmem:[#allocation21 + $0x50] sm:$0xff]
    %v6276 = vld [vmem:[#allocation21 + $0x58] sm:$0xff]
    %v6277 = vld [vmem:[#allocation21 + $0x60] sm:$0xff]
    %v6278 = vld [vmem:[#allocation21 + $0x68] sm:$0xff]
    %v6279 = vld [vmem:[#allocation21 + $0x70] sm:$0xff]
    %v6280 = vld [vmem:[#allocation21 + $0x78] sm:$0xff]
    %v6281 = vld [vmem:[#allocation21 + $0x80] sm:$0xff]
    %v6282 = vld [vmem:[#allocation21 + $0x88] sm:$0xff]
    %v6283 = vld [vmem:[#allocation21 + $0x90] sm:$0xff]
    %v6284 = vld [vmem:[#allocation21 + $0x98] sm:$0xff]
    %v6285 = vld [vmem:[#allocation21 + $0xa0] sm:$0xff]
    %v6286 = vld [vmem:[#allocation21 + $0xa8] sm:$0xff]
    %v6287 = vld [vmem:[#allocation21 + $0xb0] sm:$0xff]
    %v6288 = vld [vmem:[#allocation21 + $0xb8] sm:$0xff]
    %v6289 = vld [vmem:[#allocation21 + $0xc0] sm:$0xff]
    %v6290 = vld [vmem:[#allocation21 + $0xc8] sm:$0xff]
    %v6291 = vld [vmem:[#allocation21 + $0xd0] sm:$0xff]
    %v6292 = vld [vmem:[#allocation21 + $0xd8] sm:$0xff]
    %v6293 = vld [vmem:[#allocation21 + $0xe0] sm:$0xff]
    %v6294 = vld [vmem:[#allocation21 + $0xe8] sm:$0xff]
    %v6295 = vld [vmem:[#allocation21 + $0xf0] sm:$0xff]
    %v6296 = vld [vmem:[#allocation21 + $0xf8] sm:$0xff]
    %v6297 = vld [vmem:[#allocation21 + $0x100] sm:$0xff]
    %v6298 = vld [vmem:[#allocation21 + $0x108] sm:$0xff]
    %v6299 = vld [vmem:[#allocation21 + $0x110] sm:$0xff]
    %v6300 = vld [vmem:[#allocation21 + $0x118] sm:$0xff]
    %v6301 = vld [vmem:[#allocation21 + $0x120] sm:$0xff]
    %v6302 = vld [vmem:[#allocation21 + $0x128] sm:$0xff]
    %v6303 = vld [vmem:[#allocation21 + $0x130] sm:$0xff]
    %v6304 = vld [vmem:[#allocation21 + $0x138] sm:$0xff]
    %v6305 = vld [vmem:[#allocation21 + $0x140] sm:$0xff]
    %v6306 = vld [vmem:[#allocation21 + $0x148] sm:$0xff]
    %v6307 = vld [vmem:[#allocation21 + $0x150] sm:$0xff]
    %v6308 = vld [vmem:[#allocation21 + $0x158] sm:$0xff]
    %v6309 = vld [vmem:[#allocation21 + $0x160] sm:$0xff]
    %v6310 = vld [vmem:[#allocation21 + $0x168] sm:$0xff]
    %v6311 = vld [vmem:[#allocation21 + $0x170] sm:$0xff]
    %v6312 = vld [vmem:[#allocation21 + $0x178] sm:$0xff]
    %v6313 = vld [vmem:[#allocation21 + $0x180] sm:$0xff]
    %v6314 = vld [vmem:[#allocation21 + $0x188] sm:$0xff]
    %v6315 = vld [vmem:[#allocation21 + $0x190] sm:$0xff]
    %v6316 = vld [vmem:[#allocation21 + $0x198] sm:$0xff]
    %v6317 = vld [vmem:[#allocation21 + $0x1a0] sm:$0xff]
    %v6318 = vld [vmem:[#allocation21 + $0x1a8] sm:$0xff]
    %v6319 = vld [vmem:[#allocation21 + $0x1b0] sm:$0xff]
    %v6320 = vld [vmem:[#allocation21 + $0x1b8] sm:$0xff]
    %v6321 = vld [vmem:[#allocation21 + $0x1c0] sm:$0xff]
    %v6322 = vld [vmem:[#allocation21 + $0x1c8] sm:$0xff]
    %v6323 = vld [vmem:[#allocation21 + $0x1d0] sm:$0xff]
    %v6324 = vld [vmem:[#allocation21 + $0x1d8] sm:$0xff]
    %v6325 = vld [vmem:[#allocation21 + $0x1e0] sm:$0xff]
    %v6326 = vld [vmem:[#allocation21 + $0x1e8] sm:$0xff]
    %v6327 = vld [vmem:[#allocation21 + $0x1f0] sm:$0xff]
    %v6328 = vld [vmem:[#allocation21 + $0x1f8] sm:$0xff]
    %6329 = vmatprep.subr.mxu0 %v6326
    %6330 = vmatpush1.msra.mxu0 %v6325
    %6331 = vmatprep.subr.mxu0 %v6322
    %6332 = vmatpush1.msra.mxu0 %v6321
    %6333 = vmatprep.subr.mxu0 %v6318
    %6334 = vmatpush1.msra.mxu0 %v6317
    %6335 = vmatprep.subr.mxu0 %v6314
    %6336 = vmatpush1.msra.mxu0 %v6313
    %6337 = vmatprep.subr.mxu0 %v6310
    %6338 = vmatpush1.msra.mxu0 %v6309
    %6339 = vmatprep.subr.mxu0 %v6306
    %6340 = vmatpush1.msra.mxu0 %v6305
    %6341 = vmatprep.subr.mxu0 %v6302
    %6342 = vmatpush1.msra.mxu0 %v6301
    %6343 = vmatprep.subr.mxu0 %v6298
    %6344 = vmatpush1.msra.mxu0 %v6297
    %6345 = vmatprep.subr.mxu0 %v6294
    %6346 = vmatpush1.msra.mxu0 %v6293
    %6347 = vmatprep.subr.mxu0 %v6290
    %6348 = vmatpush1.msra.mxu0 %v6289
    %6349 = vmatprep.subr.mxu0 %v6286
    %6350 = vmatpush1.msra.mxu0 %v6285
    %6351 = vmatprep.subr.mxu0 %v6282
    %6352 = vmatpush1.msra.mxu0 %v6281
    %6353 = vmatprep.subr.mxu0 %v6278
    %6354 = vmatpush1.msra.mxu0 %v6277
    %6355 = vmatprep.subr.mxu0 %v6274
    %6356 = vmatpush1.msra.mxu0 %v6273
    %6357 = vmatprep.subr.mxu0 %v6270
    %6358 = vmatpush1.msra.mxu0 %v6269
    %6359 = vmatprep.subr.mxu0 %v6266
    %6360 = vmatpush1.msra.mxu0 %v6265
    %6361 = vmatprep.subr.mxu0 0.0
    %6362 = vmatpush2.msra.mxu0 0.0
    %6363 = vmatprep.subr.mxu0 0.0
    %6364 = vmatpush2.msra.mxu0 0.0
    %6365 = vmatprep.subr.mxu0 0.0
    %6366 = vmatpush2.msra.mxu0 0.0
    %6367 = vmatprep.subr.mxu0 0.0
    %6368 = vmatpush2.msra.mxu0 0.0
    %6369 = vmatprep.subr.mxu0 0.0
    %6370 = vmatpush2.msra.mxu0 0.0
    %6371 = vmatprep.subr.mxu0 0.0
    %6372 = vmatpush2.msra.mxu0 0.0
    %6373 = vmatprep.subr.mxu0 0.0
    %6374 = vmatpush2.msra.mxu0 0.0
    %6375 = vmatprep.subr.mxu0 0.0
    %6376 = vmatpush2.msra.mxu0 0.0
    %6377 = vmatprep.subr.mxu0 0.0
    %6378 = vmatpush2.msra.mxu0 0.0
    %6379 = vmatprep.subr.mxu0 0.0
    %6380 = vmatpush2.msra.mxu0 0.0
    %6381 = vmatprep.subr.mxu0 0.0
    %6382 = vmatpush2.msra.mxu0 0.0
    %6383 = vmatprep.subr.mxu0 0.0
    %6384 = vmatpush2.msra.mxu0 0.0
    %6385 = vmatprep.subr.mxu0 0.0
    %6386 = vmatpush2.msra.mxu0 0.0
    %6387 = vmatprep.subr.mxu0 0.0
    %6388 = vmatpush2.msra.mxu0 0.0
    %6389 = vmatprep.subr.mxu0 0.0
    %6390 = vmatpush2.msra.mxu0 0.0
    %6391 = vmatprep.subr.mxu0 0.0
    %6392 = vmatpush2.msra.mxu0 0.0
    %6393 = vmatprep.mubr.f32.mxu0 0.0
    %6394 = vmatmul.mubr.f32.gmra.mxu0 %v6264
    %v6395 = vpop.f32.mrf.mxu0
    %v6396 = vadd.f32 0.0, %v6395
    %v6397 = vpop.f32.mrf.mxu0
    %v6398 = vadd.f32 0.0, %v6397
    %6399 = vdwg.mxu0
    %6400 = vmatprep.subr.mxu0 %v6328
    %6401 = vmatpush1.msra.mxu0 %v6327
    %6402 = vmatprep.subr.mxu0 %v6324
    %6403 = vmatpush1.msra.mxu0 %v6323
    %6404 = vmatprep.subr.mxu0 %v6320
    %6405 = vmatpush1.msra.mxu0 %v6319
    %6406 = vmatprep.subr.mxu0 %v6316
    %6407 = vmatpush1.msra.mxu0 %v6315
    %6408 = vmatprep.subr.mxu0 %v6312
    %6409 = vmatpush1.msra.mxu0 %v6311
    %6410 = vmatprep.subr.mxu0 %v6308
    %6411 = vmatpush1.msra.mxu0 %v6307
    %6412 = vmatprep.subr.mxu0 %v6304
    %6413 = vmatpush1.msra.mxu0 %v6303
    %6414 = vmatprep.subr.mxu0 %v6300
    %6415 = vmatpush1.msra.mxu0 %v6299
    %6416 = vmatprep.subr.mxu0 %v6296
    %6417 = vmatpush1.msra.mxu0 %v6295
    %6418 = vmatprep.subr.mxu0 %v6292
    %6419 = vmatpush1.msra.mxu0 %v6291
    %6420 = vmatprep.subr.mxu0 %v6288
    %6421 = vmatpush1.msra.mxu0 %v6287
    %6422 = vmatprep.subr.mxu0 %v6284
    %6423 = vmatpush1.msra.mxu0 %v6283
    %6424 = vmatprep.subr.mxu0 %v6280
    %6425 = vmatpush1.msra.mxu0 %v6279
    %6426 = vmatprep.subr.mxu0 %v6276
    %6427 = vmatpush1.msra.mxu0 %v6275
    %6428 = vmatprep.subr.mxu0 %v6272
    %6429 = vmatpush1.msra.mxu0 %v6271
    %6430 = vmatprep.subr.mxu0 %v6268
    %6431 = vmatpush1.msra.mxu0 %v6267
    %6432 = vmatprep.subr.mxu0 0.0
    %6433 = vmatpush2.msra.mxu0 0.0
    %6434 = vmatprep.subr.mxu0 0.0
    %6435 = vmatpush2.msra.mxu0 0.0
    %6436 = vmatprep.subr.mxu0 0.0
    %6437 = vmatpush2.msra.mxu0 0.0
    %6438 = vmatprep.subr.mxu0 0.0
    %6439 = vmatpush2.msra.mxu0 0.0
    %6440 = vmatprep.subr.mxu0 0.0
    %6441 = vmatpush2.msra.mxu0 0.0
    %6442 = vmatprep.subr.mxu0 0.0
    %6443 = vmatpush2.msra.mxu0 0.0
    %6444 = vmatprep.subr.mxu0 0.0
    %6445 = vmatpush2.msra.mxu0 0.0
    %6446 = vmatprep.subr.mxu0 0.0
    %6447 = vmatpush2.msra.mxu0 0.0
    %6448 = vmatprep.subr.mxu0 0.0
    %6449 = vmatpush2.msra.mxu0 0.0
    %6450 = vmatprep.subr.mxu0 0.0
    %6451 = vmatpush2.msra.mxu0 0.0
    %6452 = vmatprep.subr.mxu0 0.0
    %6453 = vmatpush2.msra.mxu0 0.0
    %6454 = vmatprep.subr.mxu0 0.0
    %6455 = vmatpush2.msra.mxu0 0.0
    %6456 = vmatprep.subr.mxu0 0.0
    %6457 = vmatpush2.msra.mxu0 0.0
    %6458 = vmatprep.subr.mxu0 0.0
    %6459 = vmatpush2.msra.mxu0 0.0
    %6460 = vmatprep.subr.mxu0 0.0
    %6461 = vmatpush2.msra.mxu0 0.0
    %6462 = vmatprep.subr.mxu0 0.0
    %6463 = vmatpush2.msra.mxu0 0.0
    %6464 = vmatprep.mubr.f32.mxu0 0.0
    %6465 = vmatmul.mubr.f32.gmra.mxu0 %v6264
    %v6466 = vpop.f32.mrf.mxu0
    %v6467 = vadd.f32 0.0, %v6466
    %v6468 = vpop.f32.mrf.mxu0
    %v6469 = vadd.f32 0.0, %v6468
    %6470 = vdwg.mxu0
    %6471 = vmatprep.subr.mxu0 %v6261
    %6472 = vmatpush1.msra.mxu0 %v6260
    %6473 = vmatprep.subr.mxu0 %v6257
    %6474 = vmatpush1.msra.mxu0 %v6256
    %6475 = vmatprep.subr.mxu0 %v6253
    %6476 = vmatpush1.msra.mxu0 %v6252
    %6477 = vmatprep.subr.mxu0 %v6249
    %6478 = vmatpush1.msra.mxu0 %v6248
    %6479 = vmatprep.subr.mxu0 %v6245
    %6480 = vmatpush1.msra.mxu0 %v6244
    %6481 = vmatprep.subr.mxu0 %v6241
    %6482 = vmatpush1.msra.mxu0 %v6240
    %6483 = vmatprep.subr.mxu0 %v6237
    %6484 = vmatpush1.msra.mxu0 %v6236
    %6485 = vmatprep.subr.mxu0 %v6233
    %6486 = vmatpush1.msra.mxu0 %v6232
    %6487 = vmatprep.subr.mxu0 %v6229
    %6488 = vmatpush1.msra.mxu0 %v6228
    %6489 = vmatprep.subr.mxu0 %v6225
    %6490 = vmatpush1.msra.mxu0 %v6224
    %6491 = vmatprep.subr.mxu0 %v6221
    %6492 = vmatpush1.msra.mxu0 %v6220
    %6493 = vmatprep.subr.mxu0 %v6217
    %6494 = vmatpush1.msra.mxu0 %v6216
    %6495 = vmatprep.subr.mxu0 %v6213
    %6496 = vmatpush1.msra.mxu0 %v6212
    %6497 = vmatprep.subr.mxu0 %v6209
    %6498 = vmatpush1.msra.mxu0 %v6208
    %6499 = vmatprep.subr.mxu0 %v6205
    %6500 = vmatpush1.msra.mxu0 %v6204
    %6501 = vmatprep.subr.mxu0 %v6201
    %6502 = vmatpush1.msra.mxu0 %v6200
    %6503 = vmatprep.subr.mxu0 0.0
    %6504 = vmatpush2.msra.mxu0 0.0
    %6505 = vmatprep.subr.mxu0 0.0
    %6506 = vmatpush2.msra.mxu0 0.0
    %6507 = vmatprep.subr.mxu0 0.0
    %6508 = vmatpush2.msra.mxu0 0.0
    %6509 = vmatprep.subr.mxu0 0.0
    %6510 = vmatpush2.msra.mxu0 0.0
    %6511 = vmatprep.subr.mxu0 0.0
    %6512 = vmatpush2.msra.mxu0 0.0
    %6513 = vmatprep.subr.mxu0 0.0
    %6514 = vmatpush2.msra.mxu0 0.0
    %6515 = vmatprep.subr.mxu0 0.0
    %6516 = vmatpush2.msra.mxu0 0.0
    %6517 = vmatprep.subr.mxu0 0.0
    %6518 = vmatpush2.msra.mxu0 0.0
    %6519 = vmatprep.subr.mxu0 0.0
    %6520 = vmatpush2.msra.mxu0 0.0
    %6521 = vmatprep.subr.mxu0 0.0
    %6522 = vmatpush2.msra.mxu0 0.0
    %6523 = vmatprep.subr.mxu0 0.0
    %6524 = vmatpush2.msra.mxu0 0.0
    %6525 = vmatprep.subr.mxu0 0.0
    %6526 = vmatpush2.msra.mxu0 0.0
    %6527 = vmatprep.subr.mxu0 0.0
    %6528 = vmatpush2.msra.mxu0 0.0
    %6529 = vmatprep.subr.mxu0 0.0
    %6530 = vmatpush2.msra.mxu0 0.0
    %6531 = vmatprep.subr.mxu0 0.0
    %6532 = vmatpush2.msra.mxu0 0.0
    %6533 = vmatprep.subr.mxu0 0.0
    %6534 = vmatpush2.msra.mxu0 0.0
    %6535 = vmatprep.mubr.f32.mxu0 0.0
    %6536 = vmatmul.mubr.f32.gmra.mxu0 %v6199
    %v6537 = vpop.f32.mrf.mxu0
    %v6538 = vadd.f32 %v6396, %v6537
    %v6539 = vpop.f32.mrf.mxu0
    %v6540 = vadd.f32 %v6398, %v6539
    %6541 = vdwg.mxu0
    %6542 = vmatprep.subr.mxu0 %v6263
    %6543 = vmatpush1.msra.mxu0 %v6262
    %6544 = vmatprep.subr.mxu0 %v6259
    %6545 = vmatpush1.msra.mxu0 %v6258
    %6546 = vmatprep.subr.mxu0 %v6255
    %6547 = vmatpush1.msra.mxu0 %v6254
    %6548 = vmatprep.subr.mxu0 %v6251
    %6549 = vmatpush1.msra.mxu0 %v6250
    %6550 = vmatprep.subr.mxu0 %v6247
    %6551 = vmatpush1.msra.mxu0 %v6246
    %6552 = vmatprep.subr.mxu0 %v6243
    %6553 = vmatpush1.msra.mxu0 %v6242
    %6554 = vmatprep.subr.mxu0 %v6239
    %6555 = vmatpush1.msra.mxu0 %v6238
    %6556 = vmatprep.subr.mxu0 %v6235
    %6557 = vmatpush1.msra.mxu0 %v6234
    %6558 = vmatprep.subr.mxu0 %v6231
    %6559 = vmatpush1.msra.mxu0 %v6230
    %6560 = vmatprep.subr.mxu0 %v6227
    %6561 = vmatpush1.msra.mxu0 %v6226
    %6562 = vmatprep.subr.mxu0 %v6223
    %6563 = vmatpush1.msra.mxu0 %v6222
    %6564 = vmatprep.subr.mxu0 %v6219
    %6565 = vmatpush1.msra.mxu0 %v6218
    %6566 = vmatprep.subr.mxu0 %v6215
    %6567 = vmatpush1.msra.mxu0 %v6214
    %6568 = vmatprep.subr.mxu0 %v6211
    %6569 = vmatpush1.msra.mxu0 %v6210
    %6570 = vmatprep.subr.mxu0 %v6207
    %6571 = vmatpush1.msra.mxu0 %v6206
    %6572 = vmatprep.subr.mxu0 %v6203
    %6573 = vmatpush1.msra.mxu0 %v6202
    %6574 = vmatprep.subr.mxu0 0.0
    %6575 = vmatpush2.msra.mxu0 0.0
    %6576 = vmatprep.subr.mxu0 0.0
    %6577 = vmatpush2.msra.mxu0 0.0
    %6578 = vmatprep.subr.mxu0 0.0
    %6579 = vmatpush2.msra.mxu0 0.0
    %6580 = vmatprep.subr.mxu0 0.0
    %6581 = vmatpush2.msra.mxu0 0.0
    %6582 = vmatprep.subr.mxu0 0.0
    %6583 = vmatpush2.msra.mxu0 0.0
    %6584 = vmatprep.subr.mxu0 0.0
    %6585 = vmatpush2.msra.mxu0 0.0
    %6586 = vmatprep.subr.mxu0 0.0
    %6587 = vmatpush2.msra.mxu0 0.0
    %6588 = vmatprep.subr.mxu0 0.0
    %6589 = vmatpush2.msra.mxu0 0.0
    %6590 = vmatprep.subr.mxu0 0.0
    %6591 = vmatpush2.msra.mxu0 0.0
    %6592 = vmatprep.subr.mxu0 0.0
    %6593 = vmatpush2.msra.mxu0 0.0
    %6594 = vmatprep.subr.mxu0 0.0
    %6595 = vmatpush2.msra.mxu0 0.0
    %6596 = vmatprep.subr.mxu0 0.0
    %6597 = vmatpush2.msra.mxu0 0.0
    %6598 = vmatprep.subr.mxu0 0.0
    %6599 = vmatpush2.msra.mxu0 0.0
    %6600 = vmatprep.subr.mxu0 0.0
    %6601 = vmatpush2.msra.mxu0 0.0
    %6602 = vmatprep.subr.mxu0 0.0
    %6603 = vmatpush2.msra.mxu0 0.0
    %6604 = vmatprep.subr.mxu0 0.0
    %6605 = vmatpush2.msra.mxu0 0.0
    %6606 = vmatprep.mubr.f32.mxu0 0.0
    %6607 = vmatmul.mubr.f32.gmra.mxu0 %v6199
    %v6608 = vpop.f32.mrf.mxu0
    %v6609 = vadd.f32 %v6467, %v6608
    %v6610 = vpop.f32.mrf.mxu0
    %v6611 = vadd.f32 %v6469, %v6610
    %6612 = vdwg.mxu0
    %v6613 = vld [vmem:[%s12] sm:$0xf]
    %v6615 = vlaneseq
    %v6616 = vshrl.u32 %v6615, 7
    %v6617 = vsub.s32 0, %v6616
    %v6618 = vrot.slane %v6613, %v6617
    %v6619 = vlaneseq
    %v6620 = vshrl.u32 %v6619, 7
    %v6621 = vsub.s32 1, %v6620
    %v6622 = vrot.slane %v6613, %v6621
    %v6623 = vlaneseq
    %v6624 = vshrl.u32 %v6623, 7
    %v6625 = vsub.s32 2, %v6624
    %v6626 = vrot.slane %v6613, %v6625
    %v6627 = vlaneseq
    %v6628 = vshrl.u32 %v6627, 7
    %v6629 = vsub.s32 3, %v6628
    %v6630 = vrot.slane %v6613, %v6629
    %v6635 = vadd.f32 %v6538, %v6618
    %v6636 = vadd.f32 %v6540, %v6622
    %v6637 = vadd.f32 %v6609, %v6626
    %v6638 = vadd.f32 %v6611, %v6630
    %s6639 = scalar_lea.vmem [#allocation10], 16
    %v6640 = vld [vmem:[%s6639] sm:$0xff]
    %s6641 = scalar_lea.vmem [#allocation12], 16
    %v6642 = vld [vmem:[%s6641] sm:$0xff]
    %v6643 = vld [vmem:[#allocation22] sm:$0xff]
    %v6644 = vld [vmem:[#allocation22 + $0x8] sm:$0xff]
    %v6645 = vld [vmem:[#allocation22 + $0x10] sm:$0xff]
    %v6646 = vld [vmem:[#allocation22 + $0x18] sm:$0xff]
    %v6647 = vld [vmem:[#allocation22 + $0x20] sm:$0xff]
    %v6648 = vld [vmem:[#allocation22 + $0x28] sm:$0xff]
    %v6649 = vld [vmem:[#allocation22 + $0x30] sm:$0xff]
    %v6650 = vld [vmem:[#allocation22 + $0x38] sm:$0xff]
    %v6651 = vld [vmem:[#allocation22 + $0x40] sm:$0xff]
    %v6652 = vld [vmem:[#allocation22 + $0x48] sm:$0xff]
    %v6653 = vld [vmem:[#allocation22 + $0x50] sm:$0xff]
    %v6654 = vld [vmem:[#allocation22 + $0x58] sm:$0xff]
    %v6655 = vld [vmem:[#allocation22 + $0x60] sm:$0xff]
    %v6656 = vld [vmem:[#allocation22 + $0x68] sm:$0xff]
    %v6657 = vld [vmem:[#allocation22 + $0x70] sm:$0xff]
    %v6658 = vld [vmem:[#allocation22 + $0x78] sm:$0xff]
    %v6659 = vld [vmem:[#allocation22 + $0x80] sm:$0xff]
    %v6660 = vld [vmem:[#allocation22 + $0x88] sm:$0xff]
    %v6661 = vld [vmem:[#allocation22 + $0x90] sm:$0xff]
    %v6662 = vld [vmem:[#allocation22 + $0x98] sm:$0xff]
    %v6663 = vld [vmem:[#allocation22 + $0xa0] sm:$0xff]
    %v6664 = vld [vmem:[#allocation22 + $0xa8] sm:$0xff]
    %v6665 = vld [vmem:[#allocation22 + $0xb0] sm:$0xff]
    %v6666 = vld [vmem:[#allocation22 + $0xb8] sm:$0xff]
    %v6667 = vld [vmem:[#allocation22 + $0xc0] sm:$0xff]
    %v6668 = vld [vmem:[#allocation22 + $0xc8] sm:$0xff]
    %v6669 = vld [vmem:[#allocation22 + $0xd0] sm:$0xff]
    %v6670 = vld [vmem:[#allocation22 + $0xd8] sm:$0xff]
    %v6671 = vld [vmem:[#allocation22 + $0xe0] sm:$0xff]
    %v6672 = vld [vmem:[#allocation22 + $0xe8] sm:$0xff]
    %v6673 = vld [vmem:[#allocation22 + $0xf0] sm:$0xff]
    %v6674 = vld [vmem:[#allocation22 + $0xf8] sm:$0xff]
    %v6675 = vld [vmem:[#allocation22 + $0x100] sm:$0xff]
    %v6676 = vld [vmem:[#allocation22 + $0x108] sm:$0xff]
    %v6677 = vld [vmem:[#allocation22 + $0x110] sm:$0xff]
    %v6678 = vld [vmem:[#allocation22 + $0x118] sm:$0xff]
    %v6679 = vld [vmem:[#allocation22 + $0x120] sm:$0xff]
    %v6680 = vld [vmem:[#allocation22 + $0x128] sm:$0xff]
    %v6681 = vld [vmem:[#allocation22 + $0x130] sm:$0xff]
    %v6682 = vld [vmem:[#allocation22 + $0x138] sm:$0xff]
    %v6683 = vld [vmem:[#allocation22 + $0x140] sm:$0xff]
    %v6684 = vld [vmem:[#allocation22 + $0x148] sm:$0xff]
    %v6685 = vld [vmem:[#allocation22 + $0x150] sm:$0xff]
    %v6686 = vld [vmem:[#allocation22 + $0x158] sm:$0xff]
    %v6687 = vld [vmem:[#allocation22 + $0x160] sm:$0xff]
    %v6688 = vld [vmem:[#allocation22 + $0x168] sm:$0xff]
    %v6689 = vld [vmem:[#allocation22 + $0x170] sm:$0xff]
    %v6690 = vld [vmem:[#allocation22 + $0x178] sm:$0xff]
    %v6691 = vld [vmem:[#allocation22 + $0x180] sm:$0xff]
    %v6692 = vld [vmem:[#allocation22 + $0x188] sm:$0xff]
    %v6693 = vld [vmem:[#allocation22 + $0x190] sm:$0xff]
    %v6694 = vld [vmem:[#allocation22 + $0x198] sm:$0xff]
    %v6695 = vld [vmem:[#allocation22 + $0x1a0] sm:$0xff]
    %v6696 = vld [vmem:[#allocation22 + $0x1a8] sm:$0xff]
    %v6697 = vld [vmem:[#allocation22 + $0x1b0] sm:$0xff]
    %v6698 = vld [vmem:[#allocation22 + $0x1b8] sm:$0xff]
    %v6699 = vld [vmem:[#allocation22 + $0x1c0] sm:$0xff]
    %v6700 = vld [vmem:[#allocation22 + $0x1c8] sm:$0xff]
    %v6701 = vld [vmem:[#allocation22 + $0x1d0] sm:$0xff]
    %v6702 = vld [vmem:[#allocation22 + $0x1d8] sm:$0xff]
    %v6703 = vld [vmem:[#allocation22 + $0x1e0] sm:$0xff]
    %v6704 = vld [vmem:[#allocation22 + $0x1e8] sm:$0xff]
    %v6705 = vld [vmem:[#allocation22 + $0x1f0] sm:$0xff]
    %v6706 = vld [vmem:[#allocation22 + $0x1f8] sm:$0xff]
    %6707 = vmatprep.subr.mxu0 %v6704
    %6708 = vmatpush1.msra.mxu0 %v6703
    %6709 = vmatprep.subr.mxu0 %v6700
    %6710 = vmatpush1.msra.mxu0 %v6699
    %6711 = vmatprep.subr.mxu0 %v6696
    %6712 = vmatpush1.msra.mxu0 %v6695
    %6713 = vmatprep.subr.mxu0 %v6692
    %6714 = vmatpush1.msra.mxu0 %v6691
    %6715 = vmatprep.subr.mxu0 %v6688
    %6716 = vmatpush1.msra.mxu0 %v6687
    %6717 = vmatprep.subr.mxu0 %v6684
    %6718 = vmatpush1.msra.mxu0 %v6683
    %6719 = vmatprep.subr.mxu0 %v6680
    %6720 = vmatpush1.msra.mxu0 %v6679
    %6721 = vmatprep.subr.mxu0 %v6676
    %6722 = vmatpush1.msra.mxu0 %v6675
    %6723 = vmatprep.subr.mxu0 %v6672
    %6724 = vmatpush1.msra.mxu0 %v6671
    %6725 = vmatprep.subr.mxu0 %v6668
    %6726 = vmatpush1.msra.mxu0 %v6667
    %6727 = vmatprep.subr.mxu0 %v6664
    %6728 = vmatpush1.msra.mxu0 %v6663
    %6729 = vmatprep.subr.mxu0 %v6660
    %6730 = vmatpush1.msra.mxu0 %v6659
    %6731 = vmatprep.subr.mxu0 %v6656
    %6732 = vmatpush1.msra.mxu0 %v6655
    %6733 = vmatprep.subr.mxu0 %v6652
    %6734 = vmatpush1.msra.mxu0 %v6651
    %6735 = vmatprep.subr.mxu0 %v6648
    %6736 = vmatpush1.msra.mxu0 %v6647
    %6737 = vmatprep.subr.mxu0 %v6644
    %6738 = vmatpush1.msra.mxu0 %v6643
    %6739 = vmatprep.subr.mxu0 0.0
    %6740 = vmatpush2.msra.mxu0 0.0
    %6741 = vmatprep.subr.mxu0 0.0
    %6742 = vmatpush2.msra.mxu0 0.0
    %6743 = vmatprep.subr.mxu0 0.0
    %6744 = vmatpush2.msra.mxu0 0.0
    %6745 = vmatprep.subr.mxu0 0.0
    %6746 = vmatpush2.msra.mxu0 0.0
    %6747 = vmatprep.subr.mxu0 0.0
    %6748 = vmatpush2.msra.mxu0 0.0
    %6749 = vmatprep.subr.mxu0 0.0
    %6750 = vmatpush2.msra.mxu0 0.0
    %6751 = vmatprep.subr.mxu0 0.0
    %6752 = vmatpush2.msra.mxu0 0.0
    %6753 = vmatprep.subr.mxu0 0.0
    %6754 = vmatpush2.msra.mxu0 0.0
    %6755 = vmatprep.subr.mxu0 0.0
    %6756 = vmatpush2.msra.mxu0 0.0
    %6757 = vmatprep.subr.mxu0 0.0
    %6758 = vmatpush2.msra.mxu0 0.0
    %6759 = vmatprep.subr.mxu0 0.0
    %6760 = vmatpush2.msra.mxu0 0.0
    %6761 = vmatprep.subr.mxu0 0.0
    %6762 = vmatpush2.msra.mxu0 0.0
    %6763 = vmatprep.subr.mxu0 0.0
    %6764 = vmatpush2.msra.mxu0 0.0
    %6765 = vmatprep.subr.mxu0 0.0
    %6766 = vmatpush2.msra.mxu0 0.0
    %6767 = vmatprep.subr.mxu0 0.0
    %6768 = vmatpush2.msra.mxu0 0.0
    %6769 = vmatprep.subr.mxu0 0.0
    %6770 = vmatpush2.msra.mxu0 0.0
    %6771 = vmatprep.mubr.f32.mxu0 0.0
    %6772 = vmatmul.mubr.f32.gmra.mxu0 %v6640
    %v6773 = vpop.f32.mrf.mxu0
    %v6774 = vadd.f32 %v6635, %v6773
    %v6775 = vpop.f32.mrf.mxu0
    %v6776 = vadd.f32 %v6636, %v6775
    %6777 = vdwg.mxu0
    %6778 = vmatprep.subr.mxu0 %v6706
    %6779 = vmatpush1.msra.mxu0 %v6705
    %6780 = vmatprep.subr.mxu0 %v6702
    %6781 = vmatpush1.msra.mxu0 %v6701
    %6782 = vmatprep.subr.mxu0 %v6698
    %6783 = vmatpush1.msra.mxu0 %v6697
    %6784 = vmatprep.subr.mxu0 %v6694
    %6785 = vmatpush1.msra.mxu0 %v6693
    %6786 = vmatprep.subr.mxu0 %v6690
    %6787 = vmatpush1.msra.mxu0 %v6689
    %6788 = vmatprep.subr.mxu0 %v6686
    %6789 = vmatpush1.msra.mxu0 %v6685
    %6790 = vmatprep.subr.mxu0 %v6682
    %6791 = vmatpush1.msra.mxu0 %v6681
    %6792 = vmatprep.subr.mxu0 %v6678
    %6793 = vmatpush1.msra.mxu0 %v6677
    %6794 = vmatprep.subr.mxu0 %v6674
    %6795 = vmatpush1.msra.mxu0 %v6673
    %6796 = vmatprep.subr.mxu0 %v6670
    %6797 = vmatpush1.msra.mxu0 %v6669
    %6798 = vmatprep.subr.mxu0 %v6666
    %6799 = vmatpush1.msra.mxu0 %v6665
    %6800 = vmatprep.subr.mxu0 %v6662
    %6801 = vmatpush1.msra.mxu0 %v6661
    %6802 = vmatprep.subr.mxu0 %v6658
    %6803 = vmatpush1.msra.mxu0 %v6657
    %6804 = vmatprep.subr.mxu0 %v6654
    %6805 = vmatpush1.msra.mxu0 %v6653
    %6806 = vmatprep.subr.mxu0 %v6650
    %6807 = vmatpush1.msra.mxu0 %v6649
    %6808 = vmatprep.subr.mxu0 %v6646
    %6809 = vmatpush1.msra.mxu0 %v6645
    %6810 = vmatprep.subr.mxu0 0.0
    %6811 = vmatpush2.msra.mxu0 0.0
    %6812 = vmatprep.subr.mxu0 0.0
    %6813 = vmatpush2.msra.mxu0 0.0
    %6814 = vmatprep.subr.mxu0 0.0
    %6815 = vmatpush2.msra.mxu0 0.0
    %6816 = vmatprep.subr.mxu0 0.0
    %6817 = vmatpush2.msra.mxu0 0.0
    %6818 = vmatprep.subr.mxu0 0.0
    %6819 = vmatpush2.msra.mxu0 0.0
    %6820 = vmatprep.subr.mxu0 0.0
    %6821 = vmatpush2.msra.mxu0 0.0
    %6822 = vmatprep.subr.mxu0 0.0
    %6823 = vmatpush2.msra.mxu0 0.0
    %6824 = vmatprep.subr.mxu0 0.0
    %6825 = vmatpush2.msra.mxu0 0.0
    %6826 = vmatprep.subr.mxu0 0.0
    %6827 = vmatpush2.msra.mxu0 0.0
    %6828 = vmatprep.subr.mxu0 0.0
    %6829 = vmatpush2.msra.mxu0 0.0
    %6830 = vmatprep.subr.mxu0 0.0
    %6831 = vmatpush2.msra.mxu0 0.0
    %6832 = vmatprep.subr.mxu0 0.0
    %6833 = vmatpush2.msra.mxu0 0.0
    %6834 = vmatprep.subr.mxu0 0.0
    %6835 = vmatpush2.msra.mxu0 0.0
    %6836 = vmatprep.subr.mxu0 0.0
    %6837 = vmatpush2.msra.mxu0 0.0
    %6838 = vmatprep.subr.mxu0 0.0
    %6839 = vmatpush2.msra.mxu0 0.0
    %6840 = vmatprep.subr.mxu0 0.0
    %6841 = vmatpush2.msra.mxu0 0.0
    %6842 = vmatprep.mubr.f32.mxu0 0.0
    %6843 = vmatmul.mubr.f32.gmra.mxu0 %v6640
    %v6844 = vpop.f32.mrf.mxu0
    %v6845 = vadd.f32 %v6637, %v6844
    %v6846 = vpop.f32.mrf.mxu0
    %v6847 = vadd.f32 %v6638, %v6846
    %6848 = vdwg.mxu0
    %v6849 = vsub.f32 0.0, %v6774
    %v6850 = vmul.f32 %v6849, 1.442695
    %v6851 = vpow.pop %v6850
    %v6852 = vadd.f32 %v6851, 1.0
    %v6853 = vrcp.pop %v6852
    %v6854 = vsub.f32 0.0, %v6776
    %v6855 = vmul.f32 %v6854, 1.442695
    %v6856 = vpow.pop %v6855
    %v6857 = vadd.f32 %v6856, 1.0
    %v6858 = vrcp.pop %v6857
    %v6859 = vtanh.pop %v6845
    %v6860 = vsub.f32 0.0, %v6847
    %v6861 = vmul.f32 %v6860, 1.442695
    %v6862 = vpow.pop %v6861
    %v6863 = vadd.f32 %v6862, 1.0
    %v6864 = vrcp.pop %v6863
    %v6865 = vmul.f32 %v6858, %v6642
    %v6866 = vmul.f32 %v6853, %v6859
    %v6867 = vadd.f32 %v6865, %v6866
    %v6868 = vtanh.pop %v6867
    %v6869 = vmul.f32 %v6864, %v6868
    %s6870 = scalar_lea.vmem [#allocation10], 24
    %v6871 = vld [vmem:[%s6870] sm:$0xff]
    %s6872 = scalar_lea.vmem [#allocation12], 24
    %v6873 = vld [vmem:[%s6872] sm:$0xff]
    %v6874 = vld [vmem:[#allocation6 + $0xe0] sm:$0xff]
    %v6875 = vld [vmem:[#allocation6 + $0xe8] sm:$0xff]
    %v6876 = vld [vmem:[#allocation6 + $0xf0] sm:$0xff]
    %v6877 = vld [vmem:[#allocation6 + $0xf8] sm:$0xff]
    %v6878 = vld [vmem:[#allocation27] sm:$0xff]
    %v6879 = vld [vmem:[#allocation27 + $0x8] sm:$0xff]
    %v6880 = vld [vmem:[#allocation27 + $0x10] sm:$0xff]
    %v6881 = vld [vmem:[#allocation27 + $0x18] sm:$0xff]
    %v6882 = vld [vmem:[#allocation27 + $0x20] sm:$0xff]
    %v6883 = vld [vmem:[#allocation27 + $0x28] sm:$0xff]
    %v6884 = vld [vmem:[#allocation27 + $0x30] sm:$0xff]
    %v6885 = vld [vmem:[#allocation27 + $0x38] sm:$0xff]
    %v6886 = vld [vmem:[#allocation27 + $0x40] sm:$0xff]
    %v6887 = vld [vmem:[#allocation27 + $0x48] sm:$0xff]
    %v6888 = vld [vmem:[#allocation27 + $0x50] sm:$0xff]
    %v6889 = vld [vmem:[#allocation27 + $0x58] sm:$0xff]
    %v6890 = vld [vmem:[#allocation27 + $0x60] sm:$0xff]
    %v6891 = vld [vmem:[#allocation27 + $0x68] sm:$0xff]
    %v6892 = vld [vmem:[#allocation27 + $0x70] sm:$0xff]
    %v6893 = vld [vmem:[#allocation27 + $0x78] sm:$0xff]
    %v6894 = vld [vmem:[#allocation27 + $0x80] sm:$0xff]
    %v6895 = vld [vmem:[#allocation27 + $0x88] sm:$0xff]
    %v6896 = vld [vmem:[#allocation27 + $0x90] sm:$0xff]
    %v6897 = vld [vmem:[#allocation27 + $0x98] sm:$0xff]
    %v6898 = vld [vmem:[#allocation27 + $0xa0] sm:$0xff]
    %v6899 = vld [vmem:[#allocation27 + $0xa8] sm:$0xff]
    %v6900 = vld [vmem:[#allocation27 + $0xb0] sm:$0xff]
    %v6901 = vld [vmem:[#allocation27 + $0xb8] sm:$0xff]
    %v6902 = vld [vmem:[#allocation27 + $0xc0] sm:$0xff]
    %v6903 = vld [vmem:[#allocation27 + $0xc8] sm:$0xff]
    %v6904 = vld [vmem:[#allocation27 + $0xd0] sm:$0xff]
    %v6905 = vld [vmem:[#allocation27 + $0xd8] sm:$0xff]
    %v6906 = vld [vmem:[#allocation27 + $0xe0] sm:$0xff]
    %v6907 = vld [vmem:[#allocation27 + $0xe8] sm:$0xff]
    %v6908 = vld [vmem:[#allocation27 + $0xf0] sm:$0xff]
    %v6909 = vld [vmem:[#allocation27 + $0xf8] sm:$0xff]
    %v6910 = vld [vmem:[#allocation27 + $0x100] sm:$0xff]
    %v6911 = vld [vmem:[#allocation27 + $0x108] sm:$0xff]
    %v6912 = vld [vmem:[#allocation27 + $0x110] sm:$0xff]
    %v6913 = vld [vmem:[#allocation27 + $0x118] sm:$0xff]
    %v6914 = vld [vmem:[#allocation27 + $0x120] sm:$0xff]
    %v6915 = vld [vmem:[#allocation27 + $0x128] sm:$0xff]
    %v6916 = vld [vmem:[#allocation27 + $0x130] sm:$0xff]
    %v6917 = vld [vmem:[#allocation27 + $0x138] sm:$0xff]
    %v6918 = vld [vmem:[#allocation27 + $0x140] sm:$0xff]
    %v6919 = vld [vmem:[#allocation27 + $0x148] sm:$0xff]
    %v6920 = vld [vmem:[#allocation27 + $0x150] sm:$0xff]
    %v6921 = vld [vmem:[#allocation27 + $0x158] sm:$0xff]
    %v6922 = vld [vmem:[#allocation27 + $0x160] sm:$0xff]
    %v6923 = vld [vmem:[#allocation27 + $0x168] sm:$0xff]
    %v6924 = vld [vmem:[#allocation27 + $0x170] sm:$0xff]
    %v6925 = vld [vmem:[#allocation27 + $0x178] sm:$0xff]
    %v6926 = vld [vmem:[#allocation27 + $0x180] sm:$0xff]
    %v6927 = vld [vmem:[#allocation27 + $0x188] sm:$0xff]
    %v6928 = vld [vmem:[#allocation27 + $0x190] sm:$0xff]
    %v6929 = vld [vmem:[#allocation27 + $0x198] sm:$0xff]
    %v6930 = vld [vmem:[#allocation27 + $0x1a0] sm:$0xff]
    %v6931 = vld [vmem:[#allocation27 + $0x1a8] sm:$0xff]
    %v6932 = vld [vmem:[#allocation27 + $0x1b0] sm:$0xff]
    %v6933 = vld [vmem:[#allocation27 + $0x1b8] sm:$0xff]
    %v6934 = vld [vmem:[#allocation27 + $0x1c0] sm:$0xff]
    %v6935 = vld [vmem:[#allocation27 + $0x1c8] sm:$0xff]
    %v6936 = vld [vmem:[#allocation27 + $0x1d0] sm:$0xff]
    %v6937 = vld [vmem:[#allocation27 + $0x1d8] sm:$0xff]
    %v6938 = vld [vmem:[#allocation27 + $0x1e0] sm:$0xff]
    %v6939 = vld [vmem:[#allocation27 + $0x1e8] sm:$0xff]
    %v6940 = vld [vmem:[#allocation27 + $0x1f0] sm:$0xff]
    %v6941 = vld [vmem:[#allocation27 + $0x1f8] sm:$0xff]
    %6942 = vmatprep.subr.mxu0 %v6939
    %6943 = vmatpush1.msra.mxu0 %v6938
    %6944 = vmatprep.subr.mxu0 %v6935
    %6945 = vmatpush1.msra.mxu0 %v6934
    %6946 = vmatprep.subr.mxu0 %v6931
    %6947 = vmatpush1.msra.mxu0 %v6930
    %6948 = vmatprep.subr.mxu0 %v6927
    %6949 = vmatpush1.msra.mxu0 %v6926
    %6950 = vmatprep.subr.mxu0 %v6923
    %6951 = vmatpush1.msra.mxu0 %v6922
    %6952 = vmatprep.subr.mxu0 %v6919
    %6953 = vmatpush1.msra.mxu0 %v6918
    %6954 = vmatprep.subr.mxu0 %v6915
    %6955 = vmatpush1.msra.mxu0 %v6914
    %6956 = vmatprep.subr.mxu0 %v6911
    %6957 = vmatpush1.msra.mxu0 %v6910
    %6958 = vmatprep.subr.mxu0 %v6907
    %6959 = vmatpush1.msra.mxu0 %v6906
    %6960 = vmatprep.subr.mxu0 %v6903
    %6961 = vmatpush1.msra.mxu0 %v6902
    %6962 = vmatprep.subr.mxu0 %v6899
    %6963 = vmatpush1.msra.mxu0 %v6898
    %6964 = vmatprep.subr.mxu0 %v6895
    %6965 = vmatpush1.msra.mxu0 %v6894
    %6966 = vmatprep.subr.mxu0 %v6891
    %6967 = vmatpush1.msra.mxu0 %v6890
    %6968 = vmatprep.subr.mxu0 %v6887
    %6969 = vmatpush1.msra.mxu0 %v6886
    %6970 = vmatprep.subr.mxu0 %v6883
    %6971 = vmatpush1.msra.mxu0 %v6882
    %6972 = vmatprep.subr.mxu0 %v6879
    %6973 = vmatpush1.msra.mxu0 %v6878
    %6974 = vmatprep.subr.mxu0 0.0
    %6975 = vmatpush2.msra.mxu0 0.0
    %6976 = vmatprep.subr.mxu0 0.0
    %6977 = vmatpush2.msra.mxu0 0.0
    %6978 = vmatprep.subr.mxu0 0.0
    %6979 = vmatpush2.msra.mxu0 0.0
    %6980 = vmatprep.subr.mxu0 0.0
    %6981 = vmatpush2.msra.mxu0 0.0
    %6982 = vmatprep.subr.mxu0 0.0
    %6983 = vmatpush2.msra.mxu0 0.0
    %6984 = vmatprep.subr.mxu0 0.0
    %6985 = vmatpush2.msra.mxu0 0.0
    %6986 = vmatprep.subr.mxu0 0.0
    %6987 = vmatpush2.msra.mxu0 0.0
    %6988 = vmatprep.subr.mxu0 0.0
    %6989 = vmatpush2.msra.mxu0 0.0
    %6990 = vmatprep.subr.mxu0 0.0
    %6991 = vmatpush2.msra.mxu0 0.0
    %6992 = vmatprep.subr.mxu0 0.0
    %6993 = vmatpush2.msra.mxu0 0.0
    %6994 = vmatprep.subr.mxu0 0.0
    %6995 = vmatpush2.msra.mxu0 0.0
    %6996 = vmatprep.subr.mxu0 0.0
    %6997 = vmatpush2.msra.mxu0 0.0
    %6998 = vmatprep.subr.mxu0 0.0
    %6999 = vmatpush2.msra.mxu0 0.0
    %7000 = vmatprep.subr.mxu0 0.0
    %7001 = vmatpush2.msra.mxu0 0.0
    %7002 = vmatprep.subr.mxu0 0.0
    %7003 = vmatpush2.msra.mxu0 0.0
    %7004 = vmatprep.subr.mxu0 0.0
    %7005 = vmatpush2.msra.mxu0 0.0
    %7006 = vmatprep.mubr.f32.mxu0 0.0
    %7007 = vmatmul.mubr.f32.gmra.mxu0 %v6871
    %v7008 = vpop.f32.mrf.mxu0
    %v7009 = vadd.f32 %v6874, %v7008
    %v7010 = vpop.f32.mrf.mxu0
    %v7011 = vadd.f32 %v6875, %v7010
    %7012 = vdwg.mxu0
    %7013 = vmatprep.subr.mxu0 %v6941
    %7014 = vmatpush1.msra.mxu0 %v6940
    %7015 = vmatprep.subr.mxu0 %v6937
    %7016 = vmatpush1.msra.mxu0 %v6936
    %7017 = vmatprep.subr.mxu0 %v6933
    %7018 = vmatpush1.msra.mxu0 %v6932
    %7019 = vmatprep.subr.mxu0 %v6929
    %7020 = vmatpush1.msra.mxu0 %v6928
    %7021 = vmatprep.subr.mxu0 %v6925
    %7022 = vmatpush1.msra.mxu0 %v6924
    %7023 = vmatprep.subr.mxu0 %v6921
    %7024 = vmatpush1.msra.mxu0 %v6920
    %7025 = vmatprep.subr.mxu0 %v6917
    %7026 = vmatpush1.msra.mxu0 %v6916
    %7027 = vmatprep.subr.mxu0 %v6913
    %7028 = vmatpush1.msra.mxu0 %v6912
    %7029 = vmatprep.subr.mxu0 %v6909
    %7030 = vmatpush1.msra.mxu0 %v6908
    %7031 = vmatprep.subr.mxu0 %v6905
    %7032 = vmatpush1.msra.mxu0 %v6904
    %7033 = vmatprep.subr.mxu0 %v6901
    %7034 = vmatpush1.msra.mxu0 %v6900
    %7035 = vmatprep.subr.mxu0 %v6897
    %7036 = vmatpush1.msra.mxu0 %v6896
    %7037 = vmatprep.subr.mxu0 %v6893
    %7038 = vmatpush1.msra.mxu0 %v6892
    %7039 = vmatprep.subr.mxu0 %v6889
    %7040 = vmatpush1.msra.mxu0 %v6888
    %7041 = vmatprep.subr.mxu0 %v6885
    %7042 = vmatpush1.msra.mxu0 %v6884
    %7043 = vmatprep.subr.mxu0 %v6881
    %7044 = vmatpush1.msra.mxu0 %v6880
    %7045 = vmatprep.subr.mxu0 0.0
    %7046 = vmatpush2.msra.mxu0 0.0
    %7047 = vmatprep.subr.mxu0 0.0
    %7048 = vmatpush2.msra.mxu0 0.0
    %7049 = vmatprep.subr.mxu0 0.0
    %7050 = vmatpush2.msra.mxu0 0.0
    %7051 = vmatprep.subr.mxu0 0.0
    %7052 = vmatpush2.msra.mxu0 0.0
    %7053 = vmatprep.subr.mxu0 0.0
    %7054 = vmatpush2.msra.mxu0 0.0
    %7055 = vmatprep.subr.mxu0 0.0
    %7056 = vmatpush2.msra.mxu0 0.0
    %7057 = vmatprep.subr.mxu0 0.0
    %7058 = vmatpush2.msra.mxu0 0.0
    %7059 = vmatprep.subr.mxu0 0.0
    %7060 = vmatpush2.msra.mxu0 0.0
    %7061 = vmatprep.subr.mxu0 0.0
    %7062 = vmatpush2.msra.mxu0 0.0
    %7063 = vmatprep.subr.mxu0 0.0
    %7064 = vmatpush2.msra.mxu0 0.0
    %7065 = vmatprep.subr.mxu0 0.0
    %7066 = vmatpush2.msra.mxu0 0.0
    %7067 = vmatprep.subr.mxu0 0.0
    %7068 = vmatpush2.msra.mxu0 0.0
    %7069 = vmatprep.subr.mxu0 0.0
    %7070 = vmatpush2.msra.mxu0 0.0
    %7071 = vmatprep.subr.mxu0 0.0
    %7072 = vmatpush2.msra.mxu0 0.0
    %7073 = vmatprep.subr.mxu0 0.0
    %7074 = vmatpush2.msra.mxu0 0.0
    %7075 = vmatprep.subr.mxu0 0.0
    %7076 = vmatpush2.msra.mxu0 0.0
    %7077 = vmatprep.mubr.f32.mxu0 0.0
    %7078 = vmatmul.mubr.f32.gmra.mxu0 %v6871
    %v7079 = vpop.f32.mrf.mxu0
    %v7080 = vadd.f32 %v6876, %v7079
    %v7081 = vpop.f32.mrf.mxu0
    %v7082 = vadd.f32 %v6877, %v7081
    %7083 = vdwg.mxu0
    %v7084 = vsub.f32 0.0, %v7009
    %v7085 = vmul.f32 %v7084, 1.442695
    %v7086 = vpow.pop %v7085
    %v7087 = vadd.f32 %v7086, 1.0
    %v7088 = vrcp.pop %v7087
    %v7089 = vsub.f32 0.0, %v7011
    %v7090 = vmul.f32 %v7089, 1.442695
    %v7091 = vpow.pop %v7090
    %v7092 = vadd.f32 %v7091, 1.0
    %v7093 = vrcp.pop %v7092
    %v7094 = vtanh.pop %v7080
    %v7095 = vsub.f32 0.0, %v7082
    %v7096 = vmul.f32 %v7095, 1.442695
    %v7097 = vpow.pop %v7096
    %v7098 = vadd.f32 %v7097, 1.0
    %v7099 = vrcp.pop %v7098
    %v7100 = vmul.f32 %v7093, %v6873
    %v7101 = vmul.f32 %v7088, %v7094
    %v7102 = vadd.f32 %v7100, %v7101
    %v7103 = vtanh.pop %v7102
    %v7104 = vmul.f32 %v7099, %v7103
    %v7105 = vld [vmem:[#allocation6 + $0xc0] sm:$0xff]
    %v7106 = vld [vmem:[#allocation6 + $0xc8] sm:$0xff]
    %v7107 = vld [vmem:[#allocation6 + $0xd0] sm:$0xff]
    %v7108 = vld [vmem:[#allocation6 + $0xd8] sm:$0xff]
    %7109 = vmatprep.subr.mxu0 %v6939
    %7110 = vmatpush1.msra.mxu0 %v6938
    %7111 = vmatprep.subr.mxu0 %v6935
    %7112 = vmatpush1.msra.mxu0 %v6934
    %7113 = vmatprep.subr.mxu0 %v6931
    %7114 = vmatpush1.msra.mxu0 %v6930
    %7115 = vmatprep.subr.mxu0 %v6927
    %7116 = vmatpush1.msra.mxu0 %v6926
    %7117 = vmatprep.subr.mxu0 %v6923
    %7118 = vmatpush1.msra.mxu0 %v6922
    %7119 = vmatprep.subr.mxu0 %v6919
    %7120 = vmatpush1.msra.mxu0 %v6918
    %7121 = vmatprep.subr.mxu0 %v6915
    %7122 = vmatpush1.msra.mxu0 %v6914
    %7123 = vmatprep.subr.mxu0 %v6911
    %7124 = vmatpush1.msra.mxu0 %v6910
    %7125 = vmatprep.subr.mxu0 %v6907
    %7126 = vmatpush1.msra.mxu0 %v6906
    %7127 = vmatprep.subr.mxu0 %v6903
    %7128 = vmatpush1.msra.mxu0 %v6902
    %7129 = vmatprep.subr.mxu0 %v6899
    %7130 = vmatpush1.msra.mxu0 %v6898
    %7131 = vmatprep.subr.mxu0 %v6895
    %7132 = vmatpush1.msra.mxu0 %v6894
    %7133 = vmatprep.subr.mxu0 %v6891
    %7134 = vmatpush1.msra.mxu0 %v6890
    %7135 = vmatprep.subr.mxu0 %v6887
    %7136 = vmatpush1.msra.mxu0 %v6886
    %7137 = vmatprep.subr.mxu0 %v6883
    %7138 = vmatpush1.msra.mxu0 %v6882
    %7139 = vmatprep.subr.mxu0 %v6879
    %7140 = vmatpush1.msra.mxu0 %v6878
    %7141 = vmatprep.subr.mxu0 0.0
    %7142 = vmatpush2.msra.mxu0 0.0
    %7143 = vmatprep.subr.mxu0 0.0
    %7144 = vmatpush2.msra.mxu0 0.0
    %7145 = vmatprep.subr.mxu0 0.0
    %7146 = vmatpush2.msra.mxu0 0.0
    %7147 = vmatprep.subr.mxu0 0.0
    %7148 = vmatpush2.msra.mxu0 0.0
    %7149 = vmatprep.subr.mxu0 0.0
    %7150 = vmatpush2.msra.mxu0 0.0
    %7151 = vmatprep.subr.mxu0 0.0
    %7152 = vmatpush2.msra.mxu0 0.0
    %7153 = vmatprep.subr.mxu0 0.0
    %7154 = vmatpush2.msra.mxu0 0.0
    %7155 = vmatprep.subr.mxu0 0.0
    %7156 = vmatpush2.msra.mxu0 0.0
    %7157 = vmatprep.subr.mxu0 0.0
    %7158 = vmatpush2.msra.mxu0 0.0
    %7159 = vmatprep.subr.mxu0 0.0
    %7160 = vmatpush2.msra.mxu0 0.0
    %7161 = vmatprep.subr.mxu0 0.0
    %7162 = vmatpush2.msra.mxu0 0.0
    %7163 = vmatprep.subr.mxu0 0.0
    %7164 = vmatpush2.msra.mxu0 0.0
    %7165 = vmatprep.subr.mxu0 0.0
    %7166 = vmatpush2.msra.mxu0 0.0
    %7167 = vmatprep.subr.mxu0 0.0
    %7168 = vmatpush2.msra.mxu0 0.0
    %7169 = vmatprep.subr.mxu0 0.0
    %7170 = vmatpush2.msra.mxu0 0.0
    %7171 = vmatprep.subr.mxu0 0.0
    %7172 = vmatpush2.msra.mxu0 0.0
    %7173 = vmatprep.mubr.f32.mxu0 0.0
    %7174 = vmatmul.mubr.f32.gmra.mxu0 %v7104
    %v7175 = vpop.f32.mrf.mxu0
    %v7176 = vadd.f32 %v7105, %v7175
    %v7177 = vpop.f32.mrf.mxu0
    %v7178 = vadd.f32 %v7106, %v7177
    %7179 = vdwg.mxu0
    %7180 = vmatprep.subr.mxu0 %v6941
    %7181 = vmatpush1.msra.mxu0 %v6940
    %7182 = vmatprep.subr.mxu0 %v6937
    %7183 = vmatpush1.msra.mxu0 %v6936
    %7184 = vmatprep.subr.mxu0 %v6933
    %7185 = vmatpush1.msra.mxu0 %v6932
    %7186 = vmatprep.subr.mxu0 %v6929
    %7187 = vmatpush1.msra.mxu0 %v6928
    %7188 = vmatprep.subr.mxu0 %v6925
    %7189 = vmatpush1.msra.mxu0 %v6924
    %7190 = vmatprep.subr.mxu0 %v6921
    %7191 = vmatpush1.msra.mxu0 %v6920
    %7192 = vmatprep.subr.mxu0 %v6917
    %7193 = vmatpush1.msra.mxu0 %v6916
    %7194 = vmatprep.subr.mxu0 %v6913
    %7195 = vmatpush1.msra.mxu0 %v6912
    %7196 = vmatprep.subr.mxu0 %v6909
    %7197 = vmatpush1.msra.mxu0 %v6908
    %7198 = vmatprep.subr.mxu0 %v6905
    %7199 = vmatpush1.msra.mxu0 %v6904
    %7200 = vmatprep.subr.mxu0 %v6901
    %7201 = vmatpush1.msra.mxu0 %v6900
    %7202 = vmatprep.subr.mxu0 %v6897
    %7203 = vmatpush1.msra.mxu0 %v6896
    %7204 = vmatprep.subr.mxu0 %v6893
    %7205 = vmatpush1.msra.mxu0 %v6892
    %7206 = vmatprep.subr.mxu0 %v6889
    %7207 = vmatpush1.msra.mxu0 %v6888
    %7208 = vmatprep.subr.mxu0 %v6885
    %7209 = vmatpush1.msra.mxu0 %v6884
    %7210 = vmatprep.subr.mxu0 %v6881
    %7211 = vmatpush1.msra.mxu0 %v6880
    %7212 = vmatprep.subr.mxu0 0.0
    %7213 = vmatpush2.msra.mxu0 0.0
    %7214 = vmatprep.subr.mxu0 0.0
    %7215 = vmatpush2.msra.mxu0 0.0
    %7216 = vmatprep.subr.mxu0 0.0
    %7217 = vmatpush2.msra.mxu0 0.0
    %7218 = vmatprep.subr.mxu0 0.0
    %7219 = vmatpush2.msra.mxu0 0.0
    %7220 = vmatprep.subr.mxu0 0.0
    %7221 = vmatpush2.msra.mxu0 0.0
    %7222 = vmatprep.subr.mxu0 0.0
    %7223 = vmatpush2.msra.mxu0 0.0
    %7224 = vmatprep.subr.mxu0 0.0
    %7225 = vmatpush2.msra.mxu0 0.0
    %7226 = vmatprep.subr.mxu0 0.0
    %7227 = vmatpush2.msra.mxu0 0.0
    %7228 = vmatprep.subr.mxu0 0.0
    %7229 = vmatpush2.msra.mxu0 0.0
    %7230 = vmatprep.subr.mxu0 0.0
    %7231 = vmatpush2.msra.mxu0 0.0
    %7232 = vmatprep.subr.mxu0 0.0
    %7233 = vmatpush2.msra.mxu0 0.0
    %7234 = vmatprep.subr.mxu0 0.0
    %7235 = vmatpush2.msra.mxu0 0.0
    %7236 = vmatprep.subr.mxu0 0.0
    %7237 = vmatpush2.msra.mxu0 0.0
    %7238 = vmatprep.subr.mxu0 0.0
    %7239 = vmatpush2.msra.mxu0 0.0
    %7240 = vmatprep.subr.mxu0 0.0
    %7241 = vmatpush2.msra.mxu0 0.0
    %7242 = vmatprep.subr.mxu0 0.0
    %7243 = vmatpush2.msra.mxu0 0.0
    %7244 = vmatprep.mubr.f32.mxu0 0.0
    %7245 = vmatmul.mubr.f32.gmra.mxu0 %v7104
    %v7246 = vpop.f32.mrf.mxu0
    %v7247 = vadd.f32 %v7107, %v7246
    %v7248 = vpop.f32.mrf.mxu0
    %v7249 = vadd.f32 %v7108, %v7248
    %7250 = vdwg.mxu0
    %v7251 = vsub.f32 0.0, %v7176
    %v7252 = vmul.f32 %v7251, 1.442695
    %v7253 = vpow.pop %v7252
    %v7254 = vadd.f32 %v7253, 1.0
    %v7255 = vrcp.pop %v7254
    %v7256 = vsub.f32 0.0, %v7178
    %v7257 = vmul.f32 %v7256, 1.442695
    %v7258 = vpow.pop %v7257
    %v7259 = vadd.f32 %v7258, 1.0
    %v7260 = vrcp.pop %v7259
    %v7261 = vtanh.pop %v7247
    %v7262 = vsub.f32 0.0, %v7249
    %v7263 = vmul.f32 %v7262, 1.442695
    %v7264 = vpow.pop %v7263
    %v7265 = vadd.f32 %v7264, 1.0
    %v7266 = vrcp.pop %v7265
    %v7267 = vmul.f32 %v7260, %v7102
    %v7268 = vmul.f32 %v7255, %v7261
    %v7269 = vadd.f32 %v7267, %v7268
    %v7270 = vtanh.pop %v7269
    %v7271 = vmul.f32 %v7266, %v7270
    %v7272 = vld [vmem:[#allocation6 + $0xa0] sm:$0xff]
    %v7273 = vld [vmem:[#allocation6 + $0xa8] sm:$0xff]
    %v7274 = vld [vmem:[#allocation6 + $0xb0] sm:$0xff]
    %v7275 = vld [vmem:[#allocation6 + $0xb8] sm:$0xff]
    %7276 = vmatprep.subr.mxu0 %v6939
    %7277 = vmatpush1.msra.mxu0 %v6938
    %7278 = vmatprep.subr.mxu0 %v6935
    %7279 = vmatpush1.msra.mxu0 %v6934
    %7280 = vmatprep.subr.mxu0 %v6931
    %7281 = vmatpush1.msra.mxu0 %v6930
    %7282 = vmatprep.subr.mxu0 %v6927
    %7283 = vmatpush1.msra.mxu0 %v6926
    %7284 = vmatprep.subr.mxu0 %v6923
    %7285 = vmatpush1.msra.mxu0 %v6922
    %7286 = vmatprep.subr.mxu0 %v6919
    %7287 = vmatpush1.msra.mxu0 %v6918
    %7288 = vmatprep.subr.mxu0 %v6915
    %7289 = vmatpush1.msra.mxu0 %v6914
    %7290 = vmatprep.subr.mxu0 %v6911
    %7291 = vmatpush1.msra.mxu0 %v6910
    %7292 = vmatprep.subr.mxu0 %v6907
    %7293 = vmatpush1.msra.mxu0 %v6906
    %7294 = vmatprep.subr.mxu0 %v6903
    %7295 = vmatpush1.msra.mxu0 %v6902
    %7296 = vmatprep.subr.mxu0 %v6899
    %7297 = vmatpush1.msra.mxu0 %v6898
    %7298 = vmatprep.subr.mxu0 %v6895
    %7299 = vmatpush1.msra.mxu0 %v6894
    %7300 = vmatprep.subr.mxu0 %v6891
    %7301 = vmatpush1.msra.mxu0 %v6890
    %7302 = vmatprep.subr.mxu0 %v6887
    %7303 = vmatpush1.msra.mxu0 %v6886
    %7304 = vmatprep.subr.mxu0 %v6883
    %7305 = vmatpush1.msra.mxu0 %v6882
    %7306 = vmatprep.subr.mxu0 %v6879
    %7307 = vmatpush1.msra.mxu0 %v6878
    %7308 = vmatprep.subr.mxu0 0.0
    %7309 = vmatpush2.msra.mxu0 0.0
    %7310 = vmatprep.subr.mxu0 0.0
    %7311 = vmatpush2.msra.mxu0 0.0
    %7312 = vmatprep.subr.mxu0 0.0
    %7313 = vmatpush2.msra.mxu0 0.0
    %7314 = vmatprep.subr.mxu0 0.0
    %7315 = vmatpush2.msra.mxu0 0.0
    %7316 = vmatprep.subr.mxu0 0.0
    %7317 = vmatpush2.msra.mxu0 0.0
    %7318 = vmatprep.subr.mxu0 0.0
    %7319 = vmatpush2.msra.mxu0 0.0
    %7320 = vmatprep.subr.mxu0 0.0
    %7321 = vmatpush2.msra.mxu0 0.0
    %7322 = vmatprep.subr.mxu0 0.0
    %7323 = vmatpush2.msra.mxu0 0.0
    %7324 = vmatprep.subr.mxu0 0.0
    %7325 = vmatpush2.msra.mxu0 0.0
    %7326 = vmatprep.subr.mxu0 0.0
    %7327 = vmatpush2.msra.mxu0 0.0
    %7328 = vmatprep.subr.mxu0 0.0
    %7329 = vmatpush2.msra.mxu0 0.0
    %7330 = vmatprep.subr.mxu0 0.0
    %7331 = vmatpush2.msra.mxu0 0.0
    %7332 = vmatprep.subr.mxu0 0.0
    %7333 = vmatpush2.msra.mxu0 0.0
    %7334 = vmatprep.subr.mxu0 0.0
    %7335 = vmatpush2.msra.mxu0 0.0
    %7336 = vmatprep.subr.mxu0 0.0
    %7337 = vmatpush2.msra.mxu0 0.0
    %7338 = vmatprep.subr.mxu0 0.0
    %7339 = vmatpush2.msra.mxu0 0.0
    %7340 = vmatprep.mubr.f32.mxu0 0.0
    %7341 = vmatmul.mubr.f32.gmra.mxu0 %v7271
    %v7342 = vpop.f32.mrf.mxu0
    %v7343 = vadd.f32 %v7272, %v7342
    %v7344 = vpop.f32.mrf.mxu0
    %v7345 = vadd.f32 %v7273, %v7344
    %7346 = vdwg.mxu0
    %7347 = vmatprep.subr.mxu0 %v6941
    %7348 = vmatpush1.msra.mxu0 %v6940
    %7349 = vmatprep.subr.mxu0 %v6937
    %7350 = vmatpush1.msra.mxu0 %v6936
    %7351 = vmatprep.subr.mxu0 %v6933
    %7352 = vmatpush1.msra.mxu0 %v6932
    %7353 = vmatprep.subr.mxu0 %v6929
    %7354 = vmatpush1.msra.mxu0 %v6928
    %7355 = vmatprep.subr.mxu0 %v6925
    %7356 = vmatpush1.msra.mxu0 %v6924
    %7357 = vmatprep.subr.mxu0 %v6921
    %7358 = vmatpush1.msra.mxu0 %v6920
    %7359 = vmatprep.subr.mxu0 %v6917
    %7360 = vmatpush1.msra.mxu0 %v6916
    %7361 = vmatprep.subr.mxu0 %v6913
    %7362 = vmatpush1.msra.mxu0 %v6912
    %7363 = vmatprep.subr.mxu0 %v6909
    %7364 = vmatpush1.msra.mxu0 %v6908
    %7365 = vmatprep.subr.mxu0 %v6905
    %7366 = vmatpush1.msra.mxu0 %v6904
    %7367 = vmatprep.subr.mxu0 %v6901
    %7368 = vmatpush1.msra.mxu0 %v6900
    %7369 = vmatprep.subr.mxu0 %v6897
    %7370 = vmatpush1.msra.mxu0 %v6896
    %7371 = vmatprep.subr.mxu0 %v6893
    %7372 = vmatpush1.msra.mxu0 %v6892
    %7373 = vmatprep.subr.mxu0 %v6889
    %7374 = vmatpush1.msra.mxu0 %v6888
    %7375 = vmatprep.subr.mxu0 %v6885
    %7376 = vmatpush1.msra.mxu0 %v6884
    %7377 = vmatprep.subr.mxu0 %v6881
    %7378 = vmatpush1.msra.mxu0 %v6880
    %7379 = vmatprep.subr.mxu0 0.0
    %7380 = vmatpush2.msra.mxu0 0.0
    %7381 = vmatprep.subr.mxu0 0.0
    %7382 = vmatpush2.msra.mxu0 0.0
    %7383 = vmatprep.subr.mxu0 0.0
    %7384 = vmatpush2.msra.mxu0 0.0
    %7385 = vmatprep.subr.mxu0 0.0
    %7386 = vmatpush2.msra.mxu0 0.0
    %7387 = vmatprep.subr.mxu0 0.0
    %7388 = vmatpush2.msra.mxu0 0.0
    %7389 = vmatprep.subr.mxu0 0.0
    %7390 = vmatpush2.msra.mxu0 0.0
    %7391 = vmatprep.subr.mxu0 0.0
    %7392 = vmatpush2.msra.mxu0 0.0
    %7393 = vmatprep.subr.mxu0 0.0
    %7394 = vmatpush2.msra.mxu0 0.0
    %7395 = vmatprep.subr.mxu0 0.0
    %7396 = vmatpush2.msra.mxu0 0.0
    %7397 = vmatprep.subr.mxu0 0.0
    %7398 = vmatpush2.msra.mxu0 0.0
    %7399 = vmatprep.subr.mxu0 0.0
    %7400 = vmatpush2.msra.mxu0 0.0
    %7401 = vmatprep.subr.mxu0 0.0
    %7402 = vmatpush2.msra.mxu0 0.0
    %7403 = vmatprep.subr.mxu0 0.0
    %7404 = vmatpush2.msra.mxu0 0.0
    %7405 = vmatprep.subr.mxu0 0.0
    %7406 = vmatpush2.msra.mxu0 0.0
    %7407 = vmatprep.subr.mxu0 0.0
    %7408 = vmatpush2.msra.mxu0 0.0
    %7409 = vmatprep.subr.mxu0 0.0
    %7410 = vmatpush2.msra.mxu0 0.0
    %7411 = vmatprep.mubr.f32.mxu0 0.0
    %7412 = vmatmul.mubr.f32.gmra.mxu0 %v7271
    %v7413 = vpop.f32.mrf.mxu0
    %v7414 = vadd.f32 %v7274, %v7413
    %v7415 = vpop.f32.mrf.mxu0
    %v7416 = vadd.f32 %v7275, %v7415
    %7417 = vdwg.mxu0
    %v7418 = vsub.f32 0.0, %v7343
    %v7419 = vmul.f32 %v7418, 1.442695
    %v7420 = vpow.pop %v7419
    %v7421 = vadd.f32 %v7420, 1.0
    %v7422 = vrcp.pop %v7421
    %v7423 = vsub.f32 0.0, %v7345
    %v7424 = vmul.f32 %v7423, 1.442695
    %v7425 = vpow.pop %v7424
    %v7426 = vadd.f32 %v7425, 1.0
    %v7427 = vrcp.pop %v7426
    %v7428 = vtanh.pop %v7414
    %v7429 = vsub.f32 0.0, %v7416
    %v7430 = vmul.f32 %v7429, 1.442695
    %v7431 = vpow.pop %v7430
    %v7432 = vadd.f32 %v7431, 1.0
    %v7433 = vrcp.pop %v7432
    %v7434 = vmul.f32 %v7427, %v7269
    %v7435 = vmul.f32 %v7422, %v7428
    %v7436 = vadd.f32 %v7434, %v7435
    %v7437 = vtanh.pop %v7436
    %v7438 = vmul.f32 %v7433, %v7437
    %v7439 = vld [vmem:[#allocation6 + $0x80] sm:$0xff]
    %v7440 = vld [vmem:[#allocation6 + $0x88] sm:$0xff]
    %v7441 = vld [vmem:[#allocation6 + $0x90] sm:$0xff]
    %v7442 = vld [vmem:[#allocation6 + $0x98] sm:$0xff]
    %7443 = vmatprep.subr.mxu0 %v6939
    %7444 = vmatpush1.msra.mxu0 %v6938
    %7445 = vmatprep.subr.mxu0 %v6935
    %7446 = vmatpush1.msra.mxu0 %v6934
    %7447 = vmatprep.subr.mxu0 %v6931
    %7448 = vmatpush1.msra.mxu0 %v6930
    %7449 = vmatprep.subr.mxu0 %v6927
    %7450 = vmatpush1.msra.mxu0 %v6926
    %7451 = vmatprep.subr.mxu0 %v6923
    %7452 = vmatpush1.msra.mxu0 %v6922
    %7453 = vmatprep.subr.mxu0 %v6919
    %7454 = vmatpush1.msra.mxu0 %v6918
    %7455 = vmatprep.subr.mxu0 %v6915
    %7456 = vmatpush1.msra.mxu0 %v6914
    %7457 = vmatprep.subr.mxu0 %v6911
    %7458 = vmatpush1.msra.mxu0 %v6910
    %7459 = vmatprep.subr.mxu0 %v6907
    %7460 = vmatpush1.msra.mxu0 %v6906
    %7461 = vmatprep.subr.mxu0 %v6903
    %7462 = vmatpush1.msra.mxu0 %v6902
    %7463 = vmatprep.subr.mxu0 %v6899
    %7464 = vmatpush1.msra.mxu0 %v6898
    %7465 = vmatprep.subr.mxu0 %v6895
    %7466 = vmatpush1.msra.mxu0 %v6894
    %7467 = vmatprep.subr.mxu0 %v6891
    %7468 = vmatpush1.msra.mxu0 %v6890
    %7469 = vmatprep.subr.mxu0 %v6887
    %7470 = vmatpush1.msra.mxu0 %v6886
    %7471 = vmatprep.subr.mxu0 %v6883
    %7472 = vmatpush1.msra.mxu0 %v6882
    %7473 = vmatprep.subr.mxu0 %v6879
    %7474 = vmatpush1.msra.mxu0 %v6878
    %7475 = vmatprep.subr.mxu0 0.0
    %7476 = vmatpush2.msra.mxu0 0.0
    %7477 = vmatprep.subr.mxu0 0.0
    %7478 = vmatpush2.msra.mxu0 0.0
    %7479 = vmatprep.subr.mxu0 0.0
    %7480 = vmatpush2.msra.mxu0 0.0
    %7481 = vmatprep.subr.mxu0 0.0
    %7482 = vmatpush2.msra.mxu0 0.0
    %7483 = vmatprep.subr.mxu0 0.0
    %7484 = vmatpush2.msra.mxu0 0.0
    %7485 = vmatprep.subr.mxu0 0.0
    %7486 = vmatpush2.msra.mxu0 0.0
    %7487 = vmatprep.subr.mxu0 0.0
    %7488 = vmatpush2.msra.mxu0 0.0
    %7489 = vmatprep.subr.mxu0 0.0
    %7490 = vmatpush2.msra.mxu0 0.0
    %7491 = vmatprep.subr.mxu0 0.0
    %7492 = vmatpush2.msra.mxu0 0.0
    %7493 = vmatprep.subr.mxu0 0.0
    %7494 = vmatpush2.msra.mxu0 0.0
    %7495 = vmatprep.subr.mxu0 0.0
    %7496 = vmatpush2.msra.mxu0 0.0
    %7497 = vmatprep.subr.mxu0 0.0
    %7498 = vmatpush2.msra.mxu0 0.0
    %7499 = vmatprep.subr.mxu0 0.0
    %7500 = vmatpush2.msra.mxu0 0.0
    %7501 = vmatprep.subr.mxu0 0.0
    %7502 = vmatpush2.msra.mxu0 0.0
    %7503 = vmatprep.subr.mxu0 0.0
    %7504 = vmatpush2.msra.mxu0 0.0
    %7505 = vmatprep.subr.mxu0 0.0
    %7506 = vmatpush2.msra.mxu0 0.0
    %7507 = vmatprep.mubr.f32.mxu0 0.0
    %7508 = vmatmul.mubr.f32.gmra.mxu0 %v7438
    %v7509 = vpop.f32.mrf.mxu0
    %v7510 = vadd.f32 %v7439, %v7509
    %v7511 = vpop.f32.mrf.mxu0
    %v7512 = vadd.f32 %v7440, %v7511
    %7513 = vdwg.mxu0
    %7514 = vmatprep.subr.mxu0 %v6941
    %7515 = vmatpush1.msra.mxu0 %v6940
    %7516 = vmatprep.subr.mxu0 %v6937
    %7517 = vmatpush1.msra.mxu0 %v6936
    %7518 = vmatprep.subr.mxu0 %v6933
    %7519 = vmatpush1.msra.mxu0 %v6932
    %7520 = vmatprep.subr.mxu0 %v6929
    %7521 = vmatpush1.msra.mxu0 %v6928
    %7522 = vmatprep.subr.mxu0 %v6925
    %7523 = vmatpush1.msra.mxu0 %v6924
    %7524 = vmatprep.subr.mxu0 %v6921
    %7525 = vmatpush1.msra.mxu0 %v6920
    %7526 = vmatprep.subr.mxu0 %v6917
    %7527 = vmatpush1.msra.mxu0 %v6916
    %7528 = vmatprep.subr.mxu0 %v6913
    %7529 = vmatpush1.msra.mxu0 %v6912
    %7530 = vmatprep.subr.mxu0 %v6909
    %7531 = vmatpush1.msra.mxu0 %v6908
    %7532 = vmatprep.subr.mxu0 %v6905
    %7533 = vmatpush1.msra.mxu0 %v6904
    %7534 = vmatprep.subr.mxu0 %v6901
    %7535 = vmatpush1.msra.mxu0 %v6900
    %7536 = vmatprep.subr.mxu0 %v6897
    %7537 = vmatpush1.msra.mxu0 %v6896
    %7538 = vmatprep.subr.mxu0 %v6893
    %7539 = vmatpush1.msra.mxu0 %v6892
    %7540 = vmatprep.subr.mxu0 %v6889
    %7541 = vmatpush1.msra.mxu0 %v6888
    %7542 = vmatprep.subr.mxu0 %v6885
    %7543 = vmatpush1.msra.mxu0 %v6884
    %7544 = vmatprep.subr.mxu0 %v6881
    %7545 = vmatpush1.msra.mxu0 %v6880
    %7546 = vmatprep.subr.mxu0 0.0
    %7547 = vmatpush2.msra.mxu0 0.0
    %7548 = vmatprep.subr.mxu0 0.0
    %7549 = vmatpush2.msra.mxu0 0.0
    %7550 = vmatprep.subr.mxu0 0.0
    %7551 = vmatpush2.msra.mxu0 0.0
    %7552 = vmatprep.subr.mxu0 0.0
    %7553 = vmatpush2.msra.mxu0 0.0
    %7554 = vmatprep.subr.mxu0 0.0
    %7555 = vmatpush2.msra.mxu0 0.0
    %7556 = vmatprep.subr.mxu0 0.0
    %7557 = vmatpush2.msra.mxu0 0.0
    %7558 = vmatprep.subr.mxu0 0.0
    %7559 = vmatpush2.msra.mxu0 0.0
    %7560 = vmatprep.subr.mxu0 0.0
    %7561 = vmatpush2.msra.mxu0 0.0
    %7562 = vmatprep.subr.mxu0 0.0
    %7563 = vmatpush2.msra.mxu0 0.0
    %7564 = vmatprep.subr.mxu0 0.0
    %7565 = vmatpush2.msra.mxu0 0.0
    %7566 = vmatprep.subr.mxu0 0.0
    %7567 = vmatpush2.msra.mxu0 0.0
    %7568 = vmatprep.subr.mxu0 0.0
    %7569 = vmatpush2.msra.mxu0 0.0
    %7570 = vmatprep.subr.mxu0 0.0
    %7571 = vmatpush2.msra.mxu0 0.0
    %7572 = vmatprep.subr.mxu0 0.0
    %7573 = vmatpush2.msra.mxu0 0.0
    %7574 = vmatprep.subr.mxu0 0.0
    %7575 = vmatpush2.msra.mxu0 0.0
    %7576 = vmatprep.subr.mxu0 0.0
    %7577 = vmatpush2.msra.mxu0 0.0
    %7578 = vmatprep.mubr.f32.mxu0 0.0
    %7579 = vmatmul.mubr.f32.gmra.mxu0 %v7438
    %v7580 = vpop.f32.mrf.mxu0
    %v7581 = vadd.f32 %v7441, %v7580
    %v7582 = vpop.f32.mrf.mxu0
    %v7583 = vadd.f32 %v7442, %v7582
    %7584 = vdwg.mxu0
    %v7585 = vsub.f32 0.0, %v7510
    %v7586 = vmul.f32 %v7585, 1.442695
    %v7587 = vpow.pop %v7586
    %v7588 = vadd.f32 %v7587, 1.0
    %v7589 = vrcp.pop %v7588
    %v7590 = vsub.f32 0.0, %v7512
    %v7591 = vmul.f32 %v7590, 1.442695
    %v7592 = vpow.pop %v7591
    %v7593 = vadd.f32 %v7592, 1.0
    %v7594 = vrcp.pop %v7593
    %v7595 = vtanh.pop %v7581
    %v7596 = vsub.f32 0.0, %v7583
    %v7597 = vmul.f32 %v7596, 1.442695
    %v7598 = vpow.pop %v7597
    %v7599 = vadd.f32 %v7598, 1.0
    %v7600 = vrcp.pop %v7599
    %v7601 = vmul.f32 %v7594, %v7436
    %v7602 = vmul.f32 %v7589, %v7595
    %v7603 = vadd.f32 %v7601, %v7602
    %v7604 = vtanh.pop %v7603
    %v7605 = vmul.f32 %v7600, %v7604
    %v7606 = vld [vmem:[#allocation6 + $0x60] sm:$0xff]
    %v7607 = vld [vmem:[#allocation6 + $0x68] sm:$0xff]
    %v7608 = vld [vmem:[#allocation6 + $0x70] sm:$0xff]
    %v7609 = vld [vmem:[#allocation6 + $0x78] sm:$0xff]
    %7610 = vmatprep.subr.mxu0 %v6939
    %7611 = vmatpush1.msra.mxu0 %v6938
    %7612 = vmatprep.subr.mxu0 %v6935
    %7613 = vmatpush1.msra.mxu0 %v6934
    %7614 = vmatprep.subr.mxu0 %v6931
    %7615 = vmatpush1.msra.mxu0 %v6930
    %7616 = vmatprep.subr.mxu0 %v6927
    %7617 = vmatpush1.msra.mxu0 %v6926
    %7618 = vmatprep.subr.mxu0 %v6923
    %7619 = vmatpush1.msra.mxu0 %v6922
    %7620 = vmatprep.subr.mxu0 %v6919
    %7621 = vmatpush1.msra.mxu0 %v6918
    %7622 = vmatprep.subr.mxu0 %v6915
    %7623 = vmatpush1.msra.mxu0 %v6914
    %7624 = vmatprep.subr.mxu0 %v6911
    %7625 = vmatpush1.msra.mxu0 %v6910
    %7626 = vmatprep.subr.mxu0 %v6907
    %7627 = vmatpush1.msra.mxu0 %v6906
    %7628 = vmatprep.subr.mxu0 %v6903
    %7629 = vmatpush1.msra.mxu0 %v6902
    %7630 = vmatprep.subr.mxu0 %v6899
    %7631 = vmatpush1.msra.mxu0 %v6898
    %7632 = vmatprep.subr.mxu0 %v6895
    %7633 = vmatpush1.msra.mxu0 %v6894
    %7634 = vmatprep.subr.mxu0 %v6891
    %7635 = vmatpush1.msra.mxu0 %v6890
    %7636 = vmatprep.subr.mxu0 %v6887
    %7637 = vmatpush1.msra.mxu0 %v6886
    %7638 = vmatprep.subr.mxu0 %v6883
    %7639 = vmatpush1.msra.mxu0 %v6882
    %7640 = vmatprep.subr.mxu0 %v6879
    %7641 = vmatpush1.msra.mxu0 %v6878
    %7642 = vmatprep.subr.mxu0 0.0
    %7643 = vmatpush2.msra.mxu0 0.0
    %7644 = vmatprep.subr.mxu0 0.0
    %7645 = vmatpush2.msra.mxu0 0.0
    %7646 = vmatprep.subr.mxu0 0.0
    %7647 = vmatpush2.msra.mxu0 0.0
    %7648 = vmatprep.subr.mxu0 0.0
    %7649 = vmatpush2.msra.mxu0 0.0
    %7650 = vmatprep.subr.mxu0 0.0
    %7651 = vmatpush2.msra.mxu0 0.0
    %7652 = vmatprep.subr.mxu0 0.0
    %7653 = vmatpush2.msra.mxu0 0.0
    %7654 = vmatprep.subr.mxu0 0.0
    %7655 = vmatpush2.msra.mxu0 0.0
    %7656 = vmatprep.subr.mxu0 0.0
    %7657 = vmatpush2.msra.mxu0 0.0
    %7658 = vmatprep.subr.mxu0 0.0
    %7659 = vmatpush2.msra.mxu0 0.0
    %7660 = vmatprep.subr.mxu0 0.0
    %7661 = vmatpush2.msra.mxu0 0.0
    %7662 = vmatprep.subr.mxu0 0.0
    %7663 = vmatpush2.msra.mxu0 0.0
    %7664 = vmatprep.subr.mxu0 0.0
    %7665 = vmatpush2.msra.mxu0 0.0
    %7666 = vmatprep.subr.mxu0 0.0
    %7667 = vmatpush2.msra.mxu0 0.0
    %7668 = vmatprep.subr.mxu0 0.0
    %7669 = vmatpush2.msra.mxu0 0.0
    %7670 = vmatprep.subr.mxu0 0.0
    %7671 = vmatpush2.msra.mxu0 0.0
    %7672 = vmatprep.subr.mxu0 0.0
    %7673 = vmatpush2.msra.mxu0 0.0
    %7674 = vmatprep.mubr.f32.mxu0 0.0
    %7675 = vmatmul.mubr.f32.gmra.mxu0 %v7605
    %v7676 = vpop.f32.mrf.mxu0
    %v7677 = vadd.f32 %v7606, %v7676
    %v7678 = vpop.f32.mrf.mxu0
    %v7679 = vadd.f32 %v7607, %v7678
    %7680 = vdwg.mxu0
    %7681 = vmatprep.subr.mxu0 %v6941
    %7682 = vmatpush1.msra.mxu0 %v6940
    %7683 = vmatprep.subr.mxu0 %v6937
    %7684 = vmatpush1.msra.mxu0 %v6936
    %7685 = vmatprep.subr.mxu0 %v6933
    %7686 = vmatpush1.msra.mxu0 %v6932
    %7687 = vmatprep.subr.mxu0 %v6929
    %7688 = vmatpush1.msra.mxu0 %v6928
    %7689 = vmatprep.subr.mxu0 %v6925
    %7690 = vmatpush1.msra.mxu0 %v6924
    %7691 = vmatprep.subr.mxu0 %v6921
    %7692 = vmatpush1.msra.mxu0 %v6920
    %7693 = vmatprep.subr.mxu0 %v6917
    %7694 = vmatpush1.msra.mxu0 %v6916
    %7695 = vmatprep.subr.mxu0 %v6913
    %7696 = vmatpush1.msra.mxu0 %v6912
    %7697 = vmatprep.subr.mxu0 %v6909
    %7698 = vmatpush1.msra.mxu0 %v6908
    %7699 = vmatprep.subr.mxu0 %v6905
    %7700 = vmatpush1.msra.mxu0 %v6904
    %7701 = vmatprep.subr.mxu0 %v6901
    %7702 = vmatpush1.msra.mxu0 %v6900
    %7703 = vmatprep.subr.mxu0 %v6897
    %7704 = vmatpush1.msra.mxu0 %v6896
    %7705 = vmatprep.subr.mxu0 %v6893
    %7706 = vmatpush1.msra.mxu0 %v6892
    %7707 = vmatprep.subr.mxu0 %v6889
    %7708 = vmatpush1.msra.mxu0 %v6888
    %7709 = vmatprep.subr.mxu0 %v6885
    %7710 = vmatpush1.msra.mxu0 %v6884
    %7711 = vmatprep.subr.mxu0 %v6881
    %7712 = vmatpush1.msra.mxu0 %v6880
    %7713 = vmatprep.subr.mxu0 0.0
    %7714 = vmatpush2.msra.mxu0 0.0
    %7715 = vmatprep.subr.mxu0 0.0
    %7716 = vmatpush2.msra.mxu0 0.0
    %7717 = vmatprep.subr.mxu0 0.0
    %7718 = vmatpush2.msra.mxu0 0.0
    %7719 = vmatprep.subr.mxu0 0.0
    %7720 = vmatpush2.msra.mxu0 0.0
    %7721 = vmatprep.subr.mxu0 0.0
    %7722 = vmatpush2.msra.mxu0 0.0
    %7723 = vmatprep.subr.mxu0 0.0
    %7724 = vmatpush2.msra.mxu0 0.0
    %7725 = vmatprep.subr.mxu0 0.0
    %7726 = vmatpush2.msra.mxu0 0.0
    %7727 = vmatprep.subr.mxu0 0.0
    %7728 = vmatpush2.msra.mxu0 0.0
    %7729 = vmatprep.subr.mxu0 0.0
    %7730 = vmatpush2.msra.mxu0 0.0
    %7731 = vmatprep.subr.mxu0 0.0
    %7732 = vmatpush2.msra.mxu0 0.0
    %7733 = vmatprep.subr.mxu0 0.0
    %7734 = vmatpush2.msra.mxu0 0.0
    %7735 = vmatprep.subr.mxu0 0.0
    %7736 = vmatpush2.msra.mxu0 0.0
    %7737 = vmatprep.subr.mxu0 0.0
    %7738 = vmatpush2.msra.mxu0 0.0
    %7739 = vmatprep.subr.mxu0 0.0
    %7740 = vmatpush2.msra.mxu0 0.0
    %7741 = vmatprep.subr.mxu0 0.0
    %7742 = vmatpush2.msra.mxu0 0.0
    %7743 = vmatprep.subr.mxu0 0.0
    %7744 = vmatpush2.msra.mxu0 0.0
    %7745 = vmatprep.mubr.f32.mxu0 0.0
    %7746 = vmatmul.mubr.f32.gmra.mxu0 %v7605
    %v7747 = vpop.f32.mrf.mxu0
    %v7748 = vadd.f32 %v7608, %v7747
    %v7749 = vpop.f32.mrf.mxu0
    %v7750 = vadd.f32 %v7609, %v7749
    %7751 = vdwg.mxu0
    %v7752 = vsub.f32 0.0, %v7677
    %v7753 = vmul.f32 %v7752, 1.442695
    %v7754 = vpow.pop %v7753
    %v7755 = vadd.f32 %v7754, 1.0
    %v7756 = vrcp.pop %v7755
    %v7757 = vsub.f32 0.0, %v7679
    %v7758 = vmul.f32 %v7757, 1.442695
    %v7759 = vpow.pop %v7758
    %v7760 = vadd.f32 %v7759, 1.0
    %v7761 = vrcp.pop %v7760
    %v7762 = vtanh.pop %v7748
    %v7763 = vsub.f32 0.0, %v7750
    %v7764 = vmul.f32 %v7763, 1.442695
    %v7765 = vpow.pop %v7764
    %v7766 = vadd.f32 %v7765, 1.0
    %v7767 = vrcp.pop %v7766
    %v7768 = vmul.f32 %v7761, %v7603
    %v7769 = vmul.f32 %v7756, %v7762
    %v7770 = vadd.f32 %v7768, %v7769
    %v7771 = vtanh.pop %v7770
    %v7772 = vmul.f32 %v7767, %v7771
    %v7773 = vld [vmem:[#allocation6 + $0x40] sm:$0xff]
    %v7774 = vld [vmem:[#allocation6 + $0x48] sm:$0xff]
    %v7775 = vld [vmem:[#allocation6 + $0x50] sm:$0xff]
    %v7776 = vld [vmem:[#allocation6 + $0x58] sm:$0xff]
    %7777 = vmatprep.subr.mxu0 %v6939
    %7778 = vmatpush1.msra.mxu0 %v6938
    %7779 = vmatprep.subr.mxu0 %v6935
    %7780 = vmatpush1.msra.mxu0 %v6934
    %7781 = vmatprep.subr.mxu0 %v6931
    %7782 = vmatpush1.msra.mxu0 %v6930
    %7783 = vmatprep.subr.mxu0 %v6927
    %7784 = vmatpush1.msra.mxu0 %v6926
    %7785 = vmatprep.subr.mxu0 %v6923
    %7786 = vmatpush1.msra.mxu0 %v6922
    %7787 = vmatprep.subr.mxu0 %v6919
    %7788 = vmatpush1.msra.mxu0 %v6918
    %7789 = vmatprep.subr.mxu0 %v6915
    %7790 = vmatpush1.msra.mxu0 %v6914
    %7791 = vmatprep.subr.mxu0 %v6911
    %7792 = vmatpush1.msra.mxu0 %v6910
    %7793 = vmatprep.subr.mxu0 %v6907
    %7794 = vmatpush1.msra.mxu0 %v6906
    %7795 = vmatprep.subr.mxu0 %v6903
    %7796 = vmatpush1.msra.mxu0 %v6902
    %7797 = vmatprep.subr.mxu0 %v6899
    %7798 = vmatpush1.msra.mxu0 %v6898
    %7799 = vmatprep.subr.mxu0 %v6895
    %7800 = vmatpush1.msra.mxu0 %v6894
    %7801 = vmatprep.subr.mxu0 %v6891
    %7802 = vmatpush1.msra.mxu0 %v6890
    %7803 = vmatprep.subr.mxu0 %v6887
    %7804 = vmatpush1.msra.mxu0 %v6886
    %7805 = vmatprep.subr.mxu0 %v6883
    %7806 = vmatpush1.msra.mxu0 %v6882
    %7807 = vmatprep.subr.mxu0 %v6879
    %7808 = vmatpush1.msra.mxu0 %v6878
    %7809 = vmatprep.subr.mxu0 0.0
    %7810 = vmatpush2.msra.mxu0 0.0
    %7811 = vmatprep.subr.mxu0 0.0
    %7812 = vmatpush2.msra.mxu0 0.0
    %7813 = vmatprep.subr.mxu0 0.0
    %7814 = vmatpush2.msra.mxu0 0.0
    %7815 = vmatprep.subr.mxu0 0.0
    %7816 = vmatpush2.msra.mxu0 0.0
    %7817 = vmatprep.subr.mxu0 0.0
    %7818 = vmatpush2.msra.mxu0 0.0
    %7819 = vmatprep.subr.mxu0 0.0
    %7820 = vmatpush2.msra.mxu0 0.0
    %7821 = vmatprep.subr.mxu0 0.0
    %7822 = vmatpush2.msra.mxu0 0.0
    %7823 = vmatprep.subr.mxu0 0.0
    %7824 = vmatpush2.msra.mxu0 0.0
    %7825 = vmatprep.subr.mxu0 0.0
    %7826 = vmatpush2.msra.mxu0 0.0
    %7827 = vmatprep.subr.mxu0 0.0
    %7828 = vmatpush2.msra.mxu0 0.0
    %7829 = vmatprep.subr.mxu0 0.0
    %7830 = vmatpush2.msra.mxu0 0.0
    %7831 = vmatprep.subr.mxu0 0.0
    %7832 = vmatpush2.msra.mxu0 0.0
    %7833 = vmatprep.subr.mxu0 0.0
    %7834 = vmatpush2.msra.mxu0 0.0
    %7835 = vmatprep.subr.mxu0 0.0
    %7836 = vmatpush2.msra.mxu0 0.0
    %7837 = vmatprep.subr.mxu0 0.0
    %7838 = vmatpush2.msra.mxu0 0.0
    %7839 = vmatprep.subr.mxu0 0.0
    %7840 = vmatpush2.msra.mxu0 0.0
    %7841 = vmatprep.mubr.f32.mxu0 0.0
    %7842 = vmatmul.mubr.f32.gmra.mxu0 %v7772
    %v7843 = vpop.f32.mrf.mxu0
    %v7844 = vadd.f32 %v7773, %v7843
    %v7845 = vpop.f32.mrf.mxu0
    %v7846 = vadd.f32 %v7774, %v7845
    %7847 = vdwg.mxu0
    %7848 = vmatprep.subr.mxu0 %v6941
    %7849 = vmatpush1.msra.mxu0 %v6940
    %7850 = vmatprep.subr.mxu0 %v6937
    %7851 = vmatpush1.msra.mxu0 %v6936
    %7852 = vmatprep.subr.mxu0 %v6933
    %7853 = vmatpush1.msra.mxu0 %v6932
    %7854 = vmatprep.subr.mxu0 %v6929
    %7855 = vmatpush1.msra.mxu0 %v6928
    %7856 = vmatprep.subr.mxu0 %v6925
    %7857 = vmatpush1.msra.mxu0 %v6924
    %7858 = vmatprep.subr.mxu0 %v6921
    %7859 = vmatpush1.msra.mxu0 %v6920
    %7860 = vmatprep.subr.mxu0 %v6917
    %7861 = vmatpush1.msra.mxu0 %v6916
    %7862 = vmatprep.subr.mxu0 %v6913
    %7863 = vmatpush1.msra.mxu0 %v6912
    %7864 = vmatprep.subr.mxu0 %v6909
    %7865 = vmatpush1.msra.mxu0 %v6908
    %7866 = vmatprep.subr.mxu0 %v6905
    %7867 = vmatpush1.msra.mxu0 %v6904
    %7868 = vmatprep.subr.mxu0 %v6901
    %7869 = vmatpush1.msra.mxu0 %v6900
    %7870 = vmatprep.subr.mxu0 %v6897
    %7871 = vmatpush1.msra.mxu0 %v6896
    %7872 = vmatprep.subr.mxu0 %v6893
    %7873 = vmatpush1.msra.mxu0 %v6892
    %7874 = vmatprep.subr.mxu0 %v6889
    %7875 = vmatpush1.msra.mxu0 %v6888
    %7876 = vmatprep.subr.mxu0 %v6885
    %7877 = vmatpush1.msra.mxu0 %v6884
    %7878 = vmatprep.subr.mxu0 %v6881
    %7879 = vmatpush1.msra.mxu0 %v6880
    %7880 = vmatprep.subr.mxu0 0.0
    %7881 = vmatpush2.msra.mxu0 0.0
    %7882 = vmatprep.subr.mxu0 0.0
    %7883 = vmatpush2.msra.mxu0 0.0
    %7884 = vmatprep.subr.mxu0 0.0
    %7885 = vmatpush2.msra.mxu0 0.0
    %7886 = vmatprep.subr.mxu0 0.0
    %7887 = vmatpush2.msra.mxu0 0.0
    %7888 = vmatprep.subr.mxu0 0.0
    %7889 = vmatpush2.msra.mxu0 0.0
    %7890 = vmatprep.subr.mxu0 0.0
    %7891 = vmatpush2.msra.mxu0 0.0
    %7892 = vmatprep.subr.mxu0 0.0
    %7893 = vmatpush2.msra.mxu0 0.0
    %7894 = vmatprep.subr.mxu0 0.0
    %7895 = vmatpush2.msra.mxu0 0.0
    %7896 = vmatprep.subr.mxu0 0.0
    %7897 = vmatpush2.msra.mxu0 0.0
    %7898 = vmatprep.subr.mxu0 0.0
    %7899 = vmatpush2.msra.mxu0 0.0
    %7900 = vmatprep.subr.mxu0 0.0
    %7901 = vmatpush2.msra.mxu0 0.0
    %7902 = vmatprep.subr.mxu0 0.0
    %7903 = vmatpush2.msra.mxu0 0.0
    %7904 = vmatprep.subr.mxu0 0.0
    %7905 = vmatpush2.msra.mxu0 0.0
    %7906 = vmatprep.subr.mxu0 0.0
    %7907 = vmatpush2.msra.mxu0 0.0
    %7908 = vmatprep.subr.mxu0 0.0
    %7909 = vmatpush2.msra.mxu0 0.0
    %7910 = vmatprep.subr.mxu0 0.0
    %7911 = vmatpush2.msra.mxu0 0.0
    %7912 = vmatprep.mubr.f32.mxu0 0.0
    %7913 = vmatmul.mubr.f32.gmra.mxu0 %v7772
    %v7914 = vpop.f32.mrf.mxu0
    %v7915 = vadd.f32 %v7775, %v7914
    %v7916 = vpop.f32.mrf.mxu0
    %v7917 = vadd.f32 %v7776, %v7916
    %7918 = vdwg.mxu0
    %v7919 = vsub.f32 0.0, %v7844
    %v7920 = vmul.f32 %v7919, 1.442695
    %v7921 = vpow.pop %v7920
    %v7922 = vadd.f32 %v7921, 1.0
    %v7923 = vrcp.pop %v7922
    %v7924 = vsub.f32 0.0, %v7846
    %v7925 = vmul.f32 %v7924, 1.442695
    %v7926 = vpow.pop %v7925
    %v7927 = vadd.f32 %v7926, 1.0
    %v7928 = vrcp.pop %v7927
    %v7929 = vtanh.pop %v7915
    %v7930 = vsub.f32 0.0, %v7917
    %v7931 = vmul.f32 %v7930, 1.442695
    %v7932 = vpow.pop %v7931
    %v7933 = vadd.f32 %v7932, 1.0
    %v7934 = vrcp.pop %v7933
    %v7935 = vmul.f32 %v7928, %v7770
    %v7936 = vmul.f32 %v7923, %v7929
    %v7937 = vadd.f32 %v7935, %v7936
    %v7938 = vtanh.pop %v7937
    %v7939 = vmul.f32 %v7934, %v7938
    %v7940 = vld [vmem:[#allocation6 + $0x20] sm:$0xff]
    %v7941 = vld [vmem:[#allocation6 + $0x28] sm:$0xff]
    %v7942 = vld [vmem:[#allocation6 + $0x30] sm:$0xff]
    %v7943 = vld [vmem:[#allocation6 + $0x38] sm:$0xff]
    %7944 = vmatprep.subr.mxu0 %v6939
    %7945 = vmatpush1.msra.mxu0 %v6938
    %7946 = vmatprep.subr.mxu0 %v6935
    %7947 = vmatpush1.msra.mxu0 %v6934
    %7948 = vmatprep.subr.mxu0 %v6931
    %7949 = vmatpush1.msra.mxu0 %v6930
    %7950 = vmatprep.subr.mxu0 %v6927
    %7951 = vmatpush1.msra.mxu0 %v6926
    %7952 = vmatprep.subr.mxu0 %v6923
    %7953 = vmatpush1.msra.mxu0 %v6922
    %7954 = vmatprep.subr.mxu0 %v6919
    %7955 = vmatpush1.msra.mxu0 %v6918
    %7956 = vmatprep.subr.mxu0 %v6915
    %7957 = vmatpush1.msra.mxu0 %v6914
    %7958 = vmatprep.subr.mxu0 %v6911
    %7959 = vmatpush1.msra.mxu0 %v6910
    %7960 = vmatprep.subr.mxu0 %v6907
    %7961 = vmatpush1.msra.mxu0 %v6906
    %7962 = vmatprep.subr.mxu0 %v6903
    %7963 = vmatpush1.msra.mxu0 %v6902
    %7964 = vmatprep.subr.mxu0 %v6899
    %7965 = vmatpush1.msra.mxu0 %v6898
    %7966 = vmatprep.subr.mxu0 %v6895
    %7967 = vmatpush1.msra.mxu0 %v6894
    %7968 = vmatprep.subr.mxu0 %v6891
    %7969 = vmatpush1.msra.mxu0 %v6890
    %7970 = vmatprep.subr.mxu0 %v6887
    %7971 = vmatpush1.msra.mxu0 %v6886
    %7972 = vmatprep.subr.mxu0 %v6883
    %7973 = vmatpush1.msra.mxu0 %v6882
    %7974 = vmatprep.subr.mxu0 %v6879
    %7975 = vmatpush1.msra.mxu0 %v6878
    %7976 = vmatprep.subr.mxu0 0.0
    %7977 = vmatpush2.msra.mxu0 0.0
    %7978 = vmatprep.subr.mxu0 0.0
    %7979 = vmatpush2.msra.mxu0 0.0
    %7980 = vmatprep.subr.mxu0 0.0
    %7981 = vmatpush2.msra.mxu0 0.0
    %7982 = vmatprep.subr.mxu0 0.0
    %7983 = vmatpush2.msra.mxu0 0.0
    %7984 = vmatprep.subr.mxu0 0.0
    %7985 = vmatpush2.msra.mxu0 0.0
    %7986 = vmatprep.subr.mxu0 0.0
    %7987 = vmatpush2.msra.mxu0 0.0
    %7988 = vmatprep.subr.mxu0 0.0
    %7989 = vmatpush2.msra.mxu0 0.0
    %7990 = vmatprep.subr.mxu0 0.0
    %7991 = vmatpush2.msra.mxu0 0.0
    %7992 = vmatprep.subr.mxu0 0.0
    %7993 = vmatpush2.msra.mxu0 0.0
    %7994 = vmatprep.subr.mxu0 0.0
    %7995 = vmatpush2.msra.mxu0 0.0
    %7996 = vmatprep.subr.mxu0 0.0
    %7997 = vmatpush2.msra.mxu0 0.0
    %7998 = vmatprep.subr.mxu0 0.0
    %7999 = vmatpush2.msra.mxu0 0.0
    %8000 = vmatprep.subr.mxu0 0.0
    %8001 = vmatpush2.msra.mxu0 0.0
    %8002 = vmatprep.subr.mxu0 0.0
    %8003 = vmatpush2.msra.mxu0 0.0
    %8004 = vmatprep.subr.mxu0 0.0
    %8005 = vmatpush2.msra.mxu0 0.0
    %8006 = vmatprep.subr.mxu0 0.0
    %8007 = vmatpush2.msra.mxu0 0.0
    %8008 = vmatprep.mubr.f32.mxu0 0.0
    %8009 = vmatmul.mubr.f32.gmra.mxu0 %v7939
    %v8010 = vpop.f32.mrf.mxu0
    %v8011 = vadd.f32 %v7940, %v8010
    %v8012 = vpop.f32.mrf.mxu0
    %v8013 = vadd.f32 %v7941, %v8012
    %8014 = vdwg.mxu0
    %8015 = vmatprep.subr.mxu0 %v6941
    %8016 = vmatpush1.msra.mxu0 %v6940
    %8017 = vmatprep.subr.mxu0 %v6937
    %8018 = vmatpush1.msra.mxu0 %v6936
    %8019 = vmatprep.subr.mxu0 %v6933
    %8020 = vmatpush1.msra.mxu0 %v6932
    %8021 = vmatprep.subr.mxu0 %v6929
    %8022 = vmatpush1.msra.mxu0 %v6928
    %8023 = vmatprep.subr.mxu0 %v6925
    %8024 = vmatpush1.msra.mxu0 %v6924
    %8025 = vmatprep.subr.mxu0 %v6921
    %8026 = vmatpush1.msra.mxu0 %v6920
    %8027 = vmatprep.subr.mxu0 %v6917
    %8028 = vmatpush1.msra.mxu0 %v6916
    %8029 = vmatprep.subr.mxu0 %v6913
    %8030 = vmatpush1.msra.mxu0 %v6912
    %8031 = vmatprep.subr.mxu0 %v6909
    %8032 = vmatpush1.msra.mxu0 %v6908
    %8033 = vmatprep.subr.mxu0 %v6905
    %8034 = vmatpush1.msra.mxu0 %v6904
    %8035 = vmatprep.subr.mxu0 %v6901
    %8036 = vmatpush1.msra.mxu0 %v6900
    %8037 = vmatprep.subr.mxu0 %v6897
    %8038 = vmatpush1.msra.mxu0 %v6896
    %8039 = vmatprep.subr.mxu0 %v6893
    %8040 = vmatpush1.msra.mxu0 %v6892
    %8041 = vmatprep.subr.mxu0 %v6889
    %8042 = vmatpush1.msra.mxu0 %v6888
    %8043 = vmatprep.subr.mxu0 %v6885
    %8044 = vmatpush1.msra.mxu0 %v6884
    %8045 = vmatprep.subr.mxu0 %v6881
    %8046 = vmatpush1.msra.mxu0 %v6880
    %8047 = vmatprep.subr.mxu0 0.0
    %8048 = vmatpush2.msra.mxu0 0.0
    %8049 = vmatprep.subr.mxu0 0.0
    %8050 = vmatpush2.msra.mxu0 0.0
    %8051 = vmatprep.subr.mxu0 0.0
    %8052 = vmatpush2.msra.mxu0 0.0
    %8053 = vmatprep.subr.mxu0 0.0
    %8054 = vmatpush2.msra.mxu0 0.0
    %8055 = vmatprep.subr.mxu0 0.0
    %8056 = vmatpush2.msra.mxu0 0.0
    %8057 = vmatprep.subr.mxu0 0.0
    %8058 = vmatpush2.msra.mxu0 0.0
    %8059 = vmatprep.subr.mxu0 0.0
    %8060 = vmatpush2.msra.mxu0 0.0
    %8061 = vmatprep.subr.mxu0 0.0
    %8062 = vmatpush2.msra.mxu0 0.0
    %8063 = vmatprep.subr.mxu0 0.0
    %8064 = vmatpush2.msra.mxu0 0.0
    %8065 = vmatprep.subr.mxu0 0.0
    %8066 = vmatpush2.msra.mxu0 0.0
    %8067 = vmatprep.subr.mxu0 0.0
    %8068 = vmatpush2.msra.mxu0 0.0
    %8069 = vmatprep.subr.mxu0 0.0
    %8070 = vmatpush2.msra.mxu0 0.0
    %8071 = vmatprep.subr.mxu0 0.0
    %8072 = vmatpush2.msra.mxu0 0.0
    %8073 = vmatprep.subr.mxu0 0.0
    %8074 = vmatpush2.msra.mxu0 0.0
    %8075 = vmatprep.subr.mxu0 0.0
    %8076 = vmatpush2.msra.mxu0 0.0
    %8077 = vmatprep.subr.mxu0 0.0
    %8078 = vmatpush2.msra.mxu0 0.0
    %8079 = vmatprep.mubr.f32.mxu0 0.0
    %8080 = vmatmul.mubr.f32.gmra.mxu0 %v7939
    %v8081 = vpop.f32.mrf.mxu0
    %v8082 = vadd.f32 %v7942, %v8081
    %v8083 = vpop.f32.mrf.mxu0
    %v8084 = vadd.f32 %v7943, %v8083
    %8085 = vdwg.mxu0
    %v8086 = vsub.f32 0.0, %v8011
    %v8087 = vmul.f32 %v8086, 1.442695
    %v8088 = vpow.pop %v8087
    %v8089 = vadd.f32 %v8088, 1.0
    %v8090 = vrcp.pop %v8089
    %v8091 = vsub.f32 0.0, %v8013
    %v8092 = vmul.f32 %v8091, 1.442695
    %v8093 = vpow.pop %v8092
    %v8094 = vadd.f32 %v8093, 1.0
    %v8095 = vrcp.pop %v8094
    %v8096 = vtanh.pop %v8082
    %v8097 = vsub.f32 0.0, %v8084
    %v8098 = vmul.f32 %v8097, 1.442695
    %v8099 = vpow.pop %v8098
    %v8100 = vadd.f32 %v8099, 1.0
    %v8101 = vrcp.pop %v8100
    %v8102 = vmul.f32 %v8095, %v7937
    %v8103 = vmul.f32 %v8090, %v8096
    %v8104 = vadd.f32 %v8102, %v8103
    %v8105 = vtanh.pop %v8104
    %v8106 = vmul.f32 %v8101, %v8105
    %v8107 = vld [vmem:[#allocation6] sm:$0xff]
    %v8108 = vld [vmem:[#allocation6 + $0x8] sm:$0xff]
    %v8109 = vld [vmem:[#allocation6 + $0x10] sm:$0xff]
    %v8110 = vld [vmem:[#allocation6 + $0x18] sm:$0xff]
    %8111 = vmatprep.subr.mxu0 %v6939
    %8112 = vmatpush1.msra.mxu0 %v6938
    %8113 = vmatprep.subr.mxu0 %v6935
    %8114 = vmatpush1.msra.mxu0 %v6934
    %8115 = vmatprep.subr.mxu0 %v6931
    %8116 = vmatpush1.msra.mxu0 %v6930
    %8117 = vmatprep.subr.mxu0 %v6927
    %8118 = vmatpush1.msra.mxu0 %v6926
    %8119 = vmatprep.subr.mxu0 %v6923
    %8120 = vmatpush1.msra.mxu0 %v6922
    %8121 = vmatprep.subr.mxu0 %v6919
    %8122 = vmatpush1.msra.mxu0 %v6918
    %8123 = vmatprep.subr.mxu0 %v6915
    %8124 = vmatpush1.msra.mxu0 %v6914
    %8125 = vmatprep.subr.mxu0 %v6911
    %8126 = vmatpush1.msra.mxu0 %v6910
    %8127 = vmatprep.subr.mxu0 %v6907
    %8128 = vmatpush1.msra.mxu0 %v6906
    %8129 = vmatprep.subr.mxu0 %v6903
    %8130 = vmatpush1.msra.mxu0 %v6902
    %8131 = vmatprep.subr.mxu0 %v6899
    %8132 = vmatpush1.msra.mxu0 %v6898
    %8133 = vmatprep.subr.mxu0 %v6895
    %8134 = vmatpush1.msra.mxu0 %v6894
    %8135 = vmatprep.subr.mxu0 %v6891
    %8136 = vmatpush1.msra.mxu0 %v6890
    %8137 = vmatprep.subr.mxu0 %v6887
    %8138 = vmatpush1.msra.mxu0 %v6886
    %8139 = vmatprep.subr.mxu0 %v6883
    %8140 = vmatpush1.msra.mxu0 %v6882
    %8141 = vmatprep.subr.mxu0 %v6879
    %8142 = vmatpush1.msra.mxu0 %v6878
    %8143 = vmatprep.subr.mxu0 0.0
    %8144 = vmatpush2.msra.mxu0 0.0
    %8145 = vmatprep.subr.mxu0 0.0
    %8146 = vmatpush2.msra.mxu0 0.0
    %8147 = vmatprep.subr.mxu0 0.0
    %8148 = vmatpush2.msra.mxu0 0.0
    %8149 = vmatprep.subr.mxu0 0.0
    %8150 = vmatpush2.msra.mxu0 0.0
    %8151 = vmatprep.subr.mxu0 0.0
    %8152 = vmatpush2.msra.mxu0 0.0
    %8153 = vmatprep.subr.mxu0 0.0
    %8154 = vmatpush2.msra.mxu0 0.0
    %8155 = vmatprep.subr.mxu0 0.0
    %8156 = vmatpush2.msra.mxu0 0.0
    %8157 = vmatprep.subr.mxu0 0.0
    %8158 = vmatpush2.msra.mxu0 0.0
    %8159 = vmatprep.subr.mxu0 0.0
    %8160 = vmatpush2.msra.mxu0 0.0
    %8161 = vmatprep.subr.mxu0 0.0
    %8162 = vmatpush2.msra.mxu0 0.0
    %8163 = vmatprep.subr.mxu0 0.0
    %8164 = vmatpush2.msra.mxu0 0.0
    %8165 = vmatprep.subr.mxu0 0.0
    %8166 = vmatpush2.msra.mxu0 0.0
    %8167 = vmatprep.subr.mxu0 0.0
    %8168 = vmatpush2.msra.mxu0 0.0
    %8169 = vmatprep.subr.mxu0 0.0
    %8170 = vmatpush2.msra.mxu0 0.0
    %8171 = vmatprep.subr.mxu0 0.0
    %8172 = vmatpush2.msra.mxu0 0.0
    %8173 = vmatprep.subr.mxu0 0.0
    %8174 = vmatpush2.msra.mxu0 0.0
    %8175 = vmatprep.mubr.f32.mxu0 0.0
    %8176 = vmatmul.mubr.f32.gmra.mxu0 %v8106
    %v8177 = vpop.f32.mrf.mxu0
    %v8178 = vadd.f32 %v8107, %v8177
    %v8179 = vpop.f32.mrf.mxu0
    %v8180 = vadd.f32 %v8108, %v8179
    %8181 = vdwg.mxu0
    %8182 = vmatprep.subr.mxu0 %v6941
    %8183 = vmatpush1.msra.mxu0 %v6940
    %8184 = vmatprep.subr.mxu0 %v6937
    %8185 = vmatpush1.msra.mxu0 %v6936
    %8186 = vmatprep.subr.mxu0 %v6933
    %8187 = vmatpush1.msra.mxu0 %v6932
    %8188 = vmatprep.subr.mxu0 %v6929
    %8189 = vmatpush1.msra.mxu0 %v6928
    %8190 = vmatprep.subr.mxu0 %v6925
    %8191 = vmatpush1.msra.mxu0 %v6924
    %8192 = vmatprep.subr.mxu0 %v6921
    %8193 = vmatpush1.msra.mxu0 %v6920
    %8194 = vmatprep.subr.mxu0 %v6917
    %8195 = vmatpush1.msra.mxu0 %v6916
    %8196 = vmatprep.subr.mxu0 %v6913
    %8197 = vmatpush1.msra.mxu0 %v6912
    %8198 = vmatprep.subr.mxu0 %v6909
    %8199 = vmatpush1.msra.mxu0 %v6908
    %8200 = vmatprep.subr.mxu0 %v6905
    %8201 = vmatpush1.msra.mxu0 %v6904
    %8202 = vmatprep.subr.mxu0 %v6901
    %8203 = vmatpush1.msra.mxu0 %v6900
    %8204 = vmatprep.subr.mxu0 %v6897
    %8205 = vmatpush1.msra.mxu0 %v6896
    %8206 = vmatprep.subr.mxu0 %v6893
    %8207 = vmatpush1.msra.mxu0 %v6892
    %8208 = vmatprep.subr.mxu0 %v6889
    %8209 = vmatpush1.msra.mxu0 %v6888
    %8210 = vmatprep.subr.mxu0 %v6885
    %8211 = vmatpush1.msra.mxu0 %v6884
    %8212 = vmatprep.subr.mxu0 %v6881
    %8213 = vmatpush1.msra.mxu0 %v6880
    %8214 = vmatprep.subr.mxu0 0.0
    %8215 = vmatpush2.msra.mxu0 0.0
    %8216 = vmatprep.subr.mxu0 0.0
    %8217 = vmatpush2.msra.mxu0 0.0
    %8218 = vmatprep.subr.mxu0 0.0
    %8219 = vmatpush2.msra.mxu0 0.0
    %8220 = vmatprep.subr.mxu0 0.0
    %8221 = vmatpush2.msra.mxu0 0.0
    %8222 = vmatprep.subr.mxu0 0.0
    %8223 = vmatpush2.msra.mxu0 0.0
    %8224 = vmatprep.subr.mxu0 0.0
    %8225 = vmatpush2.msra.mxu0 0.0
    %8226 = vmatprep.subr.mxu0 0.0
    %8227 = vmatpush2.msra.mxu0 0.0
    %8228 = vmatprep.subr.mxu0 0.0
    %8229 = vmatpush2.msra.mxu0 0.0
    %8230 = vmatprep.subr.mxu0 0.0
    %8231 = vmatpush2.msra.mxu0 0.0
    %8232 = vmatprep.subr.mxu0 0.0
    %8233 = vmatpush2.msra.mxu0 0.0
    %8234 = vmatprep.subr.mxu0 0.0
    %8235 = vmatpush2.msra.mxu0 0.0
    %8236 = vmatprep.subr.mxu0 0.0
    %8237 = vmatpush2.msra.mxu0 0.0
    %8238 = vmatprep.subr.mxu0 0.0
    %8239 = vmatpush2.msra.mxu0 0.0
    %8240 = vmatprep.subr.mxu0 0.0
    %8241 = vmatpush2.msra.mxu0 0.0
    %8242 = vmatprep.subr.mxu0 0.0
    %8243 = vmatpush2.msra.mxu0 0.0
    %8244 = vmatprep.subr.mxu0 0.0
    %8245 = vmatpush2.msra.mxu0 0.0
    %8246 = vmatprep.mubr.f32.mxu0 0.0
    %8247 = vmatmul.mubr.f32.gmra.mxu0 %v8106
    %v8248 = vpop.f32.mrf.mxu0
    %v8249 = vadd.f32 %v8109, %v8248
    %v8250 = vpop.f32.mrf.mxu0
    %v8251 = vadd.f32 %v8110, %v8250
    %8252 = vdwg.mxu0
    %v8253 = vsub.f32 0.0, %v8178
    %v8254 = vmul.f32 %v8253, 1.442695
    %v8255 = vpow.pop %v8254
    %v8256 = vadd.f32 %v8255, 1.0
    %v8257 = vrcp.pop %v8256
    %v8258 = vsub.f32 0.0, %v8180
    %v8259 = vmul.f32 %v8258, 1.442695
    %v8260 = vpow.pop %v8259
    %v8261 = vadd.f32 %v8260, 1.0
    %v8262 = vrcp.pop %v8261
    %v8263 = vtanh.pop %v8249
    %v8264 = vsub.f32 0.0, %v8251
    %v8265 = vmul.f32 %v8264, 1.442695
    %v8266 = vpow.pop %v8265
    %v8267 = vadd.f32 %v8266, 1.0
    %v8268 = vrcp.pop %v8267
    %v8269 = vmul.f32 %v8262, %v8104
    %v8270 = vmul.f32 %v8257, %v8263
    %v8271 = vadd.f32 %v8269, %v8270
    %v8272 = vtanh.pop %v8271
    %v8273 = vmul.f32 %v8268, %v8272
    %v8274 = vld [vmem:[%s17] sm:$0x1]
    %v8276 = vlaneseq
    %v8277 = vshrl.u32 %v8276, 7
    %v8278 = vsub.s32 0, %v8277
    %v8279 = vrot.slane %v8274, %v8278
    %v8281 = vmul.f32 %v6869, %v8279
    %v8282 = vld [vmem:[%s18] sm:$0x1]
    %v8284 = vlaneseq
    %v8285 = vshrl.u32 %v8284, 7
    %v8286 = vsub.s32 0, %v8285
    %v8287 = vrot.slane %v8282, %v8286
    %v8289 = vmul.f32 %v8273, %v8287
    %v8290 = vadd.f32 %v8281, %v8289
    %8291 = vadd.xlane.f32.xlu0 %v8290
    %v8292 = vpop.xlane.xlu0 %8291
    %v8293 = vld [vmem:[#allocation7] sm:$0x1]
    %v8295 = vlaneseq
    %v8296 = vshrl.u32 %v8295, 7
    %v8297 = vsub.s32 0, %v8296
    %v8298 = vrot.slane %v8293, %v8297
    %v8300 = vadd.f32 %v8292, %v8298
    %vm8301 = vcmask 7168
    %8302 = vst.msk [vmem:[%s20] sm:$0xff] %vm8301, %v8300
    // Predicated region
    $region134: #{tpu_custom_call.1} parent=1 // pred_check
      _
    $region135: #{tpu_custom_call.1} parent=1 // pred_check_branch
      %8304 = sbr.rel (0) target = $region137
    $region136: #{tpu_custom_call.1} parent=1 // pred_region
      _
    $region137: #{tpu_custom_call.1} parent=1 // pred_fallthru
      _
    // Predicated region
    $region138: #{tpu_custom_call.1} parent=1 // pred_check
      _
    $region139: #{tpu_custom_call.1} parent=1 // pred_check_branch
      %8306 = sbr.rel (0) target = $region141
    $region140: #{tpu_custom_call.1} parent=1 // pred_region
      _
    $region141: #{tpu_custom_call.1} parent=1 // pred_fallthru
      _
    %8307 = vsyncpa [#allocation9], 1
    %8308 = vsyncpa [#allocation11], 1
    %8309 = vsyncpa [#allocation14], 1
    %8310 = vsyncpa [#allocation17], 1
    %8311 = vsyncpa [#allocation20], 1
    %8312 = vsyncpa [#allocation23], 1
    %8313 = vsyncpa [#allocation26], 1

</llo_original>
